<compile_context>
chip_gen: v7x
topology: tpu7x:2x2x1
jax: 0.10.0
libtpu: 0.0.40
codegen_flags: <defaults>
</compile_context>

<pallas_src>
import jax
import jax.numpy as jnp
from jax import lax
from jax.experimental import pallas as pl
from jax.experimental.pallas import tpu as pltpu

LEAKY_SLOPE = 0.2
VMEM_LIMIT = 32 << 20  # conservative scoped-VMEM cap: fits v5e/v6e/v7x


# ----------------------------- Pallas kernels ------------------------------

def _conv_macro_kernel(m_ref, w_ref, b_ref, o_ref):
    """One image of Conv2d(k=4,s=2,p=1) + LeakyReLU(0.2).

    m_ref: (Hm, Wm, Km) bf16 macro input (space-to-depth of the padded input,
           Km = 4*Ci, Hm = H+1, Wm = W+1).
    w_ref: (4, Km, Co) bf16 weights, tap t = 2*a + b for macro offset (a, b).
    b_ref: (1, Co) f32 bias.
    o_ref: (H, W, Co) bf16 output.
    """
    H, W, _ = o_ref.shape
    bias = b_ref[...]  # (1, Co) f32
    # Static per-row loop (H <= 8 for the demo sizes); the 2x2 macro taps are
    # contiguous slices of the macro rows -> no strided access, no reshapes.
    for y in range(H):
        acc = jnp.zeros(o_ref.shape[1:], jnp.float32)  # (W, Co) f32
        for t, (a, b) in enumerate(((0, 0), (0, 1), (1, 0), (1, 1))):
            lhs = m_ref[y + a, b:b + W, :]              # (W, Km) bf16
            acc = acc + jnp.dot(lhs, w_ref[t],
                                preferred_element_type=jnp.float32)
        acc = acc + bias
        o_ref[y] = jnp.where(acc > 0, acc, LEAKY_SLOPE * acc).astype(o_ref.dtype)


def _linear_sigmoid_kernel(x_ref, w_ref, b_ref, o_ref, acc_ref):
    """Linear(F->1) + Sigmoid with a lane-dense (N, 128) f32 accumulator.

    x_ref: (N, TF) bf16; w_ref: (1, TF) bf16; b_ref: (1, 1) f32;
    o_ref: (N, 1) f32; acc_ref: (N, 128) f32 VMEM scratch.
    """
    k = pl.program_id(0)

    @pl.when(k == 0)
    def _():
        acc_ref[...] = jnp.zeros_like(acc_ref)
        o_ref[...] = jnp.zeros_like(o_ref)

    prod = x_ref[...].astype(jnp.float32) * w_ref[...].astype(jnp.float32)  # (N, TF)
    part = acc_ref[...]
    for s in range(prod.shape[1] // 128):           # pure VPU adds, lane-dense
        part = part + prod[:, s * 128:(s + 1) * 128]
    acc_ref[...] = part

    @pl.when(k == pl.num_programs(0) - 1)
    def _():
        # Single cross-lane (XLU) reduce + bias + sigmoid only in the epilogue.
        z = jnp.sum(acc_ref[...], axis=-1, keepdims=True) + b_ref[...]
        o_ref[...] = 1.0 / (1.0 + jnp.exp(-z))


# ------------------------------ JAX glue ------------------------------------

def _space_to_depth_macro(x_nhwc):
    """pad=1 then 2x2 space-to-depth: (N,H,W,C) bf16 -> (N, H/2+1, W/2+1, 4C).

    macro[n, i, j, (r*2+c)*C + ci] = x_padded[n, 2i+r, 2j+c, ci].
    Single fused pad/copy in XLA (~1x activation bytes, vs ~16x for im2col).
    """
    N, H, W, C = x_nhwc.shape
    xp = jnp.pad(x_nhwc, ((0, 0), (1, 1), (1, 1), (0, 0)))
    Hm, Wm = (H + 2) // 2, (W + 2) // 2
    xm = xp.reshape(N, Hm, 2, Wm, 2, C)
    xm = jnp.transpose(xm, (0, 1, 3, 2, 4, 5)).reshape(N, Hm, Wm, 4 * C)
    return xm


def conv_lrelu_pallas(macro, w_taps, b):
    """Conv2d(k=4,s=2,p=1)+LeakyReLU on a macro input, gridded over batch.

    macro: (N, Hm, Wm, Km) bf16;  w_taps: (4, Km, Co) bf16;  b: (Co,) f32.
    Returns (N, Hm-1, Wm-1, Co) bf16.
    """
    N, Hm, Wm, Km = macro.shape
    assert w_taps.shape[0] == 4 and w_taps.shape[1] == Km
    Co = w_taps.shape[2]
    H, W = Hm - 1, Wm - 1

    return pl.pallas_call(
        _conv_macro_kernel,
        out_shape=jax.ShapeDtypeStruct((N, H, W, Co), jnp.bfloat16),
        grid=(N,),
        in_specs=[
            pl.BlockSpec((None, Hm, Wm, Km), lambda n: (n, 0, 0, 0)),
            pl.BlockSpec((4, Km, Co), lambda n: (0, 0, 0)),   # weights resident
            pl.BlockSpec((1, Co), lambda n: (0, 0)),           # bias resident
        ],
        out_specs=pl.BlockSpec((None, H, W, Co), lambda n: (n, 0, 0, 0)),
        compiler_params=pltpu.CompilerParams(
            dimension_semantics=("parallel",),
            vmem_limit_bytes=VMEM_LIMIT),
        cost_estimate=pl.CostEstimate(
            flops=2 * N * H * W * 4 * Km * Co,
            transcendentals=0,
            bytes_accessed=(N * Hm * Wm * Km * 2 + 4 * Km * Co * 2
                            + N * H * W * Co * 2 + Co * 4)),
    )(macro, w_taps, b.reshape(1, Co).astype(jnp.float32))


def linear_sigmoid_pallas(x_flat, w_row, b):
    """Linear(F->1) + Sigmoid.  x_flat: (N,F) bf16, w_row: (1,F) bf16, b: (1,1) f32."""
    N, F = x_flat.shape
    assert F % 128 == 0
    if F <= 8192:
        TF = F
    else:
        TF = 128
        for cand in (8192, 4096, 2048, 1024, 512, 256):
            if F % cand == 0:
                TF = cand
                break

    return pl.pallas_call(
        _linear_sigmoid_kernel,
        out_shape=jax.ShapeDtypeStruct((N, 1), jnp.float32),
        grid=(F // TF,),
        in_specs=[
            pl.BlockSpec((N, TF), lambda k: (0, k)),
            pl.BlockSpec((1, TF), lambda k: (0, k)),
            pl.BlockSpec((1, 1), lambda k: (0, 0)),
        ],
        out_specs=pl.BlockSpec((N, 1), lambda k: (0, 0)),   # resident output
        scratch_shapes=[pltpu.VMEM((N, 128), jnp.float32)],
        compiler_params=pltpu.CompilerParams(
            dimension_semantics=("arbitrary",),
            vmem_limit_bytes=VMEM_LIMIT),
        cost_estimate=pl.CostEstimate(
            flops=2 * N * F,
            transcendentals=N,
            bytes_accessed=N * F * 2 + F * 2 + N * 4 + 4),
    )(x_flat, w_row.astype(jnp.bfloat16), b)


# ----------------------------- Parameters -----------------------------------

def init_params(key, img_size):
    """Raw (PyTorch-layout-equivalent) parameters: HWIO conv weights, (F,1) linear."""
    ks = jax.random.split(key, 8)

    def conv_w(k, ci, co):
        fan_in = ci * 4 * 4
        return (jax.random.normal(k, (4, 4, ci, co), jnp.float32)
                / jnp.sqrt(float(fan_in)))

    feat = 256 * (img_size // 8) * (img_size // 8)
    return {
        "w1": conv_w(ks[0], 1, 64),
        "b1": 0.01 * jax.random.normal(ks[1], (64,), jnp.float32),
        "w2": conv_w(ks[2], 64, 128),
        "b2": 0.01 * jax.random.normal(ks[3], (128,), jnp.float32),
        "w3": conv_w(ks[4], 128, 256),
        "b3": 0.01 * jax.random.normal(ks[5], (256,), jnp.float32),
        "wf": (jax.random.normal(ks[6], (feat, 1), jnp.float32)
               / jnp.sqrt(float(feat))),
        "bf": 0.01 * jax.random.normal(ks[7], (1,), jnp.float32),
    }


def _prep_conv_w(w_hwio):
    """HWIO (4,4,Ci,Co) -> (4, 4*Ci, Co) bf16 macro-tap weights.

    Tap t = 2a+b holds rows in (r, c, ci) order so that
    out[y,x] = sum_{a,b} macro[y+a, x+b, :] @ W'[2a+b].
    """
    Ci, Co = w_hwio.shape[2], w_hwio.shape[3]
    w = w_hwio.reshape(2, 2, 2, 2, Ci, Co)           # [a, r, b, c, ci, co]
    w = jnp.transpose(w, (0, 2, 1, 3, 4, 5))          # [a, b, r, c, ci, co]
    return w.reshape(4, 4 * Ci, Co).astype(jnp.bfloat16)


def prepare_params(params, img_size):
    """One-time kernel-friendly repack: bf16 macro-tap conv weights, bf16 linear
    weight with rows permuted from (C,H,W)-flatten to (H,W,C)-flatten order."""
    s8 = img_size // 8
    wf = params["wf"].reshape(256, s8, s8)            # (C, H, W)
    wf_nhwc = jnp.transpose(wf, (1, 2, 0)).reshape(1, -1)
    return {
        "w1": _prep_conv_w(params["w1"]), "b1": params["b1"].astype(jnp.float32),
        "w2": _prep_conv_w(params["w2"]), "b2": params["b2"].astype(jnp.float32),
        "w3": _prep_conv_w(params["w3"]), "b3": params["b3"].astype(jnp.float32),
        "wf": wf_nhwc.astype(jnp.bfloat16),
        "bf": params["bf"].reshape(1, 1).astype(jnp.float32),
    }


# ----------------------------- Discriminator --------------------------------

def discriminator_forward(prep, x_nchw):
    # NCHW (PyTorch) -> NHWC (kernel layout); GEMM operands run in bf16.
    x = jnp.transpose(x_nchw, (0, 2, 3, 1)).astype(jnp.bfloat16)
    a = conv_lrelu_pallas(_space_to_depth_macro(x), prep["w1"], prep["b1"])
    # TODO(synk): nn.Dropout(0.3) is identity in eval mode; training-time
    # stochastic masking is intentionally not implemented here.
    a = conv_lrelu_pallas(_space_to_depth_macro(a), prep["w2"], prep["b2"])
    a = conv_lrelu_pallas(_space_to_depth_macro(a), prep["w3"], prep["b3"])
    n = a.shape[0]
    flat = a.reshape(n, -1)   # NHWC flatten; linear weight rows pre-permuted to match
    return linear_sigmoid_pallas(flat, prep["wf"], prep["bf"])


# Pure-JAX reference (matches PyTorch semantics) for a correctness check.
def reference_forward(params, x_nchw):
    def conv(x, w, b):
        y = lax.conv_general_dilated(
            x, w, window_strides=(2, 2), padding=((1, 1), (1, 1)),
            dimension_numbers=("NCHW", "HWIO", "NCHW"))
        y = y + b[None, :, None, None]
        return jnp.where(y > 0, y, LEAKY_SLOPE * y)

    x = conv(x_nchw.astype(jnp.float32), params["w1"], params["b1"])
    x = conv(x, params["w2"], params["b2"])
    x = conv(x, params["w3"], params["b3"])
    x = x.reshape(x.shape[0], -1)
    z = x @ params["wf"] + params["bf"]
    return jax.nn.sigmoid(z)


if __name__ == "__main__":
    img_size = 16
    key = jax.random.PRNGKey(0)
    k_param, k_x = jax.random.split(key)

    params = init_params(k_param, img_size)
    prep = prepare_params(params, img_size)
    x = jax.random.normal(k_x, (2, 1, img_size, img_size), jnp.float32)

    fwd = jax.jit(discriminator_forward)
    out = jax.block_until_ready(fwd(prep, x))
    ref = jax.block_until_ready(reference_forward(params, x))

    if out.shape != (2, 1):
        raise AssertionError(f"unexpected output shape {out.shape}")
    if not bool(jnp.allclose(out.astype(jnp.float32), ref, atol=2e-2, rtol=2e-2)):
        raise AssertionError(f"mismatch vs reference: {out} vs {ref}")

    print("KERNEL_OK")
</pallas_src>

<mosaic_0001>
module attributes {stable_mosaic.version = 11 : i64} {
  func.func @_conv_macro_kernel(%arg0: i32, %arg1: memref<1x9x9x4xbf16, #tpu.memory_space<vmem>>, %arg2: memref<4x4x64xbf16, #tpu.memory_space<vmem>>, %arg3: memref<1x64xf32, #tpu.memory_space<vmem>>, %arg4: memref<1x8x8x64xbf16, #tpu.memory_space<vmem>>) attributes {dimension_semantics = [#tpu.dimension_semantics<parallel>], iteration_bounds = array<i64: 2>, scalar_prefetch = 0 : i64, scratch_operands = 0 : i64, tpu.core_type = #tpu.core_type<tc>, window_params = [{transform_indices = @transform_0, window_bounds = array<i64: 1, 9, 9, 4>}, {pipeline_mode = #tpu.pipeline_mode<synchronous>, transform_indices = @transform_1, window_bounds = array<i64: 4, 4, 64>}, {pipeline_mode = #tpu.pipeline_mode<synchronous>, transform_indices = @transform_2, window_bounds = array<i64: 1, 64>}, {transform_indices = @transform_3, window_bounds = array<i64: 1, 8, 8, 64>}]} {
    %c0 = arith.constant 0 : index
    %c0_0 = arith.constant 0 : index
    %0 = vector.load %arg3[%c0, %c0_0] : memref<1x64xf32, #tpu.memory_space<vmem>>, vector<1x64xf32>
    %cst = arith.constant 0.000000e+00 : f32
    %1 = vector.broadcast %cst : f32 to vector<8x64xf32>
    %c0_1 = arith.constant 0 : index
    %c0_2 = arith.constant 0 : index
    %c0_3 = arith.constant 0 : index
    %c0_4 = arith.constant 0 : index
    %2 = vector.load %arg1[%c0_1, %c0_2, %c0_3, %c0_4] : memref<1x9x9x4xbf16, #tpu.memory_space<vmem>>, vector<1x1x8x4xbf16>
    %3 = vector.shape_cast %2 : vector<1x1x8x4xbf16> to vector<8x4xbf16>
    %c0_5 = arith.constant 0 : index
    %c0_6 = arith.constant 0 : index
    %c0_7 = arith.constant 0 : index
    %4 = vector.load %arg2[%c0_5, %c0_6, %c0_7] : memref<4x4x64xbf16, #tpu.memory_space<vmem>>, vector<1x4x64xbf16>
    %5 = vector.shape_cast %4 : vector<1x4x64xbf16> to vector<4x64xbf16>
    %cst_8 = arith.constant dense<0.000000e+00> : vector<8x64xf32>
    %6 = tpu.matmul %3, %5, %cst_8 {dimension_numbers = #tpu.dot_dimension_numbers<[1], [0], [0], [1], [0, 0, 1, 1], [], []>} : vector<8x4xbf16>, vector<4x64xbf16>, vector<8x64xf32> -> vector<8x64xf32>
    %7 = arith.addf %1, %6 : vector<8x64xf32>
    %c0_9 = arith.constant 0 : index
    %c0_10 = arith.constant 0 : index
    %c1 = arith.constant 1 : index
    %c0_11 = arith.constant 0 : index
    %8 = vector.load %arg1[%c0_9, %c0_10, %c1, %c0_11] : memref<1x9x9x4xbf16, #tpu.memory_space<vmem>>, vector<1x1x8x4xbf16>
    %9 = vector.shape_cast %8 : vector<1x1x8x4xbf16> to vector<8x4xbf16>
    %c1_12 = arith.constant 1 : index
    %c0_13 = arith.constant 0 : index
    %c0_14 = arith.constant 0 : index
    %10 = vector.load %arg2[%c1_12, %c0_13, %c0_14] : memref<4x4x64xbf16, #tpu.memory_space<vmem>>, vector<1x4x64xbf16>
    %11 = vector.shape_cast %10 : vector<1x4x64xbf16> to vector<4x64xbf16>
    %cst_15 = arith.constant dense<0.000000e+00> : vector<8x64xf32>
    %12 = tpu.matmul %9, %11, %cst_15 {dimension_numbers = #tpu.dot_dimension_numbers<[1], [0], [0], [1], [0, 0, 1, 1], [], []>} : vector<8x4xbf16>, vector<4x64xbf16>, vector<8x64xf32> -> vector<8x64xf32>
    %13 = arith.addf %7, %12 : vector<8x64xf32>
    %c0_16 = arith.constant 0 : index
    %c1_17 = arith.constant 1 : index
    %c0_18 = arith.constant 0 : index
    %c0_19 = arith.constant 0 : index
    %14 = vector.load %arg1[%c0_16, %c1_17, %c0_18, %c0_19] : memref<1x9x9x4xbf16, #tpu.memory_space<vmem>>, vector<1x1x8x4xbf16>
    %15 = vector.shape_cast %14 : vector<1x1x8x4xbf16> to vector<8x4xbf16>
    %c2 = arith.constant 2 : index
    %c0_20 = arith.constant 0 : index
    %c0_21 = arith.constant 0 : index
    %16 = vector.load %arg2[%c2, %c0_20, %c0_21] : memref<4x4x64xbf16, #tpu.memory_space<vmem>>, vector<1x4x64xbf16>
    %17 = vector.shape_cast %16 : vector<1x4x64xbf16> to vector<4x64xbf16>
    %cst_22 = arith.constant dense<0.000000e+00> : vector<8x64xf32>
    %18 = tpu.matmul %15, %17, %cst_22 {dimension_numbers = #tpu.dot_dimension_numbers<[1], [0], [0], [1], [0, 0, 1, 1], [], []>} : vector<8x4xbf16>, vector<4x64xbf16>, vector<8x64xf32> -> vector<8x64xf32>
    %19 = arith.addf %13, %18 : vector<8x64xf32>
    %c0_23 = arith.constant 0 : index
    %c1_24 = arith.constant 1 : index
    %c1_25 = arith.constant 1 : index
    %c0_26 = arith.constant 0 : index
    %20 = vector.load %arg1[%c0_23, %c1_24, %c1_25, %c0_26] : memref<1x9x9x4xbf16, #tpu.memory_space<vmem>>, vector<1x1x8x4xbf16>
    %21 = vector.shape_cast %20 : vector<1x1x8x4xbf16> to vector<8x4xbf16>
    %c3 = arith.constant 3 : index
    %c0_27 = arith.constant 0 : index
    %c0_28 = arith.constant 0 : index
    %22 = vector.load %arg2[%c3, %c0_27, %c0_28] : memref<4x4x64xbf16, #tpu.memory_space<vmem>>, vector<1x4x64xbf16>
    %23 = vector.shape_cast %22 : vector<1x4x64xbf16> to vector<4x64xbf16>
    %cst_29 = arith.constant dense<0.000000e+00> : vector<8x64xf32>
    %24 = tpu.matmul %21, %23, %cst_29 {dimension_numbers = #tpu.dot_dimension_numbers<[1], [0], [0], [1], [0, 0, 1, 1], [], []>} : vector<8x4xbf16>, vector<4x64xbf16>, vector<8x64xf32> -> vector<8x64xf32>
    %25 = arith.addf %19, %24 : vector<8x64xf32>
    %26 = vector.broadcast %0 : vector<1x64xf32> to vector<8x64xf32>
    %27 = arith.addf %25, %26 : vector<8x64xf32>
    %cst_30 = arith.constant 0.000000e+00 : f32
    %28 = vector.broadcast %cst_30 : f32 to vector<8x64xf32>
    %29 = arith.cmpf ogt, %27, %28 : vector<8x64xf32>
    %cst_31 = arith.constant 2.000000e-01 : f32
    %30 = vector.broadcast %cst_31 : f32 to vector<8x64xf32>
    %31 = arith.mulf %30, %27 : vector<8x64xf32>
    %32 = arith.select %29, %27, %31 : vector<8x64xi1>, vector<8x64xf32>
    %33 = arith.truncf %32 : vector<8x64xf32> to vector<8x64xbf16>
    %c0_32 = arith.constant 0 : index
    %c0_33 = arith.constant 0 : index
    %c0_34 = arith.constant 0 : index
    %c0_35 = arith.constant 0 : index
    %34 = vector.load %arg4[%c0_32, %c0_33, %c0_34, %c0_35] : memref<1x8x8x64xbf16, #tpu.memory_space<vmem>>, vector<1x1x8x64xbf16>
    %35 = vector.shape_cast %34 : vector<1x1x8x64xbf16> to vector<8x64xbf16>
    %36 = vector.shape_cast %33 : vector<8x64xbf16> to vector<1x1x8x64xbf16>
    tpu.vector_store %arg4[%c0_32, %c0_33, %c0_34, %c0_35], %36 {strides = array<i32>} : memref<1x8x8x64xbf16, #tpu.memory_space<vmem>>, vector<1x1x8x64xbf16>,
    %cst_36 = arith.constant 0.000000e+00 : f32
    %37 = vector.broadcast %cst_36 : f32 to vector<8x64xf32>
    %c0_37 = arith.constant 0 : index
    %c1_38 = arith.constant 1 : index
    %c0_39 = arith.constant 0 : index
    %c0_40 = arith.constant 0 : index
    %38 = vector.load %arg1[%c0_37, %c1_38, %c0_39, %c0_40] : memref<1x9x9x4xbf16, #tpu.memory_space<vmem>>, vector<1x1x8x4xbf16>
    %39 = vector.shape_cast %38 : vector<1x1x8x4xbf16> to vector<8x4xbf16>
    %c0_41 = arith.constant 0 : index
    %c0_42 = arith.constant 0 : index
    %c0_43 = arith.constant 0 : index
    %40 = vector.load %arg2[%c0_41, %c0_42, %c0_43] : memref<4x4x64xbf16, #tpu.memory_space<vmem>>, vector<1x4x64xbf16>
    %41 = vector.shape_cast %40 : vector<1x4x64xbf16> to vector<4x64xbf16>
    %cst_44 = arith.constant dense<0.000000e+00> : vector<8x64xf32>
    %42 = tpu.matmul %39, %41, %cst_44 {dimension_numbers = #tpu.dot_dimension_numbers<[1], [0], [0], [1], [0, 0, 1, 1], [], []>} : vector<8x4xbf16>, vector<4x64xbf16>, vector<8x64xf32> -> vector<8x64xf32>
    %43 = arith.addf %37, %42 : vector<8x64xf32>
    %c0_45 = arith.constant 0 : index
    %c1_46 = arith.constant 1 : index
    %c1_47 = arith.constant 1 : index
    %c0_48 = arith.constant 0 : index
    %44 = vector.load %arg1[%c0_45, %c1_46, %c1_47, %c0_48] : memref<1x9x9x4xbf16, #tpu.memory_space<vmem>>, vector<1x1x8x4xbf16>
    %45 = vector.shape_cast %44 : vector<1x1x8x4xbf16> to vector<8x4xbf16>
    %c1_49 = arith.constant 1 : index
    %c0_50 = arith.constant 0 : index
    %c0_51 = arith.constant 0 : index
    %46 = vector.load %arg2[%c1_49, %c0_50, %c0_51] : memref<4x4x64xbf16, #tpu.memory_space<vmem>>, vector<1x4x64xbf16>
    %47 = vector.shape_cast %46 : vector<1x4x64xbf16> to vector<4x64xbf16>
    %cst_52 = arith.constant dense<0.000000e+00> : vector<8x64xf32>
    %48 = tpu.matmul %45, %47, %cst_52 {dimension_numbers = #tpu.dot_dimension_numbers<[1], [0], [0], [1], [0, 0, 1, 1], [], []>} : vector<8x4xbf16>, vector<4x64xbf16>, vector<8x64xf32> -> vector<8x64xf32>
    %49 = arith.addf %43, %48 : vector<8x64xf32>
    %c0_53 = arith.constant 0 : index
    %c2_54 = arith.constant 2 : index
    %c0_55 = arith.constant 0 : index
    %c0_56 = arith.constant 0 : index
    %50 = vector.load %arg1[%c0_53, %c2_54, %c0_55, %c0_56] : memref<1x9x9x4xbf16, #tpu.memory_space<vmem>>, vector<1x1x8x4xbf16>
    %51 = vector.shape_cast %50 : vector<1x1x8x4xbf16> to vector<8x4xbf16>
    %c2_57 = arith.constant 2 : index
    %c0_58 = arith.constant 0 : index
    %c0_59 = arith.constant 0 : index
    %52 = vector.load %arg2[%c2_57, %c0_58, %c0_59] : memref<4x4x64xbf16, #tpu.memory_space<vmem>>, vector<1x4x64xbf16>
    %53 = vector.shape_cast %52 : vector<1x4x64xbf16> to vector<4x64xbf16>
    %cst_60 = arith.constant dense<0.000000e+00> : vector<8x64xf32>
    %54 = tpu.matmul %51, %53, %cst_60 {dimension_numbers = #tpu.dot_dimension_numbers<[1], [0], [0], [1], [0, 0, 1, 1], [], []>} : vector<8x4xbf16>, vector<4x64xbf16>, vector<8x64xf32> -> vector<8x64xf32>
    %55 = arith.addf %49, %54 : vector<8x64xf32>
    %c0_61 = arith.constant 0 : index
    %c2_62 = arith.constant 2 : index
    %c1_63 = arith.constant 1 : index
    %c0_64 = arith.constant 0 : index
    %56 = vector.load %arg1[%c0_61, %c2_62, %c1_63, %c0_64] : memref<1x9x9x4xbf16, #tpu.memory_space<vmem>>, vector<1x1x8x4xbf16>
    %57 = vector.shape_cast %56 : vector<1x1x8x4xbf16> to vector<8x4xbf16>
    %c3_65 = arith.constant 3 : index
    %c0_66 = arith.constant 0 : index
    %c0_67 = arith.constant 0 : index
    %58 = vector.load %arg2[%c3_65, %c0_66, %c0_67] : memref<4x4x64xbf16, #tpu.memory_space<vmem>>, vector<1x4x64xbf16>
    %59 = vector.shape_cast %58 : vector<1x4x64xbf16> to vector<4x64xbf16>
    %cst_68 = arith.constant dense<0.000000e+00> : vector<8x64xf32>
    %60 = tpu.matmul %57, %59, %cst_68 {dimension_numbers = #tpu.dot_dimension_numbers<[1], [0], [0], [1], [0, 0, 1, 1], [], []>} : vector<8x4xbf16>, vector<4x64xbf16>, vector<8x64xf32> -> vector<8x64xf32>
    %61 = arith.addf %55, %60 : vector<8x64xf32>
    %62 = vector.broadcast %0 : vector<1x64xf32> to vector<8x64xf32>
    %63 = arith.addf %61, %62 : vector<8x64xf32>
    %cst_69 = arith.constant 0.000000e+00 : f32
    %64 = vector.broadcast %cst_69 : f32 to vector<8x64xf32>
    %65 = arith.cmpf ogt, %63, %64 : vector<8x64xf32>
    %cst_70 = arith.constant 2.000000e-01 : f32
    %66 = vector.broadcast %cst_70 : f32 to vector<8x64xf32>
    %67 = arith.mulf %66, %63 : vector<8x64xf32>
    %68 = arith.select %65, %63, %67 : vector<8x64xi1>, vector<8x64xf32>
    %69 = arith.truncf %68 : vector<8x64xf32> to vector<8x64xbf16>
    %c0_71 = arith.constant 0 : index
    %c1_72 = arith.constant 1 : index
    %c0_73 = arith.constant 0 : index
    %c0_74 = arith.constant 0 : index
    %70 = vector.load %arg4[%c0_71, %c1_72, %c0_73, %c0_74] : memref<1x8x8x64xbf16, #tpu.memory_space<vmem>>, vector<1x1x8x64xbf16>
    %71 = vector.shape_cast %70 : vector<1x1x8x64xbf16> to vector<8x64xbf16>
    %72 = vector.shape_cast %69 : vector<8x64xbf16> to vector<1x1x8x64xbf16>
    tpu.vector_store %arg4[%c0_71, %c1_72, %c0_73, %c0_74], %72 {strides = array<i32>} : memref<1x8x8x64xbf16, #tpu.memory_space<vmem>>, vector<1x1x8x64xbf16>,
    %cst_75 = arith.constant 0.000000e+00 : f32
    %73 = vector.broadcast %cst_75 : f32 to vector<8x64xf32>
    %c0_76 = arith.constant 0 : index
    %c2_77 = arith.constant 2 : index
    %c0_78 = arith.constant 0 : index
    %c0_79 = arith.constant 0 : index
    %74 = vector.load %arg1[%c0_76, %c2_77, %c0_78, %c0_79] : memref<1x9x9x4xbf16, #tpu.memory_space<vmem>>, vector<1x1x8x4xbf16>
    %75 = vector.shape_cast %74 : vector<1x1x8x4xbf16> to vector<8x4xbf16>
    %c0_80 = arith.constant 0 : index
    %c0_81 = arith.constant 0 : index
    %c0_82 = arith.constant 0 : index
    %76 = vector.load %arg2[%c0_80, %c0_81, %c0_82] : memref<4x4x64xbf16, #tpu.memory_space<vmem>>, vector<1x4x64xbf16>
    %77 = vector.shape_cast %76 : vector<1x4x64xbf16> to vector<4x64xbf16>
    %cst_83 = arith.constant dense<0.000000e+00> : vector<8x64xf32>
    %78 = tpu.matmul %75, %77, %cst_83 {dimension_numbers = #tpu.dot_dimension_numbers<[1], [0], [0], [1], [0, 0, 1, 1], [], []>} : vector<8x4xbf16>, vector<4x64xbf16>, vector<8x64xf32> -> vector<8x64xf32>
    %79 = arith.addf %73, %78 : vector<8x64xf32>
    %c0_84 = arith.constant 0 : index
    %c2_85 = arith.constant 2 : index
    %c1_86 = arith.constant 1 : index
    %c0_87 = arith.constant 0 : index
    %80 = vector.load %arg1[%c0_84, %c2_85, %c1_86, %c0_87] : memref<1x9x9x4xbf16, #tpu.memory_space<vmem>>, vector<1x1x8x4xbf16>
    %81 = vector.shape_cast %80 : vector<1x1x8x4xbf16> to vector<8x4xbf16>
    %c1_88 = arith.constant 1 : index
    %c0_89 = arith.constant 0 : index
    %c0_90 = arith.constant 0 : index
    %82 = vector.load %arg2[%c1_88, %c0_89, %c0_90] : memref<4x4x64xbf16, #tpu.memory_space<vmem>>, vector<1x4x64xbf16>
    %83 = vector.shape_cast %82 : vector<1x4x64xbf16> to vector<4x64xbf16>
    %cst_91 = arith.constant dense<0.000000e+00> : vector<8x64xf32>
    %84 = tpu.matmul %81, %83, %cst_91 {dimension_numbers = #tpu.dot_dimension_numbers<[1], [0], [0], [1], [0, 0, 1, 1], [], []>} : vector<8x4xbf16>, vector<4x64xbf16>, vector<8x64xf32> -> vector<8x64xf32>
    %85 = arith.addf %79, %84 : vector<8x64xf32>
    %c0_92 = arith.constant 0 : index
    %c3_93 = arith.constant 3 : index
    %c0_94 = arith.constant 0 : index
    %c0_95 = arith.constant 0 : index
    %86 = vector.load %arg1[%c0_92, %c3_93, %c0_94, %c0_95] : memref<1x9x9x4xbf16, #tpu.memory_space<vmem>>, vector<1x1x8x4xbf16>
    %87 = vector.shape_cast %86 : vector<1x1x8x4xbf16> to vector<8x4xbf16>
    %c2_96 = arith.constant 2 : index
    %c0_97 = arith.constant 0 : index
    %c0_98 = arith.constant 0 : index
    %88 = vector.load %arg2[%c2_96, %c0_97, %c0_98] : memref<4x4x64xbf16, #tpu.memory_space<vmem>>, vector<1x4x64xbf16>
    %89 = vector.shape_cast %88 : vector<1x4x64xbf16> to vector<4x64xbf16>
    %cst_99 = arith.constant dense<0.000000e+00> : vector<8x64xf32>
    %90 = tpu.matmul %87, %89, %cst_99 {dimension_numbers = #tpu.dot_dimension_numbers<[1], [0], [0], [1], [0, 0, 1, 1], [], []>} : vector<8x4xbf16>, vector<4x64xbf16>, vector<8x64xf32> -> vector<8x64xf32>
    %91 = arith.addf %85, %90 : vector<8x64xf32>
    %c0_100 = arith.constant 0 : index
    %c3_101 = arith.constant 3 : index
    %c1_102 = arith.constant 1 : index
    %c0_103 = arith.constant 0 : index
    %92 = vector.load %arg1[%c0_100, %c3_101, %c1_102, %c0_103] : memref<1x9x9x4xbf16, #tpu.memory_space<vmem>>, vector<1x1x8x4xbf16>
    %93 = vector.shape_cast %92 : vector<1x1x8x4xbf16> to vector<8x4xbf16>
    %c3_104 = arith.constant 3 : index
    %c0_105 = arith.constant 0 : index
    %c0_106 = arith.constant 0 : index
    %94 = vector.load %arg2[%c3_104, %c0_105, %c0_106] : memref<4x4x64xbf16, #tpu.memory_space<vmem>>, vector<1x4x64xbf16>
    %95 = vector.shape_cast %94 : vector<1x4x64xbf16> to vector<4x64xbf16>
    %cst_107 = arith.constant dense<0.000000e+00> : vector<8x64xf32>
    %96 = tpu.matmul %93, %95, %cst_107 {dimension_numbers = #tpu.dot_dimension_numbers<[1], [0], [0], [1], [0, 0, 1, 1], [], []>} : vector<8x4xbf16>, vector<4x64xbf16>, vector<8x64xf32> -> vector<8x64xf32>
    %97 = arith.addf %91, %96 : vector<8x64xf32>
    %98 = vector.broadcast %0 : vector<1x64xf32> to vector<8x64xf32>
    %99 = arith.addf %97, %98 : vector<8x64xf32>
    %cst_108 = arith.constant 0.000000e+00 : f32
    %100 = vector.broadcast %cst_108 : f32 to vector<8x64xf32>
    %101 = arith.cmpf ogt, %99, %100 : vector<8x64xf32>
    %cst_109 = arith.constant 2.000000e-01 : f32
    %102 = vector.broadcast %cst_109 : f32 to vector<8x64xf32>
    %103 = arith.mulf %102, %99 : vector<8x64xf32>
    %104 = arith.select %101, %99, %103 : vector<8x64xi1>, vector<8x64xf32>
    %105 = arith.truncf %104 : vector<8x64xf32> to vector<8x64xbf16>
    %c0_110 = arith.constant 0 : index
    %c2_111 = arith.constant 2 : index
    %c0_112 = arith.constant 0 : index
    %c0_113 = arith.constant 0 : index
    %106 = vector.load %arg4[%c0_110, %c2_111, %c0_112, %c0_113] : memref<1x8x8x64xbf16, #tpu.memory_space<vmem>>, vector<1x1x8x64xbf16>
    %107 = vector.shape_cast %106 : vector<1x1x8x64xbf16> to vector<8x64xbf16>
    %108 = vector.shape_cast %105 : vector<8x64xbf16> to vector<1x1x8x64xbf16>
    tpu.vector_store %arg4[%c0_110, %c2_111, %c0_112, %c0_113], %108 {strides = array<i32>} : memref<1x8x8x64xbf16, #tpu.memory_space<vmem>>, vector<1x1x8x64xbf16>,
    %cst_114 = arith.constant 0.000000e+00 : f32
    %109 = vector.broadcast %cst_114 : f32 to vector<8x64xf32>
    %c0_115 = arith.constant 0 : index
    %c3_116 = arith.constant 3 : index
    %c0_117 = arith.constant 0 : index
    %c0_118 = arith.constant 0 : index
    %110 = vector.load %arg1[%c0_115, %c3_116, %c0_117, %c0_118] : memref<1x9x9x4xbf16, #tpu.memory_space<vmem>>, vector<1x1x8x4xbf16>
    %111 = vector.shape_cast %110 : vector<1x1x8x4xbf16> to vector<8x4xbf16>
    %c0_119 = arith.constant 0 : index
    %c0_120 = arith.constant 0 : index
    %c0_121 = arith.constant 0 : index
    %112 = vector.load %arg2[%c0_119, %c0_120, %c0_121] : memref<4x4x64xbf16, #tpu.memory_space<vmem>>, vector<1x4x64xbf16>
    %113 = vector.shape_cast %112 : vector<1x4x64xbf16> to vector<4x64xbf16>
    %cst_122 = arith.constant dense<0.000000e+00> : vector<8x64xf32>
    %114 = tpu.matmul %111, %113, %cst_122 {dimension_numbers = #tpu.dot_dimension_numbers<[1], [0], [0], [1], [0, 0, 1, 1], [], []>} : vector<8x4xbf16>, vector<4x64xbf16>, vector<8x64xf32> -> vector<8x64xf32>
    %115 = arith.addf %109, %114 : vector<8x64xf32>
    %c0_123 = arith.constant 0 : index
    %c3_124 = arith.constant 3 : index
    %c1_125 = arith.constant 1 : index
    %c0_126 = arith.constant 0 : index
    %116 = vector.load %arg1[%c0_123, %c3_124, %c1_125, %c0_126] : memref<1x9x9x4xbf16, #tpu.memory_space<vmem>>, vector<1x1x8x4xbf16>
    %117 = vector.shape_cast %116 : vector<1x1x8x4xbf16> to vector<8x4xbf16>
    %c1_127 = arith.constant 1 : index
    %c0_128 = arith.constant 0 : index
    %c0_129 = arith.constant 0 : index
    %118 = vector.load %arg2[%c1_127, %c0_128, %c0_129] : memref<4x4x64xbf16, #tpu.memory_space<vmem>>, vector<1x4x64xbf16>
    %119 = vector.shape_cast %118 : vector<1x4x64xbf16> to vector<4x64xbf16>
    %cst_130 = arith.constant dense<0.000000e+00> : vector<8x64xf32>
    %120 = tpu.matmul %117, %119, %cst_130 {dimension_numbers = #tpu.dot_dimension_numbers<[1], [0], [0], [1], [0, 0, 1, 1], [], []>} : vector<8x4xbf16>, vector<4x64xbf16>, vector<8x64xf32> -> vector<8x64xf32>
    %121 = arith.addf %115, %120 : vector<8x64xf32>
    %c0_131 = arith.constant 0 : index
    %c4 = arith.constant 4 : index
    %c0_132 = arith.constant 0 : index
    %c0_133 = arith.constant 0 : index
    %122 = vector.load %arg1[%c0_131, %c4, %c0_132, %c0_133] : memref<1x9x9x4xbf16, #tpu.memory_space<vmem>>, vector<1x1x8x4xbf16>
    %123 = vector.shape_cast %122 : vector<1x1x8x4xbf16> to vector<8x4xbf16>
    %c2_134 = arith.constant 2 : index
    %c0_135 = arith.constant 0 : index
    %c0_136 = arith.constant 0 : index
    %124 = vector.load %arg2[%c2_134, %c0_135, %c0_136] : memref<4x4x64xbf16, #tpu.memory_space<vmem>>, vector<1x4x64xbf16>
    %125 = vector.shape_cast %124 : vector<1x4x64xbf16> to vector<4x64xbf16>
    %cst_137 = arith.constant dense<0.000000e+00> : vector<8x64xf32>
    %126 = tpu.matmul %123, %125, %cst_137 {dimension_numbers = #tpu.dot_dimension_numbers<[1], [0], [0], [1], [0, 0, 1, 1], [], []>} : vector<8x4xbf16>, vector<4x64xbf16>, vector<8x64xf32> -> vector<8x64xf32>
    %127 = arith.addf %121, %126 : vector<8x64xf32>
    %c0_138 = arith.constant 0 : index
    %c4_139 = arith.constant 4 : index
    %c1_140 = arith.constant 1 : index
    %c0_141 = arith.constant 0 : index
    %128 = vector.load %arg1[%c0_138, %c4_139, %c1_140, %c0_141] : memref<1x9x9x4xbf16, #tpu.memory_space<vmem>>, vector<1x1x8x4xbf16>
    %129 = vector.shape_cast %128 : vector<1x1x8x4xbf16> to vector<8x4xbf16>
    %c3_142 = arith.constant 3 : index
    %c0_143 = arith.constant 0 : index
    %c0_144 = arith.constant 0 : index
    %130 = vector.load %arg2[%c3_142, %c0_143, %c0_144] : memref<4x4x64xbf16, #tpu.memory_space<vmem>>, vector<1x4x64xbf16>
    %131 = vector.shape_cast %130 : vector<1x4x64xbf16> to vector<4x64xbf16>
    %cst_145 = arith.constant dense<0.000000e+00> : vector<8x64xf32>
    %132 = tpu.matmul %129, %131, %cst_145 {dimension_numbers = #tpu.dot_dimension_numbers<[1], [0], [0], [1], [0, 0, 1, 1], [], []>} : vector<8x4xbf16>, vector<4x64xbf16>, vector<8x64xf32> -> vector<8x64xf32>
    %133 = arith.addf %127, %132 : vector<8x64xf32>
    %134 = vector.broadcast %0 : vector<1x64xf32> to vector<8x64xf32>
    %135 = arith.addf %133, %134 : vector<8x64xf32>
    %cst_146 = arith.constant 0.000000e+00 : f32
    %136 = vector.broadcast %cst_146 : f32 to vector<8x64xf32>
    %137 = arith.cmpf ogt, %135, %136 : vector<8x64xf32>
    %cst_147 = arith.constant 2.000000e-01 : f32
    %138 = vector.broadcast %cst_147 : f32 to vector<8x64xf32>
    %139 = arith.mulf %138, %135 : vector<8x64xf32>
    %140 = arith.select %137, %135, %139 : vector<8x64xi1>, vector<8x64xf32>
    %141 = arith.truncf %140 : vector<8x64xf32> to vector<8x64xbf16>
    %c0_148 = arith.constant 0 : index
    %c3_149 = arith.constant 3 : index
    %c0_150 = arith.constant 0 : index
    %c0_151 = arith.constant 0 : index
    %142 = vector.load %arg4[%c0_148, %c3_149, %c0_150, %c0_151] : memref<1x8x8x64xbf16, #tpu.memory_space<vmem>>, vector<1x1x8x64xbf16>
    %143 = vector.shape_cast %142 : vector<1x1x8x64xbf16> to vector<8x64xbf16>
    %144 = vector.shape_cast %141 : vector<8x64xbf16> to vector<1x1x8x64xbf16>
    tpu.vector_store %arg4[%c0_148, %c3_149, %c0_150, %c0_151], %144 {strides = array<i32>} : memref<1x8x8x64xbf16, #tpu.memory_space<vmem>>, vector<1x1x8x64xbf16>,
    %cst_152 = arith.constant 0.000000e+00 : f32
    %145 = vector.broadcast %cst_152 : f32 to vector<8x64xf32>
    %c0_153 = arith.constant 0 : index
    %c4_154 = arith.constant 4 : index
    %c0_155 = arith.constant 0 : index
    %c0_156 = arith.constant 0 : index
    %146 = vector.load %arg1[%c0_153, %c4_154, %c0_155, %c0_156] : memref<1x9x9x4xbf16, #tpu.memory_space<vmem>>, vector<1x1x8x4xbf16>
    %147 = vector.shape_cast %146 : vector<1x1x8x4xbf16> to vector<8x4xbf16>
    %c0_157 = arith.constant 0 : index
    %c0_158 = arith.constant 0 : index
    %c0_159 = arith.constant 0 : index
    %148 = vector.load %arg2[%c0_157, %c0_158, %c0_159] : memref<4x4x64xbf16, #tpu.memory_space<vmem>>, vector<1x4x64xbf16>
    %149 = vector.shape_cast %148 : vector<1x4x64xbf16> to vector<4x64xbf16>
    %cst_160 = arith.constant dense<0.000000e+00> : vector<8x64xf32>
    %150 = tpu.matmul %147, %149, %cst_160 {dimension_numbers = #tpu.dot_dimension_numbers<[1], [0], [0], [1], [0, 0, 1, 1], [], []>} : vector<8x4xbf16>, vector<4x64xbf16>, vector<8x64xf32> -> vector<8x64xf32>
    %151 = arith.addf %145, %150 : vector<8x64xf32>
    %c0_161 = arith.constant 0 : index
    %c4_162 = arith.constant 4 : index
    %c1_163 = arith.constant 1 : index
    %c0_164 = arith.constant 0 : index
    %152 = vector.load %arg1[%c0_161, %c4_162, %c1_163, %c0_164] : memref<1x9x9x4xbf16, #tpu.memory_space<vmem>>, vector<1x1x8x4xbf16>
    %153 = vector.shape_cast %152 : vector<1x1x8x4xbf16> to vector<8x4xbf16>
    %c1_165 = arith.constant 1 : index
    %c0_166 = arith.constant 0 : index
    %c0_167 = arith.constant 0 : index
    %154 = vector.load %arg2[%c1_165, %c0_166, %c0_167] : memref<4x4x64xbf16, #tpu.memory_space<vmem>>, vector<1x4x64xbf16>
    %155 = vector.shape_cast %154 : vector<1x4x64xbf16> to vector<4x64xbf16>
    %cst_168 = arith.constant dense<0.000000e+00> : vector<8x64xf32>
    %156 = tpu.matmul %153, %155, %cst_168 {dimension_numbers = #tpu.dot_dimension_numbers<[1], [0], [0], [1], [0, 0, 1, 1], [], []>} : vector<8x4xbf16>, vector<4x64xbf16>, vector<8x64xf32> -> vector<8x64xf32>
    %157 = arith.addf %151, %156 : vector<8x64xf32>
    %c0_169 = arith.constant 0 : index
    %c5 = arith.constant 5 : index
    %c0_170 = arith.constant 0 : index
    %c0_171 = arith.constant 0 : index
    %158 = vector.load %arg1[%c0_169, %c5, %c0_170, %c0_171] : memref<1x9x9x4xbf16, #tpu.memory_space<vmem>>, vector<1x1x8x4xbf16>
    %159 = vector.shape_cast %158 : vector<1x1x8x4xbf16> to vector<8x4xbf16>
    %c2_172 = arith.constant 2 : index
    %c0_173 = arith.constant 0 : index
    %c0_174 = arith.constant 0 : index
    %160 = vector.load %arg2[%c2_172, %c0_173, %c0_174] : memref<4x4x64xbf16, #tpu.memory_space<vmem>>, vector<1x4x64xbf16>
    %161 = vector.shape_cast %160 : vector<1x4x64xbf16> to vector<4x64xbf16>
    %cst_175 = arith.constant dense<0.000000e+00> : vector<8x64xf32>
    %162 = tpu.matmul %159, %161, %cst_175 {dimension_numbers = #tpu.dot_dimension_numbers<[1], [0], [0], [1], [0, 0, 1, 1], [], []>} : vector<8x4xbf16>, vector<4x64xbf16>, vector<8x64xf32> -> vector<8x64xf32>
    %163 = arith.addf %157, %162 : vector<8x64xf32>
    %c0_176 = arith.constant 0 : index
    %c5_177 = arith.constant 5 : index
    %c1_178 = arith.constant 1 : index
    %c0_179 = arith.constant 0 : index
    %164 = vector.load %arg1[%c0_176, %c5_177, %c1_178, %c0_179] : memref<1x9x9x4xbf16, #tpu.memory_space<vmem>>, vector<1x1x8x4xbf16>
    %165 = vector.shape_cast %164 : vector<1x1x8x4xbf16> to vector<8x4xbf16>
    %c3_180 = arith.constant 3 : index
    %c0_181 = arith.constant 0 : index
    %c0_182 = arith.constant 0 : index
    %166 = vector.load %arg2[%c3_180, %c0_181, %c0_182] : memref<4x4x64xbf16, #tpu.memory_space<vmem>>, vector<1x4x64xbf16>
    %167 = vector.shape_cast %166 : vector<1x4x64xbf16> to vector<4x64xbf16>
    %cst_183 = arith.constant dense<0.000000e+00> : vector<8x64xf32>
    %168 = tpu.matmul %165, %167, %cst_183 {dimension_numbers = #tpu.dot_dimension_numbers<[1], [0], [0], [1], [0, 0, 1, 1], [], []>} : vector<8x4xbf16>, vector<4x64xbf16>, vector<8x64xf32> -> vector<8x64xf32>
    %169 = arith.addf %163, %168 : vector<8x64xf32>
    %170 = vector.broadcast %0 : vector<1x64xf32> to vector<8x64xf32>
    %171 = arith.addf %169, %170 : vector<8x64xf32>
    %cst_184 = arith.constant 0.000000e+00 : f32
    %172 = vector.broadcast %cst_184 : f32 to vector<8x64xf32>
    %173 = arith.cmpf ogt, %171, %172 : vector<8x64xf32>
    %cst_185 = arith.constant 2.000000e-01 : f32
    %174 = vector.broadcast %cst_185 : f32 to vector<8x64xf32>
    %175 = arith.mulf %174, %171 : vector<8x64xf32>
    %176 = arith.select %173, %171, %175 : vector<8x64xi1>, vector<8x64xf32>
    %177 = arith.truncf %176 : vector<8x64xf32> to vector<8x64xbf16>
    %c0_186 = arith.constant 0 : index
    %c4_187 = arith.constant 4 : index
    %c0_188 = arith.constant 0 : index
    %c0_189 = arith.constant 0 : index
    %178 = vector.load %arg4[%c0_186, %c4_187, %c0_188, %c0_189] : memref<1x8x8x64xbf16, #tpu.memory_space<vmem>>, vector<1x1x8x64xbf16>
    %179 = vector.shape_cast %178 : vector<1x1x8x64xbf16> to vector<8x64xbf16>
    %180 = vector.shape_cast %177 : vector<8x64xbf16> to vector<1x1x8x64xbf16>
    tpu.vector_store %arg4[%c0_186, %c4_187, %c0_188, %c0_189], %180 {strides = array<i32>} : memref<1x8x8x64xbf16, #tpu.memory_space<vmem>>, vector<1x1x8x64xbf16>,
    %cst_190 = arith.constant 0.000000e+00 : f32
    %181 = vector.broadcast %cst_190 : f32 to vector<8x64xf32>
    %c0_191 = arith.constant 0 : index
    %c5_192 = arith.constant 5 : index
    %c0_193 = arith.constant 0 : index
    %c0_194 = arith.constant 0 : index
    %182 = vector.load %arg1[%c0_191, %c5_192, %c0_193, %c0_194] : memref<1x9x9x4xbf16, #tpu.memory_space<vmem>>, vector<1x1x8x4xbf16>
    %183 = vector.shape_cast %182 : vector<1x1x8x4xbf16> to vector<8x4xbf16>
    %c0_195 = arith.constant 0 : index
    %c0_196 = arith.constant 0 : index
    %c0_197 = arith.constant 0 : index
    %184 = vector.load %arg2[%c0_195, %c0_196, %c0_197] : memref<4x4x64xbf16, #tpu.memory_space<vmem>>, vector<1x4x64xbf16>
    %185 = vector.shape_cast %184 : vector<1x4x64xbf16> to vector<4x64xbf16>
    %cst_198 = arith.constant dense<0.000000e+00> : vector<8x64xf32>
    %186 = tpu.matmul %183, %185, %cst_198 {dimension_numbers = #tpu.dot_dimension_numbers<[1], [0], [0], [1], [0, 0, 1, 1], [], []>} : vector<8x4xbf16>, vector<4x64xbf16>, vector<8x64xf32> -> vector<8x64xf32>
    %187 = arith.addf %181, %186 : vector<8x64xf32>
    %c0_199 = arith.constant 0 : index
    %c5_200 = arith.constant 5 : index
    %c1_201 = arith.constant 1 : index
    %c0_202 = arith.constant 0 : index
    %188 = vector.load %arg1[%c0_199, %c5_200, %c1_201, %c0_202] : memref<1x9x9x4xbf16, #tpu.memory_space<vmem>>, vector<1x1x8x4xbf16>
    %189 = vector.shape_cast %188 : vector<1x1x8x4xbf16> to vector<8x4xbf16>
    %c1_203 = arith.constant 1 : index
    %c0_204 = arith.constant 0 : index
    %c0_205 = arith.constant 0 : index
    %190 = vector.load %arg2[%c1_203, %c0_204, %c0_205] : memref<4x4x64xbf16, #tpu.memory_space<vmem>>, vector<1x4x64xbf16>
    %191 = vector.shape_cast %190 : vector<1x4x64xbf16> to vector<4x64xbf16>
    %cst_206 = arith.constant dense<0.000000e+00> : vector<8x64xf32>
    %192 = tpu.matmul %189, %191, %cst_206 {dimension_numbers = #tpu.dot_dimension_numbers<[1], [0], [0], [1], [0, 0, 1, 1], [], []>} : vector<8x4xbf16>, vector<4x64xbf16>, vector<8x64xf32> -> vector<8x64xf32>
    %193 = arith.addf %187, %192 : vector<8x64xf32>
    %c0_207 = arith.constant 0 : index
    %c6 = arith.constant 6 : index
    %c0_208 = arith.constant 0 : index
    %c0_209 = arith.constant 0 : index
    %194 = vector.load %arg1[%c0_207, %c6, %c0_208, %c0_209] : memref<1x9x9x4xbf16, #tpu.memory_space<vmem>>, vector<1x1x8x4xbf16>
    %195 = vector.shape_cast %194 : vector<1x1x8x4xbf16> to vector<8x4xbf16>
    %c2_210 = arith.constant 2 : index
    %c0_211 = arith.constant 0 : index
    %c0_212 = arith.constant 0 : index
    %196 = vector.load %arg2[%c2_210, %c0_211, %c0_212] : memref<4x4x64xbf16, #tpu.memory_space<vmem>>, vector<1x4x64xbf16>
    %197 = vector.shape_cast %196 : vector<1x4x64xbf16> to vector<4x64xbf16>
    %cst_213 = arith.constant dense<0.000000e+00> : vector<8x64xf32>
    %198 = tpu.matmul %195, %197, %cst_213 {dimension_numbers = #tpu.dot_dimension_numbers<[1], [0], [0], [1], [0, 0, 1, 1], [], []>} : vector<8x4xbf16>, vector<4x64xbf16>, vector<8x64xf32> -> vector<8x64xf32>
    %199 = arith.addf %193, %198 : vector<8x64xf32>
    %c0_214 = arith.constant 0 : index
    %c6_215 = arith.constant 6 : index
    %c1_216 = arith.constant 1 : index
    %c0_217 = arith.constant 0 : index
    %200 = vector.load %arg1[%c0_214, %c6_215, %c1_216, %c0_217] : memref<1x9x9x4xbf16, #tpu.memory_space<vmem>>, vector<1x1x8x4xbf16>
    %201 = vector.shape_cast %200 : vector<1x1x8x4xbf16> to vector<8x4xbf16>
    %c3_218 = arith.constant 3 : index
    %c0_219 = arith.constant 0 : index
    %c0_220 = arith.constant 0 : index
    %202 = vector.load %arg2[%c3_218, %c0_219, %c0_220] : memref<4x4x64xbf16, #tpu.memory_space<vmem>>, vector<1x4x64xbf16>
    %203 = vector.shape_cast %202 : vector<1x4x64xbf16> to vector<4x64xbf16>
    %cst_221 = arith.constant dense<0.000000e+00> : vector<8x64xf32>
    %204 = tpu.matmul %201, %203, %cst_221 {dimension_numbers = #tpu.dot_dimension_numbers<[1], [0], [0], [1], [0, 0, 1, 1], [], []>} : vector<8x4xbf16>, vector<4x64xbf16>, vector<8x64xf32> -> vector<8x64xf32>
    %205 = arith.addf %199, %204 : vector<8x64xf32>
    %206 = vector.broadcast %0 : vector<1x64xf32> to vector<8x64xf32>
    %207 = arith.addf %205, %206 : vector<8x64xf32>
    %cst_222 = arith.constant 0.000000e+00 : f32
    %208 = vector.broadcast %cst_222 : f32 to vector<8x64xf32>
    %209 = arith.cmpf ogt, %207, %208 : vector<8x64xf32>
    %cst_223 = arith.constant 2.000000e-01 : f32
    %210 = vector.broadcast %cst_223 : f32 to vector<8x64xf32>
    %211 = arith.mulf %210, %207 : vector<8x64xf32>
    %212 = arith.select %209, %207, %211 : vector<8x64xi1>, vector<8x64xf32>
    %213 = arith.truncf %212 : vector<8x64xf32> to vector<8x64xbf16>
    %c0_224 = arith.constant 0 : index
    %c5_225 = arith.constant 5 : index
    %c0_226 = arith.constant 0 : index
    %c0_227 = arith.constant 0 : index
    %214 = vector.load %arg4[%c0_224, %c5_225, %c0_226, %c0_227] : memref<1x8x8x64xbf16, #tpu.memory_space<vmem>>, vector<1x1x8x64xbf16>
    %215 = vector.shape_cast %214 : vector<1x1x8x64xbf16> to vector<8x64xbf16>
    %216 = vector.shape_cast %213 : vector<8x64xbf16> to vector<1x1x8x64xbf16>
    tpu.vector_store %arg4[%c0_224, %c5_225, %c0_226, %c0_227], %216 {strides = array<i32>} : memref<1x8x8x64xbf16, #tpu.memory_space<vmem>>, vector<1x1x8x64xbf16>,
    %cst_228 = arith.constant 0.000000e+00 : f32
    %217 = vector.broadcast %cst_228 : f32 to vector<8x64xf32>
    %c0_229 = arith.constant 0 : index
    %c6_230 = arith.constant 6 : index
    %c0_231 = arith.constant 0 : index
    %c0_232 = arith.constant 0 : index
    %218 = vector.load %arg1[%c0_229, %c6_230, %c0_231, %c0_232] : memref<1x9x9x4xbf16, #tpu.memory_space<vmem>>, vector<1x1x8x4xbf16>
    %219 = vector.shape_cast %218 : vector<1x1x8x4xbf16> to vector<8x4xbf16>
    %c0_233 = arith.constant 0 : index
    %c0_234 = arith.constant 0 : index
    %c0_235 = arith.constant 0 : index
    %220 = vector.load %arg2[%c0_233, %c0_234, %c0_235] : memref<4x4x64xbf16, #tpu.memory_space<vmem>>, vector<1x4x64xbf16>
    %221 = vector.shape_cast %220 : vector<1x4x64xbf16> to vector<4x64xbf16>
    %cst_236 = arith.constant dense<0.000000e+00> : vector<8x64xf32>
    %222 = tpu.matmul %219, %221, %cst_236 {dimension_numbers = #tpu.dot_dimension_numbers<[1], [0], [0], [1], [0, 0, 1, 1], [], []>} : vector<8x4xbf16>, vector<4x64xbf16>, vector<8x64xf32> -> vector<8x64xf32>
    %223 = arith.addf %217, %222 : vector<8x64xf32>
    %c0_237 = arith.constant 0 : index
    %c6_238 = arith.constant 6 : index
    %c1_239 = arith.constant 1 : index
    %c0_240 = arith.constant 0 : index
    %224 = vector.load %arg1[%c0_237, %c6_238, %c1_239, %c0_240] : memref<1x9x9x4xbf16, #tpu.memory_space<vmem>>, vector<1x1x8x4xbf16>
    %225 = vector.shape_cast %224 : vector<1x1x8x4xbf16> to vector<8x4xbf16>
    %c1_241 = arith.constant 1 : index
    %c0_242 = arith.constant 0 : index
    %c0_243 = arith.constant 0 : index
    %226 = vector.load %arg2[%c1_241, %c0_242, %c0_243] : memref<4x4x64xbf16, #tpu.memory_space<vmem>>, vector<1x4x64xbf16>
    %227 = vector.shape_cast %226 : vector<1x4x64xbf16> to vector<4x64xbf16>
    %cst_244 = arith.constant dense<0.000000e+00> : vector<8x64xf32>
    %228 = tpu.matmul %225, %227, %cst_244 {dimension_numbers = #tpu.dot_dimension_numbers<[1], [0], [0], [1], [0, 0, 1, 1], [], []>} : vector<8x4xbf16>, vector<4x64xbf16>, vector<8x64xf32> -> vector<8x64xf32>
    %229 = arith.addf %223, %228 : vector<8x64xf32>
    %c0_245 = arith.constant 0 : index
    %c7 = arith.constant 7 : index
    %c0_246 = arith.constant 0 : index
    %c0_247 = arith.constant 0 : index
    %230 = vector.load %arg1[%c0_245, %c7, %c0_246, %c0_247] : memref<1x9x9x4xbf16, #tpu.memory_space<vmem>>, vector<1x1x8x4xbf16>
    %231 = vector.shape_cast %230 : vector<1x1x8x4xbf16> to vector<8x4xbf16>
    %c2_248 = arith.constant 2 : index
    %c0_249 = arith.constant 0 : index
    %c0_250 = arith.constant 0 : index
    %232 = vector.load %arg2[%c2_248, %c0_249, %c0_250] : memref<4x4x64xbf16, #tpu.memory_space<vmem>>, vector<1x4x64xbf16>
    %233 = vector.shape_cast %232 : vector<1x4x64xbf16> to vector<4x64xbf16>
    %cst_251 = arith.constant dense<0.000000e+00> : vector<8x64xf32>
    %234 = tpu.matmul %231, %233, %cst_251 {dimension_numbers = #tpu.dot_dimension_numbers<[1], [0], [0], [1], [0, 0, 1, 1], [], []>} : vector<8x4xbf16>, vector<4x64xbf16>, vector<8x64xf32> -> vector<8x64xf32>
    %235 = arith.addf %229, %234 : vector<8x64xf32>
    %c0_252 = arith.constant 0 : index
    %c7_253 = arith.constant 7 : index
    %c1_254 = arith.constant 1 : index
    %c0_255 = arith.constant 0 : index
    %236 = vector.load %arg1[%c0_252, %c7_253, %c1_254, %c0_255] : memref<1x9x9x4xbf16, #tpu.memory_space<vmem>>, vector<1x1x8x4xbf16>
    %237 = vector.shape_cast %236 : vector<1x1x8x4xbf16> to vector<8x4xbf16>
    %c3_256 = arith.constant 3 : index
    %c0_257 = arith.constant 0 : index
    %c0_258 = arith.constant 0 : index
    %238 = vector.load %arg2[%c3_256, %c0_257, %c0_258] : memref<4x4x64xbf16, #tpu.memory_space<vmem>>, vector<1x4x64xbf16>
    %239 = vector.shape_cast %238 : vector<1x4x64xbf16> to vector<4x64xbf16>
    %cst_259 = arith.constant dense<0.000000e+00> : vector<8x64xf32>
    %240 = tpu.matmul %237, %239, %cst_259 {dimension_numbers = #tpu.dot_dimension_numbers<[1], [0], [0], [1], [0, 0, 1, 1], [], []>} : vector<8x4xbf16>, vector<4x64xbf16>, vector<8x64xf32> -> vector<8x64xf32>
    %241 = arith.addf %235, %240 : vector<8x64xf32>
    %242 = vector.broadcast %0 : vector<1x64xf32> to vector<8x64xf32>
    %243 = arith.addf %241, %242 : vector<8x64xf32>
    %cst_260 = arith.constant 0.000000e+00 : f32
    %244 = vector.broadcast %cst_260 : f32 to vector<8x64xf32>
    %245 = arith.cmpf ogt, %243, %244 : vector<8x64xf32>
    %cst_261 = arith.constant 2.000000e-01 : f32
    %246 = vector.broadcast %cst_261 : f32 to vector<8x64xf32>
    %247 = arith.mulf %246, %243 : vector<8x64xf32>
    %248 = arith.select %245, %243, %247 : vector<8x64xi1>, vector<8x64xf32>
    %249 = arith.truncf %248 : vector<8x64xf32> to vector<8x64xbf16>
    %c0_262 = arith.constant 0 : index
    %c6_263 = arith.constant 6 : index
    %c0_264 = arith.constant 0 : index
    %c0_265 = arith.constant 0 : index
    %250 = vector.load %arg4[%c0_262, %c6_263, %c0_264, %c0_265] : memref<1x8x8x64xbf16, #tpu.memory_space<vmem>>, vector<1x1x8x64xbf16>
    %251 = vector.shape_cast %250 : vector<1x1x8x64xbf16> to vector<8x64xbf16>
    %252 = vector.shape_cast %249 : vector<8x64xbf16> to vector<1x1x8x64xbf16>
    tpu.vector_store %arg4[%c0_262, %c6_263, %c0_264, %c0_265], %252 {strides = array<i32>} : memref<1x8x8x64xbf16, #tpu.memory_space<vmem>>, vector<1x1x8x64xbf16>,
    %cst_266 = arith.constant 0.000000e+00 : f32
    %253 = vector.broadcast %cst_266 : f32 to vector<8x64xf32>
    %c0_267 = arith.constant 0 : index
    %c7_268 = arith.constant 7 : index
    %c0_269 = arith.constant 0 : index
    %c0_270 = arith.constant 0 : index
    %254 = vector.load %arg1[%c0_267, %c7_268, %c0_269, %c0_270] : memref<1x9x9x4xbf16, #tpu.memory_space<vmem>>, vector<1x1x8x4xbf16>
    %255 = vector.shape_cast %254 : vector<1x1x8x4xbf16> to vector<8x4xbf16>
    %c0_271 = arith.constant 0 : index
    %c0_272 = arith.constant 0 : index
    %c0_273 = arith.constant 0 : index
    %256 = vector.load %arg2[%c0_271, %c0_272, %c0_273] : memref<4x4x64xbf16, #tpu.memory_space<vmem>>, vector<1x4x64xbf16>
    %257 = vector.shape_cast %256 : vector<1x4x64xbf16> to vector<4x64xbf16>
    %cst_274 = arith.constant dense<0.000000e+00> : vector<8x64xf32>
    %258 = tpu.matmul %255, %257, %cst_274 {dimension_numbers = #tpu.dot_dimension_numbers<[1], [0], [0], [1], [0, 0, 1, 1], [], []>} : vector<8x4xbf16>, vector<4x64xbf16>, vector<8x64xf32> -> vector<8x64xf32>
    %259 = arith.addf %253, %258 : vector<8x64xf32>
    %c0_275 = arith.constant 0 : index
    %c7_276 = arith.constant 7 : index
    %c1_277 = arith.constant 1 : index
    %c0_278 = arith.constant 0 : index
    %260 = vector.load %arg1[%c0_275, %c7_276, %c1_277, %c0_278] : memref<1x9x9x4xbf16, #tpu.memory_space<vmem>>, vector<1x1x8x4xbf16>
    %261 = vector.shape_cast %260 : vector<1x1x8x4xbf16> to vector<8x4xbf16>
    %c1_279 = arith.constant 1 : index
    %c0_280 = arith.constant 0 : index
    %c0_281 = arith.constant 0 : index
    %262 = vector.load %arg2[%c1_279, %c0_280, %c0_281] : memref<4x4x64xbf16, #tpu.memory_space<vmem>>, vector<1x4x64xbf16>
    %263 = vector.shape_cast %262 : vector<1x4x64xbf16> to vector<4x64xbf16>
    %cst_282 = arith.constant dense<0.000000e+00> : vector<8x64xf32>
    %264 = tpu.matmul %261, %263, %cst_282 {dimension_numbers = #tpu.dot_dimension_numbers<[1], [0], [0], [1], [0, 0, 1, 1], [], []>} : vector<8x4xbf16>, vector<4x64xbf16>, vector<8x64xf32> -> vector<8x64xf32>
    %265 = arith.addf %259, %264 : vector<8x64xf32>
    %c0_283 = arith.constant 0 : index
    %c8 = arith.constant 8 : index
    %c0_284 = arith.constant 0 : index
    %c0_285 = arith.constant 0 : index
    %266 = vector.load %arg1[%c0_283, %c8, %c0_284, %c0_285] : memref<1x9x9x4xbf16, #tpu.memory_space<vmem>>, vector<1x1x8x4xbf16>
    %267 = vector.shape_cast %266 : vector<1x1x8x4xbf16> to vector<8x4xbf16>
    %c2_286 = arith.constant 2 : index
    %c0_287 = arith.constant 0 : index
    %c0_288 = arith.constant 0 : index
    %268 = vector.load %arg2[%c2_286, %c0_287, %c0_288] : memref<4x4x64xbf16, #tpu.memory_space<vmem>>, vector<1x4x64xbf16>
    %269 = vector.shape_cast %268 : vector<1x4x64xbf16> to vector<4x64xbf16>
    %cst_289 = arith.constant dense<0.000000e+00> : vector<8x64xf32>
    %270 = tpu.matmul %267, %269, %cst_289 {dimension_numbers = #tpu.dot_dimension_numbers<[1], [0], [0], [1], [0, 0, 1, 1], [], []>} : vector<8x4xbf16>, vector<4x64xbf16>, vector<8x64xf32> -> vector<8x64xf32>
    %271 = arith.addf %265, %270 : vector<8x64xf32>
    %c0_290 = arith.constant 0 : index
    %c8_291 = arith.constant 8 : index
    %c1_292 = arith.constant 1 : index
    %c0_293 = arith.constant 0 : index
    %272 = vector.load %arg1[%c0_290, %c8_291, %c1_292, %c0_293] : memref<1x9x9x4xbf16, #tpu.memory_space<vmem>>, vector<1x1x8x4xbf16>
    %273 = vector.shape_cast %272 : vector<1x1x8x4xbf16> to vector<8x4xbf16>
    %c3_294 = arith.constant 3 : index
    %c0_295 = arith.constant 0 : index
    %c0_296 = arith.constant 0 : index
    %274 = vector.load %arg2[%c3_294, %c0_295, %c0_296] : memref<4x4x64xbf16, #tpu.memory_space<vmem>>, vector<1x4x64xbf16>
    %275 = vector.shape_cast %274 : vector<1x4x64xbf16> to vector<4x64xbf16>
    %cst_297 = arith.constant dense<0.000000e+00> : vector<8x64xf32>
    %276 = tpu.matmul %273, %275, %cst_297 {dimension_numbers = #tpu.dot_dimension_numbers<[1], [0], [0], [1], [0, 0, 1, 1], [], []>} : vector<8x4xbf16>, vector<4x64xbf16>, vector<8x64xf32> -> vector<8x64xf32>
    %277 = arith.addf %271, %276 : vector<8x64xf32>
    %278 = vector.broadcast %0 : vector<1x64xf32> to vector<8x64xf32>
    %279 = arith.addf %277, %278 : vector<8x64xf32>
    %cst_298 = arith.constant 0.000000e+00 : f32
    %280 = vector.broadcast %cst_298 : f32 to vector<8x64xf32>
    %281 = arith.cmpf ogt, %279, %280 : vector<8x64xf32>
    %cst_299 = arith.constant 2.000000e-01 : f32
    %282 = vector.broadcast %cst_299 : f32 to vector<8x64xf32>
    %283 = arith.mulf %282, %279 : vector<8x64xf32>
    %284 = arith.select %281, %279, %283 : vector<8x64xi1>, vector<8x64xf32>
    %285 = arith.truncf %284 : vector<8x64xf32> to vector<8x64xbf16>
    %c0_300 = arith.constant 0 : index
    %c7_301 = arith.constant 7 : index
    %c0_302 = arith.constant 0 : index
    %c0_303 = arith.constant 0 : index
    %286 = vector.load %arg4[%c0_300, %c7_301, %c0_302, %c0_303] : memref<1x8x8x64xbf16, #tpu.memory_space<vmem>>, vector<1x1x8x64xbf16>
    %287 = vector.shape_cast %286 : vector<1x1x8x64xbf16> to vector<8x64xbf16>
    %288 = vector.shape_cast %285 : vector<8x64xbf16> to vector<1x1x8x64xbf16>
    tpu.vector_store %arg4[%c0_300, %c7_301, %c0_302, %c0_303], %288 {strides = array<i32>} : memref<1x8x8x64xbf16, #tpu.memory_space<vmem>>, vector<1x1x8x64xbf16>,
    return
  }
  func.func @transform_0(%arg0: i32) -> (i32, i32, i32, i32) {
    %c0_i32 = arith.constant 0 : i32
    %c0_i32_0 = arith.constant 0 : i32
    %c0_i32_1 = arith.constant 0 : i32
    %c0_i32_2 = arith.constant 0 : i32
    return %arg0, %c0_i32, %c0_i32_0, %c0_i32_1 : i32, i32, i32, i32
  }
  func.func @transform_1(%arg0: i32) -> (i32, i32, i32) {
    %c0_i32 = arith.constant 0 : i32
    %c0_i32_0 = arith.constant 0 : i32
    %c0_i32_1 = arith.constant 0 : i32
    %c0_i32_2 = arith.constant 0 : i32
    return %c0_i32, %c0_i32_0, %c0_i32_1 : i32, i32, i32
  }
  func.func @transform_2(%arg0: i32) -> (i32, i32) {
    %c0_i32 = arith.constant 0 : i32
    %c0_i32_0 = arith.constant 0 : i32
    %c0_i32_1 = arith.constant 0 : i32
    return %c0_i32, %c0_i32_0 : i32, i32
  }
  func.func @transform_3(%arg0: i32) -> (i32, i32, i32, i32) {
    %c0_i32 = arith.constant 0 : i32
    %c0_i32_0 = arith.constant 0 : i32
    %c0_i32_1 = arith.constant 0 : i32
    %c0_i32_2 = arith.constant 0 : i32
    return %arg0, %c0_i32, %c0_i32_0, %c0_i32_1 : i32, i32, i32, i32
  }
}

module attributes {stable_mosaic.version = 11 : i64} {
  func.func @_conv_macro_kernel(%arg0: i32, %arg1: memref<1x5x5x256xbf16, #tpu.memory_space<vmem>>, %arg2: memref<4x256x128xbf16, #tpu.memory_space<vmem>>, %arg3: memref<1x128xf32, #tpu.memory_space<vmem>>, %arg4: memref<1x4x4x128xbf16, #tpu.memory_space<vmem>>) attributes {dimension_semantics = [#tpu.dimension_semantics<parallel>], iteration_bounds = array<i64: 2>, scalar_prefetch = 0 : i64, scratch_operands = 0 : i64, tpu.core_type = #tpu.core_type<tc>, window_params = [{transform_indices = @transform_0, window_bounds = array<i64: 1, 5, 5, 256>}, {pipeline_mode = #tpu.pipeline_mode<synchronous>, transform_indices = @transform_1, window_bounds = array<i64: 4, 256, 128>}, {pipeline_mode = #tpu.pipeline_mode<synchronous>, transform_indices = @transform_2, window_bounds = array<i64: 1, 128>}, {transform_indices = @transform_3, window_bounds = array<i64: 1, 4, 4, 128>}]} {
    %c0 = arith.constant 0 : index
    %c0_0 = arith.constant 0 : index
    %0 = vector.load %arg3[%c0, %c0_0] : memref<1x128xf32, #tpu.memory_space<vmem>>, vector<1x128xf32>
    %cst = arith.constant 0.000000e+00 : f32
    %1 = vector.broadcast %cst : f32 to vector<4x128xf32>
    %c0_1 = arith.constant 0 : index
    %c0_2 = arith.constant 0 : index
    %c0_3 = arith.constant 0 : index
    %c0_4 = arith.constant 0 : index
    %2 = vector.load %arg1[%c0_1, %c0_2, %c0_3, %c0_4] : memref<1x5x5x256xbf16, #tpu.memory_space<vmem>>, vector<1x1x4x256xbf16>
    %3 = vector.shape_cast %2 : vector<1x1x4x256xbf16> to vector<4x256xbf16>
    %c0_5 = arith.constant 0 : index
    %c0_6 = arith.constant 0 : index
    %c0_7 = arith.constant 0 : index
    %4 = vector.load %arg2[%c0_5, %c0_6, %c0_7] : memref<4x256x128xbf16, #tpu.memory_space<vmem>>, vector<1x256x128xbf16>
    %5 = vector.shape_cast %4 : vector<1x256x128xbf16> to vector<256x128xbf16>
    %cst_8 = arith.constant dense<0.000000e+00> : vector<4x128xf32>
    %6 = tpu.matmul %3, %5, %cst_8 {dimension_numbers = #tpu.dot_dimension_numbers<[1], [0], [0], [1], [0, 0, 1, 1], [], []>} : vector<4x256xbf16>, vector<256x128xbf16>, vector<4x128xf32> -> vector<4x128xf32>
    %7 = arith.addf %1, %6 : vector<4x128xf32>
    %c0_9 = arith.constant 0 : index
    %c0_10 = arith.constant 0 : index
    %c1 = arith.constant 1 : index
    %c0_11 = arith.constant 0 : index
    %8 = vector.load %arg1[%c0_9, %c0_10, %c1, %c0_11] : memref<1x5x5x256xbf16, #tpu.memory_space<vmem>>, vector<1x1x4x256xbf16>
    %9 = vector.shape_cast %8 : vector<1x1x4x256xbf16> to vector<4x256xbf16>
    %c1_12 = arith.constant 1 : index
    %c0_13 = arith.constant 0 : index
    %c0_14 = arith.constant 0 : index
    %10 = vector.load %arg2[%c1_12, %c0_13, %c0_14] : memref<4x256x128xbf16, #tpu.memory_space<vmem>>, vector<1x256x128xbf16>
    %11 = vector.shape_cast %10 : vector<1x256x128xbf16> to vector<256x128xbf16>
    %cst_15 = arith.constant dense<0.000000e+00> : vector<4x128xf32>
    %12 = tpu.matmul %9, %11, %cst_15 {dimension_numbers = #tpu.dot_dimension_numbers<[1], [0], [0], [1], [0, 0, 1, 1], [], []>} : vector<4x256xbf16>, vector<256x128xbf16>, vector<4x128xf32> -> vector<4x128xf32>
    %13 = arith.addf %7, %12 : vector<4x128xf32>
    %c0_16 = arith.constant 0 : index
    %c1_17 = arith.constant 1 : index
    %c0_18 = arith.constant 0 : index
    %c0_19 = arith.constant 0 : index
    %14 = vector.load %arg1[%c0_16, %c1_17, %c0_18, %c0_19] : memref<1x5x5x256xbf16, #tpu.memory_space<vmem>>, vector<1x1x4x256xbf16>
    %15 = vector.shape_cast %14 : vector<1x1x4x256xbf16> to vector<4x256xbf16>
    %c2 = arith.constant 2 : index
    %c0_20 = arith.constant 0 : index
    %c0_21 = arith.constant 0 : index
    %16 = vector.load %arg2[%c2, %c0_20, %c0_21] : memref<4x256x128xbf16, #tpu.memory_space<vmem>>, vector<1x256x128xbf16>
    %17 = vector.shape_cast %16 : vector<1x256x128xbf16> to vector<256x128xbf16>
    %cst_22 = arith.constant dense<0.000000e+00> : vector<4x128xf32>
    %18 = tpu.matmul %15, %17, %cst_22 {dimension_numbers = #tpu.dot_dimension_numbers<[1], [0], [0], [1], [0, 0, 1, 1], [], []>} : vector<4x256xbf16>, vector<256x128xbf16>, vector<4x128xf32> -> vector<4x128xf32>
    %19 = arith.addf %13, %18 : vector<4x128xf32>
    %c0_23 = arith.constant 0 : index
    %c1_24 = arith.constant 1 : index
    %c1_25 = arith.constant 1 : index
    %c0_26 = arith.constant 0 : index
    %20 = vector.load %arg1[%c0_23, %c1_24, %c1_25, %c0_26] : memref<1x5x5x256xbf16, #tpu.memory_space<vmem>>, vector<1x1x4x256xbf16>
    %21 = vector.shape_cast %20 : vector<1x1x4x256xbf16> to vector<4x256xbf16>
    %c3 = arith.constant 3 : index
    %c0_27 = arith.constant 0 : index
    %c0_28 = arith.constant 0 : index
    %22 = vector.load %arg2[%c3, %c0_27, %c0_28] : memref<4x256x128xbf16, #tpu.memory_space<vmem>>, vector<1x256x128xbf16>
    %23 = vector.shape_cast %22 : vector<1x256x128xbf16> to vector<256x128xbf16>
    %cst_29 = arith.constant dense<0.000000e+00> : vector<4x128xf32>
    %24 = tpu.matmul %21, %23, %cst_29 {dimension_numbers = #tpu.dot_dimension_numbers<[1], [0], [0], [1], [0, 0, 1, 1], [], []>} : vector<4x256xbf16>, vector<256x128xbf16>, vector<4x128xf32> -> vector<4x128xf32>
    %25 = arith.addf %19, %24 : vector<4x128xf32>
    %26 = vector.broadcast %0 : vector<1x128xf32> to vector<4x128xf32>
    %27 = arith.addf %25, %26 : vector<4x128xf32>
    %cst_30 = arith.constant 0.000000e+00 : f32
    %28 = vector.broadcast %cst_30 : f32 to vector<4x128xf32>
    %29 = arith.cmpf ogt, %27, %28 : vector<4x128xf32>
    %cst_31 = arith.constant 2.000000e-01 : f32
    %30 = vector.broadcast %cst_31 : f32 to vector<4x128xf32>
    %31 = arith.mulf %30, %27 : vector<4x128xf32>
    %32 = arith.select %29, %27, %31 : vector<4x128xi1>, vector<4x128xf32>
    %33 = arith.truncf %32 : vector<4x128xf32> to vector<4x128xbf16>
    %c0_32 = arith.constant 0 : index
    %c0_33 = arith.constant 0 : index
    %c0_34 = arith.constant 0 : index
    %c0_35 = arith.constant 0 : index
    %34 = vector.load %arg4[%c0_32, %c0_33, %c0_34, %c0_35] : memref<1x4x4x128xbf16, #tpu.memory_space<vmem>>, vector<1x1x4x128xbf16>
    %35 = vector.shape_cast %34 : vector<1x1x4x128xbf16> to vector<4x128xbf16>
    %36 = vector.shape_cast %33 : vector<4x128xbf16> to vector<1x1x4x128xbf16>
    tpu.vector_store %arg4[%c0_32, %c0_33, %c0_34, %c0_35], %36 {strides = array<i32>} : memref<1x4x4x128xbf16, #tpu.memory_space<vmem>>, vector<1x1x4x128xbf16>,
    %cst_36 = arith.constant 0.000000e+00 : f32
    %37 = vector.broadcast %cst_36 : f32 to vector<4x128xf32>
    %c0_37 = arith.constant 0 : index
    %c1_38 = arith.constant 1 : index
    %c0_39 = arith.constant 0 : index
    %c0_40 = arith.constant 0 : index
    %38 = vector.load %arg1[%c0_37, %c1_38, %c0_39, %c0_40] : memref<1x5x5x256xbf16, #tpu.memory_space<vmem>>, vector<1x1x4x256xbf16>
    %39 = vector.shape_cast %38 : vector<1x1x4x256xbf16> to vector<4x256xbf16>
    %c0_41 = arith.constant 0 : index
    %c0_42 = arith.constant 0 : index
    %c0_43 = arith.constant 0 : index
    %40 = vector.load %arg2[%c0_41, %c0_42, %c0_43] : memref<4x256x128xbf16, #tpu.memory_space<vmem>>, vector<1x256x128xbf16>
    %41 = vector.shape_cast %40 : vector<1x256x128xbf16> to vector<256x128xbf16>
    %cst_44 = arith.constant dense<0.000000e+00> : vector<4x128xf32>
    %42 = tpu.matmul %39, %41, %cst_44 {dimension_numbers = #tpu.dot_dimension_numbers<[1], [0], [0], [1], [0, 0, 1, 1], [], []>} : vector<4x256xbf16>, vector<256x128xbf16>, vector<4x128xf32> -> vector<4x128xf32>
    %43 = arith.addf %37, %42 : vector<4x128xf32>
    %c0_45 = arith.constant 0 : index
    %c1_46 = arith.constant 1 : index
    %c1_47 = arith.constant 1 : index
    %c0_48 = arith.constant 0 : index
    %44 = vector.load %arg1[%c0_45, %c1_46, %c1_47, %c0_48] : memref<1x5x5x256xbf16, #tpu.memory_space<vmem>>, vector<1x1x4x256xbf16>
    %45 = vector.shape_cast %44 : vector<1x1x4x256xbf16> to vector<4x256xbf16>
    %c1_49 = arith.constant 1 : index
    %c0_50 = arith.constant 0 : index
    %c0_51 = arith.constant 0 : index
    %46 = vector.load %arg2[%c1_49, %c0_50, %c0_51] : memref<4x256x128xbf16, #tpu.memory_space<vmem>>, vector<1x256x128xbf16>
    %47 = vector.shape_cast %46 : vector<1x256x128xbf16> to vector<256x128xbf16>
    %cst_52 = arith.constant dense<0.000000e+00> : vector<4x128xf32>
    %48 = tpu.matmul %45, %47, %cst_52 {dimension_numbers = #tpu.dot_dimension_numbers<[1], [0], [0], [1], [0, 0, 1, 1], [], []>} : vector<4x256xbf16>, vector<256x128xbf16>, vector<4x128xf32> -> vector<4x128xf32>
    %49 = arith.addf %43, %48 : vector<4x128xf32>
    %c0_53 = arith.constant 0 : index
    %c2_54 = arith.constant 2 : index
    %c0_55 = arith.constant 0 : index
    %c0_56 = arith.constant 0 : index
    %50 = vector.load %arg1[%c0_53, %c2_54, %c0_55, %c0_56] : memref<1x5x5x256xbf16, #tpu.memory_space<vmem>>, vector<1x1x4x256xbf16>
    %51 = vector.shape_cast %50 : vector<1x1x4x256xbf16> to vector<4x256xbf16>
    %c2_57 = arith.constant 2 : index
    %c0_58 = arith.constant 0 : index
    %c0_59 = arith.constant 0 : index
    %52 = vector.load %arg2[%c2_57, %c0_58, %c0_59] : memref<4x256x128xbf16, #tpu.memory_space<vmem>>, vector<1x256x128xbf16>
    %53 = vector.shape_cast %52 : vector<1x256x128xbf16> to vector<256x128xbf16>
    %cst_60 = arith.constant dense<0.000000e+00> : vector<4x128xf32>
    %54 = tpu.matmul %51, %53, %cst_60 {dimension_numbers = #tpu.dot_dimension_numbers<[1], [0], [0], [1], [0, 0, 1, 1], [], []>} : vector<4x256xbf16>, vector<256x128xbf16>, vector<4x128xf32> -> vector<4x128xf32>
    %55 = arith.addf %49, %54 : vector<4x128xf32>
    %c0_61 = arith.constant 0 : index
    %c2_62 = arith.constant 2 : index
    %c1_63 = arith.constant 1 : index
    %c0_64 = arith.constant 0 : index
    %56 = vector.load %arg1[%c0_61, %c2_62, %c1_63, %c0_64] : memref<1x5x5x256xbf16, #tpu.memory_space<vmem>>, vector<1x1x4x256xbf16>
    %57 = vector.shape_cast %56 : vector<1x1x4x256xbf16> to vector<4x256xbf16>
    %c3_65 = arith.constant 3 : index
    %c0_66 = arith.constant 0 : index
    %c0_67 = arith.constant 0 : index
    %58 = vector.load %arg2[%c3_65, %c0_66, %c0_67] : memref<4x256x128xbf16, #tpu.memory_space<vmem>>, vector<1x256x128xbf16>
    %59 = vector.shape_cast %58 : vector<1x256x128xbf16> to vector<256x128xbf16>
    %cst_68 = arith.constant dense<0.000000e+00> : vector<4x128xf32>
    %60 = tpu.matmul %57, %59, %cst_68 {dimension_numbers = #tpu.dot_dimension_numbers<[1], [0], [0], [1], [0, 0, 1, 1], [], []>} : vector<4x256xbf16>, vector<256x128xbf16>, vector<4x128xf32> -> vector<4x128xf32>
    %61 = arith.addf %55, %60 : vector<4x128xf32>
    %62 = vector.broadcast %0 : vector<1x128xf32> to vector<4x128xf32>
    %63 = arith.addf %61, %62 : vector<4x128xf32>
    %cst_69 = arith.constant 0.000000e+00 : f32
    %64 = vector.broadcast %cst_69 : f32 to vector<4x128xf32>
    %65 = arith.cmpf ogt, %63, %64 : vector<4x128xf32>
    %cst_70 = arith.constant 2.000000e-01 : f32
    %66 = vector.broadcast %cst_70 : f32 to vector<4x128xf32>
    %67 = arith.mulf %66, %63 : vector<4x128xf32>
    %68 = arith.select %65, %63, %67 : vector<4x128xi1>, vector<4x128xf32>
    %69 = arith.truncf %68 : vector<4x128xf32> to vector<4x128xbf16>
    %c0_71 = arith.constant 0 : index
    %c1_72 = arith.constant 1 : index
    %c0_73 = arith.constant 0 : index
    %c0_74 = arith.constant 0 : index
    %70 = vector.load %arg4[%c0_71, %c1_72, %c0_73, %c0_74] : memref<1x4x4x128xbf16, #tpu.memory_space<vmem>>, vector<1x1x4x128xbf16>
    %71 = vector.shape_cast %70 : vector<1x1x4x128xbf16> to vector<4x128xbf16>
    %72 = vector.shape_cast %69 : vector<4x128xbf16> to vector<1x1x4x128xbf16>
    tpu.vector_store %arg4[%c0_71, %c1_72, %c0_73, %c0_74], %72 {strides = array<i32>} : memref<1x4x4x128xbf16, #tpu.memory_space<vmem>>, vector<1x1x4x128xbf16>,
    %cst_75 = arith.constant 0.000000e+00 : f32
    %73 = vector.broadcast %cst_75 : f32 to vector<4x128xf32>
    %c0_76 = arith.constant 0 : index
    %c2_77 = arith.constant 2 : index
    %c0_78 = arith.constant 0 : index
    %c0_79 = arith.constant 0 : index
    %74 = vector.load %arg1[%c0_76, %c2_77, %c0_78, %c0_79] : memref<1x5x5x256xbf16, #tpu.memory_space<vmem>>, vector<1x1x4x256xbf16>
    %75 = vector.shape_cast %74 : vector<1x1x4x256xbf16> to vector<4x256xbf16>
    %c0_80 = arith.constant 0 : index
    %c0_81 = arith.constant 0 : index
    %c0_82 = arith.constant 0 : index
    %76 = vector.load %arg2[%c0_80, %c0_81, %c0_82] : memref<4x256x128xbf16, #tpu.memory_space<vmem>>, vector<1x256x128xbf16>
    %77 = vector.shape_cast %76 : vector<1x256x128xbf16> to vector<256x128xbf16>
    %cst_83 = arith.constant dense<0.000000e+00> : vector<4x128xf32>
    %78 = tpu.matmul %75, %77, %cst_83 {dimension_numbers = #tpu.dot_dimension_numbers<[1], [0], [0], [1], [0, 0, 1, 1], [], []>} : vector<4x256xbf16>, vector<256x128xbf16>, vector<4x128xf32> -> vector<4x128xf32>
    %79 = arith.addf %73, %78 : vector<4x128xf32>
    %c0_84 = arith.constant 0 : index
    %c2_85 = arith.constant 2 : index
    %c1_86 = arith.constant 1 : index
    %c0_87 = arith.constant 0 : index
    %80 = vector.load %arg1[%c0_84, %c2_85, %c1_86, %c0_87] : memref<1x5x5x256xbf16, #tpu.memory_space<vmem>>, vector<1x1x4x256xbf16>
    %81 = vector.shape_cast %80 : vector<1x1x4x256xbf16> to vector<4x256xbf16>
    %c1_88 = arith.constant 1 : index
    %c0_89 = arith.constant 0 : index
    %c0_90 = arith.constant 0 : index
    %82 = vector.load %arg2[%c1_88, %c0_89, %c0_90] : memref<4x256x128xbf16, #tpu.memory_space<vmem>>, vector<1x256x128xbf16>
    %83 = vector.shape_cast %82 : vector<1x256x128xbf16> to vector<256x128xbf16>
    %cst_91 = arith.constant dense<0.000000e+00> : vector<4x128xf32>
    %84 = tpu.matmul %81, %83, %cst_91 {dimension_numbers = #tpu.dot_dimension_numbers<[1], [0], [0], [1], [0, 0, 1, 1], [], []>} : vector<4x256xbf16>, vector<256x128xbf16>, vector<4x128xf32> -> vector<4x128xf32>
    %85 = arith.addf %79, %84 : vector<4x128xf32>
    %c0_92 = arith.constant 0 : index
    %c3_93 = arith.constant 3 : index
    %c0_94 = arith.constant 0 : index
    %c0_95 = arith.constant 0 : index
    %86 = vector.load %arg1[%c0_92, %c3_93, %c0_94, %c0_95] : memref<1x5x5x256xbf16, #tpu.memory_space<vmem>>, vector<1x1x4x256xbf16>
    %87 = vector.shape_cast %86 : vector<1x1x4x256xbf16> to vector<4x256xbf16>
    %c2_96 = arith.constant 2 : index
    %c0_97 = arith.constant 0 : index
    %c0_98 = arith.constant 0 : index
    %88 = vector.load %arg2[%c2_96, %c0_97, %c0_98] : memref<4x256x128xbf16, #tpu.memory_space<vmem>>, vector<1x256x128xbf16>
    %89 = vector.shape_cast %88 : vector<1x256x128xbf16> to vector<256x128xbf16>
    %cst_99 = arith.constant dense<0.000000e+00> : vector<4x128xf32>
    %90 = tpu.matmul %87, %89, %cst_99 {dimension_numbers = #tpu.dot_dimension_numbers<[1], [0], [0], [1], [0, 0, 1, 1], [], []>} : vector<4x256xbf16>, vector<256x128xbf16>, vector<4x128xf32> -> vector<4x128xf32>
    %91 = arith.addf %85, %90 : vector<4x128xf32>
    %c0_100 = arith.constant 0 : index
    %c3_101 = arith.constant 3 : index
    %c1_102 = arith.constant 1 : index
    %c0_103 = arith.constant 0 : index
    %92 = vector.load %arg1[%c0_100, %c3_101, %c1_102, %c0_103] : memref<1x5x5x256xbf16, #tpu.memory_space<vmem>>, vector<1x1x4x256xbf16>
    %93 = vector.shape_cast %92 : vector<1x1x4x256xbf16> to vector<4x256xbf16>
    %c3_104 = arith.constant 3 : index
    %c0_105 = arith.constant 0 : index
    %c0_106 = arith.constant 0 : index
    %94 = vector.load %arg2[%c3_104, %c0_105, %c0_106] : memref<4x256x128xbf16, #tpu.memory_space<vmem>>, vector<1x256x128xbf16>
    %95 = vector.shape_cast %94 : vector<1x256x128xbf16> to vector<256x128xbf16>
    %cst_107 = arith.constant dense<0.000000e+00> : vector<4x128xf32>
    %96 = tpu.matmul %93, %95, %cst_107 {dimension_numbers = #tpu.dot_dimension_numbers<[1], [0], [0], [1], [0, 0, 1, 1], [], []>} : vector<4x256xbf16>, vector<256x128xbf16>, vector<4x128xf32> -> vector<4x128xf32>
    %97 = arith.addf %91, %96 : vector<4x128xf32>
    %98 = vector.broadcast %0 : vector<1x128xf32> to vector<4x128xf32>
    %99 = arith.addf %97, %98 : vector<4x128xf32>
    %cst_108 = arith.constant 0.000000e+00 : f32
    %100 = vector.broadcast %cst_108 : f32 to vector<4x128xf32>
    %101 = arith.cmpf ogt, %99, %100 : vector<4x128xf32>
    %cst_109 = arith.constant 2.000000e-01 : f32
    %102 = vector.broadcast %cst_109 : f32 to vector<4x128xf32>
    %103 = arith.mulf %102, %99 : vector<4x128xf32>
    %104 = arith.select %101, %99, %103 : vector<4x128xi1>, vector<4x128xf32>
    %105 = arith.truncf %104 : vector<4x128xf32> to vector<4x128xbf16>
    %c0_110 = arith.constant 0 : index
    %c2_111 = arith.constant 2 : index
    %c0_112 = arith.constant 0 : index
    %c0_113 = arith.constant 0 : index
    %106 = vector.load %arg4[%c0_110, %c2_111, %c0_112, %c0_113] : memref<1x4x4x128xbf16, #tpu.memory_space<vmem>>, vector<1x1x4x128xbf16>
    %107 = vector.shape_cast %106 : vector<1x1x4x128xbf16> to vector<4x128xbf16>
    %108 = vector.shape_cast %105 : vector<4x128xbf16> to vector<1x1x4x128xbf16>
    tpu.vector_store %arg4[%c0_110, %c2_111, %c0_112, %c0_113], %108 {strides = array<i32>} : memref<1x4x4x128xbf16, #tpu.memory_space<vmem>>, vector<1x1x4x128xbf16>,
    %cst_114 = arith.constant 0.000000e+00 : f32
    %109 = vector.broadcast %cst_114 : f32 to vector<4x128xf32>
    %c0_115 = arith.constant 0 : index
    %c3_116 = arith.constant 3 : index
    %c0_117 = arith.constant 0 : index
    %c0_118 = arith.constant 0 : index
    %110 = vector.load %arg1[%c0_115, %c3_116, %c0_117, %c0_118] : memref<1x5x5x256xbf16, #tpu.memory_space<vmem>>, vector<1x1x4x256xbf16>
    %111 = vector.shape_cast %110 : vector<1x1x4x256xbf16> to vector<4x256xbf16>
    %c0_119 = arith.constant 0 : index
    %c0_120 = arith.constant 0 : index
    %c0_121 = arith.constant 0 : index
    %112 = vector.load %arg2[%c0_119, %c0_120, %c0_121] : memref<4x256x128xbf16, #tpu.memory_space<vmem>>, vector<1x256x128xbf16>
    %113 = vector.shape_cast %112 : vector<1x256x128xbf16> to vector<256x128xbf16>
    %cst_122 = arith.constant dense<0.000000e+00> : vector<4x128xf32>
    %114 = tpu.matmul %111, %113, %cst_122 {dimension_numbers = #tpu.dot_dimension_numbers<[1], [0], [0], [1], [0, 0, 1, 1], [], []>} : vector<4x256xbf16>, vector<256x128xbf16>, vector<4x128xf32> -> vector<4x128xf32>
    %115 = arith.addf %109, %114 : vector<4x128xf32>
    %c0_123 = arith.constant 0 : index
    %c3_124 = arith.constant 3 : index
    %c1_125 = arith.constant 1 : index
    %c0_126 = arith.constant 0 : index
    %116 = vector.load %arg1[%c0_123, %c3_124, %c1_125, %c0_126] : memref<1x5x5x256xbf16, #tpu.memory_space<vmem>>, vector<1x1x4x256xbf16>
    %117 = vector.shape_cast %116 : vector<1x1x4x256xbf16> to vector<4x256xbf16>
    %c1_127 = arith.constant 1 : index
    %c0_128 = arith.constant 0 : index
    %c0_129 = arith.constant 0 : index
    %118 = vector.load %arg2[%c1_127, %c0_128, %c0_129] : memref<4x256x128xbf16, #tpu.memory_space<vmem>>, vector<1x256x128xbf16>
    %119 = vector.shape_cast %118 : vector<1x256x128xbf16> to vector<256x128xbf16>
    %cst_130 = arith.constant dense<0.000000e+00> : vector<4x128xf32>
    %120 = tpu.matmul %117, %119, %cst_130 {dimension_numbers = #tpu.dot_dimension_numbers<[1], [0], [0], [1], [0, 0, 1, 1], [], []>} : vector<4x256xbf16>, vector<256x128xbf16>, vector<4x128xf32> -> vector<4x128xf32>
    %121 = arith.addf %115, %120 : vector<4x128xf32>
    %c0_131 = arith.constant 0 : index
    %c4 = arith.constant 4 : index
    %c0_132 = arith.constant 0 : index
    %c0_133 = arith.constant 0 : index
    %122 = vector.load %arg1[%c0_131, %c4, %c0_132, %c0_133] : memref<1x5x5x256xbf16, #tpu.memory_space<vmem>>, vector<1x1x4x256xbf16>
    %123 = vector.shape_cast %122 : vector<1x1x4x256xbf16> to vector<4x256xbf16>
    %c2_134 = arith.constant 2 : index
    %c0_135 = arith.constant 0 : index
    %c0_136 = arith.constant 0 : index
    %124 = vector.load %arg2[%c2_134, %c0_135, %c0_136] : memref<4x256x128xbf16, #tpu.memory_space<vmem>>, vector<1x256x128xbf16>
    %125 = vector.shape_cast %124 : vector<1x256x128xbf16> to vector<256x128xbf16>
    %cst_137 = arith.constant dense<0.000000e+00> : vector<4x128xf32>
    %126 = tpu.matmul %123, %125, %cst_137 {dimension_numbers = #tpu.dot_dimension_numbers<[1], [0], [0], [1], [0, 0, 1, 1], [], []>} : vector<4x256xbf16>, vector<256x128xbf16>, vector<4x128xf32> -> vector<4x128xf32>
    %127 = arith.addf %121, %126 : vector<4x128xf32>
    %c0_138 = arith.constant 0 : index
    %c4_139 = arith.constant 4 : index
    %c1_140 = arith.constant 1 : index
    %c0_141 = arith.constant 0 : index
    %128 = vector.load %arg1[%c0_138, %c4_139, %c1_140, %c0_141] : memref<1x5x5x256xbf16, #tpu.memory_space<vmem>>, vector<1x1x4x256xbf16>
    %129 = vector.shape_cast %128 : vector<1x1x4x256xbf16> to vector<4x256xbf16>
    %c3_142 = arith.constant 3 : index
    %c0_143 = arith.constant 0 : index
    %c0_144 = arith.constant 0 : index
    %130 = vector.load %arg2[%c3_142, %c0_143, %c0_144] : memref<4x256x128xbf16, #tpu.memory_space<vmem>>, vector<1x256x128xbf16>
    %131 = vector.shape_cast %130 : vector<1x256x128xbf16> to vector<256x128xbf16>
    %cst_145 = arith.constant dense<0.000000e+00> : vector<4x128xf32>
    %132 = tpu.matmul %129, %131, %cst_145 {dimension_numbers = #tpu.dot_dimension_numbers<[1], [0], [0], [1], [0, 0, 1, 1], [], []>} : vector<4x256xbf16>, vector<256x128xbf16>, vector<4x128xf32> -> vector<4x128xf32>
    %133 = arith.addf %127, %132 : vector<4x128xf32>
    %134 = vector.broadcast %0 : vector<1x128xf32> to vector<4x128xf32>
    %135 = arith.addf %133, %134 : vector<4x128xf32>
    %cst_146 = arith.constant 0.000000e+00 : f32
    %136 = vector.broadcast %cst_146 : f32 to vector<4x128xf32>
    %137 = arith.cmpf ogt, %135, %136 : vector<4x128xf32>
    %cst_147 = arith.constant 2.000000e-01 : f32
    %138 = vector.broadcast %cst_147 : f32 to vector<4x128xf32>
    %139 = arith.mulf %138, %135 : vector<4x128xf32>
    %140 = arith.select %137, %135, %139 : vector<4x128xi1>, vector<4x128xf32>
    %141 = arith.truncf %140 : vector<4x128xf32> to vector<4x128xbf16>
    %c0_148 = arith.constant 0 : index
    %c3_149 = arith.constant 3 : index
    %c0_150 = arith.constant 0 : index
    %c0_151 = arith.constant 0 : index
    %142 = vector.load %arg4[%c0_148, %c3_149, %c0_150, %c0_151] : memref<1x4x4x128xbf16, #tpu.memory_space<vmem>>, vector<1x1x4x128xbf16>
    %143 = vector.shape_cast %142 : vector<1x1x4x128xbf16> to vector<4x128xbf16>
    %144 = vector.shape_cast %141 : vector<4x128xbf16> to vector<1x1x4x128xbf16>
    tpu.vector_store %arg4[%c0_148, %c3_149, %c0_150, %c0_151], %144 {strides = array<i32>} : memref<1x4x4x128xbf16, #tpu.memory_space<vmem>>, vector<1x1x4x128xbf16>,
    return
  }
  func.func @transform_0(%arg0: i32) -> (i32, i32, i32, i32) {
    %c0_i32 = arith.constant 0 : i32
    %c0_i32_0 = arith.constant 0 : i32
    %c0_i32_1 = arith.constant 0 : i32
    %c0_i32_2 = arith.constant 0 : i32
    return %arg0, %c0_i32, %c0_i32_0, %c0_i32_1 : i32, i32, i32, i32
  }
  func.func @transform_1(%arg0: i32) -> (i32, i32, i32) {
    %c0_i32 = arith.constant 0 : i32
    %c0_i32_0 = arith.constant 0 : i32
    %c0_i32_1 = arith.constant 0 : i32
    %c0_i32_2 = arith.constant 0 : i32
    return %c0_i32, %c0_i32_0, %c0_i32_1 : i32, i32, i32
  }
  func.func @transform_2(%arg0: i32) -> (i32, i32) {
    %c0_i32 = arith.constant 0 : i32
    %c0_i32_0 = arith.constant 0 : i32
    %c0_i32_1 = arith.constant 0 : i32
    return %c0_i32, %c0_i32_0 : i32, i32
  }
  func.func @transform_3(%arg0: i32) -> (i32, i32, i32, i32) {
    %c0_i32 = arith.constant 0 : i32
    %c0_i32_0 = arith.constant 0 : i32
    %c0_i32_1 = arith.constant 0 : i32
    %c0_i32_2 = arith.constant 0 : i32
    return %arg0, %c0_i32, %c0_i32_0, %c0_i32_1 : i32, i32, i32, i32
  }
}

module attributes {stable_mosaic.version = 11 : i64} {
  func.func @_linear_sigmoid_kernel(%arg0: i32, %arg1: memref<2x1024xbf16, #tpu.memory_space<vmem>>, %arg2: memref<1x1024xbf16, #tpu.memory_space<vmem>>, %arg3: memref<1x1xf32, #tpu.memory_space<vmem>>, %arg4: memref<2x1xf32, #tpu.memory_space<vmem>>, %arg5: memref<2x128xf32, #tpu.memory_space<vmem>>) attributes {dimension_semantics = [#tpu.dimension_semantics<arbitrary>], iteration_bounds = array<i64: 1>, scalar_prefetch = 0 : i64, scratch_operands = 1 : i64, tpu.core_type = #tpu.core_type<tc>, window_params = [{transform_indices = @transform_0, window_bounds = array<i64: 2, 1024>}, {transform_indices = @transform_1, window_bounds = array<i64: 1, 1024>}, {pipeline_mode = #tpu.pipeline_mode<synchronous>, transform_indices = @transform_2, window_bounds = array<i64: 1, 1>}, {pipeline_mode = #tpu.pipeline_mode<synchronous>, transform_indices = @transform_3, window_bounds = array<i64: 2, 1>}]} {
    %c0_i32 = arith.constant 0 : i32
    %0 = arith.cmpi eq, %arg0, %c0_i32 : i32
    %1 = arith.extui %0 : i1 to i32
    %c0_i32_0 = arith.constant 0 : i32
    %2 = arith.cmpi ne, %1, %c0_i32_0 : i32
    scf.if %2 {
      %cst = arith.constant 0.000000e+00 : f32
      %30 = vector.broadcast %cst : f32 to vector<2x128xf32>
      %c0_10 = arith.constant 0 : index
      %c0_11 = arith.constant 0 : index
      %31 = vector.load %arg5[%c0_10, %c0_11] : memref<2x128xf32, #tpu.memory_space<vmem>>, vector<2x128xf32>
      tpu.vector_store %arg5[%c0_10, %c0_11], %30 {strides = array<i32>} : memref<2x128xf32, #tpu.memory_space<vmem>>, vector<2x128xf32>,
      %cst_12 = arith.constant 0.000000e+00 : f32
      %32 = vector.broadcast %cst_12 : f32 to vector<2x1xf32>
      %c0_13 = arith.constant 0 : index
      %c0_14 = arith.constant 0 : index
      %33 = vector.load %arg4[%c0_13, %c0_14] : memref<2x1xf32, #tpu.memory_space<vmem>>, vector<2x1xf32>
      tpu.vector_store %arg4[%c0_13, %c0_14], %32 {strides = array<i32>} : memref<2x1xf32, #tpu.memory_space<vmem>>, vector<2x1xf32>,
    } else {
    }
    %c0 = arith.constant 0 : index
    %c0_1 = arith.constant 0 : index
    %3 = vector.load %arg1[%c0, %c0_1] : memref<2x1024xbf16, #tpu.memory_space<vmem>>, vector<2x1024xbf16>
    %4 = arith.extf %3 : vector<2x1024xbf16> to vector<2x1024xf32>
    %c0_2 = arith.constant 0 : index
    %c0_3 = arith.constant 0 : index
    %5 = vector.load %arg2[%c0_2, %c0_3] : memref<1x1024xbf16, #tpu.memory_space<vmem>>, vector<1x1024xbf16>
    %6 = arith.extf %5 : vector<1x1024xbf16> to vector<1x1024xf32>
    %7 = vector.broadcast %6 : vector<1x1024xf32> to vector<2x1024xf32>
    %8 = arith.mulf %4, %7 : vector<2x1024xf32>
    %c0_4 = arith.constant 0 : index
    %c0_5 = arith.constant 0 : index
    %9 = vector.load %arg5[%c0_4, %c0_5] : memref<2x128xf32, #tpu.memory_space<vmem>>, vector<2x128xf32>
    %10 = vector.extract_strided_slice %8 {offsets = [0, 0], sizes = [2, 128], strides = [1, 1]} : vector<2x1024xf32> to vector<2x128xf32>
    %11 = arith.addf %9, %10 : vector<2x128xf32>
    %12 = vector.extract_strided_slice %8 {offsets = [0, 128], sizes = [2, 128], strides = [1, 1]} : vector<2x1024xf32> to vector<2x128xf32>
    %13 = arith.addf %11, %12 : vector<2x128xf32>
    %14 = vector.extract_strided_slice %8 {offsets = [0, 256], sizes = [2, 128], strides = [1, 1]} : vector<2x1024xf32> to vector<2x128xf32>
    %15 = arith.addf %13, %14 : vector<2x128xf32>
    %16 = vector.extract_strided_slice %8 {offsets = [0, 384], sizes = [2, 128], strides = [1, 1]} : vector<2x1024xf32> to vector<2x128xf32>
    %17 = arith.addf %15, %16 : vector<2x128xf32>
    %18 = vector.extract_strided_slice %8 {offsets = [0, 512], sizes = [2, 128], strides = [1, 1]} : vector<2x1024xf32> to vector<2x128xf32>
    %19 = arith.addf %17, %18 : vector<2x128xf32>
    %20 = vector.extract_strided_slice %8 {offsets = [0, 640], sizes = [2, 128], strides = [1, 1]} : vector<2x1024xf32> to vector<2x128xf32>
    %21 = arith.addf %19, %20 : vector<2x128xf32>
    %22 = vector.extract_strided_slice %8 {offsets = [0, 768], sizes = [2, 128], strides = [1, 1]} : vector<2x1024xf32> to vector<2x128xf32>
    %23 = arith.addf %21, %22 : vector<2x128xf32>
    %24 = vector.extract_strided_slice %8 {offsets = [0, 896], sizes = [2, 128], strides = [1, 1]} : vector<2x1024xf32> to vector<2x128xf32>
    %25 = arith.addf %23, %24 : vector<2x128xf32>
    %c0_6 = arith.constant 0 : index
    %c0_7 = arith.constant 0 : index
    %26 = vector.load %arg5[%c0_6, %c0_7] : memref<2x128xf32, #tpu.memory_space<vmem>>, vector<2x128xf32>
    tpu.vector_store %arg5[%c0_6, %c0_7], %25 {strides = array<i32>} : memref<2x128xf32, #tpu.memory_space<vmem>>, vector<2x128xf32>,
    %c0_i32_8 = arith.constant 0 : i32
    %27 = arith.cmpi eq, %arg0, %c0_i32_8 : i32
    %28 = arith.extui %27 : i1 to i32
    %c0_i32_9 = arith.constant 0 : i32
    %29 = arith.cmpi ne, %28, %c0_i32_9 : i32
    scf.if %29 {
      %c0_10 = arith.constant 0 : index
      %c0_11 = arith.constant 0 : index
      %30 = vector.load %arg5[%c0_10, %c0_11] : memref<2x128xf32, #tpu.memory_space<vmem>>, vector<2x128xf32>
      %cst = arith.constant dense<0.000000e+00> : vector<2xf32>
      %31 = vector.multi_reduction <add>, %30, %cst [1] : vector<2x128xf32> to vector<2xf32>
      %32 = vector.shape_cast %31 : vector<2xf32> to vector<2x1xf32>
      %c0_12 = arith.constant 0 : index
      %c0_13 = arith.constant 0 : index
      %33 = vector.load %arg3[%c0_12, %c0_13] : memref<1x1xf32, #tpu.memory_space<vmem>>, vector<1x1xf32>
      %34 = vector.broadcast %33 : vector<1x1xf32> to vector<2x1xf32>
      %35 = arith.addf %32, %34 : vector<2x1xf32>
      %cst_14 = arith.constant 0.000000e+00 : f32
      %36 = vector.broadcast %cst_14 : f32 to vector<2x1xf32>
      %37 = arith.subf %36, %35 : vector<2x1xf32>
      %38 = math.exp %37 : vector<2x1xf32>
      %cst_15 = arith.constant 1.000000e+00 : f32
      %39 = vector.broadcast %cst_15 : f32 to vector<2x1xf32>
      %40 = arith.addf %39, %38 : vector<2x1xf32>
      %cst_16 = arith.constant 1.000000e+00 : f32
      %41 = vector.broadcast %cst_16 : f32 to vector<2x1xf32>
      %42 = arith.divf %41, %40 : vector<2x1xf32>
      %c0_17 = arith.constant 0 : index
      %c0_18 = arith.constant 0 : index
      %43 = vector.load %arg4[%c0_17, %c0_18] : memref<2x1xf32, #tpu.memory_space<vmem>>, vector<2x1xf32>
      tpu.vector_store %arg4[%c0_17, %c0_18], %42 {strides = array<i32>} : memref<2x1xf32, #tpu.memory_space<vmem>>, vector<2x1xf32>,
    } else {
    }
    return
  }
  func.func @transform_0(%arg0: i32) -> (i32, i32) {
    %c0_i32 = arith.constant 0 : i32
    %c0_i32_0 = arith.constant 0 : i32
    return %c0_i32, %arg0 : i32, i32
  }
  func.func @transform_1(%arg0: i32) -> (i32, i32) {
    %c0_i32 = arith.constant 0 : i32
    %c0_i32_0 = arith.constant 0 : i32
    return %c0_i32, %arg0 : i32, i32
  }
  func.func @transform_2(%arg0: i32) -> (i32, i32) {
    %c0_i32 = arith.constant 0 : i32
    %c0_i32_0 = arith.constant 0 : i32
    %c0_i32_1 = arith.constant 0 : i32
    return %c0_i32, %c0_i32_0 : i32, i32
  }
  func.func @transform_3(%arg0: i32) -> (i32, i32) {
    %c0_i32 = arith.constant 0 : i32
    %c0_i32_0 = arith.constant 0 : i32
    %c0_i32_1 = arith.constant 0 : i32
    return %c0_i32, %c0_i32_0 : i32, i32
  }
}

module attributes {stable_mosaic.version = 11 : i64} {
  func.func @_conv_macro_kernel(%arg0: i32, %arg1: memref<1x3x3x512xbf16, #tpu.memory_space<vmem>>, %arg2: memref<4x512x256xbf16, #tpu.memory_space<vmem>>, %arg3: memref<1x256xf32, #tpu.memory_space<vmem>>, %arg4: memref<1x2x2x256xbf16, #tpu.memory_space<vmem>>) attributes {dimension_semantics = [#tpu.dimension_semantics<parallel>], iteration_bounds = array<i64: 2>, scalar_prefetch = 0 : i64, scratch_operands = 0 : i64, tpu.core_type = #tpu.core_type<tc>, window_params = [{transform_indices = @transform_0, window_bounds = array<i64: 1, 3, 3, 512>}, {pipeline_mode = #tpu.pipeline_mode<synchronous>, transform_indices = @transform_1, window_bounds = array<i64: 4, 512, 256>}, {pipeline_mode = #tpu.pipeline_mode<synchronous>, transform_indices = @transform_2, window_bounds = array<i64: 1, 256>}, {transform_indices = @transform_3, window_bounds = array<i64: 1, 2, 2, 256>}]} {
    %c0 = arith.constant 0 : index
    %c0_0 = arith.constant 0 : index
    %0 = vector.load %arg3[%c0, %c0_0] : memref<1x256xf32, #tpu.memory_space<vmem>>, vector<1x256xf32>
    %cst = arith.constant 0.000000e+00 : f32
    %1 = vector.broadcast %cst : f32 to vector<2x256xf32>
    %c0_1 = arith.constant 0 : index
    %c0_2 = arith.constant 0 : index
    %c0_3 = arith.constant 0 : index
    %c0_4 = arith.constant 0 : index
    %2 = vector.load %arg1[%c0_1, %c0_2, %c0_3, %c0_4] : memref<1x3x3x512xbf16, #tpu.memory_space<vmem>>, vector<1x1x2x512xbf16>
    %3 = vector.shape_cast %2 : vector<1x1x2x512xbf16> to vector<2x512xbf16>
    %c0_5 = arith.constant 0 : index
    %c0_6 = arith.constant 0 : index
    %c0_7 = arith.constant 0 : index
    %4 = vector.load %arg2[%c0_5, %c0_6, %c0_7] : memref<4x512x256xbf16, #tpu.memory_space<vmem>>, vector<1x512x256xbf16>
    %5 = vector.shape_cast %4 : vector<1x512x256xbf16> to vector<512x256xbf16>
    %cst_8 = arith.constant dense<0.000000e+00> : vector<2x256xf32>
    %6 = tpu.matmul %3, %5, %cst_8 {dimension_numbers = #tpu.dot_dimension_numbers<[1], [0], [0], [1], [0, 0, 1, 1], [], []>} : vector<2x512xbf16>, vector<512x256xbf16>, vector<2x256xf32> -> vector<2x256xf32>
    %7 = arith.addf %1, %6 : vector<2x256xf32>
    %c0_9 = arith.constant 0 : index
    %c0_10 = arith.constant 0 : index
    %c1 = arith.constant 1 : index
    %c0_11 = arith.constant 0 : index
    %8 = vector.load %arg1[%c0_9, %c0_10, %c1, %c0_11] : memref<1x3x3x512xbf16, #tpu.memory_space<vmem>>, vector<1x1x2x512xbf16>
    %9 = vector.shape_cast %8 : vector<1x1x2x512xbf16> to vector<2x512xbf16>
    %c1_12 = arith.constant 1 : index
    %c0_13 = arith.constant 0 : index
    %c0_14 = arith.constant 0 : index
    %10 = vector.load %arg2[%c1_12, %c0_13, %c0_14] : memref<4x512x256xbf16, #tpu.memory_space<vmem>>, vector<1x512x256xbf16>
    %11 = vector.shape_cast %10 : vector<1x512x256xbf16> to vector<512x256xbf16>
    %cst_15 = arith.constant dense<0.000000e+00> : vector<2x256xf32>
    %12 = tpu.matmul %9, %11, %cst_15 {dimension_numbers = #tpu.dot_dimension_numbers<[1], [0], [0], [1], [0, 0, 1, 1], [], []>} : vector<2x512xbf16>, vector<512x256xbf16>, vector<2x256xf32> -> vector<2x256xf32>
    %13 = arith.addf %7, %12 : vector<2x256xf32>
    %c0_16 = arith.constant 0 : index
    %c1_17 = arith.constant 1 : index
    %c0_18 = arith.constant 0 : index
    %c0_19 = arith.constant 0 : index
    %14 = vector.load %arg1[%c0_16, %c1_17, %c0_18, %c0_19] : memref<1x3x3x512xbf16, #tpu.memory_space<vmem>>, vector<1x1x2x512xbf16>
    %15 = vector.shape_cast %14 : vector<1x1x2x512xbf16> to vector<2x512xbf16>
    %c2 = arith.constant 2 : index
    %c0_20 = arith.constant 0 : index
    %c0_21 = arith.constant 0 : index
    %16 = vector.load %arg2[%c2, %c0_20, %c0_21] : memref<4x512x256xbf16, #tpu.memory_space<vmem>>, vector<1x512x256xbf16>
    %17 = vector.shape_cast %16 : vector<1x512x256xbf16> to vector<512x256xbf16>
    %cst_22 = arith.constant dense<0.000000e+00> : vector<2x256xf32>
    %18 = tpu.matmul %15, %17, %cst_22 {dimension_numbers = #tpu.dot_dimension_numbers<[1], [0], [0], [1], [0, 0, 1, 1], [], []>} : vector<2x512xbf16>, vector<512x256xbf16>, vector<2x256xf32> -> vector<2x256xf32>
    %19 = arith.addf %13, %18 : vector<2x256xf32>
    %c0_23 = arith.constant 0 : index
    %c1_24 = arith.constant 1 : index
    %c1_25 = arith.constant 1 : index
    %c0_26 = arith.constant 0 : index
    %20 = vector.load %arg1[%c0_23, %c1_24, %c1_25, %c0_26] : memref<1x3x3x512xbf16, #tpu.memory_space<vmem>>, vector<1x1x2x512xbf16>
    %21 = vector.shape_cast %20 : vector<1x1x2x512xbf16> to vector<2x512xbf16>
    %c3 = arith.constant 3 : index
    %c0_27 = arith.constant 0 : index
    %c0_28 = arith.constant 0 : index
    %22 = vector.load %arg2[%c3, %c0_27, %c0_28] : memref<4x512x256xbf16, #tpu.memory_space<vmem>>, vector<1x512x256xbf16>
    %23 = vector.shape_cast %22 : vector<1x512x256xbf16> to vector<512x256xbf16>
    %cst_29 = arith.constant dense<0.000000e+00> : vector<2x256xf32>
    %24 = tpu.matmul %21, %23, %cst_29 {dimension_numbers = #tpu.dot_dimension_numbers<[1], [0], [0], [1], [0, 0, 1, 1], [], []>} : vector<2x512xbf16>, vector<512x256xbf16>, vector<2x256xf32> -> vector<2x256xf32>
    %25 = arith.addf %19, %24 : vector<2x256xf32>
    %26 = vector.broadcast %0 : vector<1x256xf32> to vector<2x256xf32>
    %27 = arith.addf %25, %26 : vector<2x256xf32>
    %cst_30 = arith.constant 0.000000e+00 : f32
    %28 = vector.broadcast %cst_30 : f32 to vector<2x256xf32>
    %29 = arith.cmpf ogt, %27, %28 : vector<2x256xf32>
    %cst_31 = arith.constant 2.000000e-01 : f32
    %30 = vector.broadcast %cst_31 : f32 to vector<2x256xf32>
    %31 = arith.mulf %30, %27 : vector<2x256xf32>
    %32 = arith.select %29, %27, %31 : vector<2x256xi1>, vector<2x256xf32>
    %33 = arith.truncf %32 : vector<2x256xf32> to vector<2x256xbf16>
    %c0_32 = arith.constant 0 : index
    %c0_33 = arith.constant 0 : index
    %c0_34 = arith.constant 0 : index
    %c0_35 = arith.constant 0 : index
    %34 = vector.load %arg4[%c0_32, %c0_33, %c0_34, %c0_35] : memref<1x2x2x256xbf16, #tpu.memory_space<vmem>>, vector<1x1x2x256xbf16>
    %35 = vector.shape_cast %34 : vector<1x1x2x256xbf16> to vector<2x256xbf16>
    %36 = vector.shape_cast %33 : vector<2x256xbf16> to vector<1x1x2x256xbf16>
    tpu.vector_store %arg4[%c0_32, %c0_33, %c0_34, %c0_35], %36 {strides = array<i32>} : memref<1x2x2x256xbf16, #tpu.memory_space<vmem>>, vector<1x1x2x256xbf16>,
    %cst_36 = arith.constant 0.000000e+00 : f32
    %37 = vector.broadcast %cst_36 : f32 to vector<2x256xf32>
    %c0_37 = arith.constant 0 : index
    %c1_38 = arith.constant 1 : index
    %c0_39 = arith.constant 0 : index
    %c0_40 = arith.constant 0 : index
    %38 = vector.load %arg1[%c0_37, %c1_38, %c0_39, %c0_40] : memref<1x3x3x512xbf16, #tpu.memory_space<vmem>>, vector<1x1x2x512xbf16>
    %39 = vector.shape_cast %38 : vector<1x1x2x512xbf16> to vector<2x512xbf16>
    %c0_41 = arith.constant 0 : index
    %c0_42 = arith.constant 0 : index
    %c0_43 = arith.constant 0 : index
    %40 = vector.load %arg2[%c0_41, %c0_42, %c0_43] : memref<4x512x256xbf16, #tpu.memory_space<vmem>>, vector<1x512x256xbf16>
    %41 = vector.shape_cast %40 : vector<1x512x256xbf16> to vector<512x256xbf16>
    %cst_44 = arith.constant dense<0.000000e+00> : vector<2x256xf32>
    %42 = tpu.matmul %39, %41, %cst_44 {dimension_numbers = #tpu.dot_dimension_numbers<[1], [0], [0], [1], [0, 0, 1, 1], [], []>} : vector<2x512xbf16>, vector<512x256xbf16>, vector<2x256xf32> -> vector<2x256xf32>
    %43 = arith.addf %37, %42 : vector<2x256xf32>
    %c0_45 = arith.constant 0 : index
    %c1_46 = arith.constant 1 : index
    %c1_47 = arith.constant 1 : index
    %c0_48 = arith.constant 0 : index
    %44 = vector.load %arg1[%c0_45, %c1_46, %c1_47, %c0_48] : memref<1x3x3x512xbf16, #tpu.memory_space<vmem>>, vector<1x1x2x512xbf16>
    %45 = vector.shape_cast %44 : vector<1x1x2x512xbf16> to vector<2x512xbf16>
    %c1_49 = arith.constant 1 : index
    %c0_50 = arith.constant 0 : index
    %c0_51 = arith.constant 0 : index
    %46 = vector.load %arg2[%c1_49, %c0_50, %c0_51] : memref<4x512x256xbf16, #tpu.memory_space<vmem>>, vector<1x512x256xbf16>
    %47 = vector.shape_cast %46 : vector<1x512x256xbf16> to vector<512x256xbf16>
    %cst_52 = arith.constant dense<0.000000e+00> : vector<2x256xf32>
    %48 = tpu.matmul %45, %47, %cst_52 {dimension_numbers = #tpu.dot_dimension_numbers<[1], [0], [0], [1], [0, 0, 1, 1], [], []>} : vector<2x512xbf16>, vector<512x256xbf16>, vector<2x256xf32> -> vector<2x256xf32>
    %49 = arith.addf %43, %48 : vector<2x256xf32>
    %c0_53 = arith.constant 0 : index
    %c2_54 = arith.constant 2 : index
    %c0_55 = arith.constant 0 : index
    %c0_56 = arith.constant 0 : index
    %50 = vector.load %arg1[%c0_53, %c2_54, %c0_55, %c0_56] : memref<1x3x3x512xbf16, #tpu.memory_space<vmem>>, vector<1x1x2x512xbf16>
    %51 = vector.shape_cast %50 : vector<1x1x2x512xbf16> to vector<2x512xbf16>
    %c2_57 = arith.constant 2 : index
    %c0_58 = arith.constant 0 : index
    %c0_59 = arith.constant 0 : index
    %52 = vector.load %arg2[%c2_57, %c0_58, %c0_59] : memref<4x512x256xbf16, #tpu.memory_space<vmem>>, vector<1x512x256xbf16>
    %53 = vector.shape_cast %52 : vector<1x512x256xbf16> to vector<512x256xbf16>
    %cst_60 = arith.constant dense<0.000000e+00> : vector<2x256xf32>
    %54 = tpu.matmul %51, %53, %cst_60 {dimension_numbers = #tpu.dot_dimension_numbers<[1], [0], [0], [1], [0, 0, 1, 1], [], []>} : vector<2x512xbf16>, vector<512x256xbf16>, vector<2x256xf32> -> vector<2x256xf32>
    %55 = arith.addf %49, %54 : vector<2x256xf32>
    %c0_61 = arith.constant 0 : index
    %c2_62 = arith.constant 2 : index
    %c1_63 = arith.constant 1 : index
    %c0_64 = arith.constant 0 : index
    %56 = vector.load %arg1[%c0_61, %c2_62, %c1_63, %c0_64] : memref<1x3x3x512xbf16, #tpu.memory_space<vmem>>, vector<1x1x2x512xbf16>
    %57 = vector.shape_cast %56 : vector<1x1x2x512xbf16> to vector<2x512xbf16>
    %c3_65 = arith.constant 3 : index
    %c0_66 = arith.constant 0 : index
    %c0_67 = arith.constant 0 : index
    %58 = vector.load %arg2[%c3_65, %c0_66, %c0_67] : memref<4x512x256xbf16, #tpu.memory_space<vmem>>, vector<1x512x256xbf16>
    %59 = vector.shape_cast %58 : vector<1x512x256xbf16> to vector<512x256xbf16>
    %cst_68 = arith.constant dense<0.000000e+00> : vector<2x256xf32>
    %60 = tpu.matmul %57, %59, %cst_68 {dimension_numbers = #tpu.dot_dimension_numbers<[1], [0], [0], [1], [0, 0, 1, 1], [], []>} : vector<2x512xbf16>, vector<512x256xbf16>, vector<2x256xf32> -> vector<2x256xf32>
    %61 = arith.addf %55, %60 : vector<2x256xf32>
    %62 = vector.broadcast %0 : vector<1x256xf32> to vector<2x256xf32>
    %63 = arith.addf %61, %62 : vector<2x256xf32>
    %cst_69 = arith.constant 0.000000e+00 : f32
    %64 = vector.broadcast %cst_69 : f32 to vector<2x256xf32>
    %65 = arith.cmpf ogt, %63, %64 : vector<2x256xf32>
    %cst_70 = arith.constant 2.000000e-01 : f32
    %66 = vector.broadcast %cst_70 : f32 to vector<2x256xf32>
    %67 = arith.mulf %66, %63 : vector<2x256xf32>
    %68 = arith.select %65, %63, %67 : vector<2x256xi1>, vector<2x256xf32>
    %69 = arith.truncf %68 : vector<2x256xf32> to vector<2x256xbf16>
    %c0_71 = arith.constant 0 : index
    %c1_72 = arith.constant 1 : index
    %c0_73 = arith.constant 0 : index
    %c0_74 = arith.constant 0 : index
    %70 = vector.load %arg4[%c0_71, %c1_72, %c0_73, %c0_74] : memref<1x2x2x256xbf16, #tpu.memory_space<vmem>>, vector<1x1x2x256xbf16>
    %71 = vector.shape_cast %70 : vector<1x1x2x256xbf16> to vector<2x256xbf16>
    %72 = vector.shape_cast %69 : vector<2x256xbf16> to vector<1x1x2x256xbf16>
    tpu.vector_store %arg4[%c0_71, %c1_72, %c0_73, %c0_74], %72 {strides = array<i32>} : memref<1x2x2x256xbf16, #tpu.memory_space<vmem>>, vector<1x1x2x256xbf16>,
    return
  }
  func.func @transform_0(%arg0: i32) -> (i32, i32, i32, i32) {
    %c0_i32 = arith.constant 0 : i32
    %c0_i32_0 = arith.constant 0 : i32
    %c0_i32_1 = arith.constant 0 : i32
    %c0_i32_2 = arith.constant 0 : i32
    return %arg0, %c0_i32, %c0_i32_0, %c0_i32_1 : i32, i32, i32, i32
  }
  func.func @transform_1(%arg0: i32) -> (i32, i32, i32) {
    %c0_i32 = arith.constant 0 : i32
    %c0_i32_0 = arith.constant 0 : i32
    %c0_i32_1 = arith.constant 0 : i32
    %c0_i32_2 = arith.constant 0 : i32
    return %c0_i32, %c0_i32_0, %c0_i32_1 : i32, i32, i32
  }
  func.func @transform_2(%arg0: i32) -> (i32, i32) {
    %c0_i32 = arith.constant 0 : i32
    %c0_i32_0 = arith.constant 0 : i32
    %c0_i32_1 = arith.constant 0 : i32
    return %c0_i32, %c0_i32_0 : i32, i32
  }
  func.func @transform_3(%arg0: i32) -> (i32, i32, i32, i32) {
    %c0_i32 = arith.constant 0 : i32
    %c0_i32_0 = arith.constant 0 : i32
    %c0_i32_1 = arith.constant 0 : i32
    %c0_i32_2 = arith.constant 0 : i32
    return %arg0, %c0_i32, %c0_i32_0, %c0_i32_1 : i32, i32, i32, i32
  }
}

</mosaic_0001>

<llo_original>
// kernel: discriminator_forward.7
$region0: #{discriminator_forward.7}
  #allocation0 [shape = 'u32[]', space=smem, size = 0x4, offset = 0x4, fixed_abs, tag = 'smem constant byte address 0x4 - core index']
  #allocation1 [shape = 'u32[144,128]{1,0:T(1,128)}', space=vmem, size = 0x12000, scoped, tag = 'internal scratch']
  #allocation2 [shape = 'f32[2,128]{1,0:T(2,128)}', space=vmem, size = 0x400, scoped, tag = 'scratch operand']
  #allocation3 [shape = 'f32[1,1]{1,0:T(1,128)S(1)}', space=vmem, size = 0x200, scoped, tag = 'scoped memory for discriminator_forward.7']
  %s0 = inlined_call_operand.vmem [shape: bf16[2,1024], index: 0, kind: input, shape index: {}]
  %s1 = inlined_call_operand.vmem [shape: bf16[1,1024], index: 1, kind: input, shape index: {}]
  %s2 = inlined_call_operand.<no memory space> [shape: f32[1,1], index: 2, kind: input, shape index: {}]
  %s3 = inlined_call_operand.vmem [shape: f32[2,1], index: 3, kind: output, shape index: {}]
  %s4 = sld [smem:[#allocation0]]
  $region30: #{discriminator_forward.7} parent=0
    _
  %s6 = ssub.s32 1, %s4
  %s7 = scalar_select 0, %s6, %s4
  %v8 = vstv %s2
  %9 = vst [vmem:[#allocation3] sm:$0x1] %v8
  // Predicated region
  $region2: #{discriminator_forward.7} parent=0 // pred_check
    _
  $region3: #{discriminator_forward.7} parent=0 // pred_check_branch
    %11 = sbr.rel (0) target = $region5
  $region4: #{discriminator_forward.7} parent=0 // pred_region
    _
  $region5: #{discriminator_forward.7} parent=0 // pred_fallthru
    _
  // Predicated region
  $region6: #{discriminator_forward.7} parent=0 // pred_check
    _
  $region7: #{discriminator_forward.7} parent=0 // pred_check_branch
    %13 = sbr.rel (0) target = $region9
  $region8: #{discriminator_forward.7} parent=0 // pred_region
    _
  $region9: #{discriminator_forward.7} parent=0 // pred_fallthru
    _
  // Predicated region
  $region10: #{discriminator_forward.7} parent=0 // pred_check
    _
  $region11: #{discriminator_forward.7} parent=0 // pred_check_branch
    %15 = sbr.rel (0) target = $region13
  $region12: #{discriminator_forward.7} parent=0 // pred_region
    _
  $region13: #{discriminator_forward.7} parent=0 // pred_fallthru
    _
  %p16 = scmp.eq.s32.totalorder 0, 0
  // Predicated region
  $region14: #{discriminator_forward.7} parent=0 // pred_check
    %p17 = pneg %p16
  $region15: #{discriminator_forward.7} parent=0 // pred_check_branch
    %19 = sbr.rel (%p17) target = $region17
  $region16: #{discriminator_forward.7} parent=0 // pred_region
    %20 = vst [vmem:[#allocation2] sm:$0x3] 0.0
    %vm21 = vcmask 1024
    %22 = vst.msk [vmem:[%s3] sm:$0x3] %vm21, 0.0
  $region17: #{discriminator_forward.7} parent=0 // pred_fallthru
    _
  %v23 = vld [vmem:[%s0] sm:$0xff]
  %v24 = vunpack.c.l.bf16 %v23
  %v25 = vunpack.c.h.bf16 %v23
  %v26 = vld [vmem:[%s1] sm:$0xff]
  %v27 = vunpack.c.l.bf16 %v26
  %v28 = vunpack.c.h.bf16 %v26
  %v31 = vlaneseq
  %v32 = vshrl.u32 %v31, 7
  %v33 = vsub.s32 0, %v32
  %v34 = vrot.slane %v27, %v33
  %v35 = vlaneseq
  %v36 = vshrl.u32 %v35, 7
  %v37 = vsub.s32 2, %v36
  %v38 = vrot.slane %v27, %v37
  %v39 = vlaneseq
  %v40 = vshrl.u32 %v39, 7
  %v41 = vsub.s32 4, %v40
  %v42 = vrot.slane %v27, %v41
  %v43 = vlaneseq
  %v44 = vshrl.u32 %v43, 7
  %v45 = vsub.s32 6, %v44
  %v46 = vrot.slane %v27, %v45
  %v47 = vlaneseq
  %v48 = vshrl.u32 %v47, 7
  %v49 = vsub.s32 0, %v48
  %v50 = vrot.slane %v28, %v49
  %v51 = vlaneseq
  %v52 = vshrl.u32 %v51, 7
  %v53 = vsub.s32 2, %v52
  %v54 = vrot.slane %v28, %v53
  %v55 = vlaneseq
  %v56 = vshrl.u32 %v55, 7
  %v57 = vsub.s32 4, %v56
  %v58 = vrot.slane %v28, %v57
  %v59 = vlaneseq
  %v60 = vshrl.u32 %v59, 7
  %v61 = vsub.s32 6, %v60
  %v62 = vrot.slane %v28, %v61
  %v71 = vlaneseq
  %v72 = vshrl.u32 %v71, 7
  %v73 = vsub.s32 0, %v72
  %v74 = vrot.slane %v34, %v73
  %v75 = vlaneseq
  %v76 = vshrl.u32 %v75, 7
  %v77 = vsub.s32 0, %v76
  %v78 = vrot.slane %v38, %v77
  %v79 = vlaneseq
  %v80 = vshrl.u32 %v79, 7
  %v81 = vsub.s32 0, %v80
  %v82 = vrot.slane %v42, %v81
  %v83 = vlaneseq
  %v84 = vshrl.u32 %v83, 7
  %v85 = vsub.s32 0, %v84
  %v86 = vrot.slane %v46, %v85
  %v87 = vlaneseq
  %v88 = vshrl.u32 %v87, 7
  %v89 = vsub.s32 0, %v88
  %v90 = vrot.slane %v50, %v89
  %v91 = vlaneseq
  %v92 = vshrl.u32 %v91, 7
  %v93 = vsub.s32 0, %v92
  %v94 = vrot.slane %v54, %v93
  %v95 = vlaneseq
  %v96 = vshrl.u32 %v95, 7
  %v97 = vsub.s32 0, %v96
  %v98 = vrot.slane %v58, %v97
  %v99 = vlaneseq
  %v100 = vshrl.u32 %v99, 7
  %v101 = vsub.s32 0, %v100
  %v102 = vrot.slane %v62, %v101
  %v111 = vcombine.low %v74, %v78
  %v112 = vcombine.low %v82, %v86
  %v114 = vunpack.c.l.s4 1983009808
  %v115 = vunpack.c.0.s8 %v114
  %v116 = vlaneseq
  %v117 = vshrl.u32 %v116, 7
  %v118 = vsub.s32 %v115, %v117
  %v119 = vrot.slane %v111, %v118
  %v121 = vunpack.c.l.s4 1983009808
  %v122 = vunpack.c.0.s8 %v121
  %v123 = vlaneseq
  %v124 = vshrl.u32 %v123, 7
  %v125 = vsub.s32 %v122, %v124
  %v126 = vrot.slane %v112, %v125
  %v127 = vcombine.low %v119, %v126
  %v128 = vcombine.low %v90, %v94
  %v129 = vcombine.low %v98, %v102
  %v131 = vunpack.c.l.s4 1983009808
  %v132 = vunpack.c.0.s8 %v131
  %v133 = vlaneseq
  %v134 = vshrl.u32 %v133, 7
  %v135 = vsub.s32 %v132, %v134
  %v136 = vrot.slane %v128, %v135
  %v138 = vunpack.c.l.s4 1983009808
  %v139 = vunpack.c.0.s8 %v138
  %v140 = vlaneseq
  %v141 = vshrl.u32 %v140, 7
  %v142 = vsub.s32 %v139, %v141
  %v143 = vrot.slane %v129, %v142
  %v144 = vcombine.low %v136, %v143
  %v147 = vmul.f32 %v24, %v127
  %v148 = vmul.f32 %v25, %v144
  %v149 = vld [vmem:[#allocation2] sm:$0x3]
  %v150 = vadd.f32 %v149, %v147
  %v153 = vunpack.c.l.s4 1983009808
  %v154 = vunpack.c.0.s8 %v153
  %v155 = vlaneseq
  %v156 = vshrl.u32 %v155, 7
  %v157 = vsub.s32 %v154, %v156
  %v158 = vrot.slane %v147, %v157
  %v159 = vcombine.high %v158, %v158
  %v161 = vadd.f32 %v150, %v159
  %v162 = vcombine.high %v147, %v147
  %v164 = vunpack.c.l.s4 1983009808
  %v165 = vunpack.c.0.s8 %v164
  %v166 = vlaneseq
  %v167 = vshrl.u32 %v166, 7
  %v168 = vsub.s32 %v165, %v167
  %v169 = vrot.slane %v162, %v168
  %v171 = vadd.f32 %v161, %v169
  %v172 = vcombine.high %v169, %v169
  %v174 = vadd.f32 %v171, %v172
  %v175 = vadd.f32 %v174, %v148
  %v178 = vunpack.c.l.s4 1983009808
  %v179 = vunpack.c.0.s8 %v178
  %v180 = vlaneseq
  %v181 = vshrl.u32 %v180, 7
  %v182 = vsub.s32 %v179, %v181
  %v183 = vrot.slane %v148, %v182
  %v184 = vcombine.high %v183, %v183
  %v186 = vadd.f32 %v175, %v184
  %v187 = vcombine.high %v148, %v148
  %v189 = vunpack.c.l.s4 1983009808
  %v190 = vunpack.c.0.s8 %v189
  %v191 = vlaneseq
  %v192 = vshrl.u32 %v191, 7
  %v193 = vsub.s32 %v190, %v192
  %v194 = vrot.slane %v187, %v193
  %v196 = vadd.f32 %v186, %v194
  %v197 = vcombine.high %v194, %v194
  %v199 = vadd.f32 %v196, %v197
  %200 = vst [vmem:[#allocation2] sm:$0x3] %v199
  // Predicated region
  $region18: #{discriminator_forward.7} parent=0 // pred_check
    %p201 = pneg %p16
  $region19: #{discriminator_forward.7} parent=0 // pred_check_branch
    %203 = sbr.rel (%p201) target = $region21
  $region20: #{discriminator_forward.7} parent=0 // pred_region
    %v204 = vld [vmem:[#allocation2] sm:$0x3]
    %vm205 = vcmask 1041408
    %v206 = vsel %vm205, %v204, 0.0
    %207 = vadd.xlane.f32.xlu0 %v206
    %v208 = vpop.xlane.xlu0 %207
    %v209 = vld [vmem:[#allocation3] sm:$0x1]
    %v211 = vlaneseq
    %v212 = vshrl.u32 %v211, 7
    %v213 = vsub.s32 0, %v212
    %v214 = vrot.slane %v209, %v213
    %v216 = vadd.f32 %v208, %v214
    %v217 = vsub.f32 0.0, %v216
    %v218 = vmul.f32 %v217, 1.442695
    %v219 = vpow.pop %v218
    %v220 = vadd.f32 %v219, 1.0
    %v221 = vrcp.pop %v220
    %v222 = vmul.f32 1.0, %v221
    %vm223 = vcmask 1024
    %224 = vst.msk [vmem:[%s3] sm:$0x3] %vm223, %v222
  $region21: #{discriminator_forward.7} parent=0 // pred_fallthru
    _
  // Predicated region
  $region22: #{discriminator_forward.7} parent=0 // pred_check
    _
  $region23: #{discriminator_forward.7} parent=0 // pred_check_branch
    %226 = sbr.rel (0) target = $region25
  $region24: #{discriminator_forward.7} parent=0 // pred_region
    _
  $region25: #{discriminator_forward.7} parent=0 // pred_fallthru
    _
  // Predicated region
  $region26: #{discriminator_forward.7} parent=0 // pred_check
    _
  $region27: #{discriminator_forward.7} parent=0 // pred_check_branch
    %228 = sbr.rel (0) target = $region29
  $region28: #{discriminator_forward.7} parent=0 // pred_region
    _
  $region29: #{discriminator_forward.7} parent=0 // pred_fallthru
    _

// kernel: discriminator_forward.4
$region0: #{discriminator_forward.4}
  #allocation0 [shape = 'u32[]', space=smem, size = 0x4, offset = 0x4, fixed_abs, tag = 'smem constant byte address 0x4 - core index']
  #allocation1 [shape = 'u32[144,128]{1,0:T(1,128)}', space=vmem, size = 0x12000, scoped, tag = 'internal scratch']
  %s0 = inlined_call_operand.vmem [shape: bf16[2,9,9,4], index: 0, kind: input, shape index: {}]
  %s1 = inlined_call_operand.vmem [shape: bf16[4,4,64], index: 1, kind: input, shape index: {}]
  %s2 = inlined_call_operand.vmem [shape: f32[1,64], index: 2, kind: input, shape index: {}]
  %s3 = inlined_call_operand.vmem [shape: bf16[2,8,8,64], index: 3, kind: output, shape index: {}]
  %s4 = sld [smem:[#allocation0]]
  $region45: #{discriminator_forward.4} parent=0
    _
  %s6 = ssub.s32 1, %s4
  %s7 = scalar_select 0, %s6, %s4
  loop: start=0, step=1, limit=4
  $region2: #{discriminator_forward.4} parent=0 // loop_pre_header
    _
  $region3: #{discriminator_forward.4} parent=0 // loop_header
    %s9 = sphi 0, %s13
    %p10 = scmp.ge.s32.totalorder %s9, 4
    %s19 = sphi 0, %s21
    %s22 = sphi 0, %s19
    %s23 = sphi 0, %s22
    %s39 = sphi 0, %s23
    %s43 = sphi 0, %s43
    %s45 = sphi 0, %s43
    %s46 = sphi 0, %s45
    %s60 = sphi 0, %s46
    %s64 = sphi 0, %s64
    %s66 = sphi 0, %s64
    %s67 = sphi 0, %s66
    %s81 = sphi 0, %s67
    %s87 = sphi 0, %s89
    %s90 = sphi 0, %s87
    %s91 = sphi 0, %s90
    %s107 = sphi 0, %s91
  $region4: #{discriminator_forward.4} parent=0 // loop_header_branch
    %12 = sbr.rel (%p10) target = $region8
  $region5: #{discriminator_forward.4} parent=0 // loop_body
    %s14 = ssub.s32 %s9, 1
    %s15 = ssub.s32 %s9, 2
    %s16 = sadd.s32 %s9, 1
    %s17 = ssub.s32 %s9, %s16
    %p18 = scmp.eq.s32.totalorder %s17, 0
    %s20 = sadd.s32 %s19, 1
    %s21 = scalar_select %p18, %s19, %s20
    %p24 = pneg %p18
    %p25 = scmp.eq.s32.totalorder %s9, 1
    %p26 = por %p24, %p25
    %p27 = scmp.ne.s32.totalorder %s19, %s22
    %p28 = scmp.eq.s32.totalorder %s9, 0
    %p29 = por %p27, %p28
    %p30 = scmp.ne.s32.totalorder %s19, %s22
    %p31 = scmp.eq.s32.totalorder %s14, 1
    %p32 = por %p30, %p31
    %p33 = scmp.ne.s32.totalorder %s22, %s23
    %p34 = scmp.eq.s32.totalorder %s14, 0
    %p35 = por %p33, %p34
    %p36 = scmp.ne.s32.totalorder %s22, %s23
    %p37 = scmp.eq.s32.totalorder %s15, 1
    %p38 = por %p36, %p37
    %p40 = scmp.ne.s32.totalorder %s23, %s39
    %p41 = scmp.eq.s32.totalorder %s15, 0
    %p42 = por %p40, %p41
    %s44 = sadd.s32 %s43, 1
    %p47 = scmp.eq.s32.totalorder %s9, 1
    %p48 = scmp.ne.s32.totalorder %s43, %s45
    %p49 = scmp.eq.s32.totalorder %s9, 0
    %p50 = por %p48, %p49
    %p51 = scmp.ne.s32.totalorder %s43, %s45
    %p52 = scmp.eq.s32.totalorder %s14, 1
    %p53 = por %p51, %p52
    %p54 = scmp.ne.s32.totalorder %s45, %s46
    %p55 = scmp.eq.s32.totalorder %s14, 0
    %p56 = por %p54, %p55
    %p57 = scmp.ne.s32.totalorder %s45, %s46
    %p58 = scmp.eq.s32.totalorder %s15, 1
    %p59 = por %p57, %p58
    %p61 = scmp.ne.s32.totalorder %s46, %s60
    %p62 = scmp.eq.s32.totalorder %s15, 0
    %p63 = por %p61, %p62
    %s65 = sadd.s32 %s64, 1
    %p68 = scmp.eq.s32.totalorder %s9, 1
    %p69 = scmp.ne.s32.totalorder %s64, %s66
    %p70 = scmp.eq.s32.totalorder %s9, 0
    %p71 = por %p69, %p70
    %p72 = scmp.ne.s32.totalorder %s64, %s66
    %p73 = scmp.eq.s32.totalorder %s14, 1
    %p74 = por %p72, %p73
    %p75 = scmp.ne.s32.totalorder %s66, %s67
    %p76 = scmp.eq.s32.totalorder %s14, 0
    %p77 = por %p75, %p76
    %p78 = scmp.ne.s32.totalorder %s66, %s67
    %p79 = scmp.eq.s32.totalorder %s15, 1
    %p80 = por %p78, %p79
    %p82 = scmp.ne.s32.totalorder %s67, %s81
    %p83 = scmp.eq.s32.totalorder %s15, 0
    %p84 = por %p82, %p83
    %s85 = ssub.s32 %s9, %s16
    %p86 = scmp.eq.s32.totalorder %s85, 0
    %s88 = sadd.s32 %s87, 1
    %s89 = scalar_select %p86, %s87, %s88
    %p92 = pneg %p86
    %p93 = scmp.eq.s32.totalorder %s9, 1
    %p94 = por %p92, %p93
    %p95 = scmp.ne.s32.totalorder %s87, %s90
    %p96 = scmp.eq.s32.totalorder %s9, 0
    %p97 = por %p95, %p96
    %p98 = scmp.ne.s32.totalorder %s87, %s90
    %p99 = scmp.eq.s32.totalorder %s14, 1
    %p100 = por %p98, %p99
    %p101 = scmp.ne.s32.totalorder %s90, %s91
    %p102 = scmp.eq.s32.totalorder %s14, 0
    %p103 = por %p101, %p102
    %p104 = scmp.ne.s32.totalorder %s90, %s91
    %p105 = scmp.eq.s32.totalorder %s15, 1
    %p106 = por %p104, %p105
    %p108 = scmp.ne.s32.totalorder %s91, %s107
    %p109 = scmp.eq.s32.totalorder %s15, 0
    %p110 = por %p108, %p109
    %p111 = scmp.le.s32.totalorder 1, %s9
    %p112 = scmp.lt.s32.totalorder %s9, 3
    %p113 = pnand %p111, %p112
    %p114 = pneg %p113
    // Predicated region
    $region9: #{discriminator_forward.4} parent=5 // pred_check
      _
    $region10: #{discriminator_forward.4} parent=5 // pred_check_branch
      %116 = sbr.rel (%p113) target = $region12
    $region11: #{discriminator_forward.4} parent=5 // pred_region
      %s117 = ssub.s32 %s9, 1
      // Predicated region
      $region13: #{discriminator_forward.4} parent=11 // pred_check
        %p118 = pneg %p56
      $region14: #{discriminator_forward.4} parent=11 // pred_check_branch
        %120 = sbr.rel (%p118) target = $region16
      $region15: #{discriminator_forward.4} parent=11 // pred_region
        _
      $region16: #{discriminator_forward.4} parent=11 // pred_fallthru
        _
      // Predicated region
      $region17: #{discriminator_forward.4} parent=11 // pred_check
        %p121 = pneg %p77
      $region18: #{discriminator_forward.4} parent=11 // pred_check_branch
        %123 = sbr.rel (%p121) target = $region20
      $region19: #{discriminator_forward.4} parent=11 // pred_region
        _
      $region20: #{discriminator_forward.4} parent=11 // pred_fallthru
        _
    $region12: #{discriminator_forward.4} parent=5 // pred_fallthru
      _
    %p124 = scmp.lt.s32.totalorder %s9, 2
    // Predicated region
    $region21: #{discriminator_forward.4} parent=5 // pred_check
      %p125 = pneg %p124
    $region22: #{discriminator_forward.4} parent=5 // pred_check_branch
      %127 = sbr.rel (%p125) target = $region24
    $region23: #{discriminator_forward.4} parent=5 // pred_region
      // Predicated region
      $region25: #{discriminator_forward.4} parent=23 // pred_check
        %p128 = pneg %p29
      $region26: #{discriminator_forward.4} parent=23 // pred_check_branch
        %130 = sbr.rel (%p128) target = $region28
      $region27: #{discriminator_forward.4} parent=23 // pred_region
        %p131 = scmp.lt.s32.totalorder %s9, 1
        %s132 = scalar_select %p131, %s9, 1
        %s133 = smul.addr %s132, 18
        %s134 = smul.addr %s133, 4
        %s135 = scalar_lea.vmem %s0, %s134
      $region28: #{discriminator_forward.4} parent=23 // pred_fallthru
        _
    $region24: #{discriminator_forward.4} parent=5 // pred_fallthru
      _
    %p136 = scmp.le.s32.totalorder 1, %s9
    %p137 = scmp.lt.s32.totalorder %s9, 3
    %p138 = pnand %p136, %p137
    %p139 = pneg %p138
    // Predicated region
    $region29: #{discriminator_forward.4} parent=5 // pred_check
      _
    $region30: #{discriminator_forward.4} parent=5 // pred_check_branch
      %141 = sbr.rel (%p138) target = $region32
    $region31: #{discriminator_forward.4} parent=5 // pred_region
      %s142 = ssub.s32 %s9, 1
      %p143 = scmp.lt.s32.totalorder %s14, 1
      %s144 = scalar_select %p143, %s14, 1
      %s145 = smul.addr %s144, 18
      %s146 = smul.addr %s145, 4
      %s147 = scalar_lea.vmem %s0, %s146
      %p148 = pneg %p35
      %p149 = pneg %p32
      %p150 = pneg %p56
      %p151 = pneg %p53
      %p152 = pneg %p77
      %p153 = pneg %p74
      %p154 = pneg %p103
      %p155 = pneg %p100
      %p156 = scmp.lt.s32.totalorder %s14, 1
      %s157 = scalar_select %p156, %s14, 1
      %s158 = smul.addr %s157, 8
      %s159 = smul.addr %s158, 4
      %s160 = scalar_lea.vmem %s3, %s159
      %p161 = scmp.lt.s32.totalorder %s14, 1
      %s162 = scalar_select %p161, %s14, 1
      %s163 = smul.addr %s162, 18
      %s164 = smul.addr %s163, 4
      %s165 = scalar_lea.vmem %s0, %s164
      %p166 = scmp.lt.s32.totalorder %s14, 1
      %s167 = scalar_select %p166, %s14, 1
      %s168 = smul.addr %s167, 8
      %s169 = smul.addr %s168, 4
      %s170 = scalar_lea.vmem %s3, %s169
      %v172 = vld [vmem:[%s2] sm:$0x1]
      %v173 = vld [vmem:[%s165] sm:$0xf]
      %v174 = vld [vmem:[%s1] sm:$0x3]
      %v175 = vld [vmem:[%s165 + $0x4] sm:$0x1]
      %s176 = scalar_lea.vmem %s1, 2
      %v177 = vld [vmem:[%s176] sm:$0x3]
      %v180 = vunpack.c.l.b16 %v173
      %v181 = vunpack.c.l.b16 %v175
      %v182 = vpack.c.b16 %v181, %v180
      %v184 = vshrl.u32 %v182, 16
      %v186 = vshll.u32 %v182, 16
      %v188 = vrot.slane %v186, 1
      %v189 = vor.u32 %v184, %v188
      %vm190 = vcmask 31744
      %v192 = vsel %vm190, %v189, 0
      %vm194 = vcmask 1041408
      %v196 = vsel %vm194, %v177, 0
      %198 = vmatprep.subr.bf16.mxu0 0
      %199 = vmatpush1.bf16.msra.mxu0 %v196
      %200 = vmatprep.subr.bf16.mxu0 0
      %201 = vmatpush1.bf16.msra.mxu0 0
      %202 = vmatprep.subr.bf16.mxu0 0
      %203 = vmatpush1.bf16.msra.mxu0 0
      %204 = vmatprep.subr.bf16.mxu0 0
      %205 = vmatpush1.bf16.msra.mxu0 0
      %206 = vmatprep.subr.bf16.mxu0 0
      %207 = vmatpush1.bf16.msra.mxu0 0
      %208 = vmatprep.subr.bf16.mxu0 0
      %209 = vmatpush1.bf16.msra.mxu0 0
      %210 = vmatprep.subr.bf16.mxu0 0
      %211 = vmatpush1.bf16.msra.mxu0 0
      %212 = vmatprep.subr.bf16.mxu0 0
      %213 = vmatpush1.bf16.msra.mxu0 0
      %214 = vmatprep.subr.bf16.mxu0 0
      %215 = vmatpush1.bf16.msra.mxu0 0
      %216 = vmatprep.subr.bf16.mxu0 0
      %217 = vmatpush1.bf16.msra.mxu0 0
      %218 = vmatprep.subr.bf16.mxu0 0
      %219 = vmatpush1.bf16.msra.mxu0 0
      %220 = vmatprep.subr.bf16.mxu0 0
      %221 = vmatpush1.bf16.msra.mxu0 0
      %222 = vmatprep.subr.bf16.mxu0 0
      %223 = vmatpush1.bf16.msra.mxu0 0
      %224 = vmatprep.subr.bf16.mxu0 0
      %225 = vmatpush1.bf16.msra.mxu0 0
      %226 = vmatprep.subr.bf16.mxu0 0
      %227 = vmatpush1.bf16.msra.mxu0 0
      %228 = vmatprep.subr.bf16.mxu0 0
      %229 = vmatpush1.bf16.msra.mxu0 0
      %230 = vmatprep.mubr.bf16.mxu0 0
      %231 = vmatmul.mubr.bf16.gmra.mrb[0].mxu0 %v192
      %v232 = vpop.f32.mrb[0].mxu0
      %v233 = vadd.f32 0.0, %v232
      %v234 = vpop.f32.mrb[0].mxu0
      %v235 = vpop.f32.mrb[0].mxu0
      %v236 = vpop.f32.mrb[0].mxu0
      %237 = vdwg.mxu0
      %v239 = vsel %vm190, %v173, 0
      %v242 = vsel %vm194, %v174, 0
      %244 = vmatprep.subr.bf16.mxu0 0
      %245 = vmatpush1.bf16.msra.mxu0 %v242
      %246 = vmatprep.subr.bf16.mxu0 0
      %247 = vmatpush1.bf16.msra.mxu0 0
      %248 = vmatprep.subr.bf16.mxu0 0
      %249 = vmatpush1.bf16.msra.mxu0 0
      %250 = vmatprep.subr.bf16.mxu0 0
      %251 = vmatpush1.bf16.msra.mxu0 0
      %252 = vmatprep.subr.bf16.mxu0 0
      %253 = vmatpush1.bf16.msra.mxu0 0
      %254 = vmatprep.subr.bf16.mxu0 0
      %255 = vmatpush1.bf16.msra.mxu0 0
      %256 = vmatprep.subr.bf16.mxu0 0
      %257 = vmatpush1.bf16.msra.mxu0 0
      %258 = vmatprep.subr.bf16.mxu0 0
      %259 = vmatpush1.bf16.msra.mxu0 0
      %260 = vmatprep.subr.bf16.mxu0 0
      %261 = vmatpush1.bf16.msra.mxu0 0
      %262 = vmatprep.subr.bf16.mxu0 0
      %263 = vmatpush1.bf16.msra.mxu0 0
      %264 = vmatprep.subr.bf16.mxu0 0
      %265 = vmatpush1.bf16.msra.mxu0 0
      %266 = vmatprep.subr.bf16.mxu0 0
      %267 = vmatpush1.bf16.msra.mxu0 0
      %268 = vmatprep.subr.bf16.mxu0 0
      %269 = vmatpush1.bf16.msra.mxu0 0
      %270 = vmatprep.subr.bf16.mxu0 0
      %271 = vmatpush1.bf16.msra.mxu0 0
      %272 = vmatprep.subr.bf16.mxu0 0
      %273 = vmatpush1.bf16.msra.mxu0 0
      %274 = vmatprep.subr.bf16.mxu0 0
      %275 = vmatpush1.bf16.msra.mxu0 0
      %276 = vmatprep.mubr.bf16.mxu0 0
      %277 = vmatmul.mubr.bf16.gmra.mrb[0].mxu0 %v239
      %v278 = vpop.f32.mrb[0].mxu0
      %v279 = vadd.f32 %v233, %v278
      %v280 = vpop.f32.mrb[0].mxu0
      %v281 = vpop.f32.mrb[0].mxu0
      %v282 = vpop.f32.mrb[0].mxu0
      %283 = vdwg.mxu0
      %s284 = scalar_lea.vmem %s165, 8
      %v285 = vld [vmem:[%s284] sm:$0xf]
      %s286 = scalar_lea.vmem %s1, 4
      %v287 = vld [vmem:[%s286] sm:$0x3]
      %v289 = vsel %vm190, %v285, 0
      %v292 = vsel %vm194, %v287, 0
      %294 = vmatprep.subr.bf16.mxu0 0
      %295 = vmatpush1.bf16.msra.mxu0 %v292
      %296 = vmatprep.subr.bf16.mxu0 0
      %297 = vmatpush1.bf16.msra.mxu0 0
      %298 = vmatprep.subr.bf16.mxu0 0
      %299 = vmatpush1.bf16.msra.mxu0 0
      %300 = vmatprep.subr.bf16.mxu0 0
      %301 = vmatpush1.bf16.msra.mxu0 0
      %302 = vmatprep.subr.bf16.mxu0 0
      %303 = vmatpush1.bf16.msra.mxu0 0
      %304 = vmatprep.subr.bf16.mxu0 0
      %305 = vmatpush1.bf16.msra.mxu0 0
      %306 = vmatprep.subr.bf16.mxu0 0
      %307 = vmatpush1.bf16.msra.mxu0 0
      %308 = vmatprep.subr.bf16.mxu0 0
      %309 = vmatpush1.bf16.msra.mxu0 0
      %310 = vmatprep.subr.bf16.mxu0 0
      %311 = vmatpush1.bf16.msra.mxu0 0
      %312 = vmatprep.subr.bf16.mxu0 0
      %313 = vmatpush1.bf16.msra.mxu0 0
      %314 = vmatprep.subr.bf16.mxu0 0
      %315 = vmatpush1.bf16.msra.mxu0 0
      %316 = vmatprep.subr.bf16.mxu0 0
      %317 = vmatpush1.bf16.msra.mxu0 0
      %318 = vmatprep.subr.bf16.mxu0 0
      %319 = vmatpush1.bf16.msra.mxu0 0
      %320 = vmatprep.subr.bf16.mxu0 0
      %321 = vmatpush1.bf16.msra.mxu0 0
      %322 = vmatprep.subr.bf16.mxu0 0
      %323 = vmatpush1.bf16.msra.mxu0 0
      %324 = vmatprep.subr.bf16.mxu0 0
      %325 = vmatpush1.bf16.msra.mxu0 0
      %326 = vmatprep.mubr.bf16.mxu0 0
      %327 = vmatmul.mubr.bf16.gmra.mrb[0].mxu0 %v289
      %v328 = vpop.f32.mrb[0].mxu0
      %v329 = vadd.f32 0.0, %v328
      %v330 = vpop.f32.mrb[0].mxu0
      %v331 = vpop.f32.mrb[0].mxu0
      %v332 = vpop.f32.mrb[0].mxu0
      %333 = vdwg.mxu0
      %v334 = vadd.f32 %v279, %v329
      %v335 = vld [vmem:[%s284] sm:$0xf]
      %v336 = vld [vmem:[%s284 + $0x4] sm:$0x1]
      %s337 = scalar_lea.vmem %s1, 6
      %v338 = vld [vmem:[%s337] sm:$0x3]
      %v341 = vunpack.c.l.b16 %v335
      %v342 = vunpack.c.l.b16 %v336
      %v343 = vpack.c.b16 %v342, %v341
      %v345 = vshrl.u32 %v343, 16
      %v347 = vshll.u32 %v343, 16
      %v349 = vrot.slane %v347, 1
      %v350 = vor.u32 %v345, %v349
      %v352 = vsel %vm190, %v350, 0
      %v355 = vsel %vm194, %v338, 0
      %357 = vmatprep.subr.bf16.mxu0 0
      %358 = vmatpush1.bf16.msra.mxu0 %v355
      %359 = vmatprep.subr.bf16.mxu0 0
      %360 = vmatpush1.bf16.msra.mxu0 0
      %361 = vmatprep.subr.bf16.mxu0 0
      %362 = vmatpush1.bf16.msra.mxu0 0
      %363 = vmatprep.subr.bf16.mxu0 0
      %364 = vmatpush1.bf16.msra.mxu0 0
      %365 = vmatprep.subr.bf16.mxu0 0
      %366 = vmatpush1.bf16.msra.mxu0 0
      %367 = vmatprep.subr.bf16.mxu0 0
      %368 = vmatpush1.bf16.msra.mxu0 0
      %369 = vmatprep.subr.bf16.mxu0 0
      %370 = vmatpush1.bf16.msra.mxu0 0
      %371 = vmatprep.subr.bf16.mxu0 0
      %372 = vmatpush1.bf16.msra.mxu0 0
      %373 = vmatprep.subr.bf16.mxu0 0
      %374 = vmatpush1.bf16.msra.mxu0 0
      %375 = vmatprep.subr.bf16.mxu0 0
      %376 = vmatpush1.bf16.msra.mxu0 0
      %377 = vmatprep.subr.bf16.mxu0 0
      %378 = vmatpush1.bf16.msra.mxu0 0
      %379 = vmatprep.subr.bf16.mxu0 0
      %380 = vmatpush1.bf16.msra.mxu0 0
      %381 = vmatprep.subr.bf16.mxu0 0
      %382 = vmatpush1.bf16.msra.mxu0 0
      %383 = vmatprep.subr.bf16.mxu0 0
      %384 = vmatpush1.bf16.msra.mxu0 0
      %385 = vmatprep.subr.bf16.mxu0 0
      %386 = vmatpush1.bf16.msra.mxu0 0
      %387 = vmatprep.subr.bf16.mxu0 0
      %388 = vmatpush1.bf16.msra.mxu0 0
      %389 = vmatprep.mubr.bf16.mxu0 0
      %390 = vmatmul.mubr.bf16.gmra.mrb[0].mxu0 %v352
      %v391 = vpop.f32.mrb[0].mxu0
      %v392 = vadd.f32 0.0, %v391
      %v393 = vpop.f32.mrb[0].mxu0
      %v394 = vpop.f32.mrb[0].mxu0
      %v395 = vpop.f32.mrb[0].mxu0
      %396 = vdwg.mxu0
      %v397 = vadd.f32 %v334, %v392
      %v399 = vlaneseq
      %v400 = vshrl.u32 %v399, 7
      %v401 = vsub.s32 0, %v400
      %v402 = vrot.slane %v172, %v401
      %v404 = vadd.f32 %v397, %v402
      %vm405 = vcmp.gt.f32.partialorder %v404, 0.0
      %v406 = vmul.f32 %v404, 0.2
      %v407 = vsel %vm405, %v404, %v406
      %v408 = vpack.c.bf16 %v407, %v407
      %vm409 = vcmask 519168
      %410 = vst.msk [vmem:[%s170] sm:$0xf] %vm409, %v408
      %v411 = vld [vmem:[%s284] sm:$0xf]
      %v412 = vld [vmem:[%s1] sm:$0x3]
      %v413 = vld [vmem:[%s284 + $0x4] sm:$0x1]
      %v414 = vld [vmem:[%s176] sm:$0x3]
      %v417 = vunpack.c.l.b16 %v411
      %v418 = vunpack.c.l.b16 %v413
      %v419 = vpack.c.b16 %v418, %v417
      %v421 = vshrl.u32 %v419, 16
      %v423 = vshll.u32 %v419, 16
      %v425 = vrot.slane %v423, 1
      %v426 = vor.u32 %v421, %v425
      %v428 = vsel %vm190, %v426, 0
      %v431 = vsel %vm194, %v414, 0
      %433 = vmatprep.subr.bf16.mxu0 0
      %434 = vmatpush1.bf16.msra.mxu0 %v431
      %435 = vmatprep.subr.bf16.mxu0 0
      %436 = vmatpush1.bf16.msra.mxu0 0
      %437 = vmatprep.subr.bf16.mxu0 0
      %438 = vmatpush1.bf16.msra.mxu0 0
      %439 = vmatprep.subr.bf16.mxu0 0
      %440 = vmatpush1.bf16.msra.mxu0 0
      %441 = vmatprep.subr.bf16.mxu0 0
      %442 = vmatpush1.bf16.msra.mxu0 0
      %443 = vmatprep.subr.bf16.mxu0 0
      %444 = vmatpush1.bf16.msra.mxu0 0
      %445 = vmatprep.subr.bf16.mxu0 0
      %446 = vmatpush1.bf16.msra.mxu0 0
      %447 = vmatprep.subr.bf16.mxu0 0
      %448 = vmatpush1.bf16.msra.mxu0 0
      %449 = vmatprep.subr.bf16.mxu0 0
      %450 = vmatpush1.bf16.msra.mxu0 0
      %451 = vmatprep.subr.bf16.mxu0 0
      %452 = vmatpush1.bf16.msra.mxu0 0
      %453 = vmatprep.subr.bf16.mxu0 0
      %454 = vmatpush1.bf16.msra.mxu0 0
      %455 = vmatprep.subr.bf16.mxu0 0
      %456 = vmatpush1.bf16.msra.mxu0 0
      %457 = vmatprep.subr.bf16.mxu0 0
      %458 = vmatpush1.bf16.msra.mxu0 0
      %459 = vmatprep.subr.bf16.mxu0 0
      %460 = vmatpush1.bf16.msra.mxu0 0
      %461 = vmatprep.subr.bf16.mxu0 0
      %462 = vmatpush1.bf16.msra.mxu0 0
      %463 = vmatprep.subr.bf16.mxu0 0
      %464 = vmatpush1.bf16.msra.mxu0 0
      %465 = vmatprep.mubr.bf16.mxu0 0
      %466 = vmatmul.mubr.bf16.gmra.mrb[0].mxu0 %v428
      %v467 = vpop.f32.mrb[0].mxu0
      %v468 = vadd.f32 0.0, %v467
      %v469 = vpop.f32.mrb[0].mxu0
      %v470 = vpop.f32.mrb[0].mxu0
      %v471 = vpop.f32.mrb[0].mxu0
      %472 = vdwg.mxu0
      %v474 = vsel %vm190, %v411, 0
      %v477 = vsel %vm194, %v412, 0
      %479 = vmatprep.subr.bf16.mxu0 0
      %480 = vmatpush1.bf16.msra.mxu0 %v477
      %481 = vmatprep.subr.bf16.mxu0 0
      %482 = vmatpush1.bf16.msra.mxu0 0
      %483 = vmatprep.subr.bf16.mxu0 0
      %484 = vmatpush1.bf16.msra.mxu0 0
      %485 = vmatprep.subr.bf16.mxu0 0
      %486 = vmatpush1.bf16.msra.mxu0 0
      %487 = vmatprep.subr.bf16.mxu0 0
      %488 = vmatpush1.bf16.msra.mxu0 0
      %489 = vmatprep.subr.bf16.mxu0 0
      %490 = vmatpush1.bf16.msra.mxu0 0
      %491 = vmatprep.subr.bf16.mxu0 0
      %492 = vmatpush1.bf16.msra.mxu0 0
      %493 = vmatprep.subr.bf16.mxu0 0
      %494 = vmatpush1.bf16.msra.mxu0 0
      %495 = vmatprep.subr.bf16.mxu0 0
      %496 = vmatpush1.bf16.msra.mxu0 0
      %497 = vmatprep.subr.bf16.mxu0 0
      %498 = vmatpush1.bf16.msra.mxu0 0
      %499 = vmatprep.subr.bf16.mxu0 0
      %500 = vmatpush1.bf16.msra.mxu0 0
      %501 = vmatprep.subr.bf16.mxu0 0
      %502 = vmatpush1.bf16.msra.mxu0 0
      %503 = vmatprep.subr.bf16.mxu0 0
      %504 = vmatpush1.bf16.msra.mxu0 0
      %505 = vmatprep.subr.bf16.mxu0 0
      %506 = vmatpush1.bf16.msra.mxu0 0
      %507 = vmatprep.subr.bf16.mxu0 0
      %508 = vmatpush1.bf16.msra.mxu0 0
      %509 = vmatprep.subr.bf16.mxu0 0
      %510 = vmatpush1.bf16.msra.mxu0 0
      %511 = vmatprep.mubr.bf16.mxu0 0
      %512 = vmatmul.mubr.bf16.gmra.mrb[0].mxu0 %v474
      %v513 = vpop.f32.mrb[0].mxu0
      %v514 = vadd.f32 %v468, %v513
      %v515 = vpop.f32.mrb[0].mxu0
      %v516 = vpop.f32.mrb[0].mxu0
      %v517 = vpop.f32.mrb[0].mxu0
      %518 = vdwg.mxu0
      %s519 = scalar_lea.vmem %s165, 16
      %v520 = vld [vmem:[%s519] sm:$0xf]
      %v521 = vld [vmem:[%s286] sm:$0x3]
      %v523 = vsel %vm190, %v520, 0
      %v526 = vsel %vm194, %v521, 0
      %528 = vmatprep.subr.bf16.mxu0 0
      %529 = vmatpush1.bf16.msra.mxu0 %v526
      %530 = vmatprep.subr.bf16.mxu0 0
      %531 = vmatpush1.bf16.msra.mxu0 0
      %532 = vmatprep.subr.bf16.mxu0 0
      %533 = vmatpush1.bf16.msra.mxu0 0
      %534 = vmatprep.subr.bf16.mxu0 0
      %535 = vmatpush1.bf16.msra.mxu0 0
      %536 = vmatprep.subr.bf16.mxu0 0
      %537 = vmatpush1.bf16.msra.mxu0 0
      %538 = vmatprep.subr.bf16.mxu0 0
      %539 = vmatpush1.bf16.msra.mxu0 0
      %540 = vmatprep.subr.bf16.mxu0 0
      %541 = vmatpush1.bf16.msra.mxu0 0
      %542 = vmatprep.subr.bf16.mxu0 0
      %543 = vmatpush1.bf16.msra.mxu0 0
      %544 = vmatprep.subr.bf16.mxu0 0
      %545 = vmatpush1.bf16.msra.mxu0 0
      %546 = vmatprep.subr.bf16.mxu0 0
      %547 = vmatpush1.bf16.msra.mxu0 0
      %548 = vmatprep.subr.bf16.mxu0 0
      %549 = vmatpush1.bf16.msra.mxu0 0
      %550 = vmatprep.subr.bf16.mxu0 0
      %551 = vmatpush1.bf16.msra.mxu0 0
      %552 = vmatprep.subr.bf16.mxu0 0
      %553 = vmatpush1.bf16.msra.mxu0 0
      %554 = vmatprep.subr.bf16.mxu0 0
      %555 = vmatpush1.bf16.msra.mxu0 0
      %556 = vmatprep.subr.bf16.mxu0 0
      %557 = vmatpush1.bf16.msra.mxu0 0
      %558 = vmatprep.subr.bf16.mxu0 0
      %559 = vmatpush1.bf16.msra.mxu0 0
      %560 = vmatprep.mubr.bf16.mxu0 0
      %561 = vmatmul.mubr.bf16.gmra.mrb[0].mxu0 %v523
      %v562 = vpop.f32.mrb[0].mxu0
      %v563 = vadd.f32 0.0, %v562
      %v564 = vpop.f32.mrb[0].mxu0
      %v565 = vpop.f32.mrb[0].mxu0
      %v566 = vpop.f32.mrb[0].mxu0
      %567 = vdwg.mxu0
      %v568 = vadd.f32 %v514, %v563
      %v569 = vld [vmem:[%s519] sm:$0xf]
      %v570 = vld [vmem:[%s519 + $0x4] sm:$0x1]
      %v571 = vld [vmem:[%s337] sm:$0x3]
      %v574 = vunpack.c.l.b16 %v569
      %v575 = vunpack.c.l.b16 %v570
      %v576 = vpack.c.b16 %v575, %v574
      %v578 = vshrl.u32 %v576, 16
      %v580 = vshll.u32 %v576, 16
      %v582 = vrot.slane %v580, 1
      %v583 = vor.u32 %v578, %v582
      %v585 = vsel %vm190, %v583, 0
      %v588 = vsel %vm194, %v571, 0
      %590 = vmatprep.subr.bf16.mxu0 0
      %591 = vmatpush1.bf16.msra.mxu0 %v588
      %592 = vmatprep.subr.bf16.mxu0 0
      %593 = vmatpush1.bf16.msra.mxu0 0
      %594 = vmatprep.subr.bf16.mxu0 0
      %595 = vmatpush1.bf16.msra.mxu0 0
      %596 = vmatprep.subr.bf16.mxu0 0
      %597 = vmatpush1.bf16.msra.mxu0 0
      %598 = vmatprep.subr.bf16.mxu0 0
      %599 = vmatpush1.bf16.msra.mxu0 0
      %600 = vmatprep.subr.bf16.mxu0 0
      %601 = vmatpush1.bf16.msra.mxu0 0
      %602 = vmatprep.subr.bf16.mxu0 0
      %603 = vmatpush1.bf16.msra.mxu0 0
      %604 = vmatprep.subr.bf16.mxu0 0
      %605 = vmatpush1.bf16.msra.mxu0 0
      %606 = vmatprep.subr.bf16.mxu0 0
      %607 = vmatpush1.bf16.msra.mxu0 0
      %608 = vmatprep.subr.bf16.mxu0 0
      %609 = vmatpush1.bf16.msra.mxu0 0
      %610 = vmatprep.subr.bf16.mxu0 0
      %611 = vmatpush1.bf16.msra.mxu0 0
      %612 = vmatprep.subr.bf16.mxu0 0
      %613 = vmatpush1.bf16.msra.mxu0 0
      %614 = vmatprep.subr.bf16.mxu0 0
      %615 = vmatpush1.bf16.msra.mxu0 0
      %616 = vmatprep.subr.bf16.mxu0 0
      %617 = vmatpush1.bf16.msra.mxu0 0
      %618 = vmatprep.subr.bf16.mxu0 0
      %619 = vmatpush1.bf16.msra.mxu0 0
      %620 = vmatprep.subr.bf16.mxu0 0
      %621 = vmatpush1.bf16.msra.mxu0 0
      %622 = vmatprep.mubr.bf16.mxu0 0
      %623 = vmatmul.mubr.bf16.gmra.mrb[0].mxu0 %v585
      %v624 = vpop.f32.mrb[0].mxu0
      %v625 = vadd.f32 0.0, %v624
      %v626 = vpop.f32.mrb[0].mxu0
      %v627 = vpop.f32.mrb[0].mxu0
      %v628 = vpop.f32.mrb[0].mxu0
      %629 = vdwg.mxu0
      %v630 = vadd.f32 %v568, %v625
      %v631 = vadd.f32 %v630, %v402
      %vm632 = vcmp.gt.f32.partialorder %v631, 0.0
      %v633 = vmul.f32 %v631, 0.2
      %v634 = vsel %vm632, %v631, %v633
      %v635 = vpack.c.bf16 %v634, %v634
      %s636 = scalar_lea.vmem %s170, 4
      %637 = vst.msk [vmem:[%s636] sm:$0xf] %vm409, %v635
      %v638 = vld [vmem:[%s519] sm:$0xf]
      %v639 = vld [vmem:[%s1] sm:$0x3]
      %v640 = vld [vmem:[%s519 + $0x4] sm:$0x1]
      %v641 = vld [vmem:[%s176] sm:$0x3]
      %v644 = vunpack.c.l.b16 %v638
      %v645 = vunpack.c.l.b16 %v640
      %v646 = vpack.c.b16 %v645, %v644
      %v648 = vshrl.u32 %v646, 16
      %v650 = vshll.u32 %v646, 16
      %v652 = vrot.slane %v650, 1
      %v653 = vor.u32 %v648, %v652
      %v655 = vsel %vm190, %v653, 0
      %v658 = vsel %vm194, %v641, 0
      %660 = vmatprep.subr.bf16.mxu0 0
      %661 = vmatpush1.bf16.msra.mxu0 %v658
      %662 = vmatprep.subr.bf16.mxu0 0
      %663 = vmatpush1.bf16.msra.mxu0 0
      %664 = vmatprep.subr.bf16.mxu0 0
      %665 = vmatpush1.bf16.msra.mxu0 0
      %666 = vmatprep.subr.bf16.mxu0 0
      %667 = vmatpush1.bf16.msra.mxu0 0
      %668 = vmatprep.subr.bf16.mxu0 0
      %669 = vmatpush1.bf16.msra.mxu0 0
      %670 = vmatprep.subr.bf16.mxu0 0
      %671 = vmatpush1.bf16.msra.mxu0 0
      %672 = vmatprep.subr.bf16.mxu0 0
      %673 = vmatpush1.bf16.msra.mxu0 0
      %674 = vmatprep.subr.bf16.mxu0 0
      %675 = vmatpush1.bf16.msra.mxu0 0
      %676 = vmatprep.subr.bf16.mxu0 0
      %677 = vmatpush1.bf16.msra.mxu0 0
      %678 = vmatprep.subr.bf16.mxu0 0
      %679 = vmatpush1.bf16.msra.mxu0 0
      %680 = vmatprep.subr.bf16.mxu0 0
      %681 = vmatpush1.bf16.msra.mxu0 0
      %682 = vmatprep.subr.bf16.mxu0 0
      %683 = vmatpush1.bf16.msra.mxu0 0
      %684 = vmatprep.subr.bf16.mxu0 0
      %685 = vmatpush1.bf16.msra.mxu0 0
      %686 = vmatprep.subr.bf16.mxu0 0
      %687 = vmatpush1.bf16.msra.mxu0 0
      %688 = vmatprep.subr.bf16.mxu0 0
      %689 = vmatpush1.bf16.msra.mxu0 0
      %690 = vmatprep.subr.bf16.mxu0 0
      %691 = vmatpush1.bf16.msra.mxu0 0
      %692 = vmatprep.mubr.bf16.mxu0 0
      %693 = vmatmul.mubr.bf16.gmra.mrb[0].mxu0 %v655
      %v694 = vpop.f32.mrb[0].mxu0
      %v695 = vadd.f32 0.0, %v694
      %v696 = vpop.f32.mrb[0].mxu0
      %v697 = vpop.f32.mrb[0].mxu0
      %v698 = vpop.f32.mrb[0].mxu0
      %699 = vdwg.mxu0
      %v701 = vsel %vm190, %v638, 0
      %v704 = vsel %vm194, %v639, 0
      %706 = vmatprep.subr.bf16.mxu0 0
      %707 = vmatpush1.bf16.msra.mxu0 %v704
      %708 = vmatprep.subr.bf16.mxu0 0
      %709 = vmatpush1.bf16.msra.mxu0 0
      %710 = vmatprep.subr.bf16.mxu0 0
      %711 = vmatpush1.bf16.msra.mxu0 0
      %712 = vmatprep.subr.bf16.mxu0 0
      %713 = vmatpush1.bf16.msra.mxu0 0
      %714 = vmatprep.subr.bf16.mxu0 0
      %715 = vmatpush1.bf16.msra.mxu0 0
      %716 = vmatprep.subr.bf16.mxu0 0
      %717 = vmatpush1.bf16.msra.mxu0 0
      %718 = vmatprep.subr.bf16.mxu0 0
      %719 = vmatpush1.bf16.msra.mxu0 0
      %720 = vmatprep.subr.bf16.mxu0 0
      %721 = vmatpush1.bf16.msra.mxu0 0
      %722 = vmatprep.subr.bf16.mxu0 0
      %723 = vmatpush1.bf16.msra.mxu0 0
      %724 = vmatprep.subr.bf16.mxu0 0
      %725 = vmatpush1.bf16.msra.mxu0 0
      %726 = vmatprep.subr.bf16.mxu0 0
      %727 = vmatpush1.bf16.msra.mxu0 0
      %728 = vmatprep.subr.bf16.mxu0 0
      %729 = vmatpush1.bf16.msra.mxu0 0
      %730 = vmatprep.subr.bf16.mxu0 0
      %731 = vmatpush1.bf16.msra.mxu0 0
      %732 = vmatprep.subr.bf16.mxu0 0
      %733 = vmatpush1.bf16.msra.mxu0 0
      %734 = vmatprep.subr.bf16.mxu0 0
      %735 = vmatpush1.bf16.msra.mxu0 0
      %736 = vmatprep.subr.bf16.mxu0 0
      %737 = vmatpush1.bf16.msra.mxu0 0
      %738 = vmatprep.mubr.bf16.mxu0 0
      %739 = vmatmul.mubr.bf16.gmra.mrb[0].mxu0 %v701
      %v740 = vpop.f32.mrb[0].mxu0
      %v741 = vadd.f32 %v695, %v740
      %v742 = vpop.f32.mrb[0].mxu0
      %v743 = vpop.f32.mrb[0].mxu0
      %v744 = vpop.f32.mrb[0].mxu0
      %745 = vdwg.mxu0
      %s746 = scalar_lea.vmem %s165, 24
      %v747 = vld [vmem:[%s746] sm:$0xf]
      %v748 = vld [vmem:[%s286] sm:$0x3]
      %v750 = vsel %vm190, %v747, 0
      %v753 = vsel %vm194, %v748, 0
      %755 = vmatprep.subr.bf16.mxu0 0
      %756 = vmatpush1.bf16.msra.mxu0 %v753
      %757 = vmatprep.subr.bf16.mxu0 0
      %758 = vmatpush1.bf16.msra.mxu0 0
      %759 = vmatprep.subr.bf16.mxu0 0
      %760 = vmatpush1.bf16.msra.mxu0 0
      %761 = vmatprep.subr.bf16.mxu0 0
      %762 = vmatpush1.bf16.msra.mxu0 0
      %763 = vmatprep.subr.bf16.mxu0 0
      %764 = vmatpush1.bf16.msra.mxu0 0
      %765 = vmatprep.subr.bf16.mxu0 0
      %766 = vmatpush1.bf16.msra.mxu0 0
      %767 = vmatprep.subr.bf16.mxu0 0
      %768 = vmatpush1.bf16.msra.mxu0 0
      %769 = vmatprep.subr.bf16.mxu0 0
      %770 = vmatpush1.bf16.msra.mxu0 0
      %771 = vmatprep.subr.bf16.mxu0 0
      %772 = vmatpush1.bf16.msra.mxu0 0
      %773 = vmatprep.subr.bf16.mxu0 0
      %774 = vmatpush1.bf16.msra.mxu0 0
      %775 = vmatprep.subr.bf16.mxu0 0
      %776 = vmatpush1.bf16.msra.mxu0 0
      %777 = vmatprep.subr.bf16.mxu0 0
      %778 = vmatpush1.bf16.msra.mxu0 0
      %779 = vmatprep.subr.bf16.mxu0 0
      %780 = vmatpush1.bf16.msra.mxu0 0
      %781 = vmatprep.subr.bf16.mxu0 0
      %782 = vmatpush1.bf16.msra.mxu0 0
      %783 = vmatprep.subr.bf16.mxu0 0
      %784 = vmatpush1.bf16.msra.mxu0 0
      %785 = vmatprep.subr.bf16.mxu0 0
      %786 = vmatpush1.bf16.msra.mxu0 0
      %787 = vmatprep.mubr.bf16.mxu0 0
      %788 = vmatmul.mubr.bf16.gmra.mrb[0].mxu0 %v750
      %v789 = vpop.f32.mrb[0].mxu0
      %v790 = vadd.f32 0.0, %v789
      %v791 = vpop.f32.mrb[0].mxu0
      %v792 = vpop.f32.mrb[0].mxu0
      %v793 = vpop.f32.mrb[0].mxu0
      %794 = vdwg.mxu0
      %v795 = vadd.f32 %v741, %v790
      %v796 = vld [vmem:[%s746] sm:$0xf]
      %v797 = vld [vmem:[%s746 + $0x4] sm:$0x1]
      %v798 = vld [vmem:[%s337] sm:$0x3]
      %v801 = vunpack.c.l.b16 %v796
      %v802 = vunpack.c.l.b16 %v797
      %v803 = vpack.c.b16 %v802, %v801
      %v805 = vshrl.u32 %v803, 16
      %v807 = vshll.u32 %v803, 16
      %v809 = vrot.slane %v807, 1
      %v810 = vor.u32 %v805, %v809
      %v812 = vsel %vm190, %v810, 0
      %v815 = vsel %vm194, %v798, 0
      %817 = vmatprep.subr.bf16.mxu0 0
      %818 = vmatpush1.bf16.msra.mxu0 %v815
      %819 = vmatprep.subr.bf16.mxu0 0
      %820 = vmatpush1.bf16.msra.mxu0 0
      %821 = vmatprep.subr.bf16.mxu0 0
      %822 = vmatpush1.bf16.msra.mxu0 0
      %823 = vmatprep.subr.bf16.mxu0 0
      %824 = vmatpush1.bf16.msra.mxu0 0
      %825 = vmatprep.subr.bf16.mxu0 0
      %826 = vmatpush1.bf16.msra.mxu0 0
      %827 = vmatprep.subr.bf16.mxu0 0
      %828 = vmatpush1.bf16.msra.mxu0 0
      %829 = vmatprep.subr.bf16.mxu0 0
      %830 = vmatpush1.bf16.msra.mxu0 0
      %831 = vmatprep.subr.bf16.mxu0 0
      %832 = vmatpush1.bf16.msra.mxu0 0
      %833 = vmatprep.subr.bf16.mxu0 0
      %834 = vmatpush1.bf16.msra.mxu0 0
      %835 = vmatprep.subr.bf16.mxu0 0
      %836 = vmatpush1.bf16.msra.mxu0 0
      %837 = vmatprep.subr.bf16.mxu0 0
      %838 = vmatpush1.bf16.msra.mxu0 0
      %839 = vmatprep.subr.bf16.mxu0 0
      %840 = vmatpush1.bf16.msra.mxu0 0
      %841 = vmatprep.subr.bf16.mxu0 0
      %842 = vmatpush1.bf16.msra.mxu0 0
      %843 = vmatprep.subr.bf16.mxu0 0
      %844 = vmatpush1.bf16.msra.mxu0 0
      %845 = vmatprep.subr.bf16.mxu0 0
      %846 = vmatpush1.bf16.msra.mxu0 0
      %847 = vmatprep.subr.bf16.mxu0 0
      %848 = vmatpush1.bf16.msra.mxu0 0
      %849 = vmatprep.mubr.bf16.mxu0 0
      %850 = vmatmul.mubr.bf16.gmra.mrb[0].mxu0 %v812
      %v851 = vpop.f32.mrb[0].mxu0
      %v852 = vadd.f32 0.0, %v851
      %v853 = vpop.f32.mrb[0].mxu0
      %v854 = vpop.f32.mrb[0].mxu0
      %v855 = vpop.f32.mrb[0].mxu0
      %856 = vdwg.mxu0
      %v857 = vadd.f32 %v795, %v852
      %v858 = vadd.f32 %v857, %v402
      %vm859 = vcmp.gt.f32.partialorder %v858, 0.0
      %v860 = vmul.f32 %v858, 0.2
      %v861 = vsel %vm859, %v858, %v860
      %v862 = vpack.c.bf16 %v861, %v861
      %s863 = scalar_lea.vmem %s170, 8
      %864 = vst.msk [vmem:[%s863] sm:$0xf] %vm409, %v862
      %v865 = vld [vmem:[%s746] sm:$0xf]
      %v866 = vld [vmem:[%s1] sm:$0x3]
      %v867 = vld [vmem:[%s746 + $0x4] sm:$0x1]
      %v868 = vld [vmem:[%s176] sm:$0x3]
      %v871 = vunpack.c.l.b16 %v865
      %v872 = vunpack.c.l.b16 %v867
      %v873 = vpack.c.b16 %v872, %v871
      %v875 = vshrl.u32 %v873, 16
      %v877 = vshll.u32 %v873, 16
      %v879 = vrot.slane %v877, 1
      %v880 = vor.u32 %v875, %v879
      %v882 = vsel %vm190, %v880, 0
      %v885 = vsel %vm194, %v868, 0
      %887 = vmatprep.subr.bf16.mxu0 0
      %888 = vmatpush1.bf16.msra.mxu0 %v885
      %889 = vmatprep.subr.bf16.mxu0 0
      %890 = vmatpush1.bf16.msra.mxu0 0
      %891 = vmatprep.subr.bf16.mxu0 0
      %892 = vmatpush1.bf16.msra.mxu0 0
      %893 = vmatprep.subr.bf16.mxu0 0
      %894 = vmatpush1.bf16.msra.mxu0 0
      %895 = vmatprep.subr.bf16.mxu0 0
      %896 = vmatpush1.bf16.msra.mxu0 0
      %897 = vmatprep.subr.bf16.mxu0 0
      %898 = vmatpush1.bf16.msra.mxu0 0
      %899 = vmatprep.subr.bf16.mxu0 0
      %900 = vmatpush1.bf16.msra.mxu0 0
      %901 = vmatprep.subr.bf16.mxu0 0
      %902 = vmatpush1.bf16.msra.mxu0 0
      %903 = vmatprep.subr.bf16.mxu0 0
      %904 = vmatpush1.bf16.msra.mxu0 0
      %905 = vmatprep.subr.bf16.mxu0 0
      %906 = vmatpush1.bf16.msra.mxu0 0
      %907 = vmatprep.subr.bf16.mxu0 0
      %908 = vmatpush1.bf16.msra.mxu0 0
      %909 = vmatprep.subr.bf16.mxu0 0
      %910 = vmatpush1.bf16.msra.mxu0 0
      %911 = vmatprep.subr.bf16.mxu0 0
      %912 = vmatpush1.bf16.msra.mxu0 0
      %913 = vmatprep.subr.bf16.mxu0 0
      %914 = vmatpush1.bf16.msra.mxu0 0
      %915 = vmatprep.subr.bf16.mxu0 0
      %916 = vmatpush1.bf16.msra.mxu0 0
      %917 = vmatprep.subr.bf16.mxu0 0
      %918 = vmatpush1.bf16.msra.mxu0 0
      %919 = vmatprep.mubr.bf16.mxu0 0
      %920 = vmatmul.mubr.bf16.gmra.mrb[0].mxu0 %v882
      %v921 = vpop.f32.mrb[0].mxu0
      %v922 = vadd.f32 0.0, %v921
      %v923 = vpop.f32.mrb[0].mxu0
      %v924 = vpop.f32.mrb[0].mxu0
      %v925 = vpop.f32.mrb[0].mxu0
      %926 = vdwg.mxu0
      %v928 = vsel %vm190, %v865, 0
      %v931 = vsel %vm194, %v866, 0
      %933 = vmatprep.subr.bf16.mxu0 0
      %934 = vmatpush1.bf16.msra.mxu0 %v931
      %935 = vmatprep.subr.bf16.mxu0 0
      %936 = vmatpush1.bf16.msra.mxu0 0
      %937 = vmatprep.subr.bf16.mxu0 0
      %938 = vmatpush1.bf16.msra.mxu0 0
      %939 = vmatprep.subr.bf16.mxu0 0
      %940 = vmatpush1.bf16.msra.mxu0 0
      %941 = vmatprep.subr.bf16.mxu0 0
      %942 = vmatpush1.bf16.msra.mxu0 0
      %943 = vmatprep.subr.bf16.mxu0 0
      %944 = vmatpush1.bf16.msra.mxu0 0
      %945 = vmatprep.subr.bf16.mxu0 0
      %946 = vmatpush1.bf16.msra.mxu0 0
      %947 = vmatprep.subr.bf16.mxu0 0
      %948 = vmatpush1.bf16.msra.mxu0 0
      %949 = vmatprep.subr.bf16.mxu0 0
      %950 = vmatpush1.bf16.msra.mxu0 0
      %951 = vmatprep.subr.bf16.mxu0 0
      %952 = vmatpush1.bf16.msra.mxu0 0
      %953 = vmatprep.subr.bf16.mxu0 0
      %954 = vmatpush1.bf16.msra.mxu0 0
      %955 = vmatprep.subr.bf16.mxu0 0
      %956 = vmatpush1.bf16.msra.mxu0 0
      %957 = vmatprep.subr.bf16.mxu0 0
      %958 = vmatpush1.bf16.msra.mxu0 0
      %959 = vmatprep.subr.bf16.mxu0 0
      %960 = vmatpush1.bf16.msra.mxu0 0
      %961 = vmatprep.subr.bf16.mxu0 0
      %962 = vmatpush1.bf16.msra.mxu0 0
      %963 = vmatprep.subr.bf16.mxu0 0
      %964 = vmatpush1.bf16.msra.mxu0 0
      %965 = vmatprep.mubr.bf16.mxu0 0
      %966 = vmatmul.mubr.bf16.gmra.mrb[0].mxu0 %v928
      %v967 = vpop.f32.mrb[0].mxu0
      %v968 = vadd.f32 %v922, %v967
      %v969 = vpop.f32.mrb[0].mxu0
      %v970 = vpop.f32.mrb[0].mxu0
      %v971 = vpop.f32.mrb[0].mxu0
      %972 = vdwg.mxu0
      %s973 = scalar_lea.vmem %s165, 32
      %v974 = vld [vmem:[%s973] sm:$0xf]
      %v975 = vld [vmem:[%s286] sm:$0x3]
      %v977 = vsel %vm190, %v974, 0
      %v980 = vsel %vm194, %v975, 0
      %982 = vmatprep.subr.bf16.mxu0 0
      %983 = vmatpush1.bf16.msra.mxu0 %v980
      %984 = vmatprep.subr.bf16.mxu0 0
      %985 = vmatpush1.bf16.msra.mxu0 0
      %986 = vmatprep.subr.bf16.mxu0 0
      %987 = vmatpush1.bf16.msra.mxu0 0
      %988 = vmatprep.subr.bf16.mxu0 0
      %989 = vmatpush1.bf16.msra.mxu0 0
      %990 = vmatprep.subr.bf16.mxu0 0
      %991 = vmatpush1.bf16.msra.mxu0 0
      %992 = vmatprep.subr.bf16.mxu0 0
      %993 = vmatpush1.bf16.msra.mxu0 0
      %994 = vmatprep.subr.bf16.mxu0 0
      %995 = vmatpush1.bf16.msra.mxu0 0
      %996 = vmatprep.subr.bf16.mxu0 0
      %997 = vmatpush1.bf16.msra.mxu0 0
      %998 = vmatprep.subr.bf16.mxu0 0
      %999 = vmatpush1.bf16.msra.mxu0 0
      %1000 = vmatprep.subr.bf16.mxu0 0
      %1001 = vmatpush1.bf16.msra.mxu0 0
      %1002 = vmatprep.subr.bf16.mxu0 0
      %1003 = vmatpush1.bf16.msra.mxu0 0
      %1004 = vmatprep.subr.bf16.mxu0 0
      %1005 = vmatpush1.bf16.msra.mxu0 0
      %1006 = vmatprep.subr.bf16.mxu0 0
      %1007 = vmatpush1.bf16.msra.mxu0 0
      %1008 = vmatprep.subr.bf16.mxu0 0
      %1009 = vmatpush1.bf16.msra.mxu0 0
      %1010 = vmatprep.subr.bf16.mxu0 0
      %1011 = vmatpush1.bf16.msra.mxu0 0
      %1012 = vmatprep.subr.bf16.mxu0 0
      %1013 = vmatpush1.bf16.msra.mxu0 0
      %1014 = vmatprep.mubr.bf16.mxu0 0
      %1015 = vmatmul.mubr.bf16.gmra.mrb[0].mxu0 %v977
      %v1016 = vpop.f32.mrb[0].mxu0
      %v1017 = vadd.f32 0.0, %v1016
      %v1018 = vpop.f32.mrb[0].mxu0
      %v1019 = vpop.f32.mrb[0].mxu0
      %v1020 = vpop.f32.mrb[0].mxu0
      %1021 = vdwg.mxu0
      %v1022 = vadd.f32 %v968, %v1017
      %v1023 = vld [vmem:[%s973] sm:$0xf]
      %v1024 = vld [vmem:[%s973 + $0x4] sm:$0x1]
      %v1025 = vld [vmem:[%s337] sm:$0x3]
      %v1028 = vunpack.c.l.b16 %v1023
      %v1029 = vunpack.c.l.b16 %v1024
      %v1030 = vpack.c.b16 %v1029, %v1028
      %v1032 = vshrl.u32 %v1030, 16
      %v1034 = vshll.u32 %v1030, 16
      %v1036 = vrot.slane %v1034, 1
      %v1037 = vor.u32 %v1032, %v1036
      %v1039 = vsel %vm190, %v1037, 0
      %v1042 = vsel %vm194, %v1025, 0
      %1044 = vmatprep.subr.bf16.mxu0 0
      %1045 = vmatpush1.bf16.msra.mxu0 %v1042
      %1046 = vmatprep.subr.bf16.mxu0 0
      %1047 = vmatpush1.bf16.msra.mxu0 0
      %1048 = vmatprep.subr.bf16.mxu0 0
      %1049 = vmatpush1.bf16.msra.mxu0 0
      %1050 = vmatprep.subr.bf16.mxu0 0
      %1051 = vmatpush1.bf16.msra.mxu0 0
      %1052 = vmatprep.subr.bf16.mxu0 0
      %1053 = vmatpush1.bf16.msra.mxu0 0
      %1054 = vmatprep.subr.bf16.mxu0 0
      %1055 = vmatpush1.bf16.msra.mxu0 0
      %1056 = vmatprep.subr.bf16.mxu0 0
      %1057 = vmatpush1.bf16.msra.mxu0 0
      %1058 = vmatprep.subr.bf16.mxu0 0
      %1059 = vmatpush1.bf16.msra.mxu0 0
      %1060 = vmatprep.subr.bf16.mxu0 0
      %1061 = vmatpush1.bf16.msra.mxu0 0
      %1062 = vmatprep.subr.bf16.mxu0 0
      %1063 = vmatpush1.bf16.msra.mxu0 0
      %1064 = vmatprep.subr.bf16.mxu0 0
      %1065 = vmatpush1.bf16.msra.mxu0 0
      %1066 = vmatprep.subr.bf16.mxu0 0
      %1067 = vmatpush1.bf16.msra.mxu0 0
      %1068 = vmatprep.subr.bf16.mxu0 0
      %1069 = vmatpush1.bf16.msra.mxu0 0
      %1070 = vmatprep.subr.bf16.mxu0 0
      %1071 = vmatpush1.bf16.msra.mxu0 0
      %1072 = vmatprep.subr.bf16.mxu0 0
      %1073 = vmatpush1.bf16.msra.mxu0 0
      %1074 = vmatprep.subr.bf16.mxu0 0
      %1075 = vmatpush1.bf16.msra.mxu0 0
      %1076 = vmatprep.mubr.bf16.mxu0 0
      %1077 = vmatmul.mubr.bf16.gmra.mrb[0].mxu0 %v1039
      %v1078 = vpop.f32.mrb[0].mxu0
      %v1079 = vadd.f32 0.0, %v1078
      %v1080 = vpop.f32.mrb[0].mxu0
      %v1081 = vpop.f32.mrb[0].mxu0
      %v1082 = vpop.f32.mrb[0].mxu0
      %1083 = vdwg.mxu0
      %v1084 = vadd.f32 %v1022, %v1079
      %v1085 = vadd.f32 %v1084, %v402
      %vm1086 = vcmp.gt.f32.partialorder %v1085, 0.0
      %v1087 = vmul.f32 %v1085, 0.2
      %v1088 = vsel %vm1086, %v1085, %v1087
      %v1089 = vpack.c.bf16 %v1088, %v1088
      %s1090 = scalar_lea.vmem %s170, 12
      %1091 = vst.msk [vmem:[%s1090] sm:$0xf] %vm409, %v1089
      %v1092 = vld [vmem:[%s973] sm:$0xf]
      %v1093 = vld [vmem:[%s1] sm:$0x3]
      %v1094 = vld [vmem:[%s973 + $0x4] sm:$0x1]
      %v1095 = vld [vmem:[%s176] sm:$0x3]
      %v1098 = vunpack.c.l.b16 %v1092
      %v1099 = vunpack.c.l.b16 %v1094
      %v1100 = vpack.c.b16 %v1099, %v1098
      %v1102 = vshrl.u32 %v1100, 16
      %v1104 = vshll.u32 %v1100, 16
      %v1106 = vrot.slane %v1104, 1
      %v1107 = vor.u32 %v1102, %v1106
      %v1109 = vsel %vm190, %v1107, 0
      %v1112 = vsel %vm194, %v1095, 0
      %1114 = vmatprep.subr.bf16.mxu0 0
      %1115 = vmatpush1.bf16.msra.mxu0 %v1112
      %1116 = vmatprep.subr.bf16.mxu0 0
      %1117 = vmatpush1.bf16.msra.mxu0 0
      %1118 = vmatprep.subr.bf16.mxu0 0
      %1119 = vmatpush1.bf16.msra.mxu0 0
      %1120 = vmatprep.subr.bf16.mxu0 0
      %1121 = vmatpush1.bf16.msra.mxu0 0
      %1122 = vmatprep.subr.bf16.mxu0 0
      %1123 = vmatpush1.bf16.msra.mxu0 0
      %1124 = vmatprep.subr.bf16.mxu0 0
      %1125 = vmatpush1.bf16.msra.mxu0 0
      %1126 = vmatprep.subr.bf16.mxu0 0
      %1127 = vmatpush1.bf16.msra.mxu0 0
      %1128 = vmatprep.subr.bf16.mxu0 0
      %1129 = vmatpush1.bf16.msra.mxu0 0
      %1130 = vmatprep.subr.bf16.mxu0 0
      %1131 = vmatpush1.bf16.msra.mxu0 0
      %1132 = vmatprep.subr.bf16.mxu0 0
      %1133 = vmatpush1.bf16.msra.mxu0 0
      %1134 = vmatprep.subr.bf16.mxu0 0
      %1135 = vmatpush1.bf16.msra.mxu0 0
      %1136 = vmatprep.subr.bf16.mxu0 0
      %1137 = vmatpush1.bf16.msra.mxu0 0
      %1138 = vmatprep.subr.bf16.mxu0 0
      %1139 = vmatpush1.bf16.msra.mxu0 0
      %1140 = vmatprep.subr.bf16.mxu0 0
      %1141 = vmatpush1.bf16.msra.mxu0 0
      %1142 = vmatprep.subr.bf16.mxu0 0
      %1143 = vmatpush1.bf16.msra.mxu0 0
      %1144 = vmatprep.subr.bf16.mxu0 0
      %1145 = vmatpush1.bf16.msra.mxu0 0
      %1146 = vmatprep.mubr.bf16.mxu0 0
      %1147 = vmatmul.mubr.bf16.gmra.mrb[0].mxu0 %v1109
      %v1148 = vpop.f32.mrb[0].mxu0
      %v1149 = vadd.f32 0.0, %v1148
      %v1150 = vpop.f32.mrb[0].mxu0
      %v1151 = vpop.f32.mrb[0].mxu0
      %v1152 = vpop.f32.mrb[0].mxu0
      %1153 = vdwg.mxu0
      %v1155 = vsel %vm190, %v1092, 0
      %v1158 = vsel %vm194, %v1093, 0
      %1160 = vmatprep.subr.bf16.mxu0 0
      %1161 = vmatpush1.bf16.msra.mxu0 %v1158
      %1162 = vmatprep.subr.bf16.mxu0 0
      %1163 = vmatpush1.bf16.msra.mxu0 0
      %1164 = vmatprep.subr.bf16.mxu0 0
      %1165 = vmatpush1.bf16.msra.mxu0 0
      %1166 = vmatprep.subr.bf16.mxu0 0
      %1167 = vmatpush1.bf16.msra.mxu0 0
      %1168 = vmatprep.subr.bf16.mxu0 0
      %1169 = vmatpush1.bf16.msra.mxu0 0
      %1170 = vmatprep.subr.bf16.mxu0 0
      %1171 = vmatpush1.bf16.msra.mxu0 0
      %1172 = vmatprep.subr.bf16.mxu0 0
      %1173 = vmatpush1.bf16.msra.mxu0 0
      %1174 = vmatprep.subr.bf16.mxu0 0
      %1175 = vmatpush1.bf16.msra.mxu0 0
      %1176 = vmatprep.subr.bf16.mxu0 0
      %1177 = vmatpush1.bf16.msra.mxu0 0
      %1178 = vmatprep.subr.bf16.mxu0 0
      %1179 = vmatpush1.bf16.msra.mxu0 0
      %1180 = vmatprep.subr.bf16.mxu0 0
      %1181 = vmatpush1.bf16.msra.mxu0 0
      %1182 = vmatprep.subr.bf16.mxu0 0
      %1183 = vmatpush1.bf16.msra.mxu0 0
      %1184 = vmatprep.subr.bf16.mxu0 0
      %1185 = vmatpush1.bf16.msra.mxu0 0
      %1186 = vmatprep.subr.bf16.mxu0 0
      %1187 = vmatpush1.bf16.msra.mxu0 0
      %1188 = vmatprep.subr.bf16.mxu0 0
      %1189 = vmatpush1.bf16.msra.mxu0 0
      %1190 = vmatprep.subr.bf16.mxu0 0
      %1191 = vmatpush1.bf16.msra.mxu0 0
      %1192 = vmatprep.mubr.bf16.mxu0 0
      %1193 = vmatmul.mubr.bf16.gmra.mrb[0].mxu0 %v1155
      %v1194 = vpop.f32.mrb[0].mxu0
      %v1195 = vadd.f32 %v1149, %v1194
      %v1196 = vpop.f32.mrb[0].mxu0
      %v1197 = vpop.f32.mrb[0].mxu0
      %v1198 = vpop.f32.mrb[0].mxu0
      %1199 = vdwg.mxu0
      %s1200 = scalar_lea.vmem %s165, 40
      %v1201 = vld [vmem:[%s1200] sm:$0xf]
      %v1202 = vld [vmem:[%s286] sm:$0x3]
      %v1204 = vsel %vm190, %v1201, 0
      %v1207 = vsel %vm194, %v1202, 0
      %1209 = vmatprep.subr.bf16.mxu0 0
      %1210 = vmatpush1.bf16.msra.mxu0 %v1207
      %1211 = vmatprep.subr.bf16.mxu0 0
      %1212 = vmatpush1.bf16.msra.mxu0 0
      %1213 = vmatprep.subr.bf16.mxu0 0
      %1214 = vmatpush1.bf16.msra.mxu0 0
      %1215 = vmatprep.subr.bf16.mxu0 0
      %1216 = vmatpush1.bf16.msra.mxu0 0
      %1217 = vmatprep.subr.bf16.mxu0 0
      %1218 = vmatpush1.bf16.msra.mxu0 0
      %1219 = vmatprep.subr.bf16.mxu0 0
      %1220 = vmatpush1.bf16.msra.mxu0 0
      %1221 = vmatprep.subr.bf16.mxu0 0
      %1222 = vmatpush1.bf16.msra.mxu0 0
      %1223 = vmatprep.subr.bf16.mxu0 0
      %1224 = vmatpush1.bf16.msra.mxu0 0
      %1225 = vmatprep.subr.bf16.mxu0 0
      %1226 = vmatpush1.bf16.msra.mxu0 0
      %1227 = vmatprep.subr.bf16.mxu0 0
      %1228 = vmatpush1.bf16.msra.mxu0 0
      %1229 = vmatprep.subr.bf16.mxu0 0
      %1230 = vmatpush1.bf16.msra.mxu0 0
      %1231 = vmatprep.subr.bf16.mxu0 0
      %1232 = vmatpush1.bf16.msra.mxu0 0
      %1233 = vmatprep.subr.bf16.mxu0 0
      %1234 = vmatpush1.bf16.msra.mxu0 0
      %1235 = vmatprep.subr.bf16.mxu0 0
      %1236 = vmatpush1.bf16.msra.mxu0 0
      %1237 = vmatprep.subr.bf16.mxu0 0
      %1238 = vmatpush1.bf16.msra.mxu0 0
      %1239 = vmatprep.subr.bf16.mxu0 0
      %1240 = vmatpush1.bf16.msra.mxu0 0
      %1241 = vmatprep.mubr.bf16.mxu0 0
      %1242 = vmatmul.mubr.bf16.gmra.mrb[0].mxu0 %v1204
      %v1243 = vpop.f32.mrb[0].mxu0
      %v1244 = vadd.f32 0.0, %v1243
      %v1245 = vpop.f32.mrb[0].mxu0
      %v1246 = vpop.f32.mrb[0].mxu0
      %v1247 = vpop.f32.mrb[0].mxu0
      %1248 = vdwg.mxu0
      %v1249 = vadd.f32 %v1195, %v1244
      %v1250 = vld [vmem:[%s1200] sm:$0xf]
      %v1251 = vld [vmem:[%s1200 + $0x4] sm:$0x1]
      %v1252 = vld [vmem:[%s337] sm:$0x3]
      %v1255 = vunpack.c.l.b16 %v1250
      %v1256 = vunpack.c.l.b16 %v1251
      %v1257 = vpack.c.b16 %v1256, %v1255
      %v1259 = vshrl.u32 %v1257, 16
      %v1261 = vshll.u32 %v1257, 16
      %v1263 = vrot.slane %v1261, 1
      %v1264 = vor.u32 %v1259, %v1263
      %v1266 = vsel %vm190, %v1264, 0
      %v1269 = vsel %vm194, %v1252, 0
      %1271 = vmatprep.subr.bf16.mxu0 0
      %1272 = vmatpush1.bf16.msra.mxu0 %v1269
      %1273 = vmatprep.subr.bf16.mxu0 0
      %1274 = vmatpush1.bf16.msra.mxu0 0
      %1275 = vmatprep.subr.bf16.mxu0 0
      %1276 = vmatpush1.bf16.msra.mxu0 0
      %1277 = vmatprep.subr.bf16.mxu0 0
      %1278 = vmatpush1.bf16.msra.mxu0 0
      %1279 = vmatprep.subr.bf16.mxu0 0
      %1280 = vmatpush1.bf16.msra.mxu0 0
      %1281 = vmatprep.subr.bf16.mxu0 0
      %1282 = vmatpush1.bf16.msra.mxu0 0
      %1283 = vmatprep.subr.bf16.mxu0 0
      %1284 = vmatpush1.bf16.msra.mxu0 0
      %1285 = vmatprep.subr.bf16.mxu0 0
      %1286 = vmatpush1.bf16.msra.mxu0 0
      %1287 = vmatprep.subr.bf16.mxu0 0
      %1288 = vmatpush1.bf16.msra.mxu0 0
      %1289 = vmatprep.subr.bf16.mxu0 0
      %1290 = vmatpush1.bf16.msra.mxu0 0
      %1291 = vmatprep.subr.bf16.mxu0 0
      %1292 = vmatpush1.bf16.msra.mxu0 0
      %1293 = vmatprep.subr.bf16.mxu0 0
      %1294 = vmatpush1.bf16.msra.mxu0 0
      %1295 = vmatprep.subr.bf16.mxu0 0
      %1296 = vmatpush1.bf16.msra.mxu0 0
      %1297 = vmatprep.subr.bf16.mxu0 0
      %1298 = vmatpush1.bf16.msra.mxu0 0
      %1299 = vmatprep.subr.bf16.mxu0 0
      %1300 = vmatpush1.bf16.msra.mxu0 0
      %1301 = vmatprep.subr.bf16.mxu0 0
      %1302 = vmatpush1.bf16.msra.mxu0 0
      %1303 = vmatprep.mubr.bf16.mxu0 0
      %1304 = vmatmul.mubr.bf16.gmra.mrb[0].mxu0 %v1266
      %v1305 = vpop.f32.mrb[0].mxu0
      %v1306 = vadd.f32 0.0, %v1305
      %v1307 = vpop.f32.mrb[0].mxu0
      %v1308 = vpop.f32.mrb[0].mxu0
      %v1309 = vpop.f32.mrb[0].mxu0
      %1310 = vdwg.mxu0
      %v1311 = vadd.f32 %v1249, %v1306
      %v1312 = vadd.f32 %v1311, %v402
      %vm1313 = vcmp.gt.f32.partialorder %v1312, 0.0
      %v1314 = vmul.f32 %v1312, 0.2
      %v1315 = vsel %vm1313, %v1312, %v1314
      %v1316 = vpack.c.bf16 %v1315, %v1315
      %s1317 = scalar_lea.vmem %s170, 16
      %1318 = vst.msk [vmem:[%s1317] sm:$0xf] %vm409, %v1316
      %v1319 = vld [vmem:[%s1200] sm:$0xf]
      %v1320 = vld [vmem:[%s1] sm:$0x3]
      %v1321 = vld [vmem:[%s1200 + $0x4] sm:$0x1]
      %v1322 = vld [vmem:[%s176] sm:$0x3]
      %v1325 = vunpack.c.l.b16 %v1319
      %v1326 = vunpack.c.l.b16 %v1321
      %v1327 = vpack.c.b16 %v1326, %v1325
      %v1329 = vshrl.u32 %v1327, 16
      %v1331 = vshll.u32 %v1327, 16
      %v1333 = vrot.slane %v1331, 1
      %v1334 = vor.u32 %v1329, %v1333
      %v1336 = vsel %vm190, %v1334, 0
      %v1339 = vsel %vm194, %v1322, 0
      %1341 = vmatprep.subr.bf16.mxu0 0
      %1342 = vmatpush1.bf16.msra.mxu0 %v1339
      %1343 = vmatprep.subr.bf16.mxu0 0
      %1344 = vmatpush1.bf16.msra.mxu0 0
      %1345 = vmatprep.subr.bf16.mxu0 0
      %1346 = vmatpush1.bf16.msra.mxu0 0
      %1347 = vmatprep.subr.bf16.mxu0 0
      %1348 = vmatpush1.bf16.msra.mxu0 0
      %1349 = vmatprep.subr.bf16.mxu0 0
      %1350 = vmatpush1.bf16.msra.mxu0 0
      %1351 = vmatprep.subr.bf16.mxu0 0
      %1352 = vmatpush1.bf16.msra.mxu0 0
      %1353 = vmatprep.subr.bf16.mxu0 0
      %1354 = vmatpush1.bf16.msra.mxu0 0
      %1355 = vmatprep.subr.bf16.mxu0 0
      %1356 = vmatpush1.bf16.msra.mxu0 0
      %1357 = vmatprep.subr.bf16.mxu0 0
      %1358 = vmatpush1.bf16.msra.mxu0 0
      %1359 = vmatprep.subr.bf16.mxu0 0
      %1360 = vmatpush1.bf16.msra.mxu0 0
      %1361 = vmatprep.subr.bf16.mxu0 0
      %1362 = vmatpush1.bf16.msra.mxu0 0
      %1363 = vmatprep.subr.bf16.mxu0 0
      %1364 = vmatpush1.bf16.msra.mxu0 0
      %1365 = vmatprep.subr.bf16.mxu0 0
      %1366 = vmatpush1.bf16.msra.mxu0 0
      %1367 = vmatprep.subr.bf16.mxu0 0
      %1368 = vmatpush1.bf16.msra.mxu0 0
      %1369 = vmatprep.subr.bf16.mxu0 0
      %1370 = vmatpush1.bf16.msra.mxu0 0
      %1371 = vmatprep.subr.bf16.mxu0 0
      %1372 = vmatpush1.bf16.msra.mxu0 0
      %1373 = vmatprep.mubr.bf16.mxu0 0
      %1374 = vmatmul.mubr.bf16.gmra.mrb[0].mxu0 %v1336
      %v1375 = vpop.f32.mrb[0].mxu0
      %v1376 = vadd.f32 0.0, %v1375
      %v1377 = vpop.f32.mrb[0].mxu0
      %v1378 = vpop.f32.mrb[0].mxu0
      %v1379 = vpop.f32.mrb[0].mxu0
      %1380 = vdwg.mxu0
      %v1382 = vsel %vm190, %v1319, 0
      %v1385 = vsel %vm194, %v1320, 0
      %1387 = vmatprep.subr.bf16.mxu0 0
      %1388 = vmatpush1.bf16.msra.mxu0 %v1385
      %1389 = vmatprep.subr.bf16.mxu0 0
      %1390 = vmatpush1.bf16.msra.mxu0 0
      %1391 = vmatprep.subr.bf16.mxu0 0
      %1392 = vmatpush1.bf16.msra.mxu0 0
      %1393 = vmatprep.subr.bf16.mxu0 0
      %1394 = vmatpush1.bf16.msra.mxu0 0
      %1395 = vmatprep.subr.bf16.mxu0 0
      %1396 = vmatpush1.bf16.msra.mxu0 0
      %1397 = vmatprep.subr.bf16.mxu0 0
      %1398 = vmatpush1.bf16.msra.mxu0 0
      %1399 = vmatprep.subr.bf16.mxu0 0
      %1400 = vmatpush1.bf16.msra.mxu0 0
      %1401 = vmatprep.subr.bf16.mxu0 0
      %1402 = vmatpush1.bf16.msra.mxu0 0
      %1403 = vmatprep.subr.bf16.mxu0 0
      %1404 = vmatpush1.bf16.msra.mxu0 0
      %1405 = vmatprep.subr.bf16.mxu0 0
      %1406 = vmatpush1.bf16.msra.mxu0 0
      %1407 = vmatprep.subr.bf16.mxu0 0
      %1408 = vmatpush1.bf16.msra.mxu0 0
      %1409 = vmatprep.subr.bf16.mxu0 0
      %1410 = vmatpush1.bf16.msra.mxu0 0
      %1411 = vmatprep.subr.bf16.mxu0 0
      %1412 = vmatpush1.bf16.msra.mxu0 0
      %1413 = vmatprep.subr.bf16.mxu0 0
      %1414 = vmatpush1.bf16.msra.mxu0 0
      %1415 = vmatprep.subr.bf16.mxu0 0
      %1416 = vmatpush1.bf16.msra.mxu0 0
      %1417 = vmatprep.subr.bf16.mxu0 0
      %1418 = vmatpush1.bf16.msra.mxu0 0
      %1419 = vmatprep.mubr.bf16.mxu0 0
      %1420 = vmatmul.mubr.bf16.gmra.mrb[0].mxu0 %v1382
      %v1421 = vpop.f32.mrb[0].mxu0
      %v1422 = vadd.f32 %v1376, %v1421
      %v1423 = vpop.f32.mrb[0].mxu0
      %v1424 = vpop.f32.mrb[0].mxu0
      %v1425 = vpop.f32.mrb[0].mxu0
      %1426 = vdwg.mxu0
      %s1427 = scalar_lea.vmem %s165, 48
      %v1428 = vld [vmem:[%s1427] sm:$0xf]
      %v1429 = vld [vmem:[%s286] sm:$0x3]
      %v1431 = vsel %vm190, %v1428, 0
      %v1434 = vsel %vm194, %v1429, 0
      %1436 = vmatprep.subr.bf16.mxu0 0
      %1437 = vmatpush1.bf16.msra.mxu0 %v1434
      %1438 = vmatprep.subr.bf16.mxu0 0
      %1439 = vmatpush1.bf16.msra.mxu0 0
      %1440 = vmatprep.subr.bf16.mxu0 0
      %1441 = vmatpush1.bf16.msra.mxu0 0
      %1442 = vmatprep.subr.bf16.mxu0 0
      %1443 = vmatpush1.bf16.msra.mxu0 0
      %1444 = vmatprep.subr.bf16.mxu0 0
      %1445 = vmatpush1.bf16.msra.mxu0 0
      %1446 = vmatprep.subr.bf16.mxu0 0
      %1447 = vmatpush1.bf16.msra.mxu0 0
      %1448 = vmatprep.subr.bf16.mxu0 0
      %1449 = vmatpush1.bf16.msra.mxu0 0
      %1450 = vmatprep.subr.bf16.mxu0 0
      %1451 = vmatpush1.bf16.msra.mxu0 0
      %1452 = vmatprep.subr.bf16.mxu0 0
      %1453 = vmatpush1.bf16.msra.mxu0 0
      %1454 = vmatprep.subr.bf16.mxu0 0
      %1455 = vmatpush1.bf16.msra.mxu0 0
      %1456 = vmatprep.subr.bf16.mxu0 0
      %1457 = vmatpush1.bf16.msra.mxu0 0
      %1458 = vmatprep.subr.bf16.mxu0 0
      %1459 = vmatpush1.bf16.msra.mxu0 0
      %1460 = vmatprep.subr.bf16.mxu0 0
      %1461 = vmatpush1.bf16.msra.mxu0 0
      %1462 = vmatprep.subr.bf16.mxu0 0
      %1463 = vmatpush1.bf16.msra.mxu0 0
      %1464 = vmatprep.subr.bf16.mxu0 0
      %1465 = vmatpush1.bf16.msra.mxu0 0
      %1466 = vmatprep.subr.bf16.mxu0 0
      %1467 = vmatpush1.bf16.msra.mxu0 0
      %1468 = vmatprep.mubr.bf16.mxu0 0
      %1469 = vmatmul.mubr.bf16.gmra.mrb[0].mxu0 %v1431
      %v1470 = vpop.f32.mrb[0].mxu0
      %v1471 = vadd.f32 0.0, %v1470
      %v1472 = vpop.f32.mrb[0].mxu0
      %v1473 = vpop.f32.mrb[0].mxu0
      %v1474 = vpop.f32.mrb[0].mxu0
      %1475 = vdwg.mxu0
      %v1476 = vadd.f32 %v1422, %v1471
      %v1477 = vld [vmem:[%s1427] sm:$0xf]
      %v1478 = vld [vmem:[%s1427 + $0x4] sm:$0x1]
      %v1479 = vld [vmem:[%s337] sm:$0x3]
      %v1482 = vunpack.c.l.b16 %v1477
      %v1483 = vunpack.c.l.b16 %v1478
      %v1484 = vpack.c.b16 %v1483, %v1482
      %v1486 = vshrl.u32 %v1484, 16
      %v1488 = vshll.u32 %v1484, 16
      %v1490 = vrot.slane %v1488, 1
      %v1491 = vor.u32 %v1486, %v1490
      %v1493 = vsel %vm190, %v1491, 0
      %v1496 = vsel %vm194, %v1479, 0
      %1498 = vmatprep.subr.bf16.mxu0 0
      %1499 = vmatpush1.bf16.msra.mxu0 %v1496
      %1500 = vmatprep.subr.bf16.mxu0 0
      %1501 = vmatpush1.bf16.msra.mxu0 0
      %1502 = vmatprep.subr.bf16.mxu0 0
      %1503 = vmatpush1.bf16.msra.mxu0 0
      %1504 = vmatprep.subr.bf16.mxu0 0
      %1505 = vmatpush1.bf16.msra.mxu0 0
      %1506 = vmatprep.subr.bf16.mxu0 0
      %1507 = vmatpush1.bf16.msra.mxu0 0
      %1508 = vmatprep.subr.bf16.mxu0 0
      %1509 = vmatpush1.bf16.msra.mxu0 0
      %1510 = vmatprep.subr.bf16.mxu0 0
      %1511 = vmatpush1.bf16.msra.mxu0 0
      %1512 = vmatprep.subr.bf16.mxu0 0
      %1513 = vmatpush1.bf16.msra.mxu0 0
      %1514 = vmatprep.subr.bf16.mxu0 0
      %1515 = vmatpush1.bf16.msra.mxu0 0
      %1516 = vmatprep.subr.bf16.mxu0 0
      %1517 = vmatpush1.bf16.msra.mxu0 0
      %1518 = vmatprep.subr.bf16.mxu0 0
      %1519 = vmatpush1.bf16.msra.mxu0 0
      %1520 = vmatprep.subr.bf16.mxu0 0
      %1521 = vmatpush1.bf16.msra.mxu0 0
      %1522 = vmatprep.subr.bf16.mxu0 0
      %1523 = vmatpush1.bf16.msra.mxu0 0
      %1524 = vmatprep.subr.bf16.mxu0 0
      %1525 = vmatpush1.bf16.msra.mxu0 0
      %1526 = vmatprep.subr.bf16.mxu0 0
      %1527 = vmatpush1.bf16.msra.mxu0 0
      %1528 = vmatprep.subr.bf16.mxu0 0
      %1529 = vmatpush1.bf16.msra.mxu0 0
      %1530 = vmatprep.mubr.bf16.mxu0 0
      %1531 = vmatmul.mubr.bf16.gmra.mrb[0].mxu0 %v1493
      %v1532 = vpop.f32.mrb[0].mxu0
      %v1533 = vadd.f32 0.0, %v1532
      %v1534 = vpop.f32.mrb[0].mxu0
      %v1535 = vpop.f32.mrb[0].mxu0
      %v1536 = vpop.f32.mrb[0].mxu0
      %1537 = vdwg.mxu0
      %v1538 = vadd.f32 %v1476, %v1533
      %v1539 = vadd.f32 %v1538, %v402
      %vm1540 = vcmp.gt.f32.partialorder %v1539, 0.0
      %v1541 = vmul.f32 %v1539, 0.2
      %v1542 = vsel %vm1540, %v1539, %v1541
      %v1543 = vpack.c.bf16 %v1542, %v1542
      %s1544 = scalar_lea.vmem %s170, 20
      %1545 = vst.msk [vmem:[%s1544] sm:$0xf] %vm409, %v1543
      %v1546 = vld [vmem:[%s1427] sm:$0xf]
      %v1547 = vld [vmem:[%s1] sm:$0x3]
      %v1548 = vld [vmem:[%s1427 + $0x4] sm:$0x1]
      %v1549 = vld [vmem:[%s176] sm:$0x3]
      %v1552 = vunpack.c.l.b16 %v1546
      %v1553 = vunpack.c.l.b16 %v1548
      %v1554 = vpack.c.b16 %v1553, %v1552
      %v1556 = vshrl.u32 %v1554, 16
      %v1558 = vshll.u32 %v1554, 16
      %v1560 = vrot.slane %v1558, 1
      %v1561 = vor.u32 %v1556, %v1560
      %v1563 = vsel %vm190, %v1561, 0
      %v1566 = vsel %vm194, %v1549, 0
      %1568 = vmatprep.subr.bf16.mxu0 0
      %1569 = vmatpush1.bf16.msra.mxu0 %v1566
      %1570 = vmatprep.subr.bf16.mxu0 0
      %1571 = vmatpush1.bf16.msra.mxu0 0
      %1572 = vmatprep.subr.bf16.mxu0 0
      %1573 = vmatpush1.bf16.msra.mxu0 0
      %1574 = vmatprep.subr.bf16.mxu0 0
      %1575 = vmatpush1.bf16.msra.mxu0 0
      %1576 = vmatprep.subr.bf16.mxu0 0
      %1577 = vmatpush1.bf16.msra.mxu0 0
      %1578 = vmatprep.subr.bf16.mxu0 0
      %1579 = vmatpush1.bf16.msra.mxu0 0
      %1580 = vmatprep.subr.bf16.mxu0 0
      %1581 = vmatpush1.bf16.msra.mxu0 0
      %1582 = vmatprep.subr.bf16.mxu0 0
      %1583 = vmatpush1.bf16.msra.mxu0 0
      %1584 = vmatprep.subr.bf16.mxu0 0
      %1585 = vmatpush1.bf16.msra.mxu0 0
      %1586 = vmatprep.subr.bf16.mxu0 0
      %1587 = vmatpush1.bf16.msra.mxu0 0
      %1588 = vmatprep.subr.bf16.mxu0 0
      %1589 = vmatpush1.bf16.msra.mxu0 0
      %1590 = vmatprep.subr.bf16.mxu0 0
      %1591 = vmatpush1.bf16.msra.mxu0 0
      %1592 = vmatprep.subr.bf16.mxu0 0
      %1593 = vmatpush1.bf16.msra.mxu0 0
      %1594 = vmatprep.subr.bf16.mxu0 0
      %1595 = vmatpush1.bf16.msra.mxu0 0
      %1596 = vmatprep.subr.bf16.mxu0 0
      %1597 = vmatpush1.bf16.msra.mxu0 0
      %1598 = vmatprep.subr.bf16.mxu0 0
      %1599 = vmatpush1.bf16.msra.mxu0 0
      %1600 = vmatprep.mubr.bf16.mxu0 0
      %1601 = vmatmul.mubr.bf16.gmra.mrb[0].mxu0 %v1563
      %v1602 = vpop.f32.mrb[0].mxu0
      %v1603 = vadd.f32 0.0, %v1602
      %v1604 = vpop.f32.mrb[0].mxu0
      %v1605 = vpop.f32.mrb[0].mxu0
      %v1606 = vpop.f32.mrb[0].mxu0
      %1607 = vdwg.mxu0
      %v1609 = vsel %vm190, %v1546, 0
      %v1612 = vsel %vm194, %v1547, 0
      %1614 = vmatprep.subr.bf16.mxu0 0
      %1615 = vmatpush1.bf16.msra.mxu0 %v1612
      %1616 = vmatprep.subr.bf16.mxu0 0
      %1617 = vmatpush1.bf16.msra.mxu0 0
      %1618 = vmatprep.subr.bf16.mxu0 0
      %1619 = vmatpush1.bf16.msra.mxu0 0
      %1620 = vmatprep.subr.bf16.mxu0 0
      %1621 = vmatpush1.bf16.msra.mxu0 0
      %1622 = vmatprep.subr.bf16.mxu0 0
      %1623 = vmatpush1.bf16.msra.mxu0 0
      %1624 = vmatprep.subr.bf16.mxu0 0
      %1625 = vmatpush1.bf16.msra.mxu0 0
      %1626 = vmatprep.subr.bf16.mxu0 0
      %1627 = vmatpush1.bf16.msra.mxu0 0
      %1628 = vmatprep.subr.bf16.mxu0 0
      %1629 = vmatpush1.bf16.msra.mxu0 0
      %1630 = vmatprep.subr.bf16.mxu0 0
      %1631 = vmatpush1.bf16.msra.mxu0 0
      %1632 = vmatprep.subr.bf16.mxu0 0
      %1633 = vmatpush1.bf16.msra.mxu0 0
      %1634 = vmatprep.subr.bf16.mxu0 0
      %1635 = vmatpush1.bf16.msra.mxu0 0
      %1636 = vmatprep.subr.bf16.mxu0 0
      %1637 = vmatpush1.bf16.msra.mxu0 0
      %1638 = vmatprep.subr.bf16.mxu0 0
      %1639 = vmatpush1.bf16.msra.mxu0 0
      %1640 = vmatprep.subr.bf16.mxu0 0
      %1641 = vmatpush1.bf16.msra.mxu0 0
      %1642 = vmatprep.subr.bf16.mxu0 0
      %1643 = vmatpush1.bf16.msra.mxu0 0
      %1644 = vmatprep.subr.bf16.mxu0 0
      %1645 = vmatpush1.bf16.msra.mxu0 0
      %1646 = vmatprep.mubr.bf16.mxu0 0
      %1647 = vmatmul.mubr.bf16.gmra.mrb[0].mxu0 %v1609
      %v1648 = vpop.f32.mrb[0].mxu0
      %v1649 = vadd.f32 %v1603, %v1648
      %v1650 = vpop.f32.mrb[0].mxu0
      %v1651 = vpop.f32.mrb[0].mxu0
      %v1652 = vpop.f32.mrb[0].mxu0
      %1653 = vdwg.mxu0
      %s1654 = scalar_lea.vmem %s165, 56
      %v1655 = vld [vmem:[%s1654] sm:$0xf]
      %v1656 = vld [vmem:[%s286] sm:$0x3]
      %v1658 = vsel %vm190, %v1655, 0
      %v1661 = vsel %vm194, %v1656, 0
      %1663 = vmatprep.subr.bf16.mxu0 0
      %1664 = vmatpush1.bf16.msra.mxu0 %v1661
      %1665 = vmatprep.subr.bf16.mxu0 0
      %1666 = vmatpush1.bf16.msra.mxu0 0
      %1667 = vmatprep.subr.bf16.mxu0 0
      %1668 = vmatpush1.bf16.msra.mxu0 0
      %1669 = vmatprep.subr.bf16.mxu0 0
      %1670 = vmatpush1.bf16.msra.mxu0 0
      %1671 = vmatprep.subr.bf16.mxu0 0
      %1672 = vmatpush1.bf16.msra.mxu0 0
      %1673 = vmatprep.subr.bf16.mxu0 0
      %1674 = vmatpush1.bf16.msra.mxu0 0
      %1675 = vmatprep.subr.bf16.mxu0 0
      %1676 = vmatpush1.bf16.msra.mxu0 0
      %1677 = vmatprep.subr.bf16.mxu0 0
      %1678 = vmatpush1.bf16.msra.mxu0 0
      %1679 = vmatprep.subr.bf16.mxu0 0
      %1680 = vmatpush1.bf16.msra.mxu0 0
      %1681 = vmatprep.subr.bf16.mxu0 0
      %1682 = vmatpush1.bf16.msra.mxu0 0
      %1683 = vmatprep.subr.bf16.mxu0 0
      %1684 = vmatpush1.bf16.msra.mxu0 0
      %1685 = vmatprep.subr.bf16.mxu0 0
      %1686 = vmatpush1.bf16.msra.mxu0 0
      %1687 = vmatprep.subr.bf16.mxu0 0
      %1688 = vmatpush1.bf16.msra.mxu0 0
      %1689 = vmatprep.subr.bf16.mxu0 0
      %1690 = vmatpush1.bf16.msra.mxu0 0
      %1691 = vmatprep.subr.bf16.mxu0 0
      %1692 = vmatpush1.bf16.msra.mxu0 0
      %1693 = vmatprep.subr.bf16.mxu0 0
      %1694 = vmatpush1.bf16.msra.mxu0 0
      %1695 = vmatprep.mubr.bf16.mxu0 0
      %1696 = vmatmul.mubr.bf16.gmra.mrb[0].mxu0 %v1658
      %v1697 = vpop.f32.mrb[0].mxu0
      %v1698 = vadd.f32 0.0, %v1697
      %v1699 = vpop.f32.mrb[0].mxu0
      %v1700 = vpop.f32.mrb[0].mxu0
      %v1701 = vpop.f32.mrb[0].mxu0
      %1702 = vdwg.mxu0
      %v1703 = vadd.f32 %v1649, %v1698
      %v1704 = vld [vmem:[%s1654] sm:$0xf]
      %v1705 = vld [vmem:[%s1654 + $0x4] sm:$0x1]
      %v1706 = vld [vmem:[%s337] sm:$0x3]
      %v1709 = vunpack.c.l.b16 %v1704
      %v1710 = vunpack.c.l.b16 %v1705
      %v1711 = vpack.c.b16 %v1710, %v1709
      %v1713 = vshrl.u32 %v1711, 16
      %v1715 = vshll.u32 %v1711, 16
      %v1717 = vrot.slane %v1715, 1
      %v1718 = vor.u32 %v1713, %v1717
      %v1720 = vsel %vm190, %v1718, 0
      %v1723 = vsel %vm194, %v1706, 0
      %1725 = vmatprep.subr.bf16.mxu0 0
      %1726 = vmatpush1.bf16.msra.mxu0 %v1723
      %1727 = vmatprep.subr.bf16.mxu0 0
      %1728 = vmatpush1.bf16.msra.mxu0 0
      %1729 = vmatprep.subr.bf16.mxu0 0
      %1730 = vmatpush1.bf16.msra.mxu0 0
      %1731 = vmatprep.subr.bf16.mxu0 0
      %1732 = vmatpush1.bf16.msra.mxu0 0
      %1733 = vmatprep.subr.bf16.mxu0 0
      %1734 = vmatpush1.bf16.msra.mxu0 0
      %1735 = vmatprep.subr.bf16.mxu0 0
      %1736 = vmatpush1.bf16.msra.mxu0 0
      %1737 = vmatprep.subr.bf16.mxu0 0
      %1738 = vmatpush1.bf16.msra.mxu0 0
      %1739 = vmatprep.subr.bf16.mxu0 0
      %1740 = vmatpush1.bf16.msra.mxu0 0
      %1741 = vmatprep.subr.bf16.mxu0 0
      %1742 = vmatpush1.bf16.msra.mxu0 0
      %1743 = vmatprep.subr.bf16.mxu0 0
      %1744 = vmatpush1.bf16.msra.mxu0 0
      %1745 = vmatprep.subr.bf16.mxu0 0
      %1746 = vmatpush1.bf16.msra.mxu0 0
      %1747 = vmatprep.subr.bf16.mxu0 0
      %1748 = vmatpush1.bf16.msra.mxu0 0
      %1749 = vmatprep.subr.bf16.mxu0 0
      %1750 = vmatpush1.bf16.msra.mxu0 0
      %1751 = vmatprep.subr.bf16.mxu0 0
      %1752 = vmatpush1.bf16.msra.mxu0 0
      %1753 = vmatprep.subr.bf16.mxu0 0
      %1754 = vmatpush1.bf16.msra.mxu0 0
      %1755 = vmatprep.subr.bf16.mxu0 0
      %1756 = vmatpush1.bf16.msra.mxu0 0
      %1757 = vmatprep.mubr.bf16.mxu0 0
      %1758 = vmatmul.mubr.bf16.gmra.mrb[0].mxu0 %v1720
      %v1759 = vpop.f32.mrb[0].mxu0
      %v1760 = vadd.f32 0.0, %v1759
      %v1761 = vpop.f32.mrb[0].mxu0
      %v1762 = vpop.f32.mrb[0].mxu0
      %v1763 = vpop.f32.mrb[0].mxu0
      %1764 = vdwg.mxu0
      %v1765 = vadd.f32 %v1703, %v1760
      %v1766 = vadd.f32 %v1765, %v402
      %vm1767 = vcmp.gt.f32.partialorder %v1766, 0.0
      %v1768 = vmul.f32 %v1766, 0.2
      %v1769 = vsel %vm1767, %v1766, %v1768
      %v1770 = vpack.c.bf16 %v1769, %v1769
      %s1771 = scalar_lea.vmem %s170, 24
      %1772 = vst.msk [vmem:[%s1771] sm:$0xf] %vm409, %v1770
      %v1773 = vld [vmem:[%s1654] sm:$0xf]
      %v1774 = vld [vmem:[%s1] sm:$0x3]
      %v1775 = vld [vmem:[%s1654 + $0x4] sm:$0x1]
      %v1776 = vld [vmem:[%s176] sm:$0x3]
      %v1779 = vunpack.c.l.b16 %v1773
      %v1780 = vunpack.c.l.b16 %v1775
      %v1781 = vpack.c.b16 %v1780, %v1779
      %v1783 = vshrl.u32 %v1781, 16
      %v1785 = vshll.u32 %v1781, 16
      %v1787 = vrot.slane %v1785, 1
      %v1788 = vor.u32 %v1783, %v1787
      %v1790 = vsel %vm190, %v1788, 0
      %v1793 = vsel %vm194, %v1776, 0
      %1795 = vmatprep.subr.bf16.mxu0 0
      %1796 = vmatpush1.bf16.msra.mxu0 %v1793
      %1797 = vmatprep.subr.bf16.mxu0 0
      %1798 = vmatpush1.bf16.msra.mxu0 0
      %1799 = vmatprep.subr.bf16.mxu0 0
      %1800 = vmatpush1.bf16.msra.mxu0 0
      %1801 = vmatprep.subr.bf16.mxu0 0
      %1802 = vmatpush1.bf16.msra.mxu0 0
      %1803 = vmatprep.subr.bf16.mxu0 0
      %1804 = vmatpush1.bf16.msra.mxu0 0
      %1805 = vmatprep.subr.bf16.mxu0 0
      %1806 = vmatpush1.bf16.msra.mxu0 0
      %1807 = vmatprep.subr.bf16.mxu0 0
      %1808 = vmatpush1.bf16.msra.mxu0 0
      %1809 = vmatprep.subr.bf16.mxu0 0
      %1810 = vmatpush1.bf16.msra.mxu0 0
      %1811 = vmatprep.subr.bf16.mxu0 0
      %1812 = vmatpush1.bf16.msra.mxu0 0
      %1813 = vmatprep.subr.bf16.mxu0 0
      %1814 = vmatpush1.bf16.msra.mxu0 0
      %1815 = vmatprep.subr.bf16.mxu0 0
      %1816 = vmatpush1.bf16.msra.mxu0 0
      %1817 = vmatprep.subr.bf16.mxu0 0
      %1818 = vmatpush1.bf16.msra.mxu0 0
      %1819 = vmatprep.subr.bf16.mxu0 0
      %1820 = vmatpush1.bf16.msra.mxu0 0
      %1821 = vmatprep.subr.bf16.mxu0 0
      %1822 = vmatpush1.bf16.msra.mxu0 0
      %1823 = vmatprep.subr.bf16.mxu0 0
      %1824 = vmatpush1.bf16.msra.mxu0 0
      %1825 = vmatprep.subr.bf16.mxu0 0
      %1826 = vmatpush1.bf16.msra.mxu0 0
      %1827 = vmatprep.mubr.bf16.mxu0 0
      %1828 = vmatmul.mubr.bf16.gmra.mrb[0].mxu0 %v1790
      %v1829 = vpop.f32.mrb[0].mxu0
      %v1830 = vadd.f32 0.0, %v1829
      %v1831 = vpop.f32.mrb[0].mxu0
      %v1832 = vpop.f32.mrb[0].mxu0
      %v1833 = vpop.f32.mrb[0].mxu0
      %1834 = vdwg.mxu0
      %v1836 = vsel %vm190, %v1773, 0
      %v1839 = vsel %vm194, %v1774, 0
      %1841 = vmatprep.subr.bf16.mxu0 0
      %1842 = vmatpush1.bf16.msra.mxu0 %v1839
      %1843 = vmatprep.subr.bf16.mxu0 0
      %1844 = vmatpush1.bf16.msra.mxu0 0
      %1845 = vmatprep.subr.bf16.mxu0 0
      %1846 = vmatpush1.bf16.msra.mxu0 0
      %1847 = vmatprep.subr.bf16.mxu0 0
      %1848 = vmatpush1.bf16.msra.mxu0 0
      %1849 = vmatprep.subr.bf16.mxu0 0
      %1850 = vmatpush1.bf16.msra.mxu0 0
      %1851 = vmatprep.subr.bf16.mxu0 0
      %1852 = vmatpush1.bf16.msra.mxu0 0
      %1853 = vmatprep.subr.bf16.mxu0 0
      %1854 = vmatpush1.bf16.msra.mxu0 0
      %1855 = vmatprep.subr.bf16.mxu0 0
      %1856 = vmatpush1.bf16.msra.mxu0 0
      %1857 = vmatprep.subr.bf16.mxu0 0
      %1858 = vmatpush1.bf16.msra.mxu0 0
      %1859 = vmatprep.subr.bf16.mxu0 0
      %1860 = vmatpush1.bf16.msra.mxu0 0
      %1861 = vmatprep.subr.bf16.mxu0 0
      %1862 = vmatpush1.bf16.msra.mxu0 0
      %1863 = vmatprep.subr.bf16.mxu0 0
      %1864 = vmatpush1.bf16.msra.mxu0 0
      %1865 = vmatprep.subr.bf16.mxu0 0
      %1866 = vmatpush1.bf16.msra.mxu0 0
      %1867 = vmatprep.subr.bf16.mxu0 0
      %1868 = vmatpush1.bf16.msra.mxu0 0
      %1869 = vmatprep.subr.bf16.mxu0 0
      %1870 = vmatpush1.bf16.msra.mxu0 0
      %1871 = vmatprep.subr.bf16.mxu0 0
      %1872 = vmatpush1.bf16.msra.mxu0 0
      %1873 = vmatprep.mubr.bf16.mxu0 0
      %1874 = vmatmul.mubr.bf16.gmra.mrb[0].mxu0 %v1836
      %v1875 = vpop.f32.mrb[0].mxu0
      %v1876 = vadd.f32 %v1830, %v1875
      %v1877 = vpop.f32.mrb[0].mxu0
      %v1878 = vpop.f32.mrb[0].mxu0
      %v1879 = vpop.f32.mrb[0].mxu0
      %1880 = vdwg.mxu0
      %s1881 = scalar_lea.vmem %s165, 64
      %v1882 = vld [vmem:[%s1881] sm:$0xf]
      %v1883 = vld [vmem:[%s286] sm:$0x3]
      %v1885 = vsel %vm190, %v1882, 0
      %v1888 = vsel %vm194, %v1883, 0
      %1890 = vmatprep.subr.bf16.mxu0 0
      %1891 = vmatpush1.bf16.msra.mxu0 %v1888
      %1892 = vmatprep.subr.bf16.mxu0 0
      %1893 = vmatpush1.bf16.msra.mxu0 0
      %1894 = vmatprep.subr.bf16.mxu0 0
      %1895 = vmatpush1.bf16.msra.mxu0 0
      %1896 = vmatprep.subr.bf16.mxu0 0
      %1897 = vmatpush1.bf16.msra.mxu0 0
      %1898 = vmatprep.subr.bf16.mxu0 0
      %1899 = vmatpush1.bf16.msra.mxu0 0
      %1900 = vmatprep.subr.bf16.mxu0 0
      %1901 = vmatpush1.bf16.msra.mxu0 0
      %1902 = vmatprep.subr.bf16.mxu0 0
      %1903 = vmatpush1.bf16.msra.mxu0 0
      %1904 = vmatprep.subr.bf16.mxu0 0
      %1905 = vmatpush1.bf16.msra.mxu0 0
      %1906 = vmatprep.subr.bf16.mxu0 0
      %1907 = vmatpush1.bf16.msra.mxu0 0
      %1908 = vmatprep.subr.bf16.mxu0 0
      %1909 = vmatpush1.bf16.msra.mxu0 0
      %1910 = vmatprep.subr.bf16.mxu0 0
      %1911 = vmatpush1.bf16.msra.mxu0 0
      %1912 = vmatprep.subr.bf16.mxu0 0
      %1913 = vmatpush1.bf16.msra.mxu0 0
      %1914 = vmatprep.subr.bf16.mxu0 0
      %1915 = vmatpush1.bf16.msra.mxu0 0
      %1916 = vmatprep.subr.bf16.mxu0 0
      %1917 = vmatpush1.bf16.msra.mxu0 0
      %1918 = vmatprep.subr.bf16.mxu0 0
      %1919 = vmatpush1.bf16.msra.mxu0 0
      %1920 = vmatprep.subr.bf16.mxu0 0
      %1921 = vmatpush1.bf16.msra.mxu0 0
      %1922 = vmatprep.mubr.bf16.mxu0 0
      %1923 = vmatmul.mubr.bf16.gmra.mrb[0].mxu0 %v1885
      %v1924 = vpop.f32.mrb[0].mxu0
      %v1925 = vadd.f32 0.0, %v1924
      %v1926 = vpop.f32.mrb[0].mxu0
      %v1927 = vpop.f32.mrb[0].mxu0
      %v1928 = vpop.f32.mrb[0].mxu0
      %1929 = vdwg.mxu0
      %v1930 = vadd.f32 %v1876, %v1925
      %v1931 = vld [vmem:[%s1881] sm:$0xf]
      %v1932 = vld [vmem:[%s1881 + $0x4] sm:$0x1]
      %v1933 = vld [vmem:[%s337] sm:$0x3]
      %v1936 = vunpack.c.l.b16 %v1931
      %v1937 = vunpack.c.l.b16 %v1932
      %v1938 = vpack.c.b16 %v1937, %v1936
      %v1940 = vshrl.u32 %v1938, 16
      %v1942 = vshll.u32 %v1938, 16
      %v1944 = vrot.slane %v1942, 1
      %v1945 = vor.u32 %v1940, %v1944
      %v1947 = vsel %vm190, %v1945, 0
      %v1950 = vsel %vm194, %v1933, 0
      %1952 = vmatprep.subr.bf16.mxu0 0
      %1953 = vmatpush1.bf16.msra.mxu0 %v1950
      %1954 = vmatprep.subr.bf16.mxu0 0
      %1955 = vmatpush1.bf16.msra.mxu0 0
      %1956 = vmatprep.subr.bf16.mxu0 0
      %1957 = vmatpush1.bf16.msra.mxu0 0
      %1958 = vmatprep.subr.bf16.mxu0 0
      %1959 = vmatpush1.bf16.msra.mxu0 0
      %1960 = vmatprep.subr.bf16.mxu0 0
      %1961 = vmatpush1.bf16.msra.mxu0 0
      %1962 = vmatprep.subr.bf16.mxu0 0
      %1963 = vmatpush1.bf16.msra.mxu0 0
      %1964 = vmatprep.subr.bf16.mxu0 0
      %1965 = vmatpush1.bf16.msra.mxu0 0
      %1966 = vmatprep.subr.bf16.mxu0 0
      %1967 = vmatpush1.bf16.msra.mxu0 0
      %1968 = vmatprep.subr.bf16.mxu0 0
      %1969 = vmatpush1.bf16.msra.mxu0 0
      %1970 = vmatprep.subr.bf16.mxu0 0
      %1971 = vmatpush1.bf16.msra.mxu0 0
      %1972 = vmatprep.subr.bf16.mxu0 0
      %1973 = vmatpush1.bf16.msra.mxu0 0
      %1974 = vmatprep.subr.bf16.mxu0 0
      %1975 = vmatpush1.bf16.msra.mxu0 0
      %1976 = vmatprep.subr.bf16.mxu0 0
      %1977 = vmatpush1.bf16.msra.mxu0 0
      %1978 = vmatprep.subr.bf16.mxu0 0
      %1979 = vmatpush1.bf16.msra.mxu0 0
      %1980 = vmatprep.subr.bf16.mxu0 0
      %1981 = vmatpush1.bf16.msra.mxu0 0
      %1982 = vmatprep.subr.bf16.mxu0 0
      %1983 = vmatpush1.bf16.msra.mxu0 0
      %1984 = vmatprep.mubr.bf16.mxu0 0
      %1985 = vmatmul.mubr.bf16.gmra.mrb[0].mxu0 %v1947
      %v1986 = vpop.f32.mrb[0].mxu0
      %v1987 = vadd.f32 0.0, %v1986
      %v1988 = vpop.f32.mrb[0].mxu0
      %v1989 = vpop.f32.mrb[0].mxu0
      %v1990 = vpop.f32.mrb[0].mxu0
      %1991 = vdwg.mxu0
      %v1992 = vadd.f32 %v1930, %v1987
      %v1993 = vadd.f32 %v1992, %v402
      %vm1994 = vcmp.gt.f32.partialorder %v1993, 0.0
      %v1995 = vmul.f32 %v1993, 0.2
      %v1996 = vsel %vm1994, %v1993, %v1995
      %v1997 = vpack.c.bf16 %v1996, %v1996
      %s1998 = scalar_lea.vmem %s170, 28
      %1999 = vst.msk [vmem:[%s1998] sm:$0xf] %vm409, %v1997
      %p2000 = scmp.lt.s32.totalorder %s14, 1
      %s2001 = scalar_select %p2000, %s14, 1
      %s2002 = smul.addr %s2001, 8
      %s2003 = smul.addr %s2002, 4
      %s2004 = scalar_lea.vmem %s3, %s2003
      // Predicated region
      $region33: #{discriminator_forward.4} parent=31 // pred_check
        %p2005 = pneg %p100
      $region34: #{discriminator_forward.4} parent=31 // pred_check_branch
        %2007 = sbr.rel (%p2005) target = $region36
      $region35: #{discriminator_forward.4} parent=31 // pred_region
        _
      $region36: #{discriminator_forward.4} parent=31 // pred_fallthru
        _
    $region32: #{discriminator_forward.4} parent=5 // pred_fallthru
      _
    %p2008 = scmp.le.s32.totalorder 2, %s9
    // Predicated region
    $region37: #{discriminator_forward.4} parent=5 // pred_check
      %p2009 = pneg %p2008
    $region38: #{discriminator_forward.4} parent=5 // pred_check_branch
      %2011 = sbr.rel (%p2009) target = $region40
    $region39: #{discriminator_forward.4} parent=5 // pred_region
      %s2012 = ssub.s32 %s9, 2
      // Predicated region
      $region41: #{discriminator_forward.4} parent=39 // pred_check
        %p2013 = pneg %p106
      $region42: #{discriminator_forward.4} parent=39 // pred_check_branch
        %2015 = sbr.rel (%p2013) target = $region44
      $region43: #{discriminator_forward.4} parent=39 // pred_region
        %p2016 = scmp.lt.s32.totalorder %s15, 1
        %s2017 = scalar_select %p2016, %s15, 1
        %s2018 = smul.addr %s2017, 8
        %s2019 = smul.addr %s2018, 4
        %s2020 = scalar_lea.vmem %s3, %s2019
      $region44: #{discriminator_forward.4} parent=39 // pred_fallthru
        _
    $region40: #{discriminator_forward.4} parent=5 // pred_fallthru
      _
  $region6: #{discriminator_forward.4} parent=0 // loop_footer
    %s13 = sadd.s32 1, %s9
  $region7: #{discriminator_forward.4} parent=0 // loop_footer_branch
    %8 = sbr.rel target = $region3
  $region8: #{discriminator_forward.4} parent=0 // loop_exit
    _

// kernel: discriminator_forward.5
$region0: #{discriminator_forward.5}
  #allocation0 [shape = 'u32[]', space=smem, size = 0x4, offset = 0x4, fixed_abs, tag = 'smem constant byte address 0x4 - core index']
  #allocation1 [shape = 'u32[144,128]{1,0:T(1,128)}', space=vmem, size = 0x12000, scoped, tag = 'internal scratch']
  %s0 = inlined_call_operand.vmem [shape: bf16[2,5,5,256], index: 0, kind: input, shape index: {}]
  %s1 = inlined_call_operand.hbm [shape: bf16[4,256,128], index: 1, kind: input, shape index: {}]
  %s2 = inlined_call_operand.vmem [shape: f32[1,128], index: 2, kind: input, shape index: {}]
  %s3 = inlined_call_operand.vmem [shape: bf16[2,4,4,128], index: 3, kind: output, shape index: {}]
  %s4 = sld [smem:[#allocation0]]
  $region49: #{discriminator_forward.5} parent=0
    _
  %s6 = ssub.s32 1, %s4
  %s7 = scalar_select 0, %s6, %s4
  $region1: #{discriminator_forward.5} parent=0
    #allocation2 [shape = 'u8[262144]{0}', space=vmem, size = 0x40000, scoped, tag = 'input window, operand 1, single buffered']
    #allocation3 [shape = 's32[2]{0}', space=sflag, size = 0x8, scoped, tag = 'scoped memory for discriminator_forward.5']
    %8 = vsyncpa [#allocation3], 0
    loop: start=0, step=1, limit=4
    $region2: #{discriminator_forward.5} parent=1 // loop_pre_header
      _
    $region3: #{discriminator_forward.5} parent=1 // loop_header
      %s10 = sphi 0, %s14
      %p11 = scmp.ge.s32.totalorder %s10, 4
      %s20 = sphi 0, %s22
      %s23 = sphi 0, %s20
      %s24 = sphi 0, %s23
      %s40 = sphi 0, %s24
      %s44 = sphi 0, %s44
      %s46 = sphi 0, %s44
      %s47 = sphi 0, %s46
      %s61 = sphi 0, %s47
      %s65 = sphi 0, %s65
      %s67 = sphi 0, %s65
      %s68 = sphi 0, %s67
      %s82 = sphi 0, %s68
      %s88 = sphi 0, %s90
      %s91 = sphi 0, %s88
      %s92 = sphi 0, %s91
      %s108 = sphi 0, %s92
    $region4: #{discriminator_forward.5} parent=1 // loop_header_branch
      %13 = sbr.rel (%p11) target = $region8
    $region5: #{discriminator_forward.5} parent=1 // loop_body
      %s15 = ssub.s32 %s10, 1
      %s16 = ssub.s32 %s10, 2
      %s17 = sadd.s32 %s10, 1
      %s18 = ssub.s32 %s10, %s17
      %p19 = scmp.eq.s32.totalorder %s18, 0
      %s21 = sadd.s32 %s20, 1
      %s22 = scalar_select %p19, %s20, %s21
      %p25 = pneg %p19
      %p26 = scmp.eq.s32.totalorder %s10, 1
      %p27 = por %p25, %p26
      %p28 = scmp.ne.s32.totalorder %s20, %s23
      %p29 = scmp.eq.s32.totalorder %s10, 0
      %p30 = por %p28, %p29
      %p31 = scmp.ne.s32.totalorder %s20, %s23
      %p32 = scmp.eq.s32.totalorder %s15, 1
      %p33 = por %p31, %p32
      %p34 = scmp.ne.s32.totalorder %s23, %s24
      %p35 = scmp.eq.s32.totalorder %s15, 0
      %p36 = por %p34, %p35
      %p37 = scmp.ne.s32.totalorder %s23, %s24
      %p38 = scmp.eq.s32.totalorder %s16, 1
      %p39 = por %p37, %p38
      %p41 = scmp.ne.s32.totalorder %s24, %s40
      %p42 = scmp.eq.s32.totalorder %s16, 0
      %p43 = por %p41, %p42
      %s45 = sadd.s32 %s44, 1
      %p48 = scmp.eq.s32.totalorder %s10, 1
      %p49 = scmp.ne.s32.totalorder %s44, %s46
      %p50 = scmp.eq.s32.totalorder %s10, 0
      %p51 = por %p49, %p50
      %p52 = scmp.ne.s32.totalorder %s44, %s46
      %p53 = scmp.eq.s32.totalorder %s15, 1
      %p54 = por %p52, %p53
      %p55 = scmp.ne.s32.totalorder %s46, %s47
      %p56 = scmp.eq.s32.totalorder %s15, 0
      %p57 = por %p55, %p56
      %p58 = scmp.ne.s32.totalorder %s46, %s47
      %p59 = scmp.eq.s32.totalorder %s16, 1
      %p60 = por %p58, %p59
      %p62 = scmp.ne.s32.totalorder %s47, %s61
      %p63 = scmp.eq.s32.totalorder %s16, 0
      %p64 = por %p62, %p63
      %s66 = sadd.s32 %s65, 1
      %p69 = scmp.eq.s32.totalorder %s10, 1
      %p70 = scmp.ne.s32.totalorder %s65, %s67
      %p71 = scmp.eq.s32.totalorder %s10, 0
      %p72 = por %p70, %p71
      %p73 = scmp.ne.s32.totalorder %s65, %s67
      %p74 = scmp.eq.s32.totalorder %s15, 1
      %p75 = por %p73, %p74
      %p76 = scmp.ne.s32.totalorder %s67, %s68
      %p77 = scmp.eq.s32.totalorder %s15, 0
      %p78 = por %p76, %p77
      %p79 = scmp.ne.s32.totalorder %s67, %s68
      %p80 = scmp.eq.s32.totalorder %s16, 1
      %p81 = por %p79, %p80
      %p83 = scmp.ne.s32.totalorder %s68, %s82
      %p84 = scmp.eq.s32.totalorder %s16, 0
      %p85 = por %p83, %p84
      %s86 = ssub.s32 %s10, %s17
      %p87 = scmp.eq.s32.totalorder %s86, 0
      %s89 = sadd.s32 %s88, 1
      %s90 = scalar_select %p87, %s88, %s89
      %p93 = pneg %p87
      %p94 = scmp.eq.s32.totalorder %s10, 1
      %p95 = por %p93, %p94
      %p96 = scmp.ne.s32.totalorder %s88, %s91
      %p97 = scmp.eq.s32.totalorder %s10, 0
      %p98 = por %p96, %p97
      %p99 = scmp.ne.s32.totalorder %s88, %s91
      %p100 = scmp.eq.s32.totalorder %s15, 1
      %p101 = por %p99, %p100
      %p102 = scmp.ne.s32.totalorder %s91, %s92
      %p103 = scmp.eq.s32.totalorder %s15, 0
      %p104 = por %p102, %p103
      %p105 = scmp.ne.s32.totalorder %s91, %s92
      %p106 = scmp.eq.s32.totalorder %s16, 1
      %p107 = por %p105, %p106
      %p109 = scmp.ne.s32.totalorder %s92, %s108
      %p110 = scmp.eq.s32.totalorder %s16, 0
      %p111 = por %p109, %p110
      %p112 = scmp.le.s32.totalorder 1, %s10
      %p113 = scmp.lt.s32.totalorder %s10, 3
      %p114 = pnand %p112, %p113
      %p115 = pneg %p114
      // Predicated region
      $region9: #{discriminator_forward.5} parent=5 // pred_check
        _
      $region10: #{discriminator_forward.5} parent=5 // pred_check_branch
        %117 = sbr.rel (%p114) target = $region12
      $region11: #{discriminator_forward.5} parent=5 // pred_region
        %s118 = ssub.s32 %s10, 1
        // Predicated region
        $region13: #{discriminator_forward.5} parent=11 // pred_check
          %p119 = pneg %p57
        $region14: #{discriminator_forward.5} parent=11 // pred_check_branch
          %121 = sbr.rel (%p119) target = $region16
        $region15: #{discriminator_forward.5} parent=11 // pred_region
          %s123 = ssub.s32 8192, 8192
          %124 = vsyncadd [#allocation3], %s123
          %s125 = sshll.u32 [#allocation2], 4
          %s126 = int_to_ptr.vmem [resolvable:$true] %s125
          %131 = dma.hbm_to_vmem [thread:$0]  %s1, 8192, %s126, [#allocation3], 64, 64, 4
        $region16: #{discriminator_forward.5} parent=11 // pred_fallthru
          _
        // Predicated region
        $region17: #{discriminator_forward.5} parent=11 // pred_check
          %p132 = pneg %p78
        $region18: #{discriminator_forward.5} parent=11 // pred_check_branch
          %134 = sbr.rel (%p132) target = $region20
        $region19: #{discriminator_forward.5} parent=11 // pred_region
          _
        $region20: #{discriminator_forward.5} parent=11 // pred_fallthru
          _
      $region12: #{discriminator_forward.5} parent=5 // pred_fallthru
        _
      %p135 = scmp.lt.s32.totalorder %s10, 2
      // Predicated region
      $region21: #{discriminator_forward.5} parent=5 // pred_check
        %p136 = pneg %p135
      $region22: #{discriminator_forward.5} parent=5 // pred_check_branch
        %138 = sbr.rel (%p136) target = $region24
      $region23: #{discriminator_forward.5} parent=5 // pred_region
        // Predicated region
        $region25: #{discriminator_forward.5} parent=23 // pred_check
          %p139 = pneg %p30
        $region26: #{discriminator_forward.5} parent=23 // pred_check_branch
          %141 = sbr.rel (%p139) target = $region28
        $region27: #{discriminator_forward.5} parent=23 // pred_region
          %p142 = scmp.lt.s32.totalorder %s10, 1
          %s143 = scalar_select %p142, %s10, 1
          %s144 = smul.addr %s143, 10
          %s145 = smul.addr %s144, 4
          %s146 = scalar_lea.vmem %s0, %s145
        $region28: #{discriminator_forward.5} parent=23 // pred_fallthru
          _
      $region24: #{discriminator_forward.5} parent=5 // pred_fallthru
        _
      %p147 = scmp.le.s32.totalorder 1, %s10
      %p148 = scmp.lt.s32.totalorder %s10, 3
      %p149 = pnand %p147, %p148
      %p150 = pneg %p149
      // Predicated region
      $region29: #{discriminator_forward.5} parent=5 // pred_check
        _
      $region30: #{discriminator_forward.5} parent=5 // pred_check_branch
        %152 = sbr.rel (%p149) target = $region32
      $region31: #{discriminator_forward.5} parent=5 // pred_region
        %s153 = ssub.s32 %s10, 1
        // Predicated region
        $region33: #{discriminator_forward.5} parent=31 // pred_check
          %p154 = pneg %p57
        $region34: #{discriminator_forward.5} parent=31 // pred_check_branch
          %156 = sbr.rel (%p154) target = $region36
        $region35: #{discriminator_forward.5} parent=31 // pred_region
          %157 = dma.done [#allocation3], 8192
        $region36: #{discriminator_forward.5} parent=31 // pred_fallthru
          _
        %p158 = scmp.lt.s32.totalorder %s15, 1
        %s159 = scalar_select %p158, %s15, 1
        %s160 = smul.addr %s159, 10
        %s161 = smul.addr %s160, 4
        %s162 = scalar_lea.vmem %s0, %s161
        %p163 = pneg %p36
        %p164 = pneg %p33
        %p165 = pneg %p57
        %p166 = pneg %p54
        %p167 = pneg %p78
        %p168 = pneg %p75
        %p169 = pneg %p104
        %p170 = pneg %p101
        %p171 = scmp.lt.s32.totalorder %s15, 1
        %s172 = scalar_select %p171, %s15, 1
        %s173 = smul.addr %s172, 4
        %s174 = smul.addr %s173, 2
        %s175 = scalar_lea.vmem %s3, %s174
        %p176 = scmp.lt.s32.totalorder %s15, 1
        %s177 = scalar_select %p176, %s15, 1
        %s178 = smul.addr %s177, 10
        %s179 = smul.addr %s178, 4
        %s180 = scalar_lea.vmem %s0, %s179
        %p181 = scmp.lt.s32.totalorder %s15, 1
        %s182 = scalar_select %p181, %s15, 1
        %s183 = smul.addr %s182, 4
        %s184 = smul.addr %s183, 2
        %s185 = scalar_lea.vmem %s3, %s184
        %v187 = vld [vmem:[%s2] sm:$0x1]
        %v188 = vld [vmem:[%s180] sm:$0x33]
        %v189 = vld [vmem:[#allocation2] sm:$0xf]
        %v190 = vld [vmem:[#allocation2 + $0x4] sm:$0xf]
        %v191 = vld [vmem:[#allocation2 + $0x8] sm:$0xf]
        %v192 = vld [vmem:[#allocation2 + $0xc] sm:$0xf]
        %v193 = vld [vmem:[#allocation2 + $0x10] sm:$0xf]
        %v194 = vld [vmem:[#allocation2 + $0x14] sm:$0xf]
        %v195 = vld [vmem:[#allocation2 + $0x18] sm:$0xf]
        %v196 = vld [vmem:[#allocation2 + $0x1c] sm:$0xf]
        %v197 = vld [vmem:[#allocation2 + $0x20] sm:$0xf]
        %v198 = vld [vmem:[#allocation2 + $0x24] sm:$0xf]
        %v199 = vld [vmem:[#allocation2 + $0x28] sm:$0xf]
        %v200 = vld [vmem:[#allocation2 + $0x2c] sm:$0xf]
        %v201 = vld [vmem:[#allocation2 + $0x30] sm:$0xf]
        %v202 = vld [vmem:[#allocation2 + $0x34] sm:$0xf]
        %v203 = vld [vmem:[#allocation2 + $0x38] sm:$0xf]
        %v204 = vld [vmem:[#allocation2 + $0x3c] sm:$0xf]
        %v205 = vld [vmem:[#allocation2 + $0x40] sm:$0xf]
        %v206 = vld [vmem:[#allocation2 + $0x44] sm:$0xf]
        %v207 = vld [vmem:[#allocation2 + $0x48] sm:$0xf]
        %v208 = vld [vmem:[#allocation2 + $0x4c] sm:$0xf]
        %v209 = vld [vmem:[#allocation2 + $0x50] sm:$0xf]
        %v210 = vld [vmem:[#allocation2 + $0x54] sm:$0xf]
        %v211 = vld [vmem:[#allocation2 + $0x58] sm:$0xf]
        %v212 = vld [vmem:[#allocation2 + $0x5c] sm:$0xf]
        %v213 = vld [vmem:[#allocation2 + $0x60] sm:$0xf]
        %v214 = vld [vmem:[#allocation2 + $0x64] sm:$0xf]
        %v215 = vld [vmem:[#allocation2 + $0x68] sm:$0xf]
        %v216 = vld [vmem:[#allocation2 + $0x6c] sm:$0xf]
        %v217 = vld [vmem:[#allocation2 + $0x70] sm:$0xf]
        %v218 = vld [vmem:[#allocation2 + $0x74] sm:$0xf]
        %v219 = vld [vmem:[#allocation2 + $0x78] sm:$0xf]
        %v220 = vld [vmem:[#allocation2 + $0x7c] sm:$0xf]
        %v221 = vld [vmem:[%s180] sm:$0x77]
        %s222 = scalar_lea.vmem [#allocation2], 128
        %v223 = vld [vmem:[%s222] sm:$0xf]
        %v224 = vld [vmem:[%s222 + $0x4] sm:$0xf]
        %v225 = vld [vmem:[%s222 + $0x8] sm:$0xf]
        %v226 = vld [vmem:[%s222 + $0xc] sm:$0xf]
        %v227 = vld [vmem:[%s222 + $0x10] sm:$0xf]
        %v228 = vld [vmem:[%s222 + $0x14] sm:$0xf]
        %v229 = vld [vmem:[%s222 + $0x18] sm:$0xf]
        %v230 = vld [vmem:[%s222 + $0x1c] sm:$0xf]
        %v231 = vld [vmem:[%s222 + $0x20] sm:$0xf]
        %v232 = vld [vmem:[%s222 + $0x24] sm:$0xf]
        %v233 = vld [vmem:[%s222 + $0x28] sm:$0xf]
        %v234 = vld [vmem:[%s222 + $0x2c] sm:$0xf]
        %v235 = vld [vmem:[%s222 + $0x30] sm:$0xf]
        %v236 = vld [vmem:[%s222 + $0x34] sm:$0xf]
        %v237 = vld [vmem:[%s222 + $0x38] sm:$0xf]
        %v238 = vld [vmem:[%s222 + $0x3c] sm:$0xf]
        %v239 = vld [vmem:[%s222 + $0x40] sm:$0xf]
        %v240 = vld [vmem:[%s222 + $0x44] sm:$0xf]
        %v241 = vld [vmem:[%s222 + $0x48] sm:$0xf]
        %v242 = vld [vmem:[%s222 + $0x4c] sm:$0xf]
        %v243 = vld [vmem:[%s222 + $0x50] sm:$0xf]
        %v244 = vld [vmem:[%s222 + $0x54] sm:$0xf]
        %v245 = vld [vmem:[%s222 + $0x58] sm:$0xf]
        %v246 = vld [vmem:[%s222 + $0x5c] sm:$0xf]
        %v247 = vld [vmem:[%s222 + $0x60] sm:$0xf]
        %v248 = vld [vmem:[%s222 + $0x64] sm:$0xf]
        %v249 = vld [vmem:[%s222 + $0x68] sm:$0xf]
        %v250 = vld [vmem:[%s222 + $0x6c] sm:$0xf]
        %v251 = vld [vmem:[%s222 + $0x70] sm:$0xf]
        %v252 = vld [vmem:[%s222 + $0x74] sm:$0xf]
        %v253 = vld [vmem:[%s222 + $0x78] sm:$0xf]
        %v254 = vld [vmem:[%s222 + $0x7c] sm:$0xf]
        %v256 = vunpack.c.l.b16 %v221
        %v257 = vunpack.c.h.b16 %v221
        %v258 = vpack.c.b16 %v256, %v256
        %v259 = vpack.c.b16 %v257, %v257
        %v261 = vshrl.u32 %v258, 16
        %v263 = vshll.u32 %v258, 16
        %v265 = vrot.slane %v263, 1
        %v266 = vor.u32 %v261, %v265
        %v268 = vshrl.u32 %v259, 16
        %v270 = vshll.u32 %v259, 16
        %v272 = vrot.slane %v270, 1
        %v273 = vor.u32 %v268, %v272
        %v308 = vunpack.c.l.b16 %v223
        %v309 = vunpack.c.l.b16 %v224
        %v310 = vunpack.c.l.b16 %v225
        %v311 = vunpack.c.l.b16 %v226
        %v312 = vunpack.c.l.b16 %v227
        %v313 = vunpack.c.l.b16 %v228
        %v314 = vunpack.c.l.b16 %v229
        %v315 = vunpack.c.l.b16 %v230
        %v316 = vunpack.c.l.b16 %v231
        %v317 = vunpack.c.l.b16 %v232
        %v318 = vunpack.c.l.b16 %v233
        %v319 = vunpack.c.l.b16 %v234
        %v320 = vunpack.c.l.b16 %v235
        %v321 = vunpack.c.l.b16 %v236
        %v322 = vunpack.c.l.b16 %v237
        %v323 = vunpack.c.l.b16 %v238
        %v324 = vunpack.c.l.b16 %v239
        %v325 = vunpack.c.l.b16 %v240
        %v326 = vunpack.c.l.b16 %v241
        %v327 = vunpack.c.l.b16 %v242
        %v328 = vunpack.c.l.b16 %v243
        %v329 = vunpack.c.l.b16 %v244
        %v330 = vunpack.c.l.b16 %v245
        %v331 = vunpack.c.l.b16 %v246
        %v332 = vunpack.c.l.b16 %v247
        %v333 = vunpack.c.l.b16 %v248
        %v334 = vunpack.c.l.b16 %v249
        %v335 = vunpack.c.l.b16 %v250
        %v336 = vunpack.c.l.b16 %v251
        %v337 = vunpack.c.l.b16 %v252
        %v338 = vunpack.c.l.b16 %v253
        %v339 = vunpack.c.l.b16 %v254
        %v340 = vpack.c.b16 %v309, %v308
        %v341 = vpack.c.b16 %v311, %v310
        %v342 = vpack.c.b16 %v313, %v312
        %v343 = vpack.c.b16 %v315, %v314
        %v344 = vpack.c.b16 %v317, %v316
        %v345 = vpack.c.b16 %v319, %v318
        %v346 = vpack.c.b16 %v321, %v320
        %v347 = vpack.c.b16 %v323, %v322
        %v348 = vpack.c.b16 %v325, %v324
        %v349 = vpack.c.b16 %v327, %v326
        %v350 = vpack.c.b16 %v329, %v328
        %v351 = vpack.c.b16 %v331, %v330
        %v352 = vpack.c.b16 %v333, %v332
        %v353 = vpack.c.b16 %v335, %v334
        %v354 = vpack.c.b16 %v337, %v336
        %v355 = vpack.c.b16 %v339, %v338
        %372 = vmatprep.subr.bf16.mxu0 0
        %373 = vmatpush1.bf16.msra.mxu0 %v340
        %374 = vmatprep.subr.bf16.mxu0 0
        %375 = vmatpush1.bf16.msra.mxu0 %v341
        %376 = vmatprep.subr.bf16.mxu0 0
        %377 = vmatpush1.bf16.msra.mxu0 %v342
        %378 = vmatprep.subr.bf16.mxu0 0
        %379 = vmatpush1.bf16.msra.mxu0 %v343
        %380 = vmatprep.subr.bf16.mxu0 0
        %381 = vmatpush1.bf16.msra.mxu0 %v344
        %382 = vmatprep.subr.bf16.mxu0 0
        %383 = vmatpush1.bf16.msra.mxu0 %v345
        %384 = vmatprep.subr.bf16.mxu0 0
        %385 = vmatpush1.bf16.msra.mxu0 %v346
        %386 = vmatprep.subr.bf16.mxu0 0
        %387 = vmatpush1.bf16.msra.mxu0 %v347
        %388 = vmatprep.subr.bf16.mxu0 0
        %389 = vmatpush1.bf16.msra.mxu0 %v348
        %390 = vmatprep.subr.bf16.mxu0 0
        %391 = vmatpush1.bf16.msra.mxu0 %v349
        %392 = vmatprep.subr.bf16.mxu0 0
        %393 = vmatpush1.bf16.msra.mxu0 %v350
        %394 = vmatprep.subr.bf16.mxu0 0
        %395 = vmatpush1.bf16.msra.mxu0 %v351
        %396 = vmatprep.subr.bf16.mxu0 0
        %397 = vmatpush1.bf16.msra.mxu0 %v352
        %398 = vmatprep.subr.bf16.mxu0 0
        %399 = vmatpush1.bf16.msra.mxu0 %v353
        %400 = vmatprep.subr.bf16.mxu0 0
        %401 = vmatpush1.bf16.msra.mxu0 %v354
        %402 = vmatprep.subr.bf16.mxu0 0
        %403 = vmatpush1.bf16.msra.mxu0 %v355
        %404 = vmatprep.mubr.bf16.mxu0 %v273
        %405 = vmatmul.mubr.bf16.gmra.mrb[0].mxu0 %v266
        %v406 = vpop.f32.mrb[0].mxu0
        %v407 = vadd.f32 0.0, %v406
        %v408 = vpop.f32.mrb[0].mxu0
        %v409 = vpop.f32.mrb[0].mxu0
        %v410 = vpop.f32.mrb[0].mxu0
        %411 = vdwg.mxu0
        %v413 = vunpack.c.l.b16 %v188
        %v414 = vunpack.c.h.b16 %v188
        %v415 = vpack.c.b16 %v413, %v413
        %v416 = vpack.c.b16 %v414, %v414
        %v451 = vunpack.c.l.b16 %v189
        %v452 = vunpack.c.l.b16 %v190
        %v453 = vunpack.c.l.b16 %v191
        %v454 = vunpack.c.l.b16 %v192
        %v455 = vunpack.c.l.b16 %v193
        %v456 = vunpack.c.l.b16 %v194
        %v457 = vunpack.c.l.b16 %v195
        %v458 = vunpack.c.l.b16 %v196
        %v459 = vunpack.c.l.b16 %v197
        %v460 = vunpack.c.l.b16 %v198
        %v461 = vunpack.c.l.b16 %v199
        %v462 = vunpack.c.l.b16 %v200
        %v463 = vunpack.c.l.b16 %v201
        %v464 = vunpack.c.l.b16 %v202
        %v465 = vunpack.c.l.b16 %v203
        %v466 = vunpack.c.l.b16 %v204
        %v467 = vunpack.c.l.b16 %v205
        %v468 = vunpack.c.l.b16 %v206
        %v469 = vunpack.c.l.b16 %v207
        %v470 = vunpack.c.l.b16 %v208
        %v471 = vunpack.c.l.b16 %v209
        %v472 = vunpack.c.l.b16 %v210
        %v473 = vunpack.c.l.b16 %v211
        %v474 = vunpack.c.l.b16 %v212
        %v475 = vunpack.c.l.b16 %v213
        %v476 = vunpack.c.l.b16 %v214
        %v477 = vunpack.c.l.b16 %v215
        %v478 = vunpack.c.l.b16 %v216
        %v479 = vunpack.c.l.b16 %v217
        %v480 = vunpack.c.l.b16 %v218
        %v481 = vunpack.c.l.b16 %v219
        %v482 = vunpack.c.l.b16 %v220
        %v483 = vpack.c.b16 %v452, %v451
        %v484 = vpack.c.b16 %v454, %v453
        %v485 = vpack.c.b16 %v456, %v455
        %v486 = vpack.c.b16 %v458, %v457
        %v487 = vpack.c.b16 %v460, %v459
        %v488 = vpack.c.b16 %v462, %v461
        %v489 = vpack.c.b16 %v464, %v463
        %v490 = vpack.c.b16 %v466, %v465
        %v491 = vpack.c.b16 %v468, %v467
        %v492 = vpack.c.b16 %v470, %v469
        %v493 = vpack.c.b16 %v472, %v471
        %v494 = vpack.c.b16 %v474, %v473
        %v495 = vpack.c.b16 %v476, %v475
        %v496 = vpack.c.b16 %v478, %v477
        %v497 = vpack.c.b16 %v480, %v479
        %v498 = vpack.c.b16 %v482, %v481
        %515 = vmatprep.subr.bf16.mxu0 0
        %516 = vmatpush1.bf16.msra.mxu0 %v483
        %517 = vmatprep.subr.bf16.mxu0 0
        %518 = vmatpush1.bf16.msra.mxu0 %v484
        %519 = vmatprep.subr.bf16.mxu0 0
        %520 = vmatpush1.bf16.msra.mxu0 %v485
        %521 = vmatprep.subr.bf16.mxu0 0
        %522 = vmatpush1.bf16.msra.mxu0 %v486
        %523 = vmatprep.subr.bf16.mxu0 0
        %524 = vmatpush1.bf16.msra.mxu0 %v487
        %525 = vmatprep.subr.bf16.mxu0 0
        %526 = vmatpush1.bf16.msra.mxu0 %v488
        %527 = vmatprep.subr.bf16.mxu0 0
        %528 = vmatpush1.bf16.msra.mxu0 %v489
        %529 = vmatprep.subr.bf16.mxu0 0
        %530 = vmatpush1.bf16.msra.mxu0 %v490
        %531 = vmatprep.subr.bf16.mxu0 0
        %532 = vmatpush1.bf16.msra.mxu0 %v491
        %533 = vmatprep.subr.bf16.mxu0 0
        %534 = vmatpush1.bf16.msra.mxu0 %v492
        %535 = vmatprep.subr.bf16.mxu0 0
        %536 = vmatpush1.bf16.msra.mxu0 %v493
        %537 = vmatprep.subr.bf16.mxu0 0
        %538 = vmatpush1.bf16.msra.mxu0 %v494
        %539 = vmatprep.subr.bf16.mxu0 0
        %540 = vmatpush1.bf16.msra.mxu0 %v495
        %541 = vmatprep.subr.bf16.mxu0 0
        %542 = vmatpush1.bf16.msra.mxu0 %v496
        %543 = vmatprep.subr.bf16.mxu0 0
        %544 = vmatpush1.bf16.msra.mxu0 %v497
        %545 = vmatprep.subr.bf16.mxu0 0
        %546 = vmatpush1.bf16.msra.mxu0 %v498
        %547 = vmatprep.mubr.bf16.mxu0 %v416
        %548 = vmatmul.mubr.bf16.gmra.mrb[0].mxu0 %v415
        %v549 = vpop.f32.mrb[0].mxu0
        %v550 = vadd.f32 %v407, %v549
        %v551 = vpop.f32.mrb[0].mxu0
        %v552 = vpop.f32.mrb[0].mxu0
        %v553 = vpop.f32.mrb[0].mxu0
        %554 = vdwg.mxu0
        %s555 = scalar_lea.vmem %s180, 8
        %v556 = vld [vmem:[%s555] sm:$0x33]
        %s557 = scalar_lea.vmem [#allocation2], 256
        %v558 = vld [vmem:[%s557] sm:$0xf]
        %v559 = vld [vmem:[%s557 + $0x4] sm:$0xf]
        %v560 = vld [vmem:[%s557 + $0x8] sm:$0xf]
        %v561 = vld [vmem:[%s557 + $0xc] sm:$0xf]
        %v562 = vld [vmem:[%s557 + $0x10] sm:$0xf]
        %v563 = vld [vmem:[%s557 + $0x14] sm:$0xf]
        %v564 = vld [vmem:[%s557 + $0x18] sm:$0xf]
        %v565 = vld [vmem:[%s557 + $0x1c] sm:$0xf]
        %v566 = vld [vmem:[%s557 + $0x20] sm:$0xf]
        %v567 = vld [vmem:[%s557 + $0x24] sm:$0xf]
        %v568 = vld [vmem:[%s557 + $0x28] sm:$0xf]
        %v569 = vld [vmem:[%s557 + $0x2c] sm:$0xf]
        %v570 = vld [vmem:[%s557 + $0x30] sm:$0xf]
        %v571 = vld [vmem:[%s557 + $0x34] sm:$0xf]
        %v572 = vld [vmem:[%s557 + $0x38] sm:$0xf]
        %v573 = vld [vmem:[%s557 + $0x3c] sm:$0xf]
        %v574 = vld [vmem:[%s557 + $0x40] sm:$0xf]
        %v575 = vld [vmem:[%s557 + $0x44] sm:$0xf]
        %v576 = vld [vmem:[%s557 + $0x48] sm:$0xf]
        %v577 = vld [vmem:[%s557 + $0x4c] sm:$0xf]
        %v578 = vld [vmem:[%s557 + $0x50] sm:$0xf]
        %v579 = vld [vmem:[%s557 + $0x54] sm:$0xf]
        %v580 = vld [vmem:[%s557 + $0x58] sm:$0xf]
        %v581 = vld [vmem:[%s557 + $0x5c] sm:$0xf]
        %v582 = vld [vmem:[%s557 + $0x60] sm:$0xf]
        %v583 = vld [vmem:[%s557 + $0x64] sm:$0xf]
        %v584 = vld [vmem:[%s557 + $0x68] sm:$0xf]
        %v585 = vld [vmem:[%s557 + $0x6c] sm:$0xf]
        %v586 = vld [vmem:[%s557 + $0x70] sm:$0xf]
        %v587 = vld [vmem:[%s557 + $0x74] sm:$0xf]
        %v588 = vld [vmem:[%s557 + $0x78] sm:$0xf]
        %v589 = vld [vmem:[%s557 + $0x7c] sm:$0xf]
        %v591 = vunpack.c.l.b16 %v556
        %v592 = vunpack.c.h.b16 %v556
        %v593 = vpack.c.b16 %v591, %v591
        %v594 = vpack.c.b16 %v592, %v592
        %v629 = vunpack.c.l.b16 %v558
        %v630 = vunpack.c.l.b16 %v559
        %v631 = vunpack.c.l.b16 %v560
        %v632 = vunpack.c.l.b16 %v561
        %v633 = vunpack.c.l.b16 %v562
        %v634 = vunpack.c.l.b16 %v563
        %v635 = vunpack.c.l.b16 %v564
        %v636 = vunpack.c.l.b16 %v565
        %v637 = vunpack.c.l.b16 %v566
        %v638 = vunpack.c.l.b16 %v567
        %v639 = vunpack.c.l.b16 %v568
        %v640 = vunpack.c.l.b16 %v569
        %v641 = vunpack.c.l.b16 %v570
        %v642 = vunpack.c.l.b16 %v571
        %v643 = vunpack.c.l.b16 %v572
        %v644 = vunpack.c.l.b16 %v573
        %v645 = vunpack.c.l.b16 %v574
        %v646 = vunpack.c.l.b16 %v575
        %v647 = vunpack.c.l.b16 %v576
        %v648 = vunpack.c.l.b16 %v577
        %v649 = vunpack.c.l.b16 %v578
        %v650 = vunpack.c.l.b16 %v579
        %v651 = vunpack.c.l.b16 %v580
        %v652 = vunpack.c.l.b16 %v581
        %v653 = vunpack.c.l.b16 %v582
        %v654 = vunpack.c.l.b16 %v583
        %v655 = vunpack.c.l.b16 %v584
        %v656 = vunpack.c.l.b16 %v585
        %v657 = vunpack.c.l.b16 %v586
        %v658 = vunpack.c.l.b16 %v587
        %v659 = vunpack.c.l.b16 %v588
        %v660 = vunpack.c.l.b16 %v589
        %v661 = vpack.c.b16 %v630, %v629
        %v662 = vpack.c.b16 %v632, %v631
        %v663 = vpack.c.b16 %v634, %v633
        %v664 = vpack.c.b16 %v636, %v635
        %v665 = vpack.c.b16 %v638, %v637
        %v666 = vpack.c.b16 %v640, %v639
        %v667 = vpack.c.b16 %v642, %v641
        %v668 = vpack.c.b16 %v644, %v643
        %v669 = vpack.c.b16 %v646, %v645
        %v670 = vpack.c.b16 %v648, %v647
        %v671 = vpack.c.b16 %v650, %v649
        %v672 = vpack.c.b16 %v652, %v651
        %v673 = vpack.c.b16 %v654, %v653
        %v674 = vpack.c.b16 %v656, %v655
        %v675 = vpack.c.b16 %v658, %v657
        %v676 = vpack.c.b16 %v660, %v659
        %693 = vmatprep.subr.bf16.mxu0 0
        %694 = vmatpush1.bf16.msra.mxu0 %v661
        %695 = vmatprep.subr.bf16.mxu0 0
        %696 = vmatpush1.bf16.msra.mxu0 %v662
        %697 = vmatprep.subr.bf16.mxu0 0
        %698 = vmatpush1.bf16.msra.mxu0 %v663
        %699 = vmatprep.subr.bf16.mxu0 0
        %700 = vmatpush1.bf16.msra.mxu0 %v664
        %701 = vmatprep.subr.bf16.mxu0 0
        %702 = vmatpush1.bf16.msra.mxu0 %v665
        %703 = vmatprep.subr.bf16.mxu0 0
        %704 = vmatpush1.bf16.msra.mxu0 %v666
        %705 = vmatprep.subr.bf16.mxu0 0
        %706 = vmatpush1.bf16.msra.mxu0 %v667
        %707 = vmatprep.subr.bf16.mxu0 0
        %708 = vmatpush1.bf16.msra.mxu0 %v668
        %709 = vmatprep.subr.bf16.mxu0 0
        %710 = vmatpush1.bf16.msra.mxu0 %v669
        %711 = vmatprep.subr.bf16.mxu0 0
        %712 = vmatpush1.bf16.msra.mxu0 %v670
        %713 = vmatprep.subr.bf16.mxu0 0
        %714 = vmatpush1.bf16.msra.mxu0 %v671
        %715 = vmatprep.subr.bf16.mxu0 0
        %716 = vmatpush1.bf16.msra.mxu0 %v672
        %717 = vmatprep.subr.bf16.mxu0 0
        %718 = vmatpush1.bf16.msra.mxu0 %v673
        %719 = vmatprep.subr.bf16.mxu0 0
        %720 = vmatpush1.bf16.msra.mxu0 %v674
        %721 = vmatprep.subr.bf16.mxu0 0
        %722 = vmatpush1.bf16.msra.mxu0 %v675
        %723 = vmatprep.subr.bf16.mxu0 0
        %724 = vmatpush1.bf16.msra.mxu0 %v676
        %725 = vmatprep.mubr.bf16.mxu0 %v594
        %726 = vmatmul.mubr.bf16.gmra.mrb[0].mxu0 %v593
        %v727 = vpop.f32.mrb[0].mxu0
        %v728 = vadd.f32 0.0, %v727
        %v729 = vpop.f32.mrb[0].mxu0
        %v730 = vpop.f32.mrb[0].mxu0
        %v731 = vpop.f32.mrb[0].mxu0
        %732 = vdwg.mxu0
        %v733 = vadd.f32 %v550, %v728
        %v734 = vld [vmem:[%s555] sm:$0x77]
        %s735 = scalar_lea.vmem [#allocation2], 384
        %v736 = vld [vmem:[%s735] sm:$0xf]
        %v737 = vld [vmem:[%s735 + $0x4] sm:$0xf]
        %v738 = vld [vmem:[%s735 + $0x8] sm:$0xf]
        %v739 = vld [vmem:[%s735 + $0xc] sm:$0xf]
        %v740 = vld [vmem:[%s735 + $0x10] sm:$0xf]
        %v741 = vld [vmem:[%s735 + $0x14] sm:$0xf]
        %v742 = vld [vmem:[%s735 + $0x18] sm:$0xf]
        %v743 = vld [vmem:[%s735 + $0x1c] sm:$0xf]
        %v744 = vld [vmem:[%s735 + $0x20] sm:$0xf]
        %v745 = vld [vmem:[%s735 + $0x24] sm:$0xf]
        %v746 = vld [vmem:[%s735 + $0x28] sm:$0xf]
        %v747 = vld [vmem:[%s735 + $0x2c] sm:$0xf]
        %v748 = vld [vmem:[%s735 + $0x30] sm:$0xf]
        %v749 = vld [vmem:[%s735 + $0x34] sm:$0xf]
        %v750 = vld [vmem:[%s735 + $0x38] sm:$0xf]
        %v751 = vld [vmem:[%s735 + $0x3c] sm:$0xf]
        %v752 = vld [vmem:[%s735 + $0x40] sm:$0xf]
        %v753 = vld [vmem:[%s735 + $0x44] sm:$0xf]
        %v754 = vld [vmem:[%s735 + $0x48] sm:$0xf]
        %v755 = vld [vmem:[%s735 + $0x4c] sm:$0xf]
        %v756 = vld [vmem:[%s735 + $0x50] sm:$0xf]
        %v757 = vld [vmem:[%s735 + $0x54] sm:$0xf]
        %v758 = vld [vmem:[%s735 + $0x58] sm:$0xf]
        %v759 = vld [vmem:[%s735 + $0x5c] sm:$0xf]
        %v760 = vld [vmem:[%s735 + $0x60] sm:$0xf]
        %v761 = vld [vmem:[%s735 + $0x64] sm:$0xf]
        %v762 = vld [vmem:[%s735 + $0x68] sm:$0xf]
        %v763 = vld [vmem:[%s735 + $0x6c] sm:$0xf]
        %v764 = vld [vmem:[%s735 + $0x70] sm:$0xf]
        %v765 = vld [vmem:[%s735 + $0x74] sm:$0xf]
        %v766 = vld [vmem:[%s735 + $0x78] sm:$0xf]
        %v767 = vld [vmem:[%s735 + $0x7c] sm:$0xf]
        %v769 = vunpack.c.l.b16 %v734
        %v770 = vunpack.c.h.b16 %v734
        %v771 = vpack.c.b16 %v769, %v769
        %v772 = vpack.c.b16 %v770, %v770
        %v774 = vshrl.u32 %v771, 16
        %v776 = vshll.u32 %v771, 16
        %v778 = vrot.slane %v776, 1
        %v779 = vor.u32 %v774, %v778
        %v781 = vshrl.u32 %v772, 16
        %v783 = vshll.u32 %v772, 16
        %v785 = vrot.slane %v783, 1
        %v786 = vor.u32 %v781, %v785
        %v821 = vunpack.c.l.b16 %v736
        %v822 = vunpack.c.l.b16 %v737
        %v823 = vunpack.c.l.b16 %v738
        %v824 = vunpack.c.l.b16 %v739
        %v825 = vunpack.c.l.b16 %v740
        %v826 = vunpack.c.l.b16 %v741
        %v827 = vunpack.c.l.b16 %v742
        %v828 = vunpack.c.l.b16 %v743
        %v829 = vunpack.c.l.b16 %v744
        %v830 = vunpack.c.l.b16 %v745
        %v831 = vunpack.c.l.b16 %v746
        %v832 = vunpack.c.l.b16 %v747
        %v833 = vunpack.c.l.b16 %v748
        %v834 = vunpack.c.l.b16 %v749
        %v835 = vunpack.c.l.b16 %v750
        %v836 = vunpack.c.l.b16 %v751
        %v837 = vunpack.c.l.b16 %v752
        %v838 = vunpack.c.l.b16 %v753
        %v839 = vunpack.c.l.b16 %v754
        %v840 = vunpack.c.l.b16 %v755
        %v841 = vunpack.c.l.b16 %v756
        %v842 = vunpack.c.l.b16 %v757
        %v843 = vunpack.c.l.b16 %v758
        %v844 = vunpack.c.l.b16 %v759
        %v845 = vunpack.c.l.b16 %v760
        %v846 = vunpack.c.l.b16 %v761
        %v847 = vunpack.c.l.b16 %v762
        %v848 = vunpack.c.l.b16 %v763
        %v849 = vunpack.c.l.b16 %v764
        %v850 = vunpack.c.l.b16 %v765
        %v851 = vunpack.c.l.b16 %v766
        %v852 = vunpack.c.l.b16 %v767
        %v853 = vpack.c.b16 %v822, %v821
        %v854 = vpack.c.b16 %v824, %v823
        %v855 = vpack.c.b16 %v826, %v825
        %v856 = vpack.c.b16 %v828, %v827
        %v857 = vpack.c.b16 %v830, %v829
        %v858 = vpack.c.b16 %v832, %v831
        %v859 = vpack.c.b16 %v834, %v833
        %v860 = vpack.c.b16 %v836, %v835
        %v861 = vpack.c.b16 %v838, %v837
        %v862 = vpack.c.b16 %v840, %v839
        %v863 = vpack.c.b16 %v842, %v841
        %v864 = vpack.c.b16 %v844, %v843
        %v865 = vpack.c.b16 %v846, %v845
        %v866 = vpack.c.b16 %v848, %v847
        %v867 = vpack.c.b16 %v850, %v849
        %v868 = vpack.c.b16 %v852, %v851
        %885 = vmatprep.subr.bf16.mxu0 0
        %886 = vmatpush1.bf16.msra.mxu0 %v853
        %887 = vmatprep.subr.bf16.mxu0 0
        %888 = vmatpush1.bf16.msra.mxu0 %v854
        %889 = vmatprep.subr.bf16.mxu0 0
        %890 = vmatpush1.bf16.msra.mxu0 %v855
        %891 = vmatprep.subr.bf16.mxu0 0
        %892 = vmatpush1.bf16.msra.mxu0 %v856
        %893 = vmatprep.subr.bf16.mxu0 0
        %894 = vmatpush1.bf16.msra.mxu0 %v857
        %895 = vmatprep.subr.bf16.mxu0 0
        %896 = vmatpush1.bf16.msra.mxu0 %v858
        %897 = vmatprep.subr.bf16.mxu0 0
        %898 = vmatpush1.bf16.msra.mxu0 %v859
        %899 = vmatprep.subr.bf16.mxu0 0
        %900 = vmatpush1.bf16.msra.mxu0 %v860
        %901 = vmatprep.subr.bf16.mxu0 0
        %902 = vmatpush1.bf16.msra.mxu0 %v861
        %903 = vmatprep.subr.bf16.mxu0 0
        %904 = vmatpush1.bf16.msra.mxu0 %v862
        %905 = vmatprep.subr.bf16.mxu0 0
        %906 = vmatpush1.bf16.msra.mxu0 %v863
        %907 = vmatprep.subr.bf16.mxu0 0
        %908 = vmatpush1.bf16.msra.mxu0 %v864
        %909 = vmatprep.subr.bf16.mxu0 0
        %910 = vmatpush1.bf16.msra.mxu0 %v865
        %911 = vmatprep.subr.bf16.mxu0 0
        %912 = vmatpush1.bf16.msra.mxu0 %v866
        %913 = vmatprep.subr.bf16.mxu0 0
        %914 = vmatpush1.bf16.msra.mxu0 %v867
        %915 = vmatprep.subr.bf16.mxu0 0
        %916 = vmatpush1.bf16.msra.mxu0 %v868
        %917 = vmatprep.mubr.bf16.mxu0 %v786
        %918 = vmatmul.mubr.bf16.gmra.mrb[0].mxu0 %v779
        %v919 = vpop.f32.mrb[0].mxu0
        %v920 = vadd.f32 0.0, %v919
        %v921 = vpop.f32.mrb[0].mxu0
        %v922 = vpop.f32.mrb[0].mxu0
        %v923 = vpop.f32.mrb[0].mxu0
        %924 = vdwg.mxu0
        %v925 = vadd.f32 %v733, %v920
        %v927 = vlaneseq
        %v928 = vshrl.u32 %v927, 7
        %v929 = vsub.s32 0, %v928
        %v930 = vrot.slane %v187, %v929
        %v932 = vadd.f32 %v925, %v930
        %vm933 = vcmp.gt.f32.partialorder %v932, 0.0
        %v934 = vmul.f32 %v932, 0.2
        %v935 = vsel %vm933, %v932, %v934
        %v936 = vpack.c.bf16 %v935, %v935
        %937 = vst [vmem:[%s185] sm:$0x3] %v936
        %v938 = vld [vmem:[%s555] sm:$0x33]
        %v939 = vld [vmem:[#allocation2] sm:$0xf]
        %v940 = vld [vmem:[#allocation2 + $0x4] sm:$0xf]
        %v941 = vld [vmem:[#allocation2 + $0x8] sm:$0xf]
        %v942 = vld [vmem:[#allocation2 + $0xc] sm:$0xf]
        %v943 = vld [vmem:[#allocation2 + $0x10] sm:$0xf]
        %v944 = vld [vmem:[#allocation2 + $0x14] sm:$0xf]
        %v945 = vld [vmem:[#allocation2 + $0x18] sm:$0xf]
        %v946 = vld [vmem:[#allocation2 + $0x1c] sm:$0xf]
        %v947 = vld [vmem:[#allocation2 + $0x20] sm:$0xf]
        %v948 = vld [vmem:[#allocation2 + $0x24] sm:$0xf]
        %v949 = vld [vmem:[#allocation2 + $0x28] sm:$0xf]
        %v950 = vld [vmem:[#allocation2 + $0x2c] sm:$0xf]
        %v951 = vld [vmem:[#allocation2 + $0x30] sm:$0xf]
        %v952 = vld [vmem:[#allocation2 + $0x34] sm:$0xf]
        %v953 = vld [vmem:[#allocation2 + $0x38] sm:$0xf]
        %v954 = vld [vmem:[#allocation2 + $0x3c] sm:$0xf]
        %v955 = vld [vmem:[#allocation2 + $0x40] sm:$0xf]
        %v956 = vld [vmem:[#allocation2 + $0x44] sm:$0xf]
        %v957 = vld [vmem:[#allocation2 + $0x48] sm:$0xf]
        %v958 = vld [vmem:[#allocation2 + $0x4c] sm:$0xf]
        %v959 = vld [vmem:[#allocation2 + $0x50] sm:$0xf]
        %v960 = vld [vmem:[#allocation2 + $0x54] sm:$0xf]
        %v961 = vld [vmem:[#allocation2 + $0x58] sm:$0xf]
        %v962 = vld [vmem:[#allocation2 + $0x5c] sm:$0xf]
        %v963 = vld [vmem:[#allocation2 + $0x60] sm:$0xf]
        %v964 = vld [vmem:[#allocation2 + $0x64] sm:$0xf]
        %v965 = vld [vmem:[#allocation2 + $0x68] sm:$0xf]
        %v966 = vld [vmem:[#allocation2 + $0x6c] sm:$0xf]
        %v967 = vld [vmem:[#allocation2 + $0x70] sm:$0xf]
        %v968 = vld [vmem:[#allocation2 + $0x74] sm:$0xf]
        %v969 = vld [vmem:[#allocation2 + $0x78] sm:$0xf]
        %v970 = vld [vmem:[#allocation2 + $0x7c] sm:$0xf]
        %v971 = vld [vmem:[%s555] sm:$0x77]
        %v972 = vld [vmem:[%s222] sm:$0xf]
        %v973 = vld [vmem:[%s222 + $0x4] sm:$0xf]
        %v974 = vld [vmem:[%s222 + $0x8] sm:$0xf]
        %v975 = vld [vmem:[%s222 + $0xc] sm:$0xf]
        %v976 = vld [vmem:[%s222 + $0x10] sm:$0xf]
        %v977 = vld [vmem:[%s222 + $0x14] sm:$0xf]
        %v978 = vld [vmem:[%s222 + $0x18] sm:$0xf]
        %v979 = vld [vmem:[%s222 + $0x1c] sm:$0xf]
        %v980 = vld [vmem:[%s222 + $0x20] sm:$0xf]
        %v981 = vld [vmem:[%s222 + $0x24] sm:$0xf]
        %v982 = vld [vmem:[%s222 + $0x28] sm:$0xf]
        %v983 = vld [vmem:[%s222 + $0x2c] sm:$0xf]
        %v984 = vld [vmem:[%s222 + $0x30] sm:$0xf]
        %v985 = vld [vmem:[%s222 + $0x34] sm:$0xf]
        %v986 = vld [vmem:[%s222 + $0x38] sm:$0xf]
        %v987 = vld [vmem:[%s222 + $0x3c] sm:$0xf]
        %v988 = vld [vmem:[%s222 + $0x40] sm:$0xf]
        %v989 = vld [vmem:[%s222 + $0x44] sm:$0xf]
        %v990 = vld [vmem:[%s222 + $0x48] sm:$0xf]
        %v991 = vld [vmem:[%s222 + $0x4c] sm:$0xf]
        %v992 = vld [vmem:[%s222 + $0x50] sm:$0xf]
        %v993 = vld [vmem:[%s222 + $0x54] sm:$0xf]
        %v994 = vld [vmem:[%s222 + $0x58] sm:$0xf]
        %v995 = vld [vmem:[%s222 + $0x5c] sm:$0xf]
        %v996 = vld [vmem:[%s222 + $0x60] sm:$0xf]
        %v997 = vld [vmem:[%s222 + $0x64] sm:$0xf]
        %v998 = vld [vmem:[%s222 + $0x68] sm:$0xf]
        %v999 = vld [vmem:[%s222 + $0x6c] sm:$0xf]
        %v1000 = vld [vmem:[%s222 + $0x70] sm:$0xf]
        %v1001 = vld [vmem:[%s222 + $0x74] sm:$0xf]
        %v1002 = vld [vmem:[%s222 + $0x78] sm:$0xf]
        %v1003 = vld [vmem:[%s222 + $0x7c] sm:$0xf]
        %v1005 = vunpack.c.l.b16 %v971
        %v1006 = vunpack.c.h.b16 %v971
        %v1007 = vpack.c.b16 %v1005, %v1005
        %v1008 = vpack.c.b16 %v1006, %v1006
        %v1010 = vshrl.u32 %v1007, 16
        %v1012 = vshll.u32 %v1007, 16
        %v1014 = vrot.slane %v1012, 1
        %v1015 = vor.u32 %v1010, %v1014
        %v1017 = vshrl.u32 %v1008, 16
        %v1019 = vshll.u32 %v1008, 16
        %v1021 = vrot.slane %v1019, 1
        %v1022 = vor.u32 %v1017, %v1021
        %v1057 = vunpack.c.l.b16 %v972
        %v1058 = vunpack.c.l.b16 %v973
        %v1059 = vunpack.c.l.b16 %v974
        %v1060 = vunpack.c.l.b16 %v975
        %v1061 = vunpack.c.l.b16 %v976
        %v1062 = vunpack.c.l.b16 %v977
        %v1063 = vunpack.c.l.b16 %v978
        %v1064 = vunpack.c.l.b16 %v979
        %v1065 = vunpack.c.l.b16 %v980
        %v1066 = vunpack.c.l.b16 %v981
        %v1067 = vunpack.c.l.b16 %v982
        %v1068 = vunpack.c.l.b16 %v983
        %v1069 = vunpack.c.l.b16 %v984
        %v1070 = vunpack.c.l.b16 %v985
        %v1071 = vunpack.c.l.b16 %v986
        %v1072 = vunpack.c.l.b16 %v987
        %v1073 = vunpack.c.l.b16 %v988
        %v1074 = vunpack.c.l.b16 %v989
        %v1075 = vunpack.c.l.b16 %v990
        %v1076 = vunpack.c.l.b16 %v991
        %v1077 = vunpack.c.l.b16 %v992
        %v1078 = vunpack.c.l.b16 %v993
        %v1079 = vunpack.c.l.b16 %v994
        %v1080 = vunpack.c.l.b16 %v995
        %v1081 = vunpack.c.l.b16 %v996
        %v1082 = vunpack.c.l.b16 %v997
        %v1083 = vunpack.c.l.b16 %v998
        %v1084 = vunpack.c.l.b16 %v999
        %v1085 = vunpack.c.l.b16 %v1000
        %v1086 = vunpack.c.l.b16 %v1001
        %v1087 = vunpack.c.l.b16 %v1002
        %v1088 = vunpack.c.l.b16 %v1003
        %v1089 = vpack.c.b16 %v1058, %v1057
        %v1090 = vpack.c.b16 %v1060, %v1059
        %v1091 = vpack.c.b16 %v1062, %v1061
        %v1092 = vpack.c.b16 %v1064, %v1063
        %v1093 = vpack.c.b16 %v1066, %v1065
        %v1094 = vpack.c.b16 %v1068, %v1067
        %v1095 = vpack.c.b16 %v1070, %v1069
        %v1096 = vpack.c.b16 %v1072, %v1071
        %v1097 = vpack.c.b16 %v1074, %v1073
        %v1098 = vpack.c.b16 %v1076, %v1075
        %v1099 = vpack.c.b16 %v1078, %v1077
        %v1100 = vpack.c.b16 %v1080, %v1079
        %v1101 = vpack.c.b16 %v1082, %v1081
        %v1102 = vpack.c.b16 %v1084, %v1083
        %v1103 = vpack.c.b16 %v1086, %v1085
        %v1104 = vpack.c.b16 %v1088, %v1087
        %1121 = vmatprep.subr.bf16.mxu0 0
        %1122 = vmatpush1.bf16.msra.mxu0 %v1089
        %1123 = vmatprep.subr.bf16.mxu0 0
        %1124 = vmatpush1.bf16.msra.mxu0 %v1090
        %1125 = vmatprep.subr.bf16.mxu0 0
        %1126 = vmatpush1.bf16.msra.mxu0 %v1091
        %1127 = vmatprep.subr.bf16.mxu0 0
        %1128 = vmatpush1.bf16.msra.mxu0 %v1092
        %1129 = vmatprep.subr.bf16.mxu0 0
        %1130 = vmatpush1.bf16.msra.mxu0 %v1093
        %1131 = vmatprep.subr.bf16.mxu0 0
        %1132 = vmatpush1.bf16.msra.mxu0 %v1094
        %1133 = vmatprep.subr.bf16.mxu0 0
        %1134 = vmatpush1.bf16.msra.mxu0 %v1095
        %1135 = vmatprep.subr.bf16.mxu0 0
        %1136 = vmatpush1.bf16.msra.mxu0 %v1096
        %1137 = vmatprep.subr.bf16.mxu0 0
        %1138 = vmatpush1.bf16.msra.mxu0 %v1097
        %1139 = vmatprep.subr.bf16.mxu0 0
        %1140 = vmatpush1.bf16.msra.mxu0 %v1098
        %1141 = vmatprep.subr.bf16.mxu0 0
        %1142 = vmatpush1.bf16.msra.mxu0 %v1099
        %1143 = vmatprep.subr.bf16.mxu0 0
        %1144 = vmatpush1.bf16.msra.mxu0 %v1100
        %1145 = vmatprep.subr.bf16.mxu0 0
        %1146 = vmatpush1.bf16.msra.mxu0 %v1101
        %1147 = vmatprep.subr.bf16.mxu0 0
        %1148 = vmatpush1.bf16.msra.mxu0 %v1102
        %1149 = vmatprep.subr.bf16.mxu0 0
        %1150 = vmatpush1.bf16.msra.mxu0 %v1103
        %1151 = vmatprep.subr.bf16.mxu0 0
        %1152 = vmatpush1.bf16.msra.mxu0 %v1104
        %1153 = vmatprep.mubr.bf16.mxu0 %v1022
        %1154 = vmatmul.mubr.bf16.gmra.mrb[0].mxu0 %v1015
        %v1155 = vpop.f32.mrb[0].mxu0
        %v1156 = vadd.f32 0.0, %v1155
        %v1157 = vpop.f32.mrb[0].mxu0
        %v1158 = vpop.f32.mrb[0].mxu0
        %v1159 = vpop.f32.mrb[0].mxu0
        %1160 = vdwg.mxu0
        %v1162 = vunpack.c.l.b16 %v938
        %v1163 = vunpack.c.h.b16 %v938
        %v1164 = vpack.c.b16 %v1162, %v1162
        %v1165 = vpack.c.b16 %v1163, %v1163
        %v1200 = vunpack.c.l.b16 %v939
        %v1201 = vunpack.c.l.b16 %v940
        %v1202 = vunpack.c.l.b16 %v941
        %v1203 = vunpack.c.l.b16 %v942
        %v1204 = vunpack.c.l.b16 %v943
        %v1205 = vunpack.c.l.b16 %v944
        %v1206 = vunpack.c.l.b16 %v945
        %v1207 = vunpack.c.l.b16 %v946
        %v1208 = vunpack.c.l.b16 %v947
        %v1209 = vunpack.c.l.b16 %v948
        %v1210 = vunpack.c.l.b16 %v949
        %v1211 = vunpack.c.l.b16 %v950
        %v1212 = vunpack.c.l.b16 %v951
        %v1213 = vunpack.c.l.b16 %v952
        %v1214 = vunpack.c.l.b16 %v953
        %v1215 = vunpack.c.l.b16 %v954
        %v1216 = vunpack.c.l.b16 %v955
        %v1217 = vunpack.c.l.b16 %v956
        %v1218 = vunpack.c.l.b16 %v957
        %v1219 = vunpack.c.l.b16 %v958
        %v1220 = vunpack.c.l.b16 %v959
        %v1221 = vunpack.c.l.b16 %v960
        %v1222 = vunpack.c.l.b16 %v961
        %v1223 = vunpack.c.l.b16 %v962
        %v1224 = vunpack.c.l.b16 %v963
        %v1225 = vunpack.c.l.b16 %v964
        %v1226 = vunpack.c.l.b16 %v965
        %v1227 = vunpack.c.l.b16 %v966
        %v1228 = vunpack.c.l.b16 %v967
        %v1229 = vunpack.c.l.b16 %v968
        %v1230 = vunpack.c.l.b16 %v969
        %v1231 = vunpack.c.l.b16 %v970
        %v1232 = vpack.c.b16 %v1201, %v1200
        %v1233 = vpack.c.b16 %v1203, %v1202
        %v1234 = vpack.c.b16 %v1205, %v1204
        %v1235 = vpack.c.b16 %v1207, %v1206
        %v1236 = vpack.c.b16 %v1209, %v1208
        %v1237 = vpack.c.b16 %v1211, %v1210
        %v1238 = vpack.c.b16 %v1213, %v1212
        %v1239 = vpack.c.b16 %v1215, %v1214
        %v1240 = vpack.c.b16 %v1217, %v1216
        %v1241 = vpack.c.b16 %v1219, %v1218
        %v1242 = vpack.c.b16 %v1221, %v1220
        %v1243 = vpack.c.b16 %v1223, %v1222
        %v1244 = vpack.c.b16 %v1225, %v1224
        %v1245 = vpack.c.b16 %v1227, %v1226
        %v1246 = vpack.c.b16 %v1229, %v1228
        %v1247 = vpack.c.b16 %v1231, %v1230
        %1264 = vmatprep.subr.bf16.mxu0 0
        %1265 = vmatpush1.bf16.msra.mxu0 %v1232
        %1266 = vmatprep.subr.bf16.mxu0 0
        %1267 = vmatpush1.bf16.msra.mxu0 %v1233
        %1268 = vmatprep.subr.bf16.mxu0 0
        %1269 = vmatpush1.bf16.msra.mxu0 %v1234
        %1270 = vmatprep.subr.bf16.mxu0 0
        %1271 = vmatpush1.bf16.msra.mxu0 %v1235
        %1272 = vmatprep.subr.bf16.mxu0 0
        %1273 = vmatpush1.bf16.msra.mxu0 %v1236
        %1274 = vmatprep.subr.bf16.mxu0 0
        %1275 = vmatpush1.bf16.msra.mxu0 %v1237
        %1276 = vmatprep.subr.bf16.mxu0 0
        %1277 = vmatpush1.bf16.msra.mxu0 %v1238
        %1278 = vmatprep.subr.bf16.mxu0 0
        %1279 = vmatpush1.bf16.msra.mxu0 %v1239
        %1280 = vmatprep.subr.bf16.mxu0 0
        %1281 = vmatpush1.bf16.msra.mxu0 %v1240
        %1282 = vmatprep.subr.bf16.mxu0 0
        %1283 = vmatpush1.bf16.msra.mxu0 %v1241
        %1284 = vmatprep.subr.bf16.mxu0 0
        %1285 = vmatpush1.bf16.msra.mxu0 %v1242
        %1286 = vmatprep.subr.bf16.mxu0 0
        %1287 = vmatpush1.bf16.msra.mxu0 %v1243
        %1288 = vmatprep.subr.bf16.mxu0 0
        %1289 = vmatpush1.bf16.msra.mxu0 %v1244
        %1290 = vmatprep.subr.bf16.mxu0 0
        %1291 = vmatpush1.bf16.msra.mxu0 %v1245
        %1292 = vmatprep.subr.bf16.mxu0 0
        %1293 = vmatpush1.bf16.msra.mxu0 %v1246
        %1294 = vmatprep.subr.bf16.mxu0 0
        %1295 = vmatpush1.bf16.msra.mxu0 %v1247
        %1296 = vmatprep.mubr.bf16.mxu0 %v1165
        %1297 = vmatmul.mubr.bf16.gmra.mrb[0].mxu0 %v1164
        %v1298 = vpop.f32.mrb[0].mxu0
        %v1299 = vadd.f32 %v1156, %v1298
        %v1300 = vpop.f32.mrb[0].mxu0
        %v1301 = vpop.f32.mrb[0].mxu0
        %v1302 = vpop.f32.mrb[0].mxu0
        %1303 = vdwg.mxu0
        %s1304 = scalar_lea.vmem %s180, 16
        %v1305 = vld [vmem:[%s1304] sm:$0x33]
        %v1306 = vld [vmem:[%s557] sm:$0xf]
        %v1307 = vld [vmem:[%s557 + $0x4] sm:$0xf]
        %v1308 = vld [vmem:[%s557 + $0x8] sm:$0xf]
        %v1309 = vld [vmem:[%s557 + $0xc] sm:$0xf]
        %v1310 = vld [vmem:[%s557 + $0x10] sm:$0xf]
        %v1311 = vld [vmem:[%s557 + $0x14] sm:$0xf]
        %v1312 = vld [vmem:[%s557 + $0x18] sm:$0xf]
        %v1313 = vld [vmem:[%s557 + $0x1c] sm:$0xf]
        %v1314 = vld [vmem:[%s557 + $0x20] sm:$0xf]
        %v1315 = vld [vmem:[%s557 + $0x24] sm:$0xf]
        %v1316 = vld [vmem:[%s557 + $0x28] sm:$0xf]
        %v1317 = vld [vmem:[%s557 + $0x2c] sm:$0xf]
        %v1318 = vld [vmem:[%s557 + $0x30] sm:$0xf]
        %v1319 = vld [vmem:[%s557 + $0x34] sm:$0xf]
        %v1320 = vld [vmem:[%s557 + $0x38] sm:$0xf]
        %v1321 = vld [vmem:[%s557 + $0x3c] sm:$0xf]
        %v1322 = vld [vmem:[%s557 + $0x40] sm:$0xf]
        %v1323 = vld [vmem:[%s557 + $0x44] sm:$0xf]
        %v1324 = vld [vmem:[%s557 + $0x48] sm:$0xf]
        %v1325 = vld [vmem:[%s557 + $0x4c] sm:$0xf]
        %v1326 = vld [vmem:[%s557 + $0x50] sm:$0xf]
        %v1327 = vld [vmem:[%s557 + $0x54] sm:$0xf]
        %v1328 = vld [vmem:[%s557 + $0x58] sm:$0xf]
        %v1329 = vld [vmem:[%s557 + $0x5c] sm:$0xf]
        %v1330 = vld [vmem:[%s557 + $0x60] sm:$0xf]
        %v1331 = vld [vmem:[%s557 + $0x64] sm:$0xf]
        %v1332 = vld [vmem:[%s557 + $0x68] sm:$0xf]
        %v1333 = vld [vmem:[%s557 + $0x6c] sm:$0xf]
        %v1334 = vld [vmem:[%s557 + $0x70] sm:$0xf]
        %v1335 = vld [vmem:[%s557 + $0x74] sm:$0xf]
        %v1336 = vld [vmem:[%s557 + $0x78] sm:$0xf]
        %v1337 = vld [vmem:[%s557 + $0x7c] sm:$0xf]
        %v1339 = vunpack.c.l.b16 %v1305
        %v1340 = vunpack.c.h.b16 %v1305
        %v1341 = vpack.c.b16 %v1339, %v1339
        %v1342 = vpack.c.b16 %v1340, %v1340
        %v1377 = vunpack.c.l.b16 %v1306
        %v1378 = vunpack.c.l.b16 %v1307
        %v1379 = vunpack.c.l.b16 %v1308
        %v1380 = vunpack.c.l.b16 %v1309
        %v1381 = vunpack.c.l.b16 %v1310
        %v1382 = vunpack.c.l.b16 %v1311
        %v1383 = vunpack.c.l.b16 %v1312
        %v1384 = vunpack.c.l.b16 %v1313
        %v1385 = vunpack.c.l.b16 %v1314
        %v1386 = vunpack.c.l.b16 %v1315
        %v1387 = vunpack.c.l.b16 %v1316
        %v1388 = vunpack.c.l.b16 %v1317
        %v1389 = vunpack.c.l.b16 %v1318
        %v1390 = vunpack.c.l.b16 %v1319
        %v1391 = vunpack.c.l.b16 %v1320
        %v1392 = vunpack.c.l.b16 %v1321
        %v1393 = vunpack.c.l.b16 %v1322
        %v1394 = vunpack.c.l.b16 %v1323
        %v1395 = vunpack.c.l.b16 %v1324
        %v1396 = vunpack.c.l.b16 %v1325
        %v1397 = vunpack.c.l.b16 %v1326
        %v1398 = vunpack.c.l.b16 %v1327
        %v1399 = vunpack.c.l.b16 %v1328
        %v1400 = vunpack.c.l.b16 %v1329
        %v1401 = vunpack.c.l.b16 %v1330
        %v1402 = vunpack.c.l.b16 %v1331
        %v1403 = vunpack.c.l.b16 %v1332
        %v1404 = vunpack.c.l.b16 %v1333
        %v1405 = vunpack.c.l.b16 %v1334
        %v1406 = vunpack.c.l.b16 %v1335
        %v1407 = vunpack.c.l.b16 %v1336
        %v1408 = vunpack.c.l.b16 %v1337
        %v1409 = vpack.c.b16 %v1378, %v1377
        %v1410 = vpack.c.b16 %v1380, %v1379
        %v1411 = vpack.c.b16 %v1382, %v1381
        %v1412 = vpack.c.b16 %v1384, %v1383
        %v1413 = vpack.c.b16 %v1386, %v1385
        %v1414 = vpack.c.b16 %v1388, %v1387
        %v1415 = vpack.c.b16 %v1390, %v1389
        %v1416 = vpack.c.b16 %v1392, %v1391
        %v1417 = vpack.c.b16 %v1394, %v1393
        %v1418 = vpack.c.b16 %v1396, %v1395
        %v1419 = vpack.c.b16 %v1398, %v1397
        %v1420 = vpack.c.b16 %v1400, %v1399
        %v1421 = vpack.c.b16 %v1402, %v1401
        %v1422 = vpack.c.b16 %v1404, %v1403
        %v1423 = vpack.c.b16 %v1406, %v1405
        %v1424 = vpack.c.b16 %v1408, %v1407
        %1441 = vmatprep.subr.bf16.mxu0 0
        %1442 = vmatpush1.bf16.msra.mxu0 %v1409
        %1443 = vmatprep.subr.bf16.mxu0 0
        %1444 = vmatpush1.bf16.msra.mxu0 %v1410
        %1445 = vmatprep.subr.bf16.mxu0 0
        %1446 = vmatpush1.bf16.msra.mxu0 %v1411
        %1447 = vmatprep.subr.bf16.mxu0 0
        %1448 = vmatpush1.bf16.msra.mxu0 %v1412
        %1449 = vmatprep.subr.bf16.mxu0 0
        %1450 = vmatpush1.bf16.msra.mxu0 %v1413
        %1451 = vmatprep.subr.bf16.mxu0 0
        %1452 = vmatpush1.bf16.msra.mxu0 %v1414
        %1453 = vmatprep.subr.bf16.mxu0 0
        %1454 = vmatpush1.bf16.msra.mxu0 %v1415
        %1455 = vmatprep.subr.bf16.mxu0 0
        %1456 = vmatpush1.bf16.msra.mxu0 %v1416
        %1457 = vmatprep.subr.bf16.mxu0 0
        %1458 = vmatpush1.bf16.msra.mxu0 %v1417
        %1459 = vmatprep.subr.bf16.mxu0 0
        %1460 = vmatpush1.bf16.msra.mxu0 %v1418
        %1461 = vmatprep.subr.bf16.mxu0 0
        %1462 = vmatpush1.bf16.msra.mxu0 %v1419
        %1463 = vmatprep.subr.bf16.mxu0 0
        %1464 = vmatpush1.bf16.msra.mxu0 %v1420
        %1465 = vmatprep.subr.bf16.mxu0 0
        %1466 = vmatpush1.bf16.msra.mxu0 %v1421
        %1467 = vmatprep.subr.bf16.mxu0 0
        %1468 = vmatpush1.bf16.msra.mxu0 %v1422
        %1469 = vmatprep.subr.bf16.mxu0 0
        %1470 = vmatpush1.bf16.msra.mxu0 %v1423
        %1471 = vmatprep.subr.bf16.mxu0 0
        %1472 = vmatpush1.bf16.msra.mxu0 %v1424
        %1473 = vmatprep.mubr.bf16.mxu0 %v1342
        %1474 = vmatmul.mubr.bf16.gmra.mrb[0].mxu0 %v1341
        %v1475 = vpop.f32.mrb[0].mxu0
        %v1476 = vadd.f32 0.0, %v1475
        %v1477 = vpop.f32.mrb[0].mxu0
        %v1478 = vpop.f32.mrb[0].mxu0
        %v1479 = vpop.f32.mrb[0].mxu0
        %1480 = vdwg.mxu0
        %v1481 = vadd.f32 %v1299, %v1476
        %v1482 = vld [vmem:[%s1304] sm:$0x77]
        %v1483 = vld [vmem:[%s735] sm:$0xf]
        %v1484 = vld [vmem:[%s735 + $0x4] sm:$0xf]
        %v1485 = vld [vmem:[%s735 + $0x8] sm:$0xf]
        %v1486 = vld [vmem:[%s735 + $0xc] sm:$0xf]
        %v1487 = vld [vmem:[%s735 + $0x10] sm:$0xf]
        %v1488 = vld [vmem:[%s735 + $0x14] sm:$0xf]
        %v1489 = vld [vmem:[%s735 + $0x18] sm:$0xf]
        %v1490 = vld [vmem:[%s735 + $0x1c] sm:$0xf]
        %v1491 = vld [vmem:[%s735 + $0x20] sm:$0xf]
        %v1492 = vld [vmem:[%s735 + $0x24] sm:$0xf]
        %v1493 = vld [vmem:[%s735 + $0x28] sm:$0xf]
        %v1494 = vld [vmem:[%s735 + $0x2c] sm:$0xf]
        %v1495 = vld [vmem:[%s735 + $0x30] sm:$0xf]
        %v1496 = vld [vmem:[%s735 + $0x34] sm:$0xf]
        %v1497 = vld [vmem:[%s735 + $0x38] sm:$0xf]
        %v1498 = vld [vmem:[%s735 + $0x3c] sm:$0xf]
        %v1499 = vld [vmem:[%s735 + $0x40] sm:$0xf]
        %v1500 = vld [vmem:[%s735 + $0x44] sm:$0xf]
        %v1501 = vld [vmem:[%s735 + $0x48] sm:$0xf]
        %v1502 = vld [vmem:[%s735 + $0x4c] sm:$0xf]
        %v1503 = vld [vmem:[%s735 + $0x50] sm:$0xf]
        %v1504 = vld [vmem:[%s735 + $0x54] sm:$0xf]
        %v1505 = vld [vmem:[%s735 + $0x58] sm:$0xf]
        %v1506 = vld [vmem:[%s735 + $0x5c] sm:$0xf]
        %v1507 = vld [vmem:[%s735 + $0x60] sm:$0xf]
        %v1508 = vld [vmem:[%s735 + $0x64] sm:$0xf]
        %v1509 = vld [vmem:[%s735 + $0x68] sm:$0xf]
        %v1510 = vld [vmem:[%s735 + $0x6c] sm:$0xf]
        %v1511 = vld [vmem:[%s735 + $0x70] sm:$0xf]
        %v1512 = vld [vmem:[%s735 + $0x74] sm:$0xf]
        %v1513 = vld [vmem:[%s735 + $0x78] sm:$0xf]
        %v1514 = vld [vmem:[%s735 + $0x7c] sm:$0xf]
        %v1516 = vunpack.c.l.b16 %v1482
        %v1517 = vunpack.c.h.b16 %v1482
        %v1518 = vpack.c.b16 %v1516, %v1516
        %v1519 = vpack.c.b16 %v1517, %v1517
        %v1521 = vshrl.u32 %v1518, 16
        %v1523 = vshll.u32 %v1518, 16
        %v1525 = vrot.slane %v1523, 1
        %v1526 = vor.u32 %v1521, %v1525
        %v1528 = vshrl.u32 %v1519, 16
        %v1530 = vshll.u32 %v1519, 16
        %v1532 = vrot.slane %v1530, 1
        %v1533 = vor.u32 %v1528, %v1532
        %v1568 = vunpack.c.l.b16 %v1483
        %v1569 = vunpack.c.l.b16 %v1484
        %v1570 = vunpack.c.l.b16 %v1485
        %v1571 = vunpack.c.l.b16 %v1486
        %v1572 = vunpack.c.l.b16 %v1487
        %v1573 = vunpack.c.l.b16 %v1488
        %v1574 = vunpack.c.l.b16 %v1489
        %v1575 = vunpack.c.l.b16 %v1490
        %v1576 = vunpack.c.l.b16 %v1491
        %v1577 = vunpack.c.l.b16 %v1492
        %v1578 = vunpack.c.l.b16 %v1493
        %v1579 = vunpack.c.l.b16 %v1494
        %v1580 = vunpack.c.l.b16 %v1495
        %v1581 = vunpack.c.l.b16 %v1496
        %v1582 = vunpack.c.l.b16 %v1497
        %v1583 = vunpack.c.l.b16 %v1498
        %v1584 = vunpack.c.l.b16 %v1499
        %v1585 = vunpack.c.l.b16 %v1500
        %v1586 = vunpack.c.l.b16 %v1501
        %v1587 = vunpack.c.l.b16 %v1502
        %v1588 = vunpack.c.l.b16 %v1503
        %v1589 = vunpack.c.l.b16 %v1504
        %v1590 = vunpack.c.l.b16 %v1505
        %v1591 = vunpack.c.l.b16 %v1506
        %v1592 = vunpack.c.l.b16 %v1507
        %v1593 = vunpack.c.l.b16 %v1508
        %v1594 = vunpack.c.l.b16 %v1509
        %v1595 = vunpack.c.l.b16 %v1510
        %v1596 = vunpack.c.l.b16 %v1511
        %v1597 = vunpack.c.l.b16 %v1512
        %v1598 = vunpack.c.l.b16 %v1513
        %v1599 = vunpack.c.l.b16 %v1514
        %v1600 = vpack.c.b16 %v1569, %v1568
        %v1601 = vpack.c.b16 %v1571, %v1570
        %v1602 = vpack.c.b16 %v1573, %v1572
        %v1603 = vpack.c.b16 %v1575, %v1574
        %v1604 = vpack.c.b16 %v1577, %v1576
        %v1605 = vpack.c.b16 %v1579, %v1578
        %v1606 = vpack.c.b16 %v1581, %v1580
        %v1607 = vpack.c.b16 %v1583, %v1582
        %v1608 = vpack.c.b16 %v1585, %v1584
        %v1609 = vpack.c.b16 %v1587, %v1586
        %v1610 = vpack.c.b16 %v1589, %v1588
        %v1611 = vpack.c.b16 %v1591, %v1590
        %v1612 = vpack.c.b16 %v1593, %v1592
        %v1613 = vpack.c.b16 %v1595, %v1594
        %v1614 = vpack.c.b16 %v1597, %v1596
        %v1615 = vpack.c.b16 %v1599, %v1598
        %1632 = vmatprep.subr.bf16.mxu0 0
        %1633 = vmatpush1.bf16.msra.mxu0 %v1600
        %1634 = vmatprep.subr.bf16.mxu0 0
        %1635 = vmatpush1.bf16.msra.mxu0 %v1601
        %1636 = vmatprep.subr.bf16.mxu0 0
        %1637 = vmatpush1.bf16.msra.mxu0 %v1602
        %1638 = vmatprep.subr.bf16.mxu0 0
        %1639 = vmatpush1.bf16.msra.mxu0 %v1603
        %1640 = vmatprep.subr.bf16.mxu0 0
        %1641 = vmatpush1.bf16.msra.mxu0 %v1604
        %1642 = vmatprep.subr.bf16.mxu0 0
        %1643 = vmatpush1.bf16.msra.mxu0 %v1605
        %1644 = vmatprep.subr.bf16.mxu0 0
        %1645 = vmatpush1.bf16.msra.mxu0 %v1606
        %1646 = vmatprep.subr.bf16.mxu0 0
        %1647 = vmatpush1.bf16.msra.mxu0 %v1607
        %1648 = vmatprep.subr.bf16.mxu0 0
        %1649 = vmatpush1.bf16.msra.mxu0 %v1608
        %1650 = vmatprep.subr.bf16.mxu0 0
        %1651 = vmatpush1.bf16.msra.mxu0 %v1609
        %1652 = vmatprep.subr.bf16.mxu0 0
        %1653 = vmatpush1.bf16.msra.mxu0 %v1610
        %1654 = vmatprep.subr.bf16.mxu0 0
        %1655 = vmatpush1.bf16.msra.mxu0 %v1611
        %1656 = vmatprep.subr.bf16.mxu0 0
        %1657 = vmatpush1.bf16.msra.mxu0 %v1612
        %1658 = vmatprep.subr.bf16.mxu0 0
        %1659 = vmatpush1.bf16.msra.mxu0 %v1613
        %1660 = vmatprep.subr.bf16.mxu0 0
        %1661 = vmatpush1.bf16.msra.mxu0 %v1614
        %1662 = vmatprep.subr.bf16.mxu0 0
        %1663 = vmatpush1.bf16.msra.mxu0 %v1615
        %1664 = vmatprep.mubr.bf16.mxu0 %v1533
        %1665 = vmatmul.mubr.bf16.gmra.mrb[0].mxu0 %v1526
        %v1666 = vpop.f32.mrb[0].mxu0
        %v1667 = vadd.f32 0.0, %v1666
        %v1668 = vpop.f32.mrb[0].mxu0
        %v1669 = vpop.f32.mrb[0].mxu0
        %v1670 = vpop.f32.mrb[0].mxu0
        %1671 = vdwg.mxu0
        %v1672 = vadd.f32 %v1481, %v1667
        %v1673 = vadd.f32 %v1672, %v930
        %vm1674 = vcmp.gt.f32.partialorder %v1673, 0.0
        %v1675 = vmul.f32 %v1673, 0.2
        %v1676 = vsel %vm1674, %v1673, %v1675
        %v1677 = vpack.c.bf16 %v1676, %v1676
        %s1678 = scalar_lea.vmem %s185, 2
        %1679 = vst [vmem:[%s1678] sm:$0x3] %v1677
        %v1680 = vld [vmem:[%s1304] sm:$0x33]
        %v1681 = vld [vmem:[#allocation2] sm:$0xf]
        %v1682 = vld [vmem:[#allocation2 + $0x4] sm:$0xf]
        %v1683 = vld [vmem:[#allocation2 + $0x8] sm:$0xf]
        %v1684 = vld [vmem:[#allocation2 + $0xc] sm:$0xf]
        %v1685 = vld [vmem:[#allocation2 + $0x10] sm:$0xf]
        %v1686 = vld [vmem:[#allocation2 + $0x14] sm:$0xf]
        %v1687 = vld [vmem:[#allocation2 + $0x18] sm:$0xf]
        %v1688 = vld [vmem:[#allocation2 + $0x1c] sm:$0xf]
        %v1689 = vld [vmem:[#allocation2 + $0x20] sm:$0xf]
        %v1690 = vld [vmem:[#allocation2 + $0x24] sm:$0xf]
        %v1691 = vld [vmem:[#allocation2 + $0x28] sm:$0xf]
        %v1692 = vld [vmem:[#allocation2 + $0x2c] sm:$0xf]
        %v1693 = vld [vmem:[#allocation2 + $0x30] sm:$0xf]
        %v1694 = vld [vmem:[#allocation2 + $0x34] sm:$0xf]
        %v1695 = vld [vmem:[#allocation2 + $0x38] sm:$0xf]
        %v1696 = vld [vmem:[#allocation2 + $0x3c] sm:$0xf]
        %v1697 = vld [vmem:[#allocation2 + $0x40] sm:$0xf]
        %v1698 = vld [vmem:[#allocation2 + $0x44] sm:$0xf]
        %v1699 = vld [vmem:[#allocation2 + $0x48] sm:$0xf]
        %v1700 = vld [vmem:[#allocation2 + $0x4c] sm:$0xf]
        %v1701 = vld [vmem:[#allocation2 + $0x50] sm:$0xf]
        %v1702 = vld [vmem:[#allocation2 + $0x54] sm:$0xf]
        %v1703 = vld [vmem:[#allocation2 + $0x58] sm:$0xf]
        %v1704 = vld [vmem:[#allocation2 + $0x5c] sm:$0xf]
        %v1705 = vld [vmem:[#allocation2 + $0x60] sm:$0xf]
        %v1706 = vld [vmem:[#allocation2 + $0x64] sm:$0xf]
        %v1707 = vld [vmem:[#allocation2 + $0x68] sm:$0xf]
        %v1708 = vld [vmem:[#allocation2 + $0x6c] sm:$0xf]
        %v1709 = vld [vmem:[#allocation2 + $0x70] sm:$0xf]
        %v1710 = vld [vmem:[#allocation2 + $0x74] sm:$0xf]
        %v1711 = vld [vmem:[#allocation2 + $0x78] sm:$0xf]
        %v1712 = vld [vmem:[#allocation2 + $0x7c] sm:$0xf]
        %v1713 = vld [vmem:[%s1304] sm:$0x77]
        %v1714 = vld [vmem:[%s222] sm:$0xf]
        %v1715 = vld [vmem:[%s222 + $0x4] sm:$0xf]
        %v1716 = vld [vmem:[%s222 + $0x8] sm:$0xf]
        %v1717 = vld [vmem:[%s222 + $0xc] sm:$0xf]
        %v1718 = vld [vmem:[%s222 + $0x10] sm:$0xf]
        %v1719 = vld [vmem:[%s222 + $0x14] sm:$0xf]
        %v1720 = vld [vmem:[%s222 + $0x18] sm:$0xf]
        %v1721 = vld [vmem:[%s222 + $0x1c] sm:$0xf]
        %v1722 = vld [vmem:[%s222 + $0x20] sm:$0xf]
        %v1723 = vld [vmem:[%s222 + $0x24] sm:$0xf]
        %v1724 = vld [vmem:[%s222 + $0x28] sm:$0xf]
        %v1725 = vld [vmem:[%s222 + $0x2c] sm:$0xf]
        %v1726 = vld [vmem:[%s222 + $0x30] sm:$0xf]
        %v1727 = vld [vmem:[%s222 + $0x34] sm:$0xf]
        %v1728 = vld [vmem:[%s222 + $0x38] sm:$0xf]
        %v1729 = vld [vmem:[%s222 + $0x3c] sm:$0xf]
        %v1730 = vld [vmem:[%s222 + $0x40] sm:$0xf]
        %v1731 = vld [vmem:[%s222 + $0x44] sm:$0xf]
        %v1732 = vld [vmem:[%s222 + $0x48] sm:$0xf]
        %v1733 = vld [vmem:[%s222 + $0x4c] sm:$0xf]
        %v1734 = vld [vmem:[%s222 + $0x50] sm:$0xf]
        %v1735 = vld [vmem:[%s222 + $0x54] sm:$0xf]
        %v1736 = vld [vmem:[%s222 + $0x58] sm:$0xf]
        %v1737 = vld [vmem:[%s222 + $0x5c] sm:$0xf]
        %v1738 = vld [vmem:[%s222 + $0x60] sm:$0xf]
        %v1739 = vld [vmem:[%s222 + $0x64] sm:$0xf]
        %v1740 = vld [vmem:[%s222 + $0x68] sm:$0xf]
        %v1741 = vld [vmem:[%s222 + $0x6c] sm:$0xf]
        %v1742 = vld [vmem:[%s222 + $0x70] sm:$0xf]
        %v1743 = vld [vmem:[%s222 + $0x74] sm:$0xf]
        %v1744 = vld [vmem:[%s222 + $0x78] sm:$0xf]
        %v1745 = vld [vmem:[%s222 + $0x7c] sm:$0xf]
        %v1747 = vunpack.c.l.b16 %v1713
        %v1748 = vunpack.c.h.b16 %v1713
        %v1749 = vpack.c.b16 %v1747, %v1747
        %v1750 = vpack.c.b16 %v1748, %v1748
        %v1752 = vshrl.u32 %v1749, 16
        %v1754 = vshll.u32 %v1749, 16
        %v1756 = vrot.slane %v1754, 1
        %v1757 = vor.u32 %v1752, %v1756
        %v1759 = vshrl.u32 %v1750, 16
        %v1761 = vshll.u32 %v1750, 16
        %v1763 = vrot.slane %v1761, 1
        %v1764 = vor.u32 %v1759, %v1763
        %v1799 = vunpack.c.l.b16 %v1714
        %v1800 = vunpack.c.l.b16 %v1715
        %v1801 = vunpack.c.l.b16 %v1716
        %v1802 = vunpack.c.l.b16 %v1717
        %v1803 = vunpack.c.l.b16 %v1718
        %v1804 = vunpack.c.l.b16 %v1719
        %v1805 = vunpack.c.l.b16 %v1720
        %v1806 = vunpack.c.l.b16 %v1721
        %v1807 = vunpack.c.l.b16 %v1722
        %v1808 = vunpack.c.l.b16 %v1723
        %v1809 = vunpack.c.l.b16 %v1724
        %v1810 = vunpack.c.l.b16 %v1725
        %v1811 = vunpack.c.l.b16 %v1726
        %v1812 = vunpack.c.l.b16 %v1727
        %v1813 = vunpack.c.l.b16 %v1728
        %v1814 = vunpack.c.l.b16 %v1729
        %v1815 = vunpack.c.l.b16 %v1730
        %v1816 = vunpack.c.l.b16 %v1731
        %v1817 = vunpack.c.l.b16 %v1732
        %v1818 = vunpack.c.l.b16 %v1733
        %v1819 = vunpack.c.l.b16 %v1734
        %v1820 = vunpack.c.l.b16 %v1735
        %v1821 = vunpack.c.l.b16 %v1736
        %v1822 = vunpack.c.l.b16 %v1737
        %v1823 = vunpack.c.l.b16 %v1738
        %v1824 = vunpack.c.l.b16 %v1739
        %v1825 = vunpack.c.l.b16 %v1740
        %v1826 = vunpack.c.l.b16 %v1741
        %v1827 = vunpack.c.l.b16 %v1742
        %v1828 = vunpack.c.l.b16 %v1743
        %v1829 = vunpack.c.l.b16 %v1744
        %v1830 = vunpack.c.l.b16 %v1745
        %v1831 = vpack.c.b16 %v1800, %v1799
        %v1832 = vpack.c.b16 %v1802, %v1801
        %v1833 = vpack.c.b16 %v1804, %v1803
        %v1834 = vpack.c.b16 %v1806, %v1805
        %v1835 = vpack.c.b16 %v1808, %v1807
        %v1836 = vpack.c.b16 %v1810, %v1809
        %v1837 = vpack.c.b16 %v1812, %v1811
        %v1838 = vpack.c.b16 %v1814, %v1813
        %v1839 = vpack.c.b16 %v1816, %v1815
        %v1840 = vpack.c.b16 %v1818, %v1817
        %v1841 = vpack.c.b16 %v1820, %v1819
        %v1842 = vpack.c.b16 %v1822, %v1821
        %v1843 = vpack.c.b16 %v1824, %v1823
        %v1844 = vpack.c.b16 %v1826, %v1825
        %v1845 = vpack.c.b16 %v1828, %v1827
        %v1846 = vpack.c.b16 %v1830, %v1829
        %1863 = vmatprep.subr.bf16.mxu0 0
        %1864 = vmatpush1.bf16.msra.mxu0 %v1831
        %1865 = vmatprep.subr.bf16.mxu0 0
        %1866 = vmatpush1.bf16.msra.mxu0 %v1832
        %1867 = vmatprep.subr.bf16.mxu0 0
        %1868 = vmatpush1.bf16.msra.mxu0 %v1833
        %1869 = vmatprep.subr.bf16.mxu0 0
        %1870 = vmatpush1.bf16.msra.mxu0 %v1834
        %1871 = vmatprep.subr.bf16.mxu0 0
        %1872 = vmatpush1.bf16.msra.mxu0 %v1835
        %1873 = vmatprep.subr.bf16.mxu0 0
        %1874 = vmatpush1.bf16.msra.mxu0 %v1836
        %1875 = vmatprep.subr.bf16.mxu0 0
        %1876 = vmatpush1.bf16.msra.mxu0 %v1837
        %1877 = vmatprep.subr.bf16.mxu0 0
        %1878 = vmatpush1.bf16.msra.mxu0 %v1838
        %1879 = vmatprep.subr.bf16.mxu0 0
        %1880 = vmatpush1.bf16.msra.mxu0 %v1839
        %1881 = vmatprep.subr.bf16.mxu0 0
        %1882 = vmatpush1.bf16.msra.mxu0 %v1840
        %1883 = vmatprep.subr.bf16.mxu0 0
        %1884 = vmatpush1.bf16.msra.mxu0 %v1841
        %1885 = vmatprep.subr.bf16.mxu0 0
        %1886 = vmatpush1.bf16.msra.mxu0 %v1842
        %1887 = vmatprep.subr.bf16.mxu0 0
        %1888 = vmatpush1.bf16.msra.mxu0 %v1843
        %1889 = vmatprep.subr.bf16.mxu0 0
        %1890 = vmatpush1.bf16.msra.mxu0 %v1844
        %1891 = vmatprep.subr.bf16.mxu0 0
        %1892 = vmatpush1.bf16.msra.mxu0 %v1845
        %1893 = vmatprep.subr.bf16.mxu0 0
        %1894 = vmatpush1.bf16.msra.mxu0 %v1846
        %1895 = vmatprep.mubr.bf16.mxu0 %v1764
        %1896 = vmatmul.mubr.bf16.gmra.mrb[0].mxu0 %v1757
        %v1897 = vpop.f32.mrb[0].mxu0
        %v1898 = vadd.f32 0.0, %v1897
        %v1899 = vpop.f32.mrb[0].mxu0
        %v1900 = vpop.f32.mrb[0].mxu0
        %v1901 = vpop.f32.mrb[0].mxu0
        %1902 = vdwg.mxu0
        %v1904 = vunpack.c.l.b16 %v1680
        %v1905 = vunpack.c.h.b16 %v1680
        %v1906 = vpack.c.b16 %v1904, %v1904
        %v1907 = vpack.c.b16 %v1905, %v1905
        %v1942 = vunpack.c.l.b16 %v1681
        %v1943 = vunpack.c.l.b16 %v1682
        %v1944 = vunpack.c.l.b16 %v1683
        %v1945 = vunpack.c.l.b16 %v1684
        %v1946 = vunpack.c.l.b16 %v1685
        %v1947 = vunpack.c.l.b16 %v1686
        %v1948 = vunpack.c.l.b16 %v1687
        %v1949 = vunpack.c.l.b16 %v1688
        %v1950 = vunpack.c.l.b16 %v1689
        %v1951 = vunpack.c.l.b16 %v1690
        %v1952 = vunpack.c.l.b16 %v1691
        %v1953 = vunpack.c.l.b16 %v1692
        %v1954 = vunpack.c.l.b16 %v1693
        %v1955 = vunpack.c.l.b16 %v1694
        %v1956 = vunpack.c.l.b16 %v1695
        %v1957 = vunpack.c.l.b16 %v1696
        %v1958 = vunpack.c.l.b16 %v1697
        %v1959 = vunpack.c.l.b16 %v1698
        %v1960 = vunpack.c.l.b16 %v1699
        %v1961 = vunpack.c.l.b16 %v1700
        %v1962 = vunpack.c.l.b16 %v1701
        %v1963 = vunpack.c.l.b16 %v1702
        %v1964 = vunpack.c.l.b16 %v1703
        %v1965 = vunpack.c.l.b16 %v1704
        %v1966 = vunpack.c.l.b16 %v1705
        %v1967 = vunpack.c.l.b16 %v1706
        %v1968 = vunpack.c.l.b16 %v1707
        %v1969 = vunpack.c.l.b16 %v1708
        %v1970 = vunpack.c.l.b16 %v1709
        %v1971 = vunpack.c.l.b16 %v1710
        %v1972 = vunpack.c.l.b16 %v1711
        %v1973 = vunpack.c.l.b16 %v1712
        %v1974 = vpack.c.b16 %v1943, %v1942
        %v1975 = vpack.c.b16 %v1945, %v1944
        %v1976 = vpack.c.b16 %v1947, %v1946
        %v1977 = vpack.c.b16 %v1949, %v1948
        %v1978 = vpack.c.b16 %v1951, %v1950
        %v1979 = vpack.c.b16 %v1953, %v1952
        %v1980 = vpack.c.b16 %v1955, %v1954
        %v1981 = vpack.c.b16 %v1957, %v1956
        %v1982 = vpack.c.b16 %v1959, %v1958
        %v1983 = vpack.c.b16 %v1961, %v1960
        %v1984 = vpack.c.b16 %v1963, %v1962
        %v1985 = vpack.c.b16 %v1965, %v1964
        %v1986 = vpack.c.b16 %v1967, %v1966
        %v1987 = vpack.c.b16 %v1969, %v1968
        %v1988 = vpack.c.b16 %v1971, %v1970
        %v1989 = vpack.c.b16 %v1973, %v1972
        %2006 = vmatprep.subr.bf16.mxu0 0
        %2007 = vmatpush1.bf16.msra.mxu0 %v1974
        %2008 = vmatprep.subr.bf16.mxu0 0
        %2009 = vmatpush1.bf16.msra.mxu0 %v1975
        %2010 = vmatprep.subr.bf16.mxu0 0
        %2011 = vmatpush1.bf16.msra.mxu0 %v1976
        %2012 = vmatprep.subr.bf16.mxu0 0
        %2013 = vmatpush1.bf16.msra.mxu0 %v1977
        %2014 = vmatprep.subr.bf16.mxu0 0
        %2015 = vmatpush1.bf16.msra.mxu0 %v1978
        %2016 = vmatprep.subr.bf16.mxu0 0
        %2017 = vmatpush1.bf16.msra.mxu0 %v1979
        %2018 = vmatprep.subr.bf16.mxu0 0
        %2019 = vmatpush1.bf16.msra.mxu0 %v1980
        %2020 = vmatprep.subr.bf16.mxu0 0
        %2021 = vmatpush1.bf16.msra.mxu0 %v1981
        %2022 = vmatprep.subr.bf16.mxu0 0
        %2023 = vmatpush1.bf16.msra.mxu0 %v1982
        %2024 = vmatprep.subr.bf16.mxu0 0
        %2025 = vmatpush1.bf16.msra.mxu0 %v1983
        %2026 = vmatprep.subr.bf16.mxu0 0
        %2027 = vmatpush1.bf16.msra.mxu0 %v1984
        %2028 = vmatprep.subr.bf16.mxu0 0
        %2029 = vmatpush1.bf16.msra.mxu0 %v1985
        %2030 = vmatprep.subr.bf16.mxu0 0
        %2031 = vmatpush1.bf16.msra.mxu0 %v1986
        %2032 = vmatprep.subr.bf16.mxu0 0
        %2033 = vmatpush1.bf16.msra.mxu0 %v1987
        %2034 = vmatprep.subr.bf16.mxu0 0
        %2035 = vmatpush1.bf16.msra.mxu0 %v1988
        %2036 = vmatprep.subr.bf16.mxu0 0
        %2037 = vmatpush1.bf16.msra.mxu0 %v1989
        %2038 = vmatprep.mubr.bf16.mxu0 %v1907
        %2039 = vmatmul.mubr.bf16.gmra.mrb[0].mxu0 %v1906
        %v2040 = vpop.f32.mrb[0].mxu0
        %v2041 = vadd.f32 %v1898, %v2040
        %v2042 = vpop.f32.mrb[0].mxu0
        %v2043 = vpop.f32.mrb[0].mxu0
        %v2044 = vpop.f32.mrb[0].mxu0
        %2045 = vdwg.mxu0
        %s2046 = scalar_lea.vmem %s180, 24
        %v2047 = vld [vmem:[%s2046] sm:$0x33]
        %v2048 = vld [vmem:[%s557] sm:$0xf]
        %v2049 = vld [vmem:[%s557 + $0x4] sm:$0xf]
        %v2050 = vld [vmem:[%s557 + $0x8] sm:$0xf]
        %v2051 = vld [vmem:[%s557 + $0xc] sm:$0xf]
        %v2052 = vld [vmem:[%s557 + $0x10] sm:$0xf]
        %v2053 = vld [vmem:[%s557 + $0x14] sm:$0xf]
        %v2054 = vld [vmem:[%s557 + $0x18] sm:$0xf]
        %v2055 = vld [vmem:[%s557 + $0x1c] sm:$0xf]
        %v2056 = vld [vmem:[%s557 + $0x20] sm:$0xf]
        %v2057 = vld [vmem:[%s557 + $0x24] sm:$0xf]
        %v2058 = vld [vmem:[%s557 + $0x28] sm:$0xf]
        %v2059 = vld [vmem:[%s557 + $0x2c] sm:$0xf]
        %v2060 = vld [vmem:[%s557 + $0x30] sm:$0xf]
        %v2061 = vld [vmem:[%s557 + $0x34] sm:$0xf]
        %v2062 = vld [vmem:[%s557 + $0x38] sm:$0xf]
        %v2063 = vld [vmem:[%s557 + $0x3c] sm:$0xf]
        %v2064 = vld [vmem:[%s557 + $0x40] sm:$0xf]
        %v2065 = vld [vmem:[%s557 + $0x44] sm:$0xf]
        %v2066 = vld [vmem:[%s557 + $0x48] sm:$0xf]
        %v2067 = vld [vmem:[%s557 + $0x4c] sm:$0xf]
        %v2068 = vld [vmem:[%s557 + $0x50] sm:$0xf]
        %v2069 = vld [vmem:[%s557 + $0x54] sm:$0xf]
        %v2070 = vld [vmem:[%s557 + $0x58] sm:$0xf]
        %v2071 = vld [vmem:[%s557 + $0x5c] sm:$0xf]
        %v2072 = vld [vmem:[%s557 + $0x60] sm:$0xf]
        %v2073 = vld [vmem:[%s557 + $0x64] sm:$0xf]
        %v2074 = vld [vmem:[%s557 + $0x68] sm:$0xf]
        %v2075 = vld [vmem:[%s557 + $0x6c] sm:$0xf]
        %v2076 = vld [vmem:[%s557 + $0x70] sm:$0xf]
        %v2077 = vld [vmem:[%s557 + $0x74] sm:$0xf]
        %v2078 = vld [vmem:[%s557 + $0x78] sm:$0xf]
        %v2079 = vld [vmem:[%s557 + $0x7c] sm:$0xf]
        %v2081 = vunpack.c.l.b16 %v2047
        %v2082 = vunpack.c.h.b16 %v2047
        %v2083 = vpack.c.b16 %v2081, %v2081
        %v2084 = vpack.c.b16 %v2082, %v2082
        %v2119 = vunpack.c.l.b16 %v2048
        %v2120 = vunpack.c.l.b16 %v2049
        %v2121 = vunpack.c.l.b16 %v2050
        %v2122 = vunpack.c.l.b16 %v2051
        %v2123 = vunpack.c.l.b16 %v2052
        %v2124 = vunpack.c.l.b16 %v2053
        %v2125 = vunpack.c.l.b16 %v2054
        %v2126 = vunpack.c.l.b16 %v2055
        %v2127 = vunpack.c.l.b16 %v2056
        %v2128 = vunpack.c.l.b16 %v2057
        %v2129 = vunpack.c.l.b16 %v2058
        %v2130 = vunpack.c.l.b16 %v2059
        %v2131 = vunpack.c.l.b16 %v2060
        %v2132 = vunpack.c.l.b16 %v2061
        %v2133 = vunpack.c.l.b16 %v2062
        %v2134 = vunpack.c.l.b16 %v2063
        %v2135 = vunpack.c.l.b16 %v2064
        %v2136 = vunpack.c.l.b16 %v2065
        %v2137 = vunpack.c.l.b16 %v2066
        %v2138 = vunpack.c.l.b16 %v2067
        %v2139 = vunpack.c.l.b16 %v2068
        %v2140 = vunpack.c.l.b16 %v2069
        %v2141 = vunpack.c.l.b16 %v2070
        %v2142 = vunpack.c.l.b16 %v2071
        %v2143 = vunpack.c.l.b16 %v2072
        %v2144 = vunpack.c.l.b16 %v2073
        %v2145 = vunpack.c.l.b16 %v2074
        %v2146 = vunpack.c.l.b16 %v2075
        %v2147 = vunpack.c.l.b16 %v2076
        %v2148 = vunpack.c.l.b16 %v2077
        %v2149 = vunpack.c.l.b16 %v2078
        %v2150 = vunpack.c.l.b16 %v2079
        %v2151 = vpack.c.b16 %v2120, %v2119
        %v2152 = vpack.c.b16 %v2122, %v2121
        %v2153 = vpack.c.b16 %v2124, %v2123
        %v2154 = vpack.c.b16 %v2126, %v2125
        %v2155 = vpack.c.b16 %v2128, %v2127
        %v2156 = vpack.c.b16 %v2130, %v2129
        %v2157 = vpack.c.b16 %v2132, %v2131
        %v2158 = vpack.c.b16 %v2134, %v2133
        %v2159 = vpack.c.b16 %v2136, %v2135
        %v2160 = vpack.c.b16 %v2138, %v2137
        %v2161 = vpack.c.b16 %v2140, %v2139
        %v2162 = vpack.c.b16 %v2142, %v2141
        %v2163 = vpack.c.b16 %v2144, %v2143
        %v2164 = vpack.c.b16 %v2146, %v2145
        %v2165 = vpack.c.b16 %v2148, %v2147
        %v2166 = vpack.c.b16 %v2150, %v2149
        %2183 = vmatprep.subr.bf16.mxu0 0
        %2184 = vmatpush1.bf16.msra.mxu0 %v2151
        %2185 = vmatprep.subr.bf16.mxu0 0
        %2186 = vmatpush1.bf16.msra.mxu0 %v2152
        %2187 = vmatprep.subr.bf16.mxu0 0
        %2188 = vmatpush1.bf16.msra.mxu0 %v2153
        %2189 = vmatprep.subr.bf16.mxu0 0
        %2190 = vmatpush1.bf16.msra.mxu0 %v2154
        %2191 = vmatprep.subr.bf16.mxu0 0
        %2192 = vmatpush1.bf16.msra.mxu0 %v2155
        %2193 = vmatprep.subr.bf16.mxu0 0
        %2194 = vmatpush1.bf16.msra.mxu0 %v2156
        %2195 = vmatprep.subr.bf16.mxu0 0
        %2196 = vmatpush1.bf16.msra.mxu0 %v2157
        %2197 = vmatprep.subr.bf16.mxu0 0
        %2198 = vmatpush1.bf16.msra.mxu0 %v2158
        %2199 = vmatprep.subr.bf16.mxu0 0
        %2200 = vmatpush1.bf16.msra.mxu0 %v2159
        %2201 = vmatprep.subr.bf16.mxu0 0
        %2202 = vmatpush1.bf16.msra.mxu0 %v2160
        %2203 = vmatprep.subr.bf16.mxu0 0
        %2204 = vmatpush1.bf16.msra.mxu0 %v2161
        %2205 = vmatprep.subr.bf16.mxu0 0
        %2206 = vmatpush1.bf16.msra.mxu0 %v2162
        %2207 = vmatprep.subr.bf16.mxu0 0
        %2208 = vmatpush1.bf16.msra.mxu0 %v2163
        %2209 = vmatprep.subr.bf16.mxu0 0
        %2210 = vmatpush1.bf16.msra.mxu0 %v2164
        %2211 = vmatprep.subr.bf16.mxu0 0
        %2212 = vmatpush1.bf16.msra.mxu0 %v2165
        %2213 = vmatprep.subr.bf16.mxu0 0
        %2214 = vmatpush1.bf16.msra.mxu0 %v2166
        %2215 = vmatprep.mubr.bf16.mxu0 %v2084
        %2216 = vmatmul.mubr.bf16.gmra.mrb[0].mxu0 %v2083
        %v2217 = vpop.f32.mrb[0].mxu0
        %v2218 = vadd.f32 0.0, %v2217
        %v2219 = vpop.f32.mrb[0].mxu0
        %v2220 = vpop.f32.mrb[0].mxu0
        %v2221 = vpop.f32.mrb[0].mxu0
        %2222 = vdwg.mxu0
        %v2223 = vadd.f32 %v2041, %v2218
        %v2224 = vld [vmem:[%s2046] sm:$0x77]
        %v2225 = vld [vmem:[%s735] sm:$0xf]
        %v2226 = vld [vmem:[%s735 + $0x4] sm:$0xf]
        %v2227 = vld [vmem:[%s735 + $0x8] sm:$0xf]
        %v2228 = vld [vmem:[%s735 + $0xc] sm:$0xf]
        %v2229 = vld [vmem:[%s735 + $0x10] sm:$0xf]
        %v2230 = vld [vmem:[%s735 + $0x14] sm:$0xf]
        %v2231 = vld [vmem:[%s735 + $0x18] sm:$0xf]
        %v2232 = vld [vmem:[%s735 + $0x1c] sm:$0xf]
        %v2233 = vld [vmem:[%s735 + $0x20] sm:$0xf]
        %v2234 = vld [vmem:[%s735 + $0x24] sm:$0xf]
        %v2235 = vld [vmem:[%s735 + $0x28] sm:$0xf]
        %v2236 = vld [vmem:[%s735 + $0x2c] sm:$0xf]
        %v2237 = vld [vmem:[%s735 + $0x30] sm:$0xf]
        %v2238 = vld [vmem:[%s735 + $0x34] sm:$0xf]
        %v2239 = vld [vmem:[%s735 + $0x38] sm:$0xf]
        %v2240 = vld [vmem:[%s735 + $0x3c] sm:$0xf]
        %v2241 = vld [vmem:[%s735 + $0x40] sm:$0xf]
        %v2242 = vld [vmem:[%s735 + $0x44] sm:$0xf]
        %v2243 = vld [vmem:[%s735 + $0x48] sm:$0xf]
        %v2244 = vld [vmem:[%s735 + $0x4c] sm:$0xf]
        %v2245 = vld [vmem:[%s735 + $0x50] sm:$0xf]
        %v2246 = vld [vmem:[%s735 + $0x54] sm:$0xf]
        %v2247 = vld [vmem:[%s735 + $0x58] sm:$0xf]
        %v2248 = vld [vmem:[%s735 + $0x5c] sm:$0xf]
        %v2249 = vld [vmem:[%s735 + $0x60] sm:$0xf]
        %v2250 = vld [vmem:[%s735 + $0x64] sm:$0xf]
        %v2251 = vld [vmem:[%s735 + $0x68] sm:$0xf]
        %v2252 = vld [vmem:[%s735 + $0x6c] sm:$0xf]
        %v2253 = vld [vmem:[%s735 + $0x70] sm:$0xf]
        %v2254 = vld [vmem:[%s735 + $0x74] sm:$0xf]
        %v2255 = vld [vmem:[%s735 + $0x78] sm:$0xf]
        %v2256 = vld [vmem:[%s735 + $0x7c] sm:$0xf]
        %v2258 = vunpack.c.l.b16 %v2224
        %v2259 = vunpack.c.h.b16 %v2224
        %v2260 = vpack.c.b16 %v2258, %v2258
        %v2261 = vpack.c.b16 %v2259, %v2259
        %v2263 = vshrl.u32 %v2260, 16
        %v2265 = vshll.u32 %v2260, 16
        %v2267 = vrot.slane %v2265, 1
        %v2268 = vor.u32 %v2263, %v2267
        %v2270 = vshrl.u32 %v2261, 16
        %v2272 = vshll.u32 %v2261, 16
        %v2274 = vrot.slane %v2272, 1
        %v2275 = vor.u32 %v2270, %v2274
        %v2310 = vunpack.c.l.b16 %v2225
        %v2311 = vunpack.c.l.b16 %v2226
        %v2312 = vunpack.c.l.b16 %v2227
        %v2313 = vunpack.c.l.b16 %v2228
        %v2314 = vunpack.c.l.b16 %v2229
        %v2315 = vunpack.c.l.b16 %v2230
        %v2316 = vunpack.c.l.b16 %v2231
        %v2317 = vunpack.c.l.b16 %v2232
        %v2318 = vunpack.c.l.b16 %v2233
        %v2319 = vunpack.c.l.b16 %v2234
        %v2320 = vunpack.c.l.b16 %v2235
        %v2321 = vunpack.c.l.b16 %v2236
        %v2322 = vunpack.c.l.b16 %v2237
        %v2323 = vunpack.c.l.b16 %v2238
        %v2324 = vunpack.c.l.b16 %v2239
        %v2325 = vunpack.c.l.b16 %v2240
        %v2326 = vunpack.c.l.b16 %v2241
        %v2327 = vunpack.c.l.b16 %v2242
        %v2328 = vunpack.c.l.b16 %v2243
        %v2329 = vunpack.c.l.b16 %v2244
        %v2330 = vunpack.c.l.b16 %v2245
        %v2331 = vunpack.c.l.b16 %v2246
        %v2332 = vunpack.c.l.b16 %v2247
        %v2333 = vunpack.c.l.b16 %v2248
        %v2334 = vunpack.c.l.b16 %v2249
        %v2335 = vunpack.c.l.b16 %v2250
        %v2336 = vunpack.c.l.b16 %v2251
        %v2337 = vunpack.c.l.b16 %v2252
        %v2338 = vunpack.c.l.b16 %v2253
        %v2339 = vunpack.c.l.b16 %v2254
        %v2340 = vunpack.c.l.b16 %v2255
        %v2341 = vunpack.c.l.b16 %v2256
        %v2342 = vpack.c.b16 %v2311, %v2310
        %v2343 = vpack.c.b16 %v2313, %v2312
        %v2344 = vpack.c.b16 %v2315, %v2314
        %v2345 = vpack.c.b16 %v2317, %v2316
        %v2346 = vpack.c.b16 %v2319, %v2318
        %v2347 = vpack.c.b16 %v2321, %v2320
        %v2348 = vpack.c.b16 %v2323, %v2322
        %v2349 = vpack.c.b16 %v2325, %v2324
        %v2350 = vpack.c.b16 %v2327, %v2326
        %v2351 = vpack.c.b16 %v2329, %v2328
        %v2352 = vpack.c.b16 %v2331, %v2330
        %v2353 = vpack.c.b16 %v2333, %v2332
        %v2354 = vpack.c.b16 %v2335, %v2334
        %v2355 = vpack.c.b16 %v2337, %v2336
        %v2356 = vpack.c.b16 %v2339, %v2338
        %v2357 = vpack.c.b16 %v2341, %v2340
        %2374 = vmatprep.subr.bf16.mxu0 0
        %2375 = vmatpush1.bf16.msra.mxu0 %v2342
        %2376 = vmatprep.subr.bf16.mxu0 0
        %2377 = vmatpush1.bf16.msra.mxu0 %v2343
        %2378 = vmatprep.subr.bf16.mxu0 0
        %2379 = vmatpush1.bf16.msra.mxu0 %v2344
        %2380 = vmatprep.subr.bf16.mxu0 0
        %2381 = vmatpush1.bf16.msra.mxu0 %v2345
        %2382 = vmatprep.subr.bf16.mxu0 0
        %2383 = vmatpush1.bf16.msra.mxu0 %v2346
        %2384 = vmatprep.subr.bf16.mxu0 0
        %2385 = vmatpush1.bf16.msra.mxu0 %v2347
        %2386 = vmatprep.subr.bf16.mxu0 0
        %2387 = vmatpush1.bf16.msra.mxu0 %v2348
        %2388 = vmatprep.subr.bf16.mxu0 0
        %2389 = vmatpush1.bf16.msra.mxu0 %v2349
        %2390 = vmatprep.subr.bf16.mxu0 0
        %2391 = vmatpush1.bf16.msra.mxu0 %v2350
        %2392 = vmatprep.subr.bf16.mxu0 0
        %2393 = vmatpush1.bf16.msra.mxu0 %v2351
        %2394 = vmatprep.subr.bf16.mxu0 0
        %2395 = vmatpush1.bf16.msra.mxu0 %v2352
        %2396 = vmatprep.subr.bf16.mxu0 0
        %2397 = vmatpush1.bf16.msra.mxu0 %v2353
        %2398 = vmatprep.subr.bf16.mxu0 0
        %2399 = vmatpush1.bf16.msra.mxu0 %v2354
        %2400 = vmatprep.subr.bf16.mxu0 0
        %2401 = vmatpush1.bf16.msra.mxu0 %v2355
        %2402 = vmatprep.subr.bf16.mxu0 0
        %2403 = vmatpush1.bf16.msra.mxu0 %v2356
        %2404 = vmatprep.subr.bf16.mxu0 0
        %2405 = vmatpush1.bf16.msra.mxu0 %v2357
        %2406 = vmatprep.mubr.bf16.mxu0 %v2275
        %2407 = vmatmul.mubr.bf16.gmra.mrb[0].mxu0 %v2268
        %v2408 = vpop.f32.mrb[0].mxu0
        %v2409 = vadd.f32 0.0, %v2408
        %v2410 = vpop.f32.mrb[0].mxu0
        %v2411 = vpop.f32.mrb[0].mxu0
        %v2412 = vpop.f32.mrb[0].mxu0
        %2413 = vdwg.mxu0
        %v2414 = vadd.f32 %v2223, %v2409
        %v2415 = vadd.f32 %v2414, %v930
        %vm2416 = vcmp.gt.f32.partialorder %v2415, 0.0
        %v2417 = vmul.f32 %v2415, 0.2
        %v2418 = vsel %vm2416, %v2415, %v2417
        %v2419 = vpack.c.bf16 %v2418, %v2418
        %s2420 = scalar_lea.vmem %s185, 4
        %2421 = vst [vmem:[%s2420] sm:$0x3] %v2419
        %v2422 = vld [vmem:[%s2046] sm:$0x33]
        %v2423 = vld [vmem:[#allocation2] sm:$0xf]
        %v2424 = vld [vmem:[#allocation2 + $0x4] sm:$0xf]
        %v2425 = vld [vmem:[#allocation2 + $0x8] sm:$0xf]
        %v2426 = vld [vmem:[#allocation2 + $0xc] sm:$0xf]
        %v2427 = vld [vmem:[#allocation2 + $0x10] sm:$0xf]
        %v2428 = vld [vmem:[#allocation2 + $0x14] sm:$0xf]
        %v2429 = vld [vmem:[#allocation2 + $0x18] sm:$0xf]
        %v2430 = vld [vmem:[#allocation2 + $0x1c] sm:$0xf]
        %v2431 = vld [vmem:[#allocation2 + $0x20] sm:$0xf]
        %v2432 = vld [vmem:[#allocation2 + $0x24] sm:$0xf]
        %v2433 = vld [vmem:[#allocation2 + $0x28] sm:$0xf]
        %v2434 = vld [vmem:[#allocation2 + $0x2c] sm:$0xf]
        %v2435 = vld [vmem:[#allocation2 + $0x30] sm:$0xf]
        %v2436 = vld [vmem:[#allocation2 + $0x34] sm:$0xf]
        %v2437 = vld [vmem:[#allocation2 + $0x38] sm:$0xf]
        %v2438 = vld [vmem:[#allocation2 + $0x3c] sm:$0xf]
        %v2439 = vld [vmem:[#allocation2 + $0x40] sm:$0xf]
        %v2440 = vld [vmem:[#allocation2 + $0x44] sm:$0xf]
        %v2441 = vld [vmem:[#allocation2 + $0x48] sm:$0xf]
        %v2442 = vld [vmem:[#allocation2 + $0x4c] sm:$0xf]
        %v2443 = vld [vmem:[#allocation2 + $0x50] sm:$0xf]
        %v2444 = vld [vmem:[#allocation2 + $0x54] sm:$0xf]
        %v2445 = vld [vmem:[#allocation2 + $0x58] sm:$0xf]
        %v2446 = vld [vmem:[#allocation2 + $0x5c] sm:$0xf]
        %v2447 = vld [vmem:[#allocation2 + $0x60] sm:$0xf]
        %v2448 = vld [vmem:[#allocation2 + $0x64] sm:$0xf]
        %v2449 = vld [vmem:[#allocation2 + $0x68] sm:$0xf]
        %v2450 = vld [vmem:[#allocation2 + $0x6c] sm:$0xf]
        %v2451 = vld [vmem:[#allocation2 + $0x70] sm:$0xf]
        %v2452 = vld [vmem:[#allocation2 + $0x74] sm:$0xf]
        %v2453 = vld [vmem:[#allocation2 + $0x78] sm:$0xf]
        %v2454 = vld [vmem:[#allocation2 + $0x7c] sm:$0xf]
        %v2455 = vld [vmem:[%s2046] sm:$0x77]
        %v2456 = vld [vmem:[%s222] sm:$0xf]
        %v2457 = vld [vmem:[%s222 + $0x4] sm:$0xf]
        %v2458 = vld [vmem:[%s222 + $0x8] sm:$0xf]
        %v2459 = vld [vmem:[%s222 + $0xc] sm:$0xf]
        %v2460 = vld [vmem:[%s222 + $0x10] sm:$0xf]
        %v2461 = vld [vmem:[%s222 + $0x14] sm:$0xf]
        %v2462 = vld [vmem:[%s222 + $0x18] sm:$0xf]
        %v2463 = vld [vmem:[%s222 + $0x1c] sm:$0xf]
        %v2464 = vld [vmem:[%s222 + $0x20] sm:$0xf]
        %v2465 = vld [vmem:[%s222 + $0x24] sm:$0xf]
        %v2466 = vld [vmem:[%s222 + $0x28] sm:$0xf]
        %v2467 = vld [vmem:[%s222 + $0x2c] sm:$0xf]
        %v2468 = vld [vmem:[%s222 + $0x30] sm:$0xf]
        %v2469 = vld [vmem:[%s222 + $0x34] sm:$0xf]
        %v2470 = vld [vmem:[%s222 + $0x38] sm:$0xf]
        %v2471 = vld [vmem:[%s222 + $0x3c] sm:$0xf]
        %v2472 = vld [vmem:[%s222 + $0x40] sm:$0xf]
        %v2473 = vld [vmem:[%s222 + $0x44] sm:$0xf]
        %v2474 = vld [vmem:[%s222 + $0x48] sm:$0xf]
        %v2475 = vld [vmem:[%s222 + $0x4c] sm:$0xf]
        %v2476 = vld [vmem:[%s222 + $0x50] sm:$0xf]
        %v2477 = vld [vmem:[%s222 + $0x54] sm:$0xf]
        %v2478 = vld [vmem:[%s222 + $0x58] sm:$0xf]
        %v2479 = vld [vmem:[%s222 + $0x5c] sm:$0xf]
        %v2480 = vld [vmem:[%s222 + $0x60] sm:$0xf]
        %v2481 = vld [vmem:[%s222 + $0x64] sm:$0xf]
        %v2482 = vld [vmem:[%s222 + $0x68] sm:$0xf]
        %v2483 = vld [vmem:[%s222 + $0x6c] sm:$0xf]
        %v2484 = vld [vmem:[%s222 + $0x70] sm:$0xf]
        %v2485 = vld [vmem:[%s222 + $0x74] sm:$0xf]
        %v2486 = vld [vmem:[%s222 + $0x78] sm:$0xf]
        %v2487 = vld [vmem:[%s222 + $0x7c] sm:$0xf]
        %v2489 = vunpack.c.l.b16 %v2455
        %v2490 = vunpack.c.h.b16 %v2455
        %v2491 = vpack.c.b16 %v2489, %v2489
        %v2492 = vpack.c.b16 %v2490, %v2490
        %v2494 = vshrl.u32 %v2491, 16
        %v2496 = vshll.u32 %v2491, 16
        %v2498 = vrot.slane %v2496, 1
        %v2499 = vor.u32 %v2494, %v2498
        %v2501 = vshrl.u32 %v2492, 16
        %v2503 = vshll.u32 %v2492, 16
        %v2505 = vrot.slane %v2503, 1
        %v2506 = vor.u32 %v2501, %v2505
        %v2541 = vunpack.c.l.b16 %v2456
        %v2542 = vunpack.c.l.b16 %v2457
        %v2543 = vunpack.c.l.b16 %v2458
        %v2544 = vunpack.c.l.b16 %v2459
        %v2545 = vunpack.c.l.b16 %v2460
        %v2546 = vunpack.c.l.b16 %v2461
        %v2547 = vunpack.c.l.b16 %v2462
        %v2548 = vunpack.c.l.b16 %v2463
        %v2549 = vunpack.c.l.b16 %v2464
        %v2550 = vunpack.c.l.b16 %v2465
        %v2551 = vunpack.c.l.b16 %v2466
        %v2552 = vunpack.c.l.b16 %v2467
        %v2553 = vunpack.c.l.b16 %v2468
        %v2554 = vunpack.c.l.b16 %v2469
        %v2555 = vunpack.c.l.b16 %v2470
        %v2556 = vunpack.c.l.b16 %v2471
        %v2557 = vunpack.c.l.b16 %v2472
        %v2558 = vunpack.c.l.b16 %v2473
        %v2559 = vunpack.c.l.b16 %v2474
        %v2560 = vunpack.c.l.b16 %v2475
        %v2561 = vunpack.c.l.b16 %v2476
        %v2562 = vunpack.c.l.b16 %v2477
        %v2563 = vunpack.c.l.b16 %v2478
        %v2564 = vunpack.c.l.b16 %v2479
        %v2565 = vunpack.c.l.b16 %v2480
        %v2566 = vunpack.c.l.b16 %v2481
        %v2567 = vunpack.c.l.b16 %v2482
        %v2568 = vunpack.c.l.b16 %v2483
        %v2569 = vunpack.c.l.b16 %v2484
        %v2570 = vunpack.c.l.b16 %v2485
        %v2571 = vunpack.c.l.b16 %v2486
        %v2572 = vunpack.c.l.b16 %v2487
        %v2573 = vpack.c.b16 %v2542, %v2541
        %v2574 = vpack.c.b16 %v2544, %v2543
        %v2575 = vpack.c.b16 %v2546, %v2545
        %v2576 = vpack.c.b16 %v2548, %v2547
        %v2577 = vpack.c.b16 %v2550, %v2549
        %v2578 = vpack.c.b16 %v2552, %v2551
        %v2579 = vpack.c.b16 %v2554, %v2553
        %v2580 = vpack.c.b16 %v2556, %v2555
        %v2581 = vpack.c.b16 %v2558, %v2557
        %v2582 = vpack.c.b16 %v2560, %v2559
        %v2583 = vpack.c.b16 %v2562, %v2561
        %v2584 = vpack.c.b16 %v2564, %v2563
        %v2585 = vpack.c.b16 %v2566, %v2565
        %v2586 = vpack.c.b16 %v2568, %v2567
        %v2587 = vpack.c.b16 %v2570, %v2569
        %v2588 = vpack.c.b16 %v2572, %v2571
        %2605 = vmatprep.subr.bf16.mxu0 0
        %2606 = vmatpush1.bf16.msra.mxu0 %v2573
        %2607 = vmatprep.subr.bf16.mxu0 0
        %2608 = vmatpush1.bf16.msra.mxu0 %v2574
        %2609 = vmatprep.subr.bf16.mxu0 0
        %2610 = vmatpush1.bf16.msra.mxu0 %v2575
        %2611 = vmatprep.subr.bf16.mxu0 0
        %2612 = vmatpush1.bf16.msra.mxu0 %v2576
        %2613 = vmatprep.subr.bf16.mxu0 0
        %2614 = vmatpush1.bf16.msra.mxu0 %v2577
        %2615 = vmatprep.subr.bf16.mxu0 0
        %2616 = vmatpush1.bf16.msra.mxu0 %v2578
        %2617 = vmatprep.subr.bf16.mxu0 0
        %2618 = vmatpush1.bf16.msra.mxu0 %v2579
        %2619 = vmatprep.subr.bf16.mxu0 0
        %2620 = vmatpush1.bf16.msra.mxu0 %v2580
        %2621 = vmatprep.subr.bf16.mxu0 0
        %2622 = vmatpush1.bf16.msra.mxu0 %v2581
        %2623 = vmatprep.subr.bf16.mxu0 0
        %2624 = vmatpush1.bf16.msra.mxu0 %v2582
        %2625 = vmatprep.subr.bf16.mxu0 0
        %2626 = vmatpush1.bf16.msra.mxu0 %v2583
        %2627 = vmatprep.subr.bf16.mxu0 0
        %2628 = vmatpush1.bf16.msra.mxu0 %v2584
        %2629 = vmatprep.subr.bf16.mxu0 0
        %2630 = vmatpush1.bf16.msra.mxu0 %v2585
        %2631 = vmatprep.subr.bf16.mxu0 0
        %2632 = vmatpush1.bf16.msra.mxu0 %v2586
        %2633 = vmatprep.subr.bf16.mxu0 0
        %2634 = vmatpush1.bf16.msra.mxu0 %v2587
        %2635 = vmatprep.subr.bf16.mxu0 0
        %2636 = vmatpush1.bf16.msra.mxu0 %v2588
        %2637 = vmatprep.mubr.bf16.mxu0 %v2506
        %2638 = vmatmul.mubr.bf16.gmra.mrb[0].mxu0 %v2499
        %v2639 = vpop.f32.mrb[0].mxu0
        %v2640 = vadd.f32 0.0, %v2639
        %v2641 = vpop.f32.mrb[0].mxu0
        %v2642 = vpop.f32.mrb[0].mxu0
        %v2643 = vpop.f32.mrb[0].mxu0
        %2644 = vdwg.mxu0
        %v2646 = vunpack.c.l.b16 %v2422
        %v2647 = vunpack.c.h.b16 %v2422
        %v2648 = vpack.c.b16 %v2646, %v2646
        %v2649 = vpack.c.b16 %v2647, %v2647
        %v2684 = vunpack.c.l.b16 %v2423
        %v2685 = vunpack.c.l.b16 %v2424
        %v2686 = vunpack.c.l.b16 %v2425
        %v2687 = vunpack.c.l.b16 %v2426
        %v2688 = vunpack.c.l.b16 %v2427
        %v2689 = vunpack.c.l.b16 %v2428
        %v2690 = vunpack.c.l.b16 %v2429
        %v2691 = vunpack.c.l.b16 %v2430
        %v2692 = vunpack.c.l.b16 %v2431
        %v2693 = vunpack.c.l.b16 %v2432
        %v2694 = vunpack.c.l.b16 %v2433
        %v2695 = vunpack.c.l.b16 %v2434
        %v2696 = vunpack.c.l.b16 %v2435
        %v2697 = vunpack.c.l.b16 %v2436
        %v2698 = vunpack.c.l.b16 %v2437
        %v2699 = vunpack.c.l.b16 %v2438
        %v2700 = vunpack.c.l.b16 %v2439
        %v2701 = vunpack.c.l.b16 %v2440
        %v2702 = vunpack.c.l.b16 %v2441
        %v2703 = vunpack.c.l.b16 %v2442
        %v2704 = vunpack.c.l.b16 %v2443
        %v2705 = vunpack.c.l.b16 %v2444
        %v2706 = vunpack.c.l.b16 %v2445
        %v2707 = vunpack.c.l.b16 %v2446
        %v2708 = vunpack.c.l.b16 %v2447
        %v2709 = vunpack.c.l.b16 %v2448
        %v2710 = vunpack.c.l.b16 %v2449
        %v2711 = vunpack.c.l.b16 %v2450
        %v2712 = vunpack.c.l.b16 %v2451
        %v2713 = vunpack.c.l.b16 %v2452
        %v2714 = vunpack.c.l.b16 %v2453
        %v2715 = vunpack.c.l.b16 %v2454
        %v2716 = vpack.c.b16 %v2685, %v2684
        %v2717 = vpack.c.b16 %v2687, %v2686
        %v2718 = vpack.c.b16 %v2689, %v2688
        %v2719 = vpack.c.b16 %v2691, %v2690
        %v2720 = vpack.c.b16 %v2693, %v2692
        %v2721 = vpack.c.b16 %v2695, %v2694
        %v2722 = vpack.c.b16 %v2697, %v2696
        %v2723 = vpack.c.b16 %v2699, %v2698
        %v2724 = vpack.c.b16 %v2701, %v2700
        %v2725 = vpack.c.b16 %v2703, %v2702
        %v2726 = vpack.c.b16 %v2705, %v2704
        %v2727 = vpack.c.b16 %v2707, %v2706
        %v2728 = vpack.c.b16 %v2709, %v2708
        %v2729 = vpack.c.b16 %v2711, %v2710
        %v2730 = vpack.c.b16 %v2713, %v2712
        %v2731 = vpack.c.b16 %v2715, %v2714
        %2748 = vmatprep.subr.bf16.mxu0 0
        %2749 = vmatpush1.bf16.msra.mxu0 %v2716
        %2750 = vmatprep.subr.bf16.mxu0 0
        %2751 = vmatpush1.bf16.msra.mxu0 %v2717
        %2752 = vmatprep.subr.bf16.mxu0 0
        %2753 = vmatpush1.bf16.msra.mxu0 %v2718
        %2754 = vmatprep.subr.bf16.mxu0 0
        %2755 = vmatpush1.bf16.msra.mxu0 %v2719
        %2756 = vmatprep.subr.bf16.mxu0 0
        %2757 = vmatpush1.bf16.msra.mxu0 %v2720
        %2758 = vmatprep.subr.bf16.mxu0 0
        %2759 = vmatpush1.bf16.msra.mxu0 %v2721
        %2760 = vmatprep.subr.bf16.mxu0 0
        %2761 = vmatpush1.bf16.msra.mxu0 %v2722
        %2762 = vmatprep.subr.bf16.mxu0 0
        %2763 = vmatpush1.bf16.msra.mxu0 %v2723
        %2764 = vmatprep.subr.bf16.mxu0 0
        %2765 = vmatpush1.bf16.msra.mxu0 %v2724
        %2766 = vmatprep.subr.bf16.mxu0 0
        %2767 = vmatpush1.bf16.msra.mxu0 %v2725
        %2768 = vmatprep.subr.bf16.mxu0 0
        %2769 = vmatpush1.bf16.msra.mxu0 %v2726
        %2770 = vmatprep.subr.bf16.mxu0 0
        %2771 = vmatpush1.bf16.msra.mxu0 %v2727
        %2772 = vmatprep.subr.bf16.mxu0 0
        %2773 = vmatpush1.bf16.msra.mxu0 %v2728
        %2774 = vmatprep.subr.bf16.mxu0 0
        %2775 = vmatpush1.bf16.msra.mxu0 %v2729
        %2776 = vmatprep.subr.bf16.mxu0 0
        %2777 = vmatpush1.bf16.msra.mxu0 %v2730
        %2778 = vmatprep.subr.bf16.mxu0 0
        %2779 = vmatpush1.bf16.msra.mxu0 %v2731
        %2780 = vmatprep.mubr.bf16.mxu0 %v2649
        %2781 = vmatmul.mubr.bf16.gmra.mrb[0].mxu0 %v2648
        %v2782 = vpop.f32.mrb[0].mxu0
        %v2783 = vadd.f32 %v2640, %v2782
        %v2784 = vpop.f32.mrb[0].mxu0
        %v2785 = vpop.f32.mrb[0].mxu0
        %v2786 = vpop.f32.mrb[0].mxu0
        %2787 = vdwg.mxu0
        %s2788 = scalar_lea.vmem %s180, 32
        %v2789 = vld [vmem:[%s2788] sm:$0x33]
        %v2790 = vld [vmem:[%s557] sm:$0xf]
        %v2791 = vld [vmem:[%s557 + $0x4] sm:$0xf]
        %v2792 = vld [vmem:[%s557 + $0x8] sm:$0xf]
        %v2793 = vld [vmem:[%s557 + $0xc] sm:$0xf]
        %v2794 = vld [vmem:[%s557 + $0x10] sm:$0xf]
        %v2795 = vld [vmem:[%s557 + $0x14] sm:$0xf]
        %v2796 = vld [vmem:[%s557 + $0x18] sm:$0xf]
        %v2797 = vld [vmem:[%s557 + $0x1c] sm:$0xf]
        %v2798 = vld [vmem:[%s557 + $0x20] sm:$0xf]
        %v2799 = vld [vmem:[%s557 + $0x24] sm:$0xf]
        %v2800 = vld [vmem:[%s557 + $0x28] sm:$0xf]
        %v2801 = vld [vmem:[%s557 + $0x2c] sm:$0xf]
        %v2802 = vld [vmem:[%s557 + $0x30] sm:$0xf]
        %v2803 = vld [vmem:[%s557 + $0x34] sm:$0xf]
        %v2804 = vld [vmem:[%s557 + $0x38] sm:$0xf]
        %v2805 = vld [vmem:[%s557 + $0x3c] sm:$0xf]
        %v2806 = vld [vmem:[%s557 + $0x40] sm:$0xf]
        %v2807 = vld [vmem:[%s557 + $0x44] sm:$0xf]
        %v2808 = vld [vmem:[%s557 + $0x48] sm:$0xf]
        %v2809 = vld [vmem:[%s557 + $0x4c] sm:$0xf]
        %v2810 = vld [vmem:[%s557 + $0x50] sm:$0xf]
        %v2811 = vld [vmem:[%s557 + $0x54] sm:$0xf]
        %v2812 = vld [vmem:[%s557 + $0x58] sm:$0xf]
        %v2813 = vld [vmem:[%s557 + $0x5c] sm:$0xf]
        %v2814 = vld [vmem:[%s557 + $0x60] sm:$0xf]
        %v2815 = vld [vmem:[%s557 + $0x64] sm:$0xf]
        %v2816 = vld [vmem:[%s557 + $0x68] sm:$0xf]
        %v2817 = vld [vmem:[%s557 + $0x6c] sm:$0xf]
        %v2818 = vld [vmem:[%s557 + $0x70] sm:$0xf]
        %v2819 = vld [vmem:[%s557 + $0x74] sm:$0xf]
        %v2820 = vld [vmem:[%s557 + $0x78] sm:$0xf]
        %v2821 = vld [vmem:[%s557 + $0x7c] sm:$0xf]
        %v2823 = vunpack.c.l.b16 %v2789
        %v2824 = vunpack.c.h.b16 %v2789
        %v2825 = vpack.c.b16 %v2823, %v2823
        %v2826 = vpack.c.b16 %v2824, %v2824
        %v2861 = vunpack.c.l.b16 %v2790
        %v2862 = vunpack.c.l.b16 %v2791
        %v2863 = vunpack.c.l.b16 %v2792
        %v2864 = vunpack.c.l.b16 %v2793
        %v2865 = vunpack.c.l.b16 %v2794
        %v2866 = vunpack.c.l.b16 %v2795
        %v2867 = vunpack.c.l.b16 %v2796
        %v2868 = vunpack.c.l.b16 %v2797
        %v2869 = vunpack.c.l.b16 %v2798
        %v2870 = vunpack.c.l.b16 %v2799
        %v2871 = vunpack.c.l.b16 %v2800
        %v2872 = vunpack.c.l.b16 %v2801
        %v2873 = vunpack.c.l.b16 %v2802
        %v2874 = vunpack.c.l.b16 %v2803
        %v2875 = vunpack.c.l.b16 %v2804
        %v2876 = vunpack.c.l.b16 %v2805
        %v2877 = vunpack.c.l.b16 %v2806
        %v2878 = vunpack.c.l.b16 %v2807
        %v2879 = vunpack.c.l.b16 %v2808
        %v2880 = vunpack.c.l.b16 %v2809
        %v2881 = vunpack.c.l.b16 %v2810
        %v2882 = vunpack.c.l.b16 %v2811
        %v2883 = vunpack.c.l.b16 %v2812
        %v2884 = vunpack.c.l.b16 %v2813
        %v2885 = vunpack.c.l.b16 %v2814
        %v2886 = vunpack.c.l.b16 %v2815
        %v2887 = vunpack.c.l.b16 %v2816
        %v2888 = vunpack.c.l.b16 %v2817
        %v2889 = vunpack.c.l.b16 %v2818
        %v2890 = vunpack.c.l.b16 %v2819
        %v2891 = vunpack.c.l.b16 %v2820
        %v2892 = vunpack.c.l.b16 %v2821
        %v2893 = vpack.c.b16 %v2862, %v2861
        %v2894 = vpack.c.b16 %v2864, %v2863
        %v2895 = vpack.c.b16 %v2866, %v2865
        %v2896 = vpack.c.b16 %v2868, %v2867
        %v2897 = vpack.c.b16 %v2870, %v2869
        %v2898 = vpack.c.b16 %v2872, %v2871
        %v2899 = vpack.c.b16 %v2874, %v2873
        %v2900 = vpack.c.b16 %v2876, %v2875
        %v2901 = vpack.c.b16 %v2878, %v2877
        %v2902 = vpack.c.b16 %v2880, %v2879
        %v2903 = vpack.c.b16 %v2882, %v2881
        %v2904 = vpack.c.b16 %v2884, %v2883
        %v2905 = vpack.c.b16 %v2886, %v2885
        %v2906 = vpack.c.b16 %v2888, %v2887
        %v2907 = vpack.c.b16 %v2890, %v2889
        %v2908 = vpack.c.b16 %v2892, %v2891
        %2925 = vmatprep.subr.bf16.mxu0 0
        %2926 = vmatpush1.bf16.msra.mxu0 %v2893
        %2927 = vmatprep.subr.bf16.mxu0 0
        %2928 = vmatpush1.bf16.msra.mxu0 %v2894
        %2929 = vmatprep.subr.bf16.mxu0 0
        %2930 = vmatpush1.bf16.msra.mxu0 %v2895
        %2931 = vmatprep.subr.bf16.mxu0 0
        %2932 = vmatpush1.bf16.msra.mxu0 %v2896
        %2933 = vmatprep.subr.bf16.mxu0 0
        %2934 = vmatpush1.bf16.msra.mxu0 %v2897
        %2935 = vmatprep.subr.bf16.mxu0 0
        %2936 = vmatpush1.bf16.msra.mxu0 %v2898
        %2937 = vmatprep.subr.bf16.mxu0 0
        %2938 = vmatpush1.bf16.msra.mxu0 %v2899
        %2939 = vmatprep.subr.bf16.mxu0 0
        %2940 = vmatpush1.bf16.msra.mxu0 %v2900
        %2941 = vmatprep.subr.bf16.mxu0 0
        %2942 = vmatpush1.bf16.msra.mxu0 %v2901
        %2943 = vmatprep.subr.bf16.mxu0 0
        %2944 = vmatpush1.bf16.msra.mxu0 %v2902
        %2945 = vmatprep.subr.bf16.mxu0 0
        %2946 = vmatpush1.bf16.msra.mxu0 %v2903
        %2947 = vmatprep.subr.bf16.mxu0 0
        %2948 = vmatpush1.bf16.msra.mxu0 %v2904
        %2949 = vmatprep.subr.bf16.mxu0 0
        %2950 = vmatpush1.bf16.msra.mxu0 %v2905
        %2951 = vmatprep.subr.bf16.mxu0 0
        %2952 = vmatpush1.bf16.msra.mxu0 %v2906
        %2953 = vmatprep.subr.bf16.mxu0 0
        %2954 = vmatpush1.bf16.msra.mxu0 %v2907
        %2955 = vmatprep.subr.bf16.mxu0 0
        %2956 = vmatpush1.bf16.msra.mxu0 %v2908
        %2957 = vmatprep.mubr.bf16.mxu0 %v2826
        %2958 = vmatmul.mubr.bf16.gmra.mrb[0].mxu0 %v2825
        %v2959 = vpop.f32.mrb[0].mxu0
        %v2960 = vadd.f32 0.0, %v2959
        %v2961 = vpop.f32.mrb[0].mxu0
        %v2962 = vpop.f32.mrb[0].mxu0
        %v2963 = vpop.f32.mrb[0].mxu0
        %2964 = vdwg.mxu0
        %v2965 = vadd.f32 %v2783, %v2960
        %v2966 = vld [vmem:[%s2788] sm:$0x77]
        %v2967 = vld [vmem:[%s735] sm:$0xf]
        %v2968 = vld [vmem:[%s735 + $0x4] sm:$0xf]
        %v2969 = vld [vmem:[%s735 + $0x8] sm:$0xf]
        %v2970 = vld [vmem:[%s735 + $0xc] sm:$0xf]
        %v2971 = vld [vmem:[%s735 + $0x10] sm:$0xf]
        %v2972 = vld [vmem:[%s735 + $0x14] sm:$0xf]
        %v2973 = vld [vmem:[%s735 + $0x18] sm:$0xf]
        %v2974 = vld [vmem:[%s735 + $0x1c] sm:$0xf]
        %v2975 = vld [vmem:[%s735 + $0x20] sm:$0xf]
        %v2976 = vld [vmem:[%s735 + $0x24] sm:$0xf]
        %v2977 = vld [vmem:[%s735 + $0x28] sm:$0xf]
        %v2978 = vld [vmem:[%s735 + $0x2c] sm:$0xf]
        %v2979 = vld [vmem:[%s735 + $0x30] sm:$0xf]
        %v2980 = vld [vmem:[%s735 + $0x34] sm:$0xf]
        %v2981 = vld [vmem:[%s735 + $0x38] sm:$0xf]
        %v2982 = vld [vmem:[%s735 + $0x3c] sm:$0xf]
        %v2983 = vld [vmem:[%s735 + $0x40] sm:$0xf]
        %v2984 = vld [vmem:[%s735 + $0x44] sm:$0xf]
        %v2985 = vld [vmem:[%s735 + $0x48] sm:$0xf]
        %v2986 = vld [vmem:[%s735 + $0x4c] sm:$0xf]
        %v2987 = vld [vmem:[%s735 + $0x50] sm:$0xf]
        %v2988 = vld [vmem:[%s735 + $0x54] sm:$0xf]
        %v2989 = vld [vmem:[%s735 + $0x58] sm:$0xf]
        %v2990 = vld [vmem:[%s735 + $0x5c] sm:$0xf]
        %v2991 = vld [vmem:[%s735 + $0x60] sm:$0xf]
        %v2992 = vld [vmem:[%s735 + $0x64] sm:$0xf]
        %v2993 = vld [vmem:[%s735 + $0x68] sm:$0xf]
        %v2994 = vld [vmem:[%s735 + $0x6c] sm:$0xf]
        %v2995 = vld [vmem:[%s735 + $0x70] sm:$0xf]
        %v2996 = vld [vmem:[%s735 + $0x74] sm:$0xf]
        %v2997 = vld [vmem:[%s735 + $0x78] sm:$0xf]
        %v2998 = vld [vmem:[%s735 + $0x7c] sm:$0xf]
        %v3000 = vunpack.c.l.b16 %v2966
        %v3001 = vunpack.c.h.b16 %v2966
        %v3002 = vpack.c.b16 %v3000, %v3000
        %v3003 = vpack.c.b16 %v3001, %v3001
        %v3005 = vshrl.u32 %v3002, 16
        %v3007 = vshll.u32 %v3002, 16
        %v3009 = vrot.slane %v3007, 1
        %v3010 = vor.u32 %v3005, %v3009
        %v3012 = vshrl.u32 %v3003, 16
        %v3014 = vshll.u32 %v3003, 16
        %v3016 = vrot.slane %v3014, 1
        %v3017 = vor.u32 %v3012, %v3016
        %v3052 = vunpack.c.l.b16 %v2967
        %v3053 = vunpack.c.l.b16 %v2968
        %v3054 = vunpack.c.l.b16 %v2969
        %v3055 = vunpack.c.l.b16 %v2970
        %v3056 = vunpack.c.l.b16 %v2971
        %v3057 = vunpack.c.l.b16 %v2972
        %v3058 = vunpack.c.l.b16 %v2973
        %v3059 = vunpack.c.l.b16 %v2974
        %v3060 = vunpack.c.l.b16 %v2975
        %v3061 = vunpack.c.l.b16 %v2976
        %v3062 = vunpack.c.l.b16 %v2977
        %v3063 = vunpack.c.l.b16 %v2978
        %v3064 = vunpack.c.l.b16 %v2979
        %v3065 = vunpack.c.l.b16 %v2980
        %v3066 = vunpack.c.l.b16 %v2981
        %v3067 = vunpack.c.l.b16 %v2982
        %v3068 = vunpack.c.l.b16 %v2983
        %v3069 = vunpack.c.l.b16 %v2984
        %v3070 = vunpack.c.l.b16 %v2985
        %v3071 = vunpack.c.l.b16 %v2986
        %v3072 = vunpack.c.l.b16 %v2987
        %v3073 = vunpack.c.l.b16 %v2988
        %v3074 = vunpack.c.l.b16 %v2989
        %v3075 = vunpack.c.l.b16 %v2990
        %v3076 = vunpack.c.l.b16 %v2991
        %v3077 = vunpack.c.l.b16 %v2992
        %v3078 = vunpack.c.l.b16 %v2993
        %v3079 = vunpack.c.l.b16 %v2994
        %v3080 = vunpack.c.l.b16 %v2995
        %v3081 = vunpack.c.l.b16 %v2996
        %v3082 = vunpack.c.l.b16 %v2997
        %v3083 = vunpack.c.l.b16 %v2998
        %v3084 = vpack.c.b16 %v3053, %v3052
        %v3085 = vpack.c.b16 %v3055, %v3054
        %v3086 = vpack.c.b16 %v3057, %v3056
        %v3087 = vpack.c.b16 %v3059, %v3058
        %v3088 = vpack.c.b16 %v3061, %v3060
        %v3089 = vpack.c.b16 %v3063, %v3062
        %v3090 = vpack.c.b16 %v3065, %v3064
        %v3091 = vpack.c.b16 %v3067, %v3066
        %v3092 = vpack.c.b16 %v3069, %v3068
        %v3093 = vpack.c.b16 %v3071, %v3070
        %v3094 = vpack.c.b16 %v3073, %v3072
        %v3095 = vpack.c.b16 %v3075, %v3074
        %v3096 = vpack.c.b16 %v3077, %v3076
        %v3097 = vpack.c.b16 %v3079, %v3078
        %v3098 = vpack.c.b16 %v3081, %v3080
        %v3099 = vpack.c.b16 %v3083, %v3082
        %3116 = vmatprep.subr.bf16.mxu0 0
        %3117 = vmatpush1.bf16.msra.mxu0 %v3084
        %3118 = vmatprep.subr.bf16.mxu0 0
        %3119 = vmatpush1.bf16.msra.mxu0 %v3085
        %3120 = vmatprep.subr.bf16.mxu0 0
        %3121 = vmatpush1.bf16.msra.mxu0 %v3086
        %3122 = vmatprep.subr.bf16.mxu0 0
        %3123 = vmatpush1.bf16.msra.mxu0 %v3087
        %3124 = vmatprep.subr.bf16.mxu0 0
        %3125 = vmatpush1.bf16.msra.mxu0 %v3088
        %3126 = vmatprep.subr.bf16.mxu0 0
        %3127 = vmatpush1.bf16.msra.mxu0 %v3089
        %3128 = vmatprep.subr.bf16.mxu0 0
        %3129 = vmatpush1.bf16.msra.mxu0 %v3090
        %3130 = vmatprep.subr.bf16.mxu0 0
        %3131 = vmatpush1.bf16.msra.mxu0 %v3091
        %3132 = vmatprep.subr.bf16.mxu0 0
        %3133 = vmatpush1.bf16.msra.mxu0 %v3092
        %3134 = vmatprep.subr.bf16.mxu0 0
        %3135 = vmatpush1.bf16.msra.mxu0 %v3093
        %3136 = vmatprep.subr.bf16.mxu0 0
        %3137 = vmatpush1.bf16.msra.mxu0 %v3094
        %3138 = vmatprep.subr.bf16.mxu0 0
        %3139 = vmatpush1.bf16.msra.mxu0 %v3095
        %3140 = vmatprep.subr.bf16.mxu0 0
        %3141 = vmatpush1.bf16.msra.mxu0 %v3096
        %3142 = vmatprep.subr.bf16.mxu0 0
        %3143 = vmatpush1.bf16.msra.mxu0 %v3097
        %3144 = vmatprep.subr.bf16.mxu0 0
        %3145 = vmatpush1.bf16.msra.mxu0 %v3098
        %3146 = vmatprep.subr.bf16.mxu0 0
        %3147 = vmatpush1.bf16.msra.mxu0 %v3099
        %3148 = vmatprep.mubr.bf16.mxu0 %v3017
        %3149 = vmatmul.mubr.bf16.gmra.mrb[0].mxu0 %v3010
        %v3150 = vpop.f32.mrb[0].mxu0
        %v3151 = vadd.f32 0.0, %v3150
        %v3152 = vpop.f32.mrb[0].mxu0
        %v3153 = vpop.f32.mrb[0].mxu0
        %v3154 = vpop.f32.mrb[0].mxu0
        %3155 = vdwg.mxu0
        %v3156 = vadd.f32 %v2965, %v3151
        %v3157 = vadd.f32 %v3156, %v930
        %vm3158 = vcmp.gt.f32.partialorder %v3157, 0.0
        %v3159 = vmul.f32 %v3157, 0.2
        %v3160 = vsel %vm3158, %v3157, %v3159
        %v3161 = vpack.c.bf16 %v3160, %v3160
        %s3162 = scalar_lea.vmem %s185, 6
        %3163 = vst [vmem:[%s3162] sm:$0x3] %v3161
        %p3164 = scmp.lt.s32.totalorder %s15, 1
        %s3165 = scalar_select %p3164, %s15, 1
        %s3166 = smul.addr %s3165, 4
        %s3167 = smul.addr %s3166, 2
        %s3168 = scalar_lea.vmem %s3, %s3167
        // Predicated region
        $region37: #{discriminator_forward.5} parent=31 // pred_check
          %p3169 = pneg %p101
        $region38: #{discriminator_forward.5} parent=31 // pred_check_branch
          %3171 = sbr.rel (%p3169) target = $region40
        $region39: #{discriminator_forward.5} parent=31 // pred_region
          _
        $region40: #{discriminator_forward.5} parent=31 // pred_fallthru
          _
      $region32: #{discriminator_forward.5} parent=5 // pred_fallthru
        _
      %p3172 = scmp.le.s32.totalorder 2, %s10
      // Predicated region
      $region41: #{discriminator_forward.5} parent=5 // pred_check
        %p3173 = pneg %p3172
      $region42: #{discriminator_forward.5} parent=5 // pred_check_branch
        %3175 = sbr.rel (%p3173) target = $region44
      $region43: #{discriminator_forward.5} parent=5 // pred_region
        %s3176 = ssub.s32 %s10, 2
        // Predicated region
        $region45: #{discriminator_forward.5} parent=43 // pred_check
          %p3177 = pneg %p107
        $region46: #{discriminator_forward.5} parent=43 // pred_check_branch
          %3179 = sbr.rel (%p3177) target = $region48
        $region47: #{discriminator_forward.5} parent=43 // pred_region
          %p3180 = scmp.lt.s32.totalorder %s16, 1
          %s3181 = scalar_select %p3180, %s16, 1
          %s3182 = smul.addr %s3181, 4
          %s3183 = smul.addr %s3182, 2
          %s3184 = scalar_lea.vmem %s3, %s3183
        $region48: #{discriminator_forward.5} parent=43 // pred_fallthru
          _
      $region44: #{discriminator_forward.5} parent=5 // pred_fallthru
        _
    $region6: #{discriminator_forward.5} parent=1 // loop_footer
      %s14 = sadd.s32 1, %s10
    $region7: #{discriminator_forward.5} parent=1 // loop_footer_branch
      %9 = sbr.rel target = $region3
    $region8: #{discriminator_forward.5} parent=1 // loop_exit
      _
    %3185 = vsyncpa [#allocation3], 1
    %s3186 = scalar_lea.sflag [#allocation3], 1
    %3187 = vsyncpa %s3186, 1

// kernel: discriminator_forward.6
$region0: #{discriminator_forward.6}
  #allocation0 [shape = 'u32[]', space=smem, size = 0x4, offset = 0x4, fixed_abs, tag = 'smem constant byte address 0x4 - core index']
  #allocation1 [shape = 'u32[144,128]{1,0:T(1,128)}', space=vmem, size = 0x12000, scoped, tag = 'internal scratch']
  %s0 = inlined_call_operand.vmem [shape: bf16[2,3,3,512], index: 0, kind: input, shape index: {}]
  %s1 = inlined_call_operand.vmem [shape: bf16[4,512,256], index: 1, kind: input, shape index: {}]
  %s2 = inlined_call_operand.vmem [shape: f32[1,256], index: 2, kind: input, shape index: {}]
  %s3 = inlined_call_operand.vmem [shape: bf16[2,2,2,256], index: 3, kind: output, shape index: {}]
  %s4 = sld [smem:[#allocation0]]
  $region45: #{discriminator_forward.6} parent=0
    _
  %s6 = ssub.s32 1, %s4
  %s7 = scalar_select 0, %s6, %s4
  loop: start=0, step=1, limit=4
  $region2: #{discriminator_forward.6} parent=0 // loop_pre_header
    _
  $region3: #{discriminator_forward.6} parent=0 // loop_header
    %s9 = sphi 0, %s13
    %p10 = scmp.ge.s32.totalorder %s9, 4
    %s19 = sphi 0, %s21
    %s22 = sphi 0, %s19
    %s23 = sphi 0, %s22
    %s39 = sphi 0, %s23
    %s43 = sphi 0, %s43
    %s45 = sphi 0, %s43
    %s46 = sphi 0, %s45
    %s60 = sphi 0, %s46
    %s64 = sphi 0, %s64
    %s66 = sphi 0, %s64
    %s67 = sphi 0, %s66
    %s81 = sphi 0, %s67
    %s87 = sphi 0, %s89
    %s90 = sphi 0, %s87
    %s91 = sphi 0, %s90
    %s107 = sphi 0, %s91
  $region4: #{discriminator_forward.6} parent=0 // loop_header_branch
    %12 = sbr.rel (%p10) target = $region8
  $region5: #{discriminator_forward.6} parent=0 // loop_body
    %s14 = ssub.s32 %s9, 1
    %s15 = ssub.s32 %s9, 2
    %s16 = sadd.s32 %s9, 1
    %s17 = ssub.s32 %s9, %s16
    %p18 = scmp.eq.s32.totalorder %s17, 0
    %s20 = sadd.s32 %s19, 1
    %s21 = scalar_select %p18, %s19, %s20
    %p24 = pneg %p18
    %p25 = scmp.eq.s32.totalorder %s9, 1
    %p26 = por %p24, %p25
    %p27 = scmp.ne.s32.totalorder %s19, %s22
    %p28 = scmp.eq.s32.totalorder %s9, 0
    %p29 = por %p27, %p28
    %p30 = scmp.ne.s32.totalorder %s19, %s22
    %p31 = scmp.eq.s32.totalorder %s14, 1
    %p32 = por %p30, %p31
    %p33 = scmp.ne.s32.totalorder %s22, %s23
    %p34 = scmp.eq.s32.totalorder %s14, 0
    %p35 = por %p33, %p34
    %p36 = scmp.ne.s32.totalorder %s22, %s23
    %p37 = scmp.eq.s32.totalorder %s15, 1
    %p38 = por %p36, %p37
    %p40 = scmp.ne.s32.totalorder %s23, %s39
    %p41 = scmp.eq.s32.totalorder %s15, 0
    %p42 = por %p40, %p41
    %s44 = sadd.s32 %s43, 1
    %p47 = scmp.eq.s32.totalorder %s9, 1
    %p48 = scmp.ne.s32.totalorder %s43, %s45
    %p49 = scmp.eq.s32.totalorder %s9, 0
    %p50 = por %p48, %p49
    %p51 = scmp.ne.s32.totalorder %s43, %s45
    %p52 = scmp.eq.s32.totalorder %s14, 1
    %p53 = por %p51, %p52
    %p54 = scmp.ne.s32.totalorder %s45, %s46
    %p55 = scmp.eq.s32.totalorder %s14, 0
    %p56 = por %p54, %p55
    %p57 = scmp.ne.s32.totalorder %s45, %s46
    %p58 = scmp.eq.s32.totalorder %s15, 1
    %p59 = por %p57, %p58
    %p61 = scmp.ne.s32.totalorder %s46, %s60
    %p62 = scmp.eq.s32.totalorder %s15, 0
    %p63 = por %p61, %p62
    %s65 = sadd.s32 %s64, 1
    %p68 = scmp.eq.s32.totalorder %s9, 1
    %p69 = scmp.ne.s32.totalorder %s64, %s66
    %p70 = scmp.eq.s32.totalorder %s9, 0
    %p71 = por %p69, %p70
    %p72 = scmp.ne.s32.totalorder %s64, %s66
    %p73 = scmp.eq.s32.totalorder %s14, 1
    %p74 = por %p72, %p73
    %p75 = scmp.ne.s32.totalorder %s66, %s67
    %p76 = scmp.eq.s32.totalorder %s14, 0
    %p77 = por %p75, %p76
    %p78 = scmp.ne.s32.totalorder %s66, %s67
    %p79 = scmp.eq.s32.totalorder %s15, 1
    %p80 = por %p78, %p79
    %p82 = scmp.ne.s32.totalorder %s67, %s81
    %p83 = scmp.eq.s32.totalorder %s15, 0
    %p84 = por %p82, %p83
    %s85 = ssub.s32 %s9, %s16
    %p86 = scmp.eq.s32.totalorder %s85, 0
    %s88 = sadd.s32 %s87, 1
    %s89 = scalar_select %p86, %s87, %s88
    %p92 = pneg %p86
    %p93 = scmp.eq.s32.totalorder %s9, 1
    %p94 = por %p92, %p93
    %p95 = scmp.ne.s32.totalorder %s87, %s90
    %p96 = scmp.eq.s32.totalorder %s9, 0
    %p97 = por %p95, %p96
    %p98 = scmp.ne.s32.totalorder %s87, %s90
    %p99 = scmp.eq.s32.totalorder %s14, 1
    %p100 = por %p98, %p99
    %p101 = scmp.ne.s32.totalorder %s90, %s91
    %p102 = scmp.eq.s32.totalorder %s14, 0
    %p103 = por %p101, %p102
    %p104 = scmp.ne.s32.totalorder %s90, %s91
    %p105 = scmp.eq.s32.totalorder %s15, 1
    %p106 = por %p104, %p105
    %p108 = scmp.ne.s32.totalorder %s91, %s107
    %p109 = scmp.eq.s32.totalorder %s15, 0
    %p110 = por %p108, %p109
    %p111 = scmp.le.s32.totalorder 1, %s9
    %p112 = scmp.lt.s32.totalorder %s9, 3
    %p113 = pnand %p111, %p112
    %p114 = pneg %p113
    // Predicated region
    $region9: #{discriminator_forward.6} parent=5 // pred_check
      _
    $region10: #{discriminator_forward.6} parent=5 // pred_check_branch
      %116 = sbr.rel (%p113) target = $region12
    $region11: #{discriminator_forward.6} parent=5 // pred_region
      %s117 = ssub.s32 %s9, 1
      // Predicated region
      $region13: #{discriminator_forward.6} parent=11 // pred_check
        %p118 = pneg %p56
      $region14: #{discriminator_forward.6} parent=11 // pred_check_branch
        %120 = sbr.rel (%p118) target = $region16
      $region15: #{discriminator_forward.6} parent=11 // pred_region
        _
      $region16: #{discriminator_forward.6} parent=11 // pred_fallthru
        _
      // Predicated region
      $region17: #{discriminator_forward.6} parent=11 // pred_check
        %p121 = pneg %p77
      $region18: #{discriminator_forward.6} parent=11 // pred_check_branch
        %123 = sbr.rel (%p121) target = $region20
      $region19: #{discriminator_forward.6} parent=11 // pred_region
        _
      $region20: #{discriminator_forward.6} parent=11 // pred_fallthru
        _
    $region12: #{discriminator_forward.6} parent=5 // pred_fallthru
      _
    %p124 = scmp.lt.s32.totalorder %s9, 2
    // Predicated region
    $region21: #{discriminator_forward.6} parent=5 // pred_check
      %p125 = pneg %p124
    $region22: #{discriminator_forward.6} parent=5 // pred_check_branch
      %127 = sbr.rel (%p125) target = $region24
    $region23: #{discriminator_forward.6} parent=5 // pred_region
      // Predicated region
      $region25: #{discriminator_forward.6} parent=23 // pred_check
        %p128 = pneg %p29
      $region26: #{discriminator_forward.6} parent=23 // pred_check_branch
        %130 = sbr.rel (%p128) target = $region28
      $region27: #{discriminator_forward.6} parent=23 // pred_region
        %p131 = scmp.lt.s32.totalorder %s9, 1
        %s132 = scalar_select %p131, %s9, 1
        %s133 = smul.addr %s132, 12
        %s134 = smul.addr %s133, 2
        %s135 = scalar_lea.vmem %s0, %s134
      $region28: #{discriminator_forward.6} parent=23 // pred_fallthru
        _
    $region24: #{discriminator_forward.6} parent=5 // pred_fallthru
      _
    %p136 = scmp.le.s32.totalorder 1, %s9
    %p137 = scmp.lt.s32.totalorder %s9, 3
    %p138 = pnand %p136, %p137
    %p139 = pneg %p138
    // Predicated region
    $region29: #{discriminator_forward.6} parent=5 // pred_check
      _
    $region30: #{discriminator_forward.6} parent=5 // pred_check_branch
      %141 = sbr.rel (%p138) target = $region32
    $region31: #{discriminator_forward.6} parent=5 // pred_region
      %s142 = ssub.s32 %s9, 1
      %p143 = scmp.lt.s32.totalorder %s14, 1
      %s144 = scalar_select %p143, %s14, 1
      %s145 = smul.addr %s144, 12
      %s146 = smul.addr %s145, 2
      %s147 = scalar_lea.vmem %s0, %s146
      %p148 = pneg %p35
      %p149 = pneg %p32
      %p150 = pneg %p56
      %p151 = pneg %p53
      %p152 = pneg %p77
      %p153 = pneg %p74
      %p154 = pneg %p103
      %p155 = pneg %p100
      %p156 = scmp.lt.s32.totalorder %s14, 1
      %s157 = scalar_select %p156, %s14, 1
      %s158 = smul.addr %s157, 4
      %s159 = scalar_lea.vmem %s3, %s158
      %p160 = scmp.lt.s32.totalorder %s14, 1
      %s161 = scalar_select %p160, %s14, 1
      %s162 = smul.addr %s161, 12
      %s163 = smul.addr %s162, 2
      %s164 = scalar_lea.vmem %s0, %s163
      %p165 = scmp.lt.s32.totalorder %s14, 1
      %s166 = scalar_select %p165, %s14, 1
      %s167 = smul.addr %s166, 4
      %s168 = scalar_lea.vmem %s3, %s167
      %v169 = vld [vmem:[%s2] sm:$0x3]
      %v170 = vld [vmem:[%s164] sm:$0x55]
      %v171 = vld [vmem:[%s1] sm:$0xff]
      %v172 = vld [vmem:[%s1 + $0x8] sm:$0xff]
      %v173 = vld [vmem:[%s1 + $0x10] sm:$0xff]
      %v174 = vld [vmem:[%s1 + $0x18] sm:$0xff]
      %v175 = vld [vmem:[%s1 + $0x20] sm:$0xff]
      %v176 = vld [vmem:[%s1 + $0x28] sm:$0xff]
      %v177 = vld [vmem:[%s1 + $0x30] sm:$0xff]
      %v178 = vld [vmem:[%s1 + $0x38] sm:$0xff]
      %v179 = vld [vmem:[%s1 + $0x40] sm:$0xff]
      %v180 = vld [vmem:[%s1 + $0x48] sm:$0xff]
      %v181 = vld [vmem:[%s1 + $0x50] sm:$0xff]
      %v182 = vld [vmem:[%s1 + $0x58] sm:$0xff]
      %v183 = vld [vmem:[%s1 + $0x60] sm:$0xff]
      %v184 = vld [vmem:[%s1 + $0x68] sm:$0xff]
      %v185 = vld [vmem:[%s1 + $0x70] sm:$0xff]
      %v186 = vld [vmem:[%s1 + $0x78] sm:$0xff]
      %v187 = vld [vmem:[%s1 + $0x80] sm:$0xff]
      %v188 = vld [vmem:[%s1 + $0x88] sm:$0xff]
      %v189 = vld [vmem:[%s1 + $0x90] sm:$0xff]
      %v190 = vld [vmem:[%s1 + $0x98] sm:$0xff]
      %v191 = vld [vmem:[%s1 + $0xa0] sm:$0xff]
      %v192 = vld [vmem:[%s1 + $0xa8] sm:$0xff]
      %v193 = vld [vmem:[%s1 + $0xb0] sm:$0xff]
      %v194 = vld [vmem:[%s1 + $0xb8] sm:$0xff]
      %v195 = vld [vmem:[%s1 + $0xc0] sm:$0xff]
      %v196 = vld [vmem:[%s1 + $0xc8] sm:$0xff]
      %v197 = vld [vmem:[%s1 + $0xd0] sm:$0xff]
      %v198 = vld [vmem:[%s1 + $0xd8] sm:$0xff]
      %v199 = vld [vmem:[%s1 + $0xe0] sm:$0xff]
      %v200 = vld [vmem:[%s1 + $0xe8] sm:$0xff]
      %v201 = vld [vmem:[%s1 + $0xf0] sm:$0xff]
      %v202 = vld [vmem:[%s1 + $0xf8] sm:$0xff]
      %v203 = vld [vmem:[%s1 + $0x100] sm:$0xff]
      %v204 = vld [vmem:[%s1 + $0x108] sm:$0xff]
      %v205 = vld [vmem:[%s1 + $0x110] sm:$0xff]
      %v206 = vld [vmem:[%s1 + $0x118] sm:$0xff]
      %v207 = vld [vmem:[%s1 + $0x120] sm:$0xff]
      %v208 = vld [vmem:[%s1 + $0x128] sm:$0xff]
      %v209 = vld [vmem:[%s1 + $0x130] sm:$0xff]
      %v210 = vld [vmem:[%s1 + $0x138] sm:$0xff]
      %v211 = vld [vmem:[%s1 + $0x140] sm:$0xff]
      %v212 = vld [vmem:[%s1 + $0x148] sm:$0xff]
      %v213 = vld [vmem:[%s1 + $0x150] sm:$0xff]
      %v214 = vld [vmem:[%s1 + $0x158] sm:$0xff]
      %v215 = vld [vmem:[%s1 + $0x160] sm:$0xff]
      %v216 = vld [vmem:[%s1 + $0x168] sm:$0xff]
      %v217 = vld [vmem:[%s1 + $0x170] sm:$0xff]
      %v218 = vld [vmem:[%s1 + $0x178] sm:$0xff]
      %v219 = vld [vmem:[%s1 + $0x180] sm:$0xff]
      %v220 = vld [vmem:[%s1 + $0x188] sm:$0xff]
      %v221 = vld [vmem:[%s1 + $0x190] sm:$0xff]
      %v222 = vld [vmem:[%s1 + $0x198] sm:$0xff]
      %v223 = vld [vmem:[%s1 + $0x1a0] sm:$0xff]
      %v224 = vld [vmem:[%s1 + $0x1a8] sm:$0xff]
      %v225 = vld [vmem:[%s1 + $0x1b0] sm:$0xff]
      %v226 = vld [vmem:[%s1 + $0x1b8] sm:$0xff]
      %v227 = vld [vmem:[%s1 + $0x1c0] sm:$0xff]
      %v228 = vld [vmem:[%s1 + $0x1c8] sm:$0xff]
      %v229 = vld [vmem:[%s1 + $0x1d0] sm:$0xff]
      %v230 = vld [vmem:[%s1 + $0x1d8] sm:$0xff]
      %v231 = vld [vmem:[%s1 + $0x1e0] sm:$0xff]
      %v232 = vld [vmem:[%s1 + $0x1e8] sm:$0xff]
      %v233 = vld [vmem:[%s1 + $0x1f0] sm:$0xff]
      %v234 = vld [vmem:[%s1 + $0x1f8] sm:$0xff]
      %v235 = vld [vmem:[%s164] sm:$0xff]
      %s236 = scalar_lea.vmem %s1, 512
      %v237 = vld [vmem:[%s236] sm:$0xff]
      %v238 = vld [vmem:[%s236 + $0x8] sm:$0xff]
      %v239 = vld [vmem:[%s236 + $0x10] sm:$0xff]
      %v240 = vld [vmem:[%s236 + $0x18] sm:$0xff]
      %v241 = vld [vmem:[%s236 + $0x20] sm:$0xff]
      %v242 = vld [vmem:[%s236 + $0x28] sm:$0xff]
      %v243 = vld [vmem:[%s236 + $0x30] sm:$0xff]
      %v244 = vld [vmem:[%s236 + $0x38] sm:$0xff]
      %v245 = vld [vmem:[%s236 + $0x40] sm:$0xff]
      %v246 = vld [vmem:[%s236 + $0x48] sm:$0xff]
      %v247 = vld [vmem:[%s236 + $0x50] sm:$0xff]
      %v248 = vld [vmem:[%s236 + $0x58] sm:$0xff]
      %v249 = vld [vmem:[%s236 + $0x60] sm:$0xff]
      %v250 = vld [vmem:[%s236 + $0x68] sm:$0xff]
      %v251 = vld [vmem:[%s236 + $0x70] sm:$0xff]
      %v252 = vld [vmem:[%s236 + $0x78] sm:$0xff]
      %v253 = vld [vmem:[%s236 + $0x80] sm:$0xff]
      %v254 = vld [vmem:[%s236 + $0x88] sm:$0xff]
      %v255 = vld [vmem:[%s236 + $0x90] sm:$0xff]
      %v256 = vld [vmem:[%s236 + $0x98] sm:$0xff]
      %v257 = vld [vmem:[%s236 + $0xa0] sm:$0xff]
      %v258 = vld [vmem:[%s236 + $0xa8] sm:$0xff]
      %v259 = vld [vmem:[%s236 + $0xb0] sm:$0xff]
      %v260 = vld [vmem:[%s236 + $0xb8] sm:$0xff]
      %v261 = vld [vmem:[%s236 + $0xc0] sm:$0xff]
      %v262 = vld [vmem:[%s236 + $0xc8] sm:$0xff]
      %v263 = vld [vmem:[%s236 + $0xd0] sm:$0xff]
      %v264 = vld [vmem:[%s236 + $0xd8] sm:$0xff]
      %v265 = vld [vmem:[%s236 + $0xe0] sm:$0xff]
      %v266 = vld [vmem:[%s236 + $0xe8] sm:$0xff]
      %v267 = vld [vmem:[%s236 + $0xf0] sm:$0xff]
      %v268 = vld [vmem:[%s236 + $0xf8] sm:$0xff]
      %v269 = vld [vmem:[%s236 + $0x100] sm:$0xff]
      %v270 = vld [vmem:[%s236 + $0x108] sm:$0xff]
      %v271 = vld [vmem:[%s236 + $0x110] sm:$0xff]
      %v272 = vld [vmem:[%s236 + $0x118] sm:$0xff]
      %v273 = vld [vmem:[%s236 + $0x120] sm:$0xff]
      %v274 = vld [vmem:[%s236 + $0x128] sm:$0xff]
      %v275 = vld [vmem:[%s236 + $0x130] sm:$0xff]
      %v276 = vld [vmem:[%s236 + $0x138] sm:$0xff]
      %v277 = vld [vmem:[%s236 + $0x140] sm:$0xff]
      %v278 = vld [vmem:[%s236 + $0x148] sm:$0xff]
      %v279 = vld [vmem:[%s236 + $0x150] sm:$0xff]
      %v280 = vld [vmem:[%s236 + $0x158] sm:$0xff]
      %v281 = vld [vmem:[%s236 + $0x160] sm:$0xff]
      %v282 = vld [vmem:[%s236 + $0x168] sm:$0xff]
      %v283 = vld [vmem:[%s236 + $0x170] sm:$0xff]
      %v284 = vld [vmem:[%s236 + $0x178] sm:$0xff]
      %v285 = vld [vmem:[%s236 + $0x180] sm:$0xff]
      %v286 = vld [vmem:[%s236 + $0x188] sm:$0xff]
      %v287 = vld [vmem:[%s236 + $0x190] sm:$0xff]
      %v288 = vld [vmem:[%s236 + $0x198] sm:$0xff]
      %v289 = vld [vmem:[%s236 + $0x1a0] sm:$0xff]
      %v290 = vld [vmem:[%s236 + $0x1a8] sm:$0xff]
      %v291 = vld [vmem:[%s236 + $0x1b0] sm:$0xff]
      %v292 = vld [vmem:[%s236 + $0x1b8] sm:$0xff]
      %v293 = vld [vmem:[%s236 + $0x1c0] sm:$0xff]
      %v294 = vld [vmem:[%s236 + $0x1c8] sm:$0xff]
      %v295 = vld [vmem:[%s236 + $0x1d0] sm:$0xff]
      %v296 = vld [vmem:[%s236 + $0x1d8] sm:$0xff]
      %v297 = vld [vmem:[%s236 + $0x1e0] sm:$0xff]
      %v298 = vld [vmem:[%s236 + $0x1e8] sm:$0xff]
      %v299 = vld [vmem:[%s236 + $0x1f0] sm:$0xff]
      %v300 = vld [vmem:[%s236 + $0x1f8] sm:$0xff]
      %v302 = vcombine.high %v235, %v235
      %v304 = vunpack.c.l.s4 1983009808
      %v305 = vunpack.c.0.s8 %v304
      %v306 = vlaneseq
      %v307 = vshrl.u32 %v306, 7
      %v308 = vsub.s32 %v305, %v307
      %v309 = vrot.slane %v235, %v308
      %v311 = vunpack.c.l.s4 1983009808
      %v312 = vunpack.c.0.s8 %v311
      %v313 = vlaneseq
      %v314 = vshrl.u32 %v313, 7
      %v315 = vsub.s32 %v312, %v314
      %v316 = vrot.slane %v302, %v315
      %v317 = vcombine.high %v309, %v309
      %v318 = vcombine.high %v316, %v316
      %v320 = vshrl.u32 %v309, 16
      %v322 = vshll.u32 %v309, 16
      %v324 = vrot.slane %v322, 1
      %v325 = vor.u32 %v320, %v324
      %v327 = vshrl.u32 %v317, 16
      %v329 = vshll.u32 %v317, 16
      %v331 = vrot.slane %v329, 1
      %v332 = vor.u32 %v327, %v331
      %v334 = vshrl.u32 %v316, 16
      %v336 = vshll.u32 %v316, 16
      %v338 = vrot.slane %v336, 1
      %v339 = vor.u32 %v334, %v338
      %v341 = vshrl.u32 %v318, 16
      %v343 = vshll.u32 %v318, 16
      %v345 = vrot.slane %v343, 1
      %v346 = vor.u32 %v341, %v345
      %v415 = vunpack.c.l.b16 %v237
      %v416 = vunpack.c.h.b16 %v237
      %v417 = vunpack.c.l.b16 %v238
      %v418 = vunpack.c.h.b16 %v238
      %v419 = vunpack.c.l.b16 %v239
      %v420 = vunpack.c.h.b16 %v239
      %v421 = vunpack.c.l.b16 %v240
      %v422 = vunpack.c.h.b16 %v240
      %v423 = vunpack.c.l.b16 %v241
      %v424 = vunpack.c.h.b16 %v241
      %v425 = vunpack.c.l.b16 %v242
      %v426 = vunpack.c.h.b16 %v242
      %v427 = vunpack.c.l.b16 %v243
      %v428 = vunpack.c.h.b16 %v243
      %v429 = vunpack.c.l.b16 %v244
      %v430 = vunpack.c.h.b16 %v244
      %v431 = vunpack.c.l.b16 %v245
      %v432 = vunpack.c.h.b16 %v245
      %v433 = vunpack.c.l.b16 %v246
      %v434 = vunpack.c.h.b16 %v246
      %v435 = vunpack.c.l.b16 %v247
      %v436 = vunpack.c.h.b16 %v247
      %v437 = vunpack.c.l.b16 %v248
      %v438 = vunpack.c.h.b16 %v248
      %v439 = vunpack.c.l.b16 %v249
      %v440 = vunpack.c.h.b16 %v249
      %v441 = vunpack.c.l.b16 %v250
      %v442 = vunpack.c.h.b16 %v250
      %v443 = vunpack.c.l.b16 %v251
      %v444 = vunpack.c.h.b16 %v251
      %v445 = vunpack.c.l.b16 %v252
      %v446 = vunpack.c.h.b16 %v252
      %v447 = vunpack.c.l.b16 %v253
      %v448 = vunpack.c.h.b16 %v253
      %v449 = vunpack.c.l.b16 %v254
      %v450 = vunpack.c.h.b16 %v254
      %v451 = vunpack.c.l.b16 %v255
      %v452 = vunpack.c.h.b16 %v255
      %v453 = vunpack.c.l.b16 %v256
      %v454 = vunpack.c.h.b16 %v256
      %v455 = vunpack.c.l.b16 %v257
      %v456 = vunpack.c.h.b16 %v257
      %v457 = vunpack.c.l.b16 %v258
      %v458 = vunpack.c.h.b16 %v258
      %v459 = vunpack.c.l.b16 %v259
      %v460 = vunpack.c.h.b16 %v259
      %v461 = vunpack.c.l.b16 %v260
      %v462 = vunpack.c.h.b16 %v260
      %v463 = vunpack.c.l.b16 %v261
      %v464 = vunpack.c.h.b16 %v261
      %v465 = vunpack.c.l.b16 %v262
      %v466 = vunpack.c.h.b16 %v262
      %v467 = vunpack.c.l.b16 %v263
      %v468 = vunpack.c.h.b16 %v263
      %v469 = vunpack.c.l.b16 %v264
      %v470 = vunpack.c.h.b16 %v264
      %v471 = vunpack.c.l.b16 %v265
      %v472 = vunpack.c.h.b16 %v265
      %v473 = vunpack.c.l.b16 %v266
      %v474 = vunpack.c.h.b16 %v266
      %v475 = vunpack.c.l.b16 %v267
      %v476 = vunpack.c.h.b16 %v267
      %v477 = vunpack.c.l.b16 %v268
      %v478 = vunpack.c.h.b16 %v268
      %v479 = vunpack.c.l.b16 %v269
      %v480 = vunpack.c.h.b16 %v269
      %v481 = vunpack.c.l.b16 %v270
      %v482 = vunpack.c.h.b16 %v270
      %v483 = vunpack.c.l.b16 %v271
      %v484 = vunpack.c.h.b16 %v271
      %v485 = vunpack.c.l.b16 %v272
      %v486 = vunpack.c.h.b16 %v272
      %v487 = vunpack.c.l.b16 %v273
      %v488 = vunpack.c.h.b16 %v273
      %v489 = vunpack.c.l.b16 %v274
      %v490 = vunpack.c.h.b16 %v274
      %v491 = vunpack.c.l.b16 %v275
      %v492 = vunpack.c.h.b16 %v275
      %v493 = vunpack.c.l.b16 %v276
      %v494 = vunpack.c.h.b16 %v276
      %v495 = vunpack.c.l.b16 %v277
      %v496 = vunpack.c.h.b16 %v277
      %v497 = vunpack.c.l.b16 %v278
      %v498 = vunpack.c.h.b16 %v278
      %v499 = vunpack.c.l.b16 %v279
      %v500 = vunpack.c.h.b16 %v279
      %v501 = vunpack.c.l.b16 %v280
      %v502 = vunpack.c.h.b16 %v280
      %v503 = vunpack.c.l.b16 %v281
      %v504 = vunpack.c.h.b16 %v281
      %v505 = vunpack.c.l.b16 %v282
      %v506 = vunpack.c.h.b16 %v282
      %v507 = vunpack.c.l.b16 %v283
      %v508 = vunpack.c.h.b16 %v283
      %v509 = vunpack.c.l.b16 %v284
      %v510 = vunpack.c.h.b16 %v284
      %v511 = vunpack.c.l.b16 %v285
      %v512 = vunpack.c.h.b16 %v285
      %v513 = vunpack.c.l.b16 %v286
      %v514 = vunpack.c.h.b16 %v286
      %v515 = vunpack.c.l.b16 %v287
      %v516 = vunpack.c.h.b16 %v287
      %v517 = vunpack.c.l.b16 %v288
      %v518 = vunpack.c.h.b16 %v288
      %v519 = vunpack.c.l.b16 %v289
      %v520 = vunpack.c.h.b16 %v289
      %v521 = vunpack.c.l.b16 %v290
      %v522 = vunpack.c.h.b16 %v290
      %v523 = vunpack.c.l.b16 %v291
      %v524 = vunpack.c.h.b16 %v291
      %v525 = vunpack.c.l.b16 %v292
      %v526 = vunpack.c.h.b16 %v292
      %v527 = vunpack.c.l.b16 %v293
      %v528 = vunpack.c.h.b16 %v293
      %v529 = vunpack.c.l.b16 %v294
      %v530 = vunpack.c.h.b16 %v294
      %v531 = vunpack.c.l.b16 %v295
      %v532 = vunpack.c.h.b16 %v295
      %v533 = vunpack.c.l.b16 %v296
      %v534 = vunpack.c.h.b16 %v296
      %v535 = vunpack.c.l.b16 %v297
      %v536 = vunpack.c.h.b16 %v297
      %v537 = vunpack.c.l.b16 %v298
      %v538 = vunpack.c.h.b16 %v298
      %v539 = vunpack.c.l.b16 %v299
      %v540 = vunpack.c.h.b16 %v299
      %v541 = vunpack.c.l.b16 %v300
      %v542 = vunpack.c.h.b16 %v300
      %v543 = vpack.c.b16 %v417, %v415
      %v544 = vpack.c.b16 %v418, %v416
      %v545 = vpack.c.b16 %v421, %v419
      %v546 = vpack.c.b16 %v422, %v420
      %v547 = vpack.c.b16 %v425, %v423
      %v548 = vpack.c.b16 %v426, %v424
      %v549 = vpack.c.b16 %v429, %v427
      %v550 = vpack.c.b16 %v430, %v428
      %v551 = vpack.c.b16 %v433, %v431
      %v552 = vpack.c.b16 %v434, %v432
      %v553 = vpack.c.b16 %v437, %v435
      %v554 = vpack.c.b16 %v438, %v436
      %v555 = vpack.c.b16 %v441, %v439
      %v556 = vpack.c.b16 %v442, %v440
      %v557 = vpack.c.b16 %v445, %v443
      %v558 = vpack.c.b16 %v446, %v444
      %v559 = vpack.c.b16 %v449, %v447
      %v560 = vpack.c.b16 %v450, %v448
      %v561 = vpack.c.b16 %v453, %v451
      %v562 = vpack.c.b16 %v454, %v452
      %v563 = vpack.c.b16 %v457, %v455
      %v564 = vpack.c.b16 %v458, %v456
      %v565 = vpack.c.b16 %v461, %v459
      %v566 = vpack.c.b16 %v462, %v460
      %v567 = vpack.c.b16 %v465, %v463
      %v568 = vpack.c.b16 %v466, %v464
      %v569 = vpack.c.b16 %v469, %v467
      %v570 = vpack.c.b16 %v470, %v468
      %v571 = vpack.c.b16 %v473, %v471
      %v572 = vpack.c.b16 %v474, %v472
      %v573 = vpack.c.b16 %v477, %v475
      %v574 = vpack.c.b16 %v478, %v476
      %v575 = vpack.c.b16 %v481, %v479
      %v576 = vpack.c.b16 %v482, %v480
      %v577 = vpack.c.b16 %v485, %v483
      %v578 = vpack.c.b16 %v486, %v484
      %v579 = vpack.c.b16 %v489, %v487
      %v580 = vpack.c.b16 %v490, %v488
      %v581 = vpack.c.b16 %v493, %v491
      %v582 = vpack.c.b16 %v494, %v492
      %v583 = vpack.c.b16 %v497, %v495
      %v584 = vpack.c.b16 %v498, %v496
      %v585 = vpack.c.b16 %v501, %v499
      %v586 = vpack.c.b16 %v502, %v500
      %v587 = vpack.c.b16 %v505, %v503
      %v588 = vpack.c.b16 %v506, %v504
      %v589 = vpack.c.b16 %v509, %v507
      %v590 = vpack.c.b16 %v510, %v508
      %v591 = vpack.c.b16 %v513, %v511
      %v592 = vpack.c.b16 %v514, %v512
      %v593 = vpack.c.b16 %v517, %v515
      %v594 = vpack.c.b16 %v518, %v516
      %v595 = vpack.c.b16 %v521, %v519
      %v596 = vpack.c.b16 %v522, %v520
      %v597 = vpack.c.b16 %v525, %v523
      %v598 = vpack.c.b16 %v526, %v524
      %v599 = vpack.c.b16 %v529, %v527
      %v600 = vpack.c.b16 %v530, %v528
      %v601 = vpack.c.b16 %v533, %v531
      %v602 = vpack.c.b16 %v534, %v532
      %v603 = vpack.c.b16 %v537, %v535
      %v604 = vpack.c.b16 %v538, %v536
      %v605 = vpack.c.b16 %v541, %v539
      %v606 = vpack.c.b16 %v542, %v540
      %671 = vmatprep.subr.bf16.mxu0 %v544
      %672 = vmatpush1.bf16.msra.mxu0 %v543
      %673 = vmatprep.subr.bf16.mxu0 %v546
      %674 = vmatpush1.bf16.msra.mxu0 %v545
      %675 = vmatprep.subr.bf16.mxu0 %v548
      %676 = vmatpush1.bf16.msra.mxu0 %v547
      %677 = vmatprep.subr.bf16.mxu0 %v550
      %678 = vmatpush1.bf16.msra.mxu0 %v549
      %679 = vmatprep.subr.bf16.mxu0 %v552
      %680 = vmatpush1.bf16.msra.mxu0 %v551
      %681 = vmatprep.subr.bf16.mxu0 %v554
      %682 = vmatpush1.bf16.msra.mxu0 %v553
      %683 = vmatprep.subr.bf16.mxu0 %v556
      %684 = vmatpush1.bf16.msra.mxu0 %v555
      %685 = vmatprep.subr.bf16.mxu0 %v558
      %686 = vmatpush1.bf16.msra.mxu0 %v557
      %687 = vmatprep.subr.bf16.mxu0 %v560
      %688 = vmatpush1.bf16.msra.mxu0 %v559
      %689 = vmatprep.subr.bf16.mxu0 %v562
      %690 = vmatpush1.bf16.msra.mxu0 %v561
      %691 = vmatprep.subr.bf16.mxu0 %v564
      %692 = vmatpush1.bf16.msra.mxu0 %v563
      %693 = vmatprep.subr.bf16.mxu0 %v566
      %694 = vmatpush1.bf16.msra.mxu0 %v565
      %695 = vmatprep.subr.bf16.mxu0 %v568
      %696 = vmatpush1.bf16.msra.mxu0 %v567
      %697 = vmatprep.subr.bf16.mxu0 %v570
      %698 = vmatpush1.bf16.msra.mxu0 %v569
      %699 = vmatprep.subr.bf16.mxu0 %v572
      %700 = vmatpush1.bf16.msra.mxu0 %v571
      %701 = vmatprep.subr.bf16.mxu0 %v574
      %702 = vmatpush1.bf16.msra.mxu0 %v573
      %703 = vmatprep.mubr.bf16.mxu0 %v332
      %704 = vmatmul.mubr.bf16.gmra.mrb[0].mxu0 %v325
      %v705 = vpop.f32.mrb[0].mxu0
      %v706 = vadd.f32 0.0, %v705
      %v707 = vpop.f32.mrb[0].mxu0
      %v708 = vadd.f32 0.0, %v707
      %v709 = vpop.f32.mrb[0].mxu0
      %v710 = vpop.f32.mrb[0].mxu0
      %711 = vdwg.mxu0
      %712 = vmatprep.subr.bf16.mxu0 %v576
      %713 = vmatpush1.bf16.msra.mxu0 %v575
      %714 = vmatprep.subr.bf16.mxu0 %v578
      %715 = vmatpush1.bf16.msra.mxu0 %v577
      %716 = vmatprep.subr.bf16.mxu0 %v580
      %717 = vmatpush1.bf16.msra.mxu0 %v579
      %718 = vmatprep.subr.bf16.mxu0 %v582
      %719 = vmatpush1.bf16.msra.mxu0 %v581
      %720 = vmatprep.subr.bf16.mxu0 %v584
      %721 = vmatpush1.bf16.msra.mxu0 %v583
      %722 = vmatprep.subr.bf16.mxu0 %v586
      %723 = vmatpush1.bf16.msra.mxu0 %v585
      %724 = vmatprep.subr.bf16.mxu0 %v588
      %725 = vmatpush1.bf16.msra.mxu0 %v587
      %726 = vmatprep.subr.bf16.mxu0 %v590
      %727 = vmatpush1.bf16.msra.mxu0 %v589
      %728 = vmatprep.subr.bf16.mxu0 %v592
      %729 = vmatpush1.bf16.msra.mxu0 %v591
      %730 = vmatprep.subr.bf16.mxu0 %v594
      %731 = vmatpush1.bf16.msra.mxu0 %v593
      %732 = vmatprep.subr.bf16.mxu0 %v596
      %733 = vmatpush1.bf16.msra.mxu0 %v595
      %734 = vmatprep.subr.bf16.mxu0 %v598
      %735 = vmatpush1.bf16.msra.mxu0 %v597
      %736 = vmatprep.subr.bf16.mxu0 %v600
      %737 = vmatpush1.bf16.msra.mxu0 %v599
      %738 = vmatprep.subr.bf16.mxu0 %v602
      %739 = vmatpush1.bf16.msra.mxu0 %v601
      %740 = vmatprep.subr.bf16.mxu0 %v604
      %741 = vmatpush1.bf16.msra.mxu0 %v603
      %742 = vmatprep.subr.bf16.mxu0 %v606
      %743 = vmatpush1.bf16.msra.mxu0 %v605
      %744 = vmatprep.mubr.bf16.mxu0 %v346
      %745 = vmatmul.mubr.bf16.gmra.mrb[0].mxu0 %v339
      %v746 = vpop.f32.mrb[0].mxu0
      %v747 = vadd.f32 %v706, %v746
      %v748 = vpop.f32.mrb[0].mxu0
      %v749 = vadd.f32 %v708, %v748
      %v750 = vpop.f32.mrb[0].mxu0
      %v751 = vpop.f32.mrb[0].mxu0
      %752 = vdwg.mxu0
      %v754 = vcombine.high %v170, %v170
      %v756 = vunpack.c.l.s4 1983009808
      %v757 = vunpack.c.0.s8 %v756
      %v758 = vlaneseq
      %v759 = vshrl.u32 %v758, 7
      %v760 = vsub.s32 %v757, %v759
      %v761 = vrot.slane %v170, %v760
      %v763 = vunpack.c.l.s4 1983009808
      %v764 = vunpack.c.0.s8 %v763
      %v765 = vlaneseq
      %v766 = vshrl.u32 %v765, 7
      %v767 = vsub.s32 %v764, %v766
      %v768 = vrot.slane %v754, %v767
      %v769 = vcombine.high %v761, %v761
      %v770 = vcombine.high %v768, %v768
      %v839 = vunpack.c.l.b16 %v171
      %v840 = vunpack.c.h.b16 %v171
      %v841 = vunpack.c.l.b16 %v172
      %v842 = vunpack.c.h.b16 %v172
      %v843 = vunpack.c.l.b16 %v173
      %v844 = vunpack.c.h.b16 %v173
      %v845 = vunpack.c.l.b16 %v174
      %v846 = vunpack.c.h.b16 %v174
      %v847 = vunpack.c.l.b16 %v175
      %v848 = vunpack.c.h.b16 %v175
      %v849 = vunpack.c.l.b16 %v176
      %v850 = vunpack.c.h.b16 %v176
      %v851 = vunpack.c.l.b16 %v177
      %v852 = vunpack.c.h.b16 %v177
      %v853 = vunpack.c.l.b16 %v178
      %v854 = vunpack.c.h.b16 %v178
      %v855 = vunpack.c.l.b16 %v179
      %v856 = vunpack.c.h.b16 %v179
      %v857 = vunpack.c.l.b16 %v180
      %v858 = vunpack.c.h.b16 %v180
      %v859 = vunpack.c.l.b16 %v181
      %v860 = vunpack.c.h.b16 %v181
      %v861 = vunpack.c.l.b16 %v182
      %v862 = vunpack.c.h.b16 %v182
      %v863 = vunpack.c.l.b16 %v183
      %v864 = vunpack.c.h.b16 %v183
      %v865 = vunpack.c.l.b16 %v184
      %v866 = vunpack.c.h.b16 %v184
      %v867 = vunpack.c.l.b16 %v185
      %v868 = vunpack.c.h.b16 %v185
      %v869 = vunpack.c.l.b16 %v186
      %v870 = vunpack.c.h.b16 %v186
      %v871 = vunpack.c.l.b16 %v187
      %v872 = vunpack.c.h.b16 %v187
      %v873 = vunpack.c.l.b16 %v188
      %v874 = vunpack.c.h.b16 %v188
      %v875 = vunpack.c.l.b16 %v189
      %v876 = vunpack.c.h.b16 %v189
      %v877 = vunpack.c.l.b16 %v190
      %v878 = vunpack.c.h.b16 %v190
      %v879 = vunpack.c.l.b16 %v191
      %v880 = vunpack.c.h.b16 %v191
      %v881 = vunpack.c.l.b16 %v192
      %v882 = vunpack.c.h.b16 %v192
      %v883 = vunpack.c.l.b16 %v193
      %v884 = vunpack.c.h.b16 %v193
      %v885 = vunpack.c.l.b16 %v194
      %v886 = vunpack.c.h.b16 %v194
      %v887 = vunpack.c.l.b16 %v195
      %v888 = vunpack.c.h.b16 %v195
      %v889 = vunpack.c.l.b16 %v196
      %v890 = vunpack.c.h.b16 %v196
      %v891 = vunpack.c.l.b16 %v197
      %v892 = vunpack.c.h.b16 %v197
      %v893 = vunpack.c.l.b16 %v198
      %v894 = vunpack.c.h.b16 %v198
      %v895 = vunpack.c.l.b16 %v199
      %v896 = vunpack.c.h.b16 %v199
      %v897 = vunpack.c.l.b16 %v200
      %v898 = vunpack.c.h.b16 %v200
      %v899 = vunpack.c.l.b16 %v201
      %v900 = vunpack.c.h.b16 %v201
      %v901 = vunpack.c.l.b16 %v202
      %v902 = vunpack.c.h.b16 %v202
      %v903 = vunpack.c.l.b16 %v203
      %v904 = vunpack.c.h.b16 %v203
      %v905 = vunpack.c.l.b16 %v204
      %v906 = vunpack.c.h.b16 %v204
      %v907 = vunpack.c.l.b16 %v205
      %v908 = vunpack.c.h.b16 %v205
      %v909 = vunpack.c.l.b16 %v206
      %v910 = vunpack.c.h.b16 %v206
      %v911 = vunpack.c.l.b16 %v207
      %v912 = vunpack.c.h.b16 %v207
      %v913 = vunpack.c.l.b16 %v208
      %v914 = vunpack.c.h.b16 %v208
      %v915 = vunpack.c.l.b16 %v209
      %v916 = vunpack.c.h.b16 %v209
      %v917 = vunpack.c.l.b16 %v210
      %v918 = vunpack.c.h.b16 %v210
      %v919 = vunpack.c.l.b16 %v211
      %v920 = vunpack.c.h.b16 %v211
      %v921 = vunpack.c.l.b16 %v212
      %v922 = vunpack.c.h.b16 %v212
      %v923 = vunpack.c.l.b16 %v213
      %v924 = vunpack.c.h.b16 %v213
      %v925 = vunpack.c.l.b16 %v214
      %v926 = vunpack.c.h.b16 %v214
      %v927 = vunpack.c.l.b16 %v215
      %v928 = vunpack.c.h.b16 %v215
      %v929 = vunpack.c.l.b16 %v216
      %v930 = vunpack.c.h.b16 %v216
      %v931 = vunpack.c.l.b16 %v217
      %v932 = vunpack.c.h.b16 %v217
      %v933 = vunpack.c.l.b16 %v218
      %v934 = vunpack.c.h.b16 %v218
      %v935 = vunpack.c.l.b16 %v219
      %v936 = vunpack.c.h.b16 %v219
      %v937 = vunpack.c.l.b16 %v220
      %v938 = vunpack.c.h.b16 %v220
      %v939 = vunpack.c.l.b16 %v221
      %v940 = vunpack.c.h.b16 %v221
      %v941 = vunpack.c.l.b16 %v222
      %v942 = vunpack.c.h.b16 %v222
      %v943 = vunpack.c.l.b16 %v223
      %v944 = vunpack.c.h.b16 %v223
      %v945 = vunpack.c.l.b16 %v224
      %v946 = vunpack.c.h.b16 %v224
      %v947 = vunpack.c.l.b16 %v225
      %v948 = vunpack.c.h.b16 %v225
      %v949 = vunpack.c.l.b16 %v226
      %v950 = vunpack.c.h.b16 %v226
      %v951 = vunpack.c.l.b16 %v227
      %v952 = vunpack.c.h.b16 %v227
      %v953 = vunpack.c.l.b16 %v228
      %v954 = vunpack.c.h.b16 %v228
      %v955 = vunpack.c.l.b16 %v229
      %v956 = vunpack.c.h.b16 %v229
      %v957 = vunpack.c.l.b16 %v230
      %v958 = vunpack.c.h.b16 %v230
      %v959 = vunpack.c.l.b16 %v231
      %v960 = vunpack.c.h.b16 %v231
      %v961 = vunpack.c.l.b16 %v232
      %v962 = vunpack.c.h.b16 %v232
      %v963 = vunpack.c.l.b16 %v233
      %v964 = vunpack.c.h.b16 %v233
      %v965 = vunpack.c.l.b16 %v234
      %v966 = vunpack.c.h.b16 %v234
      %v967 = vpack.c.b16 %v841, %v839
      %v968 = vpack.c.b16 %v842, %v840
      %v969 = vpack.c.b16 %v845, %v843
      %v970 = vpack.c.b16 %v846, %v844
      %v971 = vpack.c.b16 %v849, %v847
      %v972 = vpack.c.b16 %v850, %v848
      %v973 = vpack.c.b16 %v853, %v851
      %v974 = vpack.c.b16 %v854, %v852
      %v975 = vpack.c.b16 %v857, %v855
      %v976 = vpack.c.b16 %v858, %v856
      %v977 = vpack.c.b16 %v861, %v859
      %v978 = vpack.c.b16 %v862, %v860
      %v979 = vpack.c.b16 %v865, %v863
      %v980 = vpack.c.b16 %v866, %v864
      %v981 = vpack.c.b16 %v869, %v867
      %v982 = vpack.c.b16 %v870, %v868
      %v983 = vpack.c.b16 %v873, %v871
      %v984 = vpack.c.b16 %v874, %v872
      %v985 = vpack.c.b16 %v877, %v875
      %v986 = vpack.c.b16 %v878, %v876
      %v987 = vpack.c.b16 %v881, %v879
      %v988 = vpack.c.b16 %v882, %v880
      %v989 = vpack.c.b16 %v885, %v883
      %v990 = vpack.c.b16 %v886, %v884
      %v991 = vpack.c.b16 %v889, %v887
      %v992 = vpack.c.b16 %v890, %v888
      %v993 = vpack.c.b16 %v893, %v891
      %v994 = vpack.c.b16 %v894, %v892
      %v995 = vpack.c.b16 %v897, %v895
      %v996 = vpack.c.b16 %v898, %v896
      %v997 = vpack.c.b16 %v901, %v899
      %v998 = vpack.c.b16 %v902, %v900
      %v999 = vpack.c.b16 %v905, %v903
      %v1000 = vpack.c.b16 %v906, %v904
      %v1001 = vpack.c.b16 %v909, %v907
      %v1002 = vpack.c.b16 %v910, %v908
      %v1003 = vpack.c.b16 %v913, %v911
      %v1004 = vpack.c.b16 %v914, %v912
      %v1005 = vpack.c.b16 %v917, %v915
      %v1006 = vpack.c.b16 %v918, %v916
      %v1007 = vpack.c.b16 %v921, %v919
      %v1008 = vpack.c.b16 %v922, %v920
      %v1009 = vpack.c.b16 %v925, %v923
      %v1010 = vpack.c.b16 %v926, %v924
      %v1011 = vpack.c.b16 %v929, %v927
      %v1012 = vpack.c.b16 %v930, %v928
      %v1013 = vpack.c.b16 %v933, %v931
      %v1014 = vpack.c.b16 %v934, %v932
      %v1015 = vpack.c.b16 %v937, %v935
      %v1016 = vpack.c.b16 %v938, %v936
      %v1017 = vpack.c.b16 %v941, %v939
      %v1018 = vpack.c.b16 %v942, %v940
      %v1019 = vpack.c.b16 %v945, %v943
      %v1020 = vpack.c.b16 %v946, %v944
      %v1021 = vpack.c.b16 %v949, %v947
      %v1022 = vpack.c.b16 %v950, %v948
      %v1023 = vpack.c.b16 %v953, %v951
      %v1024 = vpack.c.b16 %v954, %v952
      %v1025 = vpack.c.b16 %v957, %v955
      %v1026 = vpack.c.b16 %v958, %v956
      %v1027 = vpack.c.b16 %v961, %v959
      %v1028 = vpack.c.b16 %v962, %v960
      %v1029 = vpack.c.b16 %v965, %v963
      %v1030 = vpack.c.b16 %v966, %v964
      %1095 = vmatprep.subr.bf16.mxu0 %v968
      %1096 = vmatpush1.bf16.msra.mxu0 %v967
      %1097 = vmatprep.subr.bf16.mxu0 %v970
      %1098 = vmatpush1.bf16.msra.mxu0 %v969
      %1099 = vmatprep.subr.bf16.mxu0 %v972
      %1100 = vmatpush1.bf16.msra.mxu0 %v971
      %1101 = vmatprep.subr.bf16.mxu0 %v974
      %1102 = vmatpush1.bf16.msra.mxu0 %v973
      %1103 = vmatprep.subr.bf16.mxu0 %v976
      %1104 = vmatpush1.bf16.msra.mxu0 %v975
      %1105 = vmatprep.subr.bf16.mxu0 %v978
      %1106 = vmatpush1.bf16.msra.mxu0 %v977
      %1107 = vmatprep.subr.bf16.mxu0 %v980
      %1108 = vmatpush1.bf16.msra.mxu0 %v979
      %1109 = vmatprep.subr.bf16.mxu0 %v982
      %1110 = vmatpush1.bf16.msra.mxu0 %v981
      %1111 = vmatprep.subr.bf16.mxu0 %v984
      %1112 = vmatpush1.bf16.msra.mxu0 %v983
      %1113 = vmatprep.subr.bf16.mxu0 %v986
      %1114 = vmatpush1.bf16.msra.mxu0 %v985
      %1115 = vmatprep.subr.bf16.mxu0 %v988
      %1116 = vmatpush1.bf16.msra.mxu0 %v987
      %1117 = vmatprep.subr.bf16.mxu0 %v990
      %1118 = vmatpush1.bf16.msra.mxu0 %v989
      %1119 = vmatprep.subr.bf16.mxu0 %v992
      %1120 = vmatpush1.bf16.msra.mxu0 %v991
      %1121 = vmatprep.subr.bf16.mxu0 %v994
      %1122 = vmatpush1.bf16.msra.mxu0 %v993
      %1123 = vmatprep.subr.bf16.mxu0 %v996
      %1124 = vmatpush1.bf16.msra.mxu0 %v995
      %1125 = vmatprep.subr.bf16.mxu0 %v998
      %1126 = vmatpush1.bf16.msra.mxu0 %v997
      %1127 = vmatprep.mubr.bf16.mxu0 %v769
      %1128 = vmatmul.mubr.bf16.gmra.mrb[0].mxu0 %v761
      %v1129 = vpop.f32.mrb[0].mxu0
      %v1130 = vadd.f32 %v747, %v1129
      %v1131 = vpop.f32.mrb[0].mxu0
      %v1132 = vadd.f32 %v749, %v1131
      %v1133 = vpop.f32.mrb[0].mxu0
      %v1134 = vpop.f32.mrb[0].mxu0
      %1135 = vdwg.mxu0
      %1136 = vmatprep.subr.bf16.mxu0 %v1000
      %1137 = vmatpush1.bf16.msra.mxu0 %v999
      %1138 = vmatprep.subr.bf16.mxu0 %v1002
      %1139 = vmatpush1.bf16.msra.mxu0 %v1001
      %1140 = vmatprep.subr.bf16.mxu0 %v1004
      %1141 = vmatpush1.bf16.msra.mxu0 %v1003
      %1142 = vmatprep.subr.bf16.mxu0 %v1006
      %1143 = vmatpush1.bf16.msra.mxu0 %v1005
      %1144 = vmatprep.subr.bf16.mxu0 %v1008
      %1145 = vmatpush1.bf16.msra.mxu0 %v1007
      %1146 = vmatprep.subr.bf16.mxu0 %v1010
      %1147 = vmatpush1.bf16.msra.mxu0 %v1009
      %1148 = vmatprep.subr.bf16.mxu0 %v1012
      %1149 = vmatpush1.bf16.msra.mxu0 %v1011
      %1150 = vmatprep.subr.bf16.mxu0 %v1014
      %1151 = vmatpush1.bf16.msra.mxu0 %v1013
      %1152 = vmatprep.subr.bf16.mxu0 %v1016
      %1153 = vmatpush1.bf16.msra.mxu0 %v1015
      %1154 = vmatprep.subr.bf16.mxu0 %v1018
      %1155 = vmatpush1.bf16.msra.mxu0 %v1017
      %1156 = vmatprep.subr.bf16.mxu0 %v1020
      %1157 = vmatpush1.bf16.msra.mxu0 %v1019
      %1158 = vmatprep.subr.bf16.mxu0 %v1022
      %1159 = vmatpush1.bf16.msra.mxu0 %v1021
      %1160 = vmatprep.subr.bf16.mxu0 %v1024
      %1161 = vmatpush1.bf16.msra.mxu0 %v1023
      %1162 = vmatprep.subr.bf16.mxu0 %v1026
      %1163 = vmatpush1.bf16.msra.mxu0 %v1025
      %1164 = vmatprep.subr.bf16.mxu0 %v1028
      %1165 = vmatpush1.bf16.msra.mxu0 %v1027
      %1166 = vmatprep.subr.bf16.mxu0 %v1030
      %1167 = vmatpush1.bf16.msra.mxu0 %v1029
      %1168 = vmatprep.mubr.bf16.mxu0 %v770
      %1169 = vmatmul.mubr.bf16.gmra.mrb[0].mxu0 %v768
      %v1170 = vpop.f32.mrb[0].mxu0
      %v1171 = vadd.f32 %v1130, %v1170
      %v1172 = vpop.f32.mrb[0].mxu0
      %v1173 = vadd.f32 %v1132, %v1172
      %v1174 = vpop.f32.mrb[0].mxu0
      %v1175 = vpop.f32.mrb[0].mxu0
      %1176 = vdwg.mxu0
      %s1177 = scalar_lea.vmem %s164, 8
      %v1178 = vld [vmem:[%s1177] sm:$0x55]
      %s1179 = scalar_lea.vmem %s1, 1024
      %v1180 = vld [vmem:[%s1179] sm:$0xff]
      %v1181 = vld [vmem:[%s1179 + $0x8] sm:$0xff]
      %v1182 = vld [vmem:[%s1179 + $0x10] sm:$0xff]
      %v1183 = vld [vmem:[%s1179 + $0x18] sm:$0xff]
      %v1184 = vld [vmem:[%s1179 + $0x20] sm:$0xff]
      %v1185 = vld [vmem:[%s1179 + $0x28] sm:$0xff]
      %v1186 = vld [vmem:[%s1179 + $0x30] sm:$0xff]
      %v1187 = vld [vmem:[%s1179 + $0x38] sm:$0xff]
      %v1188 = vld [vmem:[%s1179 + $0x40] sm:$0xff]
      %v1189 = vld [vmem:[%s1179 + $0x48] sm:$0xff]
      %v1190 = vld [vmem:[%s1179 + $0x50] sm:$0xff]
      %v1191 = vld [vmem:[%s1179 + $0x58] sm:$0xff]
      %v1192 = vld [vmem:[%s1179 + $0x60] sm:$0xff]
      %v1193 = vld [vmem:[%s1179 + $0x68] sm:$0xff]
      %v1194 = vld [vmem:[%s1179 + $0x70] sm:$0xff]
      %v1195 = vld [vmem:[%s1179 + $0x78] sm:$0xff]
      %v1196 = vld [vmem:[%s1179 + $0x80] sm:$0xff]
      %v1197 = vld [vmem:[%s1179 + $0x88] sm:$0xff]
      %v1198 = vld [vmem:[%s1179 + $0x90] sm:$0xff]
      %v1199 = vld [vmem:[%s1179 + $0x98] sm:$0xff]
      %v1200 = vld [vmem:[%s1179 + $0xa0] sm:$0xff]
      %v1201 = vld [vmem:[%s1179 + $0xa8] sm:$0xff]
      %v1202 = vld [vmem:[%s1179 + $0xb0] sm:$0xff]
      %v1203 = vld [vmem:[%s1179 + $0xb8] sm:$0xff]
      %v1204 = vld [vmem:[%s1179 + $0xc0] sm:$0xff]
      %v1205 = vld [vmem:[%s1179 + $0xc8] sm:$0xff]
      %v1206 = vld [vmem:[%s1179 + $0xd0] sm:$0xff]
      %v1207 = vld [vmem:[%s1179 + $0xd8] sm:$0xff]
      %v1208 = vld [vmem:[%s1179 + $0xe0] sm:$0xff]
      %v1209 = vld [vmem:[%s1179 + $0xe8] sm:$0xff]
      %v1210 = vld [vmem:[%s1179 + $0xf0] sm:$0xff]
      %v1211 = vld [vmem:[%s1179 + $0xf8] sm:$0xff]
      %v1212 = vld [vmem:[%s1179 + $0x100] sm:$0xff]
      %v1213 = vld [vmem:[%s1179 + $0x108] sm:$0xff]
      %v1214 = vld [vmem:[%s1179 + $0x110] sm:$0xff]
      %v1215 = vld [vmem:[%s1179 + $0x118] sm:$0xff]
      %v1216 = vld [vmem:[%s1179 + $0x120] sm:$0xff]
      %v1217 = vld [vmem:[%s1179 + $0x128] sm:$0xff]
      %v1218 = vld [vmem:[%s1179 + $0x130] sm:$0xff]
      %v1219 = vld [vmem:[%s1179 + $0x138] sm:$0xff]
      %v1220 = vld [vmem:[%s1179 + $0x140] sm:$0xff]
      %v1221 = vld [vmem:[%s1179 + $0x148] sm:$0xff]
      %v1222 = vld [vmem:[%s1179 + $0x150] sm:$0xff]
      %v1223 = vld [vmem:[%s1179 + $0x158] sm:$0xff]
      %v1224 = vld [vmem:[%s1179 + $0x160] sm:$0xff]
      %v1225 = vld [vmem:[%s1179 + $0x168] sm:$0xff]
      %v1226 = vld [vmem:[%s1179 + $0x170] sm:$0xff]
      %v1227 = vld [vmem:[%s1179 + $0x178] sm:$0xff]
      %v1228 = vld [vmem:[%s1179 + $0x180] sm:$0xff]
      %v1229 = vld [vmem:[%s1179 + $0x188] sm:$0xff]
      %v1230 = vld [vmem:[%s1179 + $0x190] sm:$0xff]
      %v1231 = vld [vmem:[%s1179 + $0x198] sm:$0xff]
      %v1232 = vld [vmem:[%s1179 + $0x1a0] sm:$0xff]
      %v1233 = vld [vmem:[%s1179 + $0x1a8] sm:$0xff]
      %v1234 = vld [vmem:[%s1179 + $0x1b0] sm:$0xff]
      %v1235 = vld [vmem:[%s1179 + $0x1b8] sm:$0xff]
      %v1236 = vld [vmem:[%s1179 + $0x1c0] sm:$0xff]
      %v1237 = vld [vmem:[%s1179 + $0x1c8] sm:$0xff]
      %v1238 = vld [vmem:[%s1179 + $0x1d0] sm:$0xff]
      %v1239 = vld [vmem:[%s1179 + $0x1d8] sm:$0xff]
      %v1240 = vld [vmem:[%s1179 + $0x1e0] sm:$0xff]
      %v1241 = vld [vmem:[%s1179 + $0x1e8] sm:$0xff]
      %v1242 = vld [vmem:[%s1179 + $0x1f0] sm:$0xff]
      %v1243 = vld [vmem:[%s1179 + $0x1f8] sm:$0xff]
      %v1245 = vcombine.high %v1178, %v1178
      %v1247 = vunpack.c.l.s4 1983009808
      %v1248 = vunpack.c.0.s8 %v1247
      %v1249 = vlaneseq
      %v1250 = vshrl.u32 %v1249, 7
      %v1251 = vsub.s32 %v1248, %v1250
      %v1252 = vrot.slane %v1178, %v1251
      %v1254 = vunpack.c.l.s4 1983009808
      %v1255 = vunpack.c.0.s8 %v1254
      %v1256 = vlaneseq
      %v1257 = vshrl.u32 %v1256, 7
      %v1258 = vsub.s32 %v1255, %v1257
      %v1259 = vrot.slane %v1245, %v1258
      %v1260 = vcombine.high %v1252, %v1252
      %v1261 = vcombine.high %v1259, %v1259
      %v1330 = vunpack.c.l.b16 %v1180
      %v1331 = vunpack.c.h.b16 %v1180
      %v1332 = vunpack.c.l.b16 %v1181
      %v1333 = vunpack.c.h.b16 %v1181
      %v1334 = vunpack.c.l.b16 %v1182
      %v1335 = vunpack.c.h.b16 %v1182
      %v1336 = vunpack.c.l.b16 %v1183
      %v1337 = vunpack.c.h.b16 %v1183
      %v1338 = vunpack.c.l.b16 %v1184
      %v1339 = vunpack.c.h.b16 %v1184
      %v1340 = vunpack.c.l.b16 %v1185
      %v1341 = vunpack.c.h.b16 %v1185
      %v1342 = vunpack.c.l.b16 %v1186
      %v1343 = vunpack.c.h.b16 %v1186
      %v1344 = vunpack.c.l.b16 %v1187
      %v1345 = vunpack.c.h.b16 %v1187
      %v1346 = vunpack.c.l.b16 %v1188
      %v1347 = vunpack.c.h.b16 %v1188
      %v1348 = vunpack.c.l.b16 %v1189
      %v1349 = vunpack.c.h.b16 %v1189
      %v1350 = vunpack.c.l.b16 %v1190
      %v1351 = vunpack.c.h.b16 %v1190
      %v1352 = vunpack.c.l.b16 %v1191
      %v1353 = vunpack.c.h.b16 %v1191
      %v1354 = vunpack.c.l.b16 %v1192
      %v1355 = vunpack.c.h.b16 %v1192
      %v1356 = vunpack.c.l.b16 %v1193
      %v1357 = vunpack.c.h.b16 %v1193
      %v1358 = vunpack.c.l.b16 %v1194
      %v1359 = vunpack.c.h.b16 %v1194
      %v1360 = vunpack.c.l.b16 %v1195
      %v1361 = vunpack.c.h.b16 %v1195
      %v1362 = vunpack.c.l.b16 %v1196
      %v1363 = vunpack.c.h.b16 %v1196
      %v1364 = vunpack.c.l.b16 %v1197
      %v1365 = vunpack.c.h.b16 %v1197
      %v1366 = vunpack.c.l.b16 %v1198
      %v1367 = vunpack.c.h.b16 %v1198
      %v1368 = vunpack.c.l.b16 %v1199
      %v1369 = vunpack.c.h.b16 %v1199
      %v1370 = vunpack.c.l.b16 %v1200
      %v1371 = vunpack.c.h.b16 %v1200
      %v1372 = vunpack.c.l.b16 %v1201
      %v1373 = vunpack.c.h.b16 %v1201
      %v1374 = vunpack.c.l.b16 %v1202
      %v1375 = vunpack.c.h.b16 %v1202
      %v1376 = vunpack.c.l.b16 %v1203
      %v1377 = vunpack.c.h.b16 %v1203
      %v1378 = vunpack.c.l.b16 %v1204
      %v1379 = vunpack.c.h.b16 %v1204
      %v1380 = vunpack.c.l.b16 %v1205
      %v1381 = vunpack.c.h.b16 %v1205
      %v1382 = vunpack.c.l.b16 %v1206
      %v1383 = vunpack.c.h.b16 %v1206
      %v1384 = vunpack.c.l.b16 %v1207
      %v1385 = vunpack.c.h.b16 %v1207
      %v1386 = vunpack.c.l.b16 %v1208
      %v1387 = vunpack.c.h.b16 %v1208
      %v1388 = vunpack.c.l.b16 %v1209
      %v1389 = vunpack.c.h.b16 %v1209
      %v1390 = vunpack.c.l.b16 %v1210
      %v1391 = vunpack.c.h.b16 %v1210
      %v1392 = vunpack.c.l.b16 %v1211
      %v1393 = vunpack.c.h.b16 %v1211
      %v1394 = vunpack.c.l.b16 %v1212
      %v1395 = vunpack.c.h.b16 %v1212
      %v1396 = vunpack.c.l.b16 %v1213
      %v1397 = vunpack.c.h.b16 %v1213
      %v1398 = vunpack.c.l.b16 %v1214
      %v1399 = vunpack.c.h.b16 %v1214
      %v1400 = vunpack.c.l.b16 %v1215
      %v1401 = vunpack.c.h.b16 %v1215
      %v1402 = vunpack.c.l.b16 %v1216
      %v1403 = vunpack.c.h.b16 %v1216
      %v1404 = vunpack.c.l.b16 %v1217
      %v1405 = vunpack.c.h.b16 %v1217
      %v1406 = vunpack.c.l.b16 %v1218
      %v1407 = vunpack.c.h.b16 %v1218
      %v1408 = vunpack.c.l.b16 %v1219
      %v1409 = vunpack.c.h.b16 %v1219
      %v1410 = vunpack.c.l.b16 %v1220
      %v1411 = vunpack.c.h.b16 %v1220
      %v1412 = vunpack.c.l.b16 %v1221
      %v1413 = vunpack.c.h.b16 %v1221
      %v1414 = vunpack.c.l.b16 %v1222
      %v1415 = vunpack.c.h.b16 %v1222
      %v1416 = vunpack.c.l.b16 %v1223
      %v1417 = vunpack.c.h.b16 %v1223
      %v1418 = vunpack.c.l.b16 %v1224
      %v1419 = vunpack.c.h.b16 %v1224
      %v1420 = vunpack.c.l.b16 %v1225
      %v1421 = vunpack.c.h.b16 %v1225
      %v1422 = vunpack.c.l.b16 %v1226
      %v1423 = vunpack.c.h.b16 %v1226
      %v1424 = vunpack.c.l.b16 %v1227
      %v1425 = vunpack.c.h.b16 %v1227
      %v1426 = vunpack.c.l.b16 %v1228
      %v1427 = vunpack.c.h.b16 %v1228
      %v1428 = vunpack.c.l.b16 %v1229
      %v1429 = vunpack.c.h.b16 %v1229
      %v1430 = vunpack.c.l.b16 %v1230
      %v1431 = vunpack.c.h.b16 %v1230
      %v1432 = vunpack.c.l.b16 %v1231
      %v1433 = vunpack.c.h.b16 %v1231
      %v1434 = vunpack.c.l.b16 %v1232
      %v1435 = vunpack.c.h.b16 %v1232
      %v1436 = vunpack.c.l.b16 %v1233
      %v1437 = vunpack.c.h.b16 %v1233
      %v1438 = vunpack.c.l.b16 %v1234
      %v1439 = vunpack.c.h.b16 %v1234
      %v1440 = vunpack.c.l.b16 %v1235
      %v1441 = vunpack.c.h.b16 %v1235
      %v1442 = vunpack.c.l.b16 %v1236
      %v1443 = vunpack.c.h.b16 %v1236
      %v1444 = vunpack.c.l.b16 %v1237
      %v1445 = vunpack.c.h.b16 %v1237
      %v1446 = vunpack.c.l.b16 %v1238
      %v1447 = vunpack.c.h.b16 %v1238
      %v1448 = vunpack.c.l.b16 %v1239
      %v1449 = vunpack.c.h.b16 %v1239
      %v1450 = vunpack.c.l.b16 %v1240
      %v1451 = vunpack.c.h.b16 %v1240
      %v1452 = vunpack.c.l.b16 %v1241
      %v1453 = vunpack.c.h.b16 %v1241
      %v1454 = vunpack.c.l.b16 %v1242
      %v1455 = vunpack.c.h.b16 %v1242
      %v1456 = vunpack.c.l.b16 %v1243
      %v1457 = vunpack.c.h.b16 %v1243
      %v1458 = vpack.c.b16 %v1332, %v1330
      %v1459 = vpack.c.b16 %v1333, %v1331
      %v1460 = vpack.c.b16 %v1336, %v1334
      %v1461 = vpack.c.b16 %v1337, %v1335
      %v1462 = vpack.c.b16 %v1340, %v1338
      %v1463 = vpack.c.b16 %v1341, %v1339
      %v1464 = vpack.c.b16 %v1344, %v1342
      %v1465 = vpack.c.b16 %v1345, %v1343
      %v1466 = vpack.c.b16 %v1348, %v1346
      %v1467 = vpack.c.b16 %v1349, %v1347
      %v1468 = vpack.c.b16 %v1352, %v1350
      %v1469 = vpack.c.b16 %v1353, %v1351
      %v1470 = vpack.c.b16 %v1356, %v1354
      %v1471 = vpack.c.b16 %v1357, %v1355
      %v1472 = vpack.c.b16 %v1360, %v1358
      %v1473 = vpack.c.b16 %v1361, %v1359
      %v1474 = vpack.c.b16 %v1364, %v1362
      %v1475 = vpack.c.b16 %v1365, %v1363
      %v1476 = vpack.c.b16 %v1368, %v1366
      %v1477 = vpack.c.b16 %v1369, %v1367
      %v1478 = vpack.c.b16 %v1372, %v1370
      %v1479 = vpack.c.b16 %v1373, %v1371
      %v1480 = vpack.c.b16 %v1376, %v1374
      %v1481 = vpack.c.b16 %v1377, %v1375
      %v1482 = vpack.c.b16 %v1380, %v1378
      %v1483 = vpack.c.b16 %v1381, %v1379
      %v1484 = vpack.c.b16 %v1384, %v1382
      %v1485 = vpack.c.b16 %v1385, %v1383
      %v1486 = vpack.c.b16 %v1388, %v1386
      %v1487 = vpack.c.b16 %v1389, %v1387
      %v1488 = vpack.c.b16 %v1392, %v1390
      %v1489 = vpack.c.b16 %v1393, %v1391
      %v1490 = vpack.c.b16 %v1396, %v1394
      %v1491 = vpack.c.b16 %v1397, %v1395
      %v1492 = vpack.c.b16 %v1400, %v1398
      %v1493 = vpack.c.b16 %v1401, %v1399
      %v1494 = vpack.c.b16 %v1404, %v1402
      %v1495 = vpack.c.b16 %v1405, %v1403
      %v1496 = vpack.c.b16 %v1408, %v1406
      %v1497 = vpack.c.b16 %v1409, %v1407
      %v1498 = vpack.c.b16 %v1412, %v1410
      %v1499 = vpack.c.b16 %v1413, %v1411
      %v1500 = vpack.c.b16 %v1416, %v1414
      %v1501 = vpack.c.b16 %v1417, %v1415
      %v1502 = vpack.c.b16 %v1420, %v1418
      %v1503 = vpack.c.b16 %v1421, %v1419
      %v1504 = vpack.c.b16 %v1424, %v1422
      %v1505 = vpack.c.b16 %v1425, %v1423
      %v1506 = vpack.c.b16 %v1428, %v1426
      %v1507 = vpack.c.b16 %v1429, %v1427
      %v1508 = vpack.c.b16 %v1432, %v1430
      %v1509 = vpack.c.b16 %v1433, %v1431
      %v1510 = vpack.c.b16 %v1436, %v1434
      %v1511 = vpack.c.b16 %v1437, %v1435
      %v1512 = vpack.c.b16 %v1440, %v1438
      %v1513 = vpack.c.b16 %v1441, %v1439
      %v1514 = vpack.c.b16 %v1444, %v1442
      %v1515 = vpack.c.b16 %v1445, %v1443
      %v1516 = vpack.c.b16 %v1448, %v1446
      %v1517 = vpack.c.b16 %v1449, %v1447
      %v1518 = vpack.c.b16 %v1452, %v1450
      %v1519 = vpack.c.b16 %v1453, %v1451
      %v1520 = vpack.c.b16 %v1456, %v1454
      %v1521 = vpack.c.b16 %v1457, %v1455
      %1586 = vmatprep.subr.bf16.mxu0 %v1459
      %1587 = vmatpush1.bf16.msra.mxu0 %v1458
      %1588 = vmatprep.subr.bf16.mxu0 %v1461
      %1589 = vmatpush1.bf16.msra.mxu0 %v1460
      %1590 = vmatprep.subr.bf16.mxu0 %v1463
      %1591 = vmatpush1.bf16.msra.mxu0 %v1462
      %1592 = vmatprep.subr.bf16.mxu0 %v1465
      %1593 = vmatpush1.bf16.msra.mxu0 %v1464
      %1594 = vmatprep.subr.bf16.mxu0 %v1467
      %1595 = vmatpush1.bf16.msra.mxu0 %v1466
      %1596 = vmatprep.subr.bf16.mxu0 %v1469
      %1597 = vmatpush1.bf16.msra.mxu0 %v1468
      %1598 = vmatprep.subr.bf16.mxu0 %v1471
      %1599 = vmatpush1.bf16.msra.mxu0 %v1470
      %1600 = vmatprep.subr.bf16.mxu0 %v1473
      %1601 = vmatpush1.bf16.msra.mxu0 %v1472
      %1602 = vmatprep.subr.bf16.mxu0 %v1475
      %1603 = vmatpush1.bf16.msra.mxu0 %v1474
      %1604 = vmatprep.subr.bf16.mxu0 %v1477
      %1605 = vmatpush1.bf16.msra.mxu0 %v1476
      %1606 = vmatprep.subr.bf16.mxu0 %v1479
      %1607 = vmatpush1.bf16.msra.mxu0 %v1478
      %1608 = vmatprep.subr.bf16.mxu0 %v1481
      %1609 = vmatpush1.bf16.msra.mxu0 %v1480
      %1610 = vmatprep.subr.bf16.mxu0 %v1483
      %1611 = vmatpush1.bf16.msra.mxu0 %v1482
      %1612 = vmatprep.subr.bf16.mxu0 %v1485
      %1613 = vmatpush1.bf16.msra.mxu0 %v1484
      %1614 = vmatprep.subr.bf16.mxu0 %v1487
      %1615 = vmatpush1.bf16.msra.mxu0 %v1486
      %1616 = vmatprep.subr.bf16.mxu0 %v1489
      %1617 = vmatpush1.bf16.msra.mxu0 %v1488
      %1618 = vmatprep.mubr.bf16.mxu0 %v1260
      %1619 = vmatmul.mubr.bf16.gmra.mrb[0].mxu0 %v1252
      %v1620 = vpop.f32.mrb[0].mxu0
      %v1621 = vadd.f32 0.0, %v1620
      %v1622 = vpop.f32.mrb[0].mxu0
      %v1623 = vadd.f32 0.0, %v1622
      %v1624 = vpop.f32.mrb[0].mxu0
      %v1625 = vpop.f32.mrb[0].mxu0
      %1626 = vdwg.mxu0
      %1627 = vmatprep.subr.bf16.mxu0 %v1491
      %1628 = vmatpush1.bf16.msra.mxu0 %v1490
      %1629 = vmatprep.subr.bf16.mxu0 %v1493
      %1630 = vmatpush1.bf16.msra.mxu0 %v1492
      %1631 = vmatprep.subr.bf16.mxu0 %v1495
      %1632 = vmatpush1.bf16.msra.mxu0 %v1494
      %1633 = vmatprep.subr.bf16.mxu0 %v1497
      %1634 = vmatpush1.bf16.msra.mxu0 %v1496
      %1635 = vmatprep.subr.bf16.mxu0 %v1499
      %1636 = vmatpush1.bf16.msra.mxu0 %v1498
      %1637 = vmatprep.subr.bf16.mxu0 %v1501
      %1638 = vmatpush1.bf16.msra.mxu0 %v1500
      %1639 = vmatprep.subr.bf16.mxu0 %v1503
      %1640 = vmatpush1.bf16.msra.mxu0 %v1502
      %1641 = vmatprep.subr.bf16.mxu0 %v1505
      %1642 = vmatpush1.bf16.msra.mxu0 %v1504
      %1643 = vmatprep.subr.bf16.mxu0 %v1507
      %1644 = vmatpush1.bf16.msra.mxu0 %v1506
      %1645 = vmatprep.subr.bf16.mxu0 %v1509
      %1646 = vmatpush1.bf16.msra.mxu0 %v1508
      %1647 = vmatprep.subr.bf16.mxu0 %v1511
      %1648 = vmatpush1.bf16.msra.mxu0 %v1510
      %1649 = vmatprep.subr.bf16.mxu0 %v1513
      %1650 = vmatpush1.bf16.msra.mxu0 %v1512
      %1651 = vmatprep.subr.bf16.mxu0 %v1515
      %1652 = vmatpush1.bf16.msra.mxu0 %v1514
      %1653 = vmatprep.subr.bf16.mxu0 %v1517
      %1654 = vmatpush1.bf16.msra.mxu0 %v1516
      %1655 = vmatprep.subr.bf16.mxu0 %v1519
      %1656 = vmatpush1.bf16.msra.mxu0 %v1518
      %1657 = vmatprep.subr.bf16.mxu0 %v1521
      %1658 = vmatpush1.bf16.msra.mxu0 %v1520
      %1659 = vmatprep.mubr.bf16.mxu0 %v1261
      %1660 = vmatmul.mubr.bf16.gmra.mrb[0].mxu0 %v1259
      %v1661 = vpop.f32.mrb[0].mxu0
      %v1662 = vadd.f32 %v1621, %v1661
      %v1663 = vpop.f32.mrb[0].mxu0
      %v1664 = vadd.f32 %v1623, %v1663
      %v1665 = vpop.f32.mrb[0].mxu0
      %v1666 = vpop.f32.mrb[0].mxu0
      %1667 = vdwg.mxu0
      %v1668 = vadd.f32 %v1171, %v1662
      %v1669 = vadd.f32 %v1173, %v1664
      %v1670 = vld [vmem:[%s1177] sm:$0xff]
      %s1671 = scalar_lea.vmem %s1, 1536
      %v1672 = vld [vmem:[%s1671] sm:$0xff]
      %v1673 = vld [vmem:[%s1671 + $0x8] sm:$0xff]
      %v1674 = vld [vmem:[%s1671 + $0x10] sm:$0xff]
      %v1675 = vld [vmem:[%s1671 + $0x18] sm:$0xff]
      %v1676 = vld [vmem:[%s1671 + $0x20] sm:$0xff]
      %v1677 = vld [vmem:[%s1671 + $0x28] sm:$0xff]
      %v1678 = vld [vmem:[%s1671 + $0x30] sm:$0xff]
      %v1679 = vld [vmem:[%s1671 + $0x38] sm:$0xff]
      %v1680 = vld [vmem:[%s1671 + $0x40] sm:$0xff]
      %v1681 = vld [vmem:[%s1671 + $0x48] sm:$0xff]
      %v1682 = vld [vmem:[%s1671 + $0x50] sm:$0xff]
      %v1683 = vld [vmem:[%s1671 + $0x58] sm:$0xff]
      %v1684 = vld [vmem:[%s1671 + $0x60] sm:$0xff]
      %v1685 = vld [vmem:[%s1671 + $0x68] sm:$0xff]
      %v1686 = vld [vmem:[%s1671 + $0x70] sm:$0xff]
      %v1687 = vld [vmem:[%s1671 + $0x78] sm:$0xff]
      %v1688 = vld [vmem:[%s1671 + $0x80] sm:$0xff]
      %v1689 = vld [vmem:[%s1671 + $0x88] sm:$0xff]
      %v1690 = vld [vmem:[%s1671 + $0x90] sm:$0xff]
      %v1691 = vld [vmem:[%s1671 + $0x98] sm:$0xff]
      %v1692 = vld [vmem:[%s1671 + $0xa0] sm:$0xff]
      %v1693 = vld [vmem:[%s1671 + $0xa8] sm:$0xff]
      %v1694 = vld [vmem:[%s1671 + $0xb0] sm:$0xff]
      %v1695 = vld [vmem:[%s1671 + $0xb8] sm:$0xff]
      %v1696 = vld [vmem:[%s1671 + $0xc0] sm:$0xff]
      %v1697 = vld [vmem:[%s1671 + $0xc8] sm:$0xff]
      %v1698 = vld [vmem:[%s1671 + $0xd0] sm:$0xff]
      %v1699 = vld [vmem:[%s1671 + $0xd8] sm:$0xff]
      %v1700 = vld [vmem:[%s1671 + $0xe0] sm:$0xff]
      %v1701 = vld [vmem:[%s1671 + $0xe8] sm:$0xff]
      %v1702 = vld [vmem:[%s1671 + $0xf0] sm:$0xff]
      %v1703 = vld [vmem:[%s1671 + $0xf8] sm:$0xff]
      %v1704 = vld [vmem:[%s1671 + $0x100] sm:$0xff]
      %v1705 = vld [vmem:[%s1671 + $0x108] sm:$0xff]
      %v1706 = vld [vmem:[%s1671 + $0x110] sm:$0xff]
      %v1707 = vld [vmem:[%s1671 + $0x118] sm:$0xff]
      %v1708 = vld [vmem:[%s1671 + $0x120] sm:$0xff]
      %v1709 = vld [vmem:[%s1671 + $0x128] sm:$0xff]
      %v1710 = vld [vmem:[%s1671 + $0x130] sm:$0xff]
      %v1711 = vld [vmem:[%s1671 + $0x138] sm:$0xff]
      %v1712 = vld [vmem:[%s1671 + $0x140] sm:$0xff]
      %v1713 = vld [vmem:[%s1671 + $0x148] sm:$0xff]
      %v1714 = vld [vmem:[%s1671 + $0x150] sm:$0xff]
      %v1715 = vld [vmem:[%s1671 + $0x158] sm:$0xff]
      %v1716 = vld [vmem:[%s1671 + $0x160] sm:$0xff]
      %v1717 = vld [vmem:[%s1671 + $0x168] sm:$0xff]
      %v1718 = vld [vmem:[%s1671 + $0x170] sm:$0xff]
      %v1719 = vld [vmem:[%s1671 + $0x178] sm:$0xff]
      %v1720 = vld [vmem:[%s1671 + $0x180] sm:$0xff]
      %v1721 = vld [vmem:[%s1671 + $0x188] sm:$0xff]
      %v1722 = vld [vmem:[%s1671 + $0x190] sm:$0xff]
      %v1723 = vld [vmem:[%s1671 + $0x198] sm:$0xff]
      %v1724 = vld [vmem:[%s1671 + $0x1a0] sm:$0xff]
      %v1725 = vld [vmem:[%s1671 + $0x1a8] sm:$0xff]
      %v1726 = vld [vmem:[%s1671 + $0x1b0] sm:$0xff]
      %v1727 = vld [vmem:[%s1671 + $0x1b8] sm:$0xff]
      %v1728 = vld [vmem:[%s1671 + $0x1c0] sm:$0xff]
      %v1729 = vld [vmem:[%s1671 + $0x1c8] sm:$0xff]
      %v1730 = vld [vmem:[%s1671 + $0x1d0] sm:$0xff]
      %v1731 = vld [vmem:[%s1671 + $0x1d8] sm:$0xff]
      %v1732 = vld [vmem:[%s1671 + $0x1e0] sm:$0xff]
      %v1733 = vld [vmem:[%s1671 + $0x1e8] sm:$0xff]
      %v1734 = vld [vmem:[%s1671 + $0x1f0] sm:$0xff]
      %v1735 = vld [vmem:[%s1671 + $0x1f8] sm:$0xff]
      %v1737 = vcombine.high %v1670, %v1670
      %v1739 = vunpack.c.l.s4 1983009808
      %v1740 = vunpack.c.0.s8 %v1739
      %v1741 = vlaneseq
      %v1742 = vshrl.u32 %v1741, 7
      %v1743 = vsub.s32 %v1740, %v1742
      %v1744 = vrot.slane %v1670, %v1743
      %v1746 = vunpack.c.l.s4 1983009808
      %v1747 = vunpack.c.0.s8 %v1746
      %v1748 = vlaneseq
      %v1749 = vshrl.u32 %v1748, 7
      %v1750 = vsub.s32 %v1747, %v1749
      %v1751 = vrot.slane %v1737, %v1750
      %v1752 = vcombine.high %v1744, %v1744
      %v1753 = vcombine.high %v1751, %v1751
      %v1755 = vshrl.u32 %v1744, 16
      %v1757 = vshll.u32 %v1744, 16
      %v1759 = vrot.slane %v1757, 1
      %v1760 = vor.u32 %v1755, %v1759
      %v1762 = vshrl.u32 %v1752, 16
      %v1764 = vshll.u32 %v1752, 16
      %v1766 = vrot.slane %v1764, 1
      %v1767 = vor.u32 %v1762, %v1766
      %v1769 = vshrl.u32 %v1751, 16
      %v1771 = vshll.u32 %v1751, 16
      %v1773 = vrot.slane %v1771, 1
      %v1774 = vor.u32 %v1769, %v1773
      %v1776 = vshrl.u32 %v1753, 16
      %v1778 = vshll.u32 %v1753, 16
      %v1780 = vrot.slane %v1778, 1
      %v1781 = vor.u32 %v1776, %v1780
      %v1850 = vunpack.c.l.b16 %v1672
      %v1851 = vunpack.c.h.b16 %v1672
      %v1852 = vunpack.c.l.b16 %v1673
      %v1853 = vunpack.c.h.b16 %v1673
      %v1854 = vunpack.c.l.b16 %v1674
      %v1855 = vunpack.c.h.b16 %v1674
      %v1856 = vunpack.c.l.b16 %v1675
      %v1857 = vunpack.c.h.b16 %v1675
      %v1858 = vunpack.c.l.b16 %v1676
      %v1859 = vunpack.c.h.b16 %v1676
      %v1860 = vunpack.c.l.b16 %v1677
      %v1861 = vunpack.c.h.b16 %v1677
      %v1862 = vunpack.c.l.b16 %v1678
      %v1863 = vunpack.c.h.b16 %v1678
      %v1864 = vunpack.c.l.b16 %v1679
      %v1865 = vunpack.c.h.b16 %v1679
      %v1866 = vunpack.c.l.b16 %v1680
      %v1867 = vunpack.c.h.b16 %v1680
      %v1868 = vunpack.c.l.b16 %v1681
      %v1869 = vunpack.c.h.b16 %v1681
      %v1870 = vunpack.c.l.b16 %v1682
      %v1871 = vunpack.c.h.b16 %v1682
      %v1872 = vunpack.c.l.b16 %v1683
      %v1873 = vunpack.c.h.b16 %v1683
      %v1874 = vunpack.c.l.b16 %v1684
      %v1875 = vunpack.c.h.b16 %v1684
      %v1876 = vunpack.c.l.b16 %v1685
      %v1877 = vunpack.c.h.b16 %v1685
      %v1878 = vunpack.c.l.b16 %v1686
      %v1879 = vunpack.c.h.b16 %v1686
      %v1880 = vunpack.c.l.b16 %v1687
      %v1881 = vunpack.c.h.b16 %v1687
      %v1882 = vunpack.c.l.b16 %v1688
      %v1883 = vunpack.c.h.b16 %v1688
      %v1884 = vunpack.c.l.b16 %v1689
      %v1885 = vunpack.c.h.b16 %v1689
      %v1886 = vunpack.c.l.b16 %v1690
      %v1887 = vunpack.c.h.b16 %v1690
      %v1888 = vunpack.c.l.b16 %v1691
      %v1889 = vunpack.c.h.b16 %v1691
      %v1890 = vunpack.c.l.b16 %v1692
      %v1891 = vunpack.c.h.b16 %v1692
      %v1892 = vunpack.c.l.b16 %v1693
      %v1893 = vunpack.c.h.b16 %v1693
      %v1894 = vunpack.c.l.b16 %v1694
      %v1895 = vunpack.c.h.b16 %v1694
      %v1896 = vunpack.c.l.b16 %v1695
      %v1897 = vunpack.c.h.b16 %v1695
      %v1898 = vunpack.c.l.b16 %v1696
      %v1899 = vunpack.c.h.b16 %v1696
      %v1900 = vunpack.c.l.b16 %v1697
      %v1901 = vunpack.c.h.b16 %v1697
      %v1902 = vunpack.c.l.b16 %v1698
      %v1903 = vunpack.c.h.b16 %v1698
      %v1904 = vunpack.c.l.b16 %v1699
      %v1905 = vunpack.c.h.b16 %v1699
      %v1906 = vunpack.c.l.b16 %v1700
      %v1907 = vunpack.c.h.b16 %v1700
      %v1908 = vunpack.c.l.b16 %v1701
      %v1909 = vunpack.c.h.b16 %v1701
      %v1910 = vunpack.c.l.b16 %v1702
      %v1911 = vunpack.c.h.b16 %v1702
      %v1912 = vunpack.c.l.b16 %v1703
      %v1913 = vunpack.c.h.b16 %v1703
      %v1914 = vunpack.c.l.b16 %v1704
      %v1915 = vunpack.c.h.b16 %v1704
      %v1916 = vunpack.c.l.b16 %v1705
      %v1917 = vunpack.c.h.b16 %v1705
      %v1918 = vunpack.c.l.b16 %v1706
      %v1919 = vunpack.c.h.b16 %v1706
      %v1920 = vunpack.c.l.b16 %v1707
      %v1921 = vunpack.c.h.b16 %v1707
      %v1922 = vunpack.c.l.b16 %v1708
      %v1923 = vunpack.c.h.b16 %v1708
      %v1924 = vunpack.c.l.b16 %v1709
      %v1925 = vunpack.c.h.b16 %v1709
      %v1926 = vunpack.c.l.b16 %v1710
      %v1927 = vunpack.c.h.b16 %v1710
      %v1928 = vunpack.c.l.b16 %v1711
      %v1929 = vunpack.c.h.b16 %v1711
      %v1930 = vunpack.c.l.b16 %v1712
      %v1931 = vunpack.c.h.b16 %v1712
      %v1932 = vunpack.c.l.b16 %v1713
      %v1933 = vunpack.c.h.b16 %v1713
      %v1934 = vunpack.c.l.b16 %v1714
      %v1935 = vunpack.c.h.b16 %v1714
      %v1936 = vunpack.c.l.b16 %v1715
      %v1937 = vunpack.c.h.b16 %v1715
      %v1938 = vunpack.c.l.b16 %v1716
      %v1939 = vunpack.c.h.b16 %v1716
      %v1940 = vunpack.c.l.b16 %v1717
      %v1941 = vunpack.c.h.b16 %v1717
      %v1942 = vunpack.c.l.b16 %v1718
      %v1943 = vunpack.c.h.b16 %v1718
      %v1944 = vunpack.c.l.b16 %v1719
      %v1945 = vunpack.c.h.b16 %v1719
      %v1946 = vunpack.c.l.b16 %v1720
      %v1947 = vunpack.c.h.b16 %v1720
      %v1948 = vunpack.c.l.b16 %v1721
      %v1949 = vunpack.c.h.b16 %v1721
      %v1950 = vunpack.c.l.b16 %v1722
      %v1951 = vunpack.c.h.b16 %v1722
      %v1952 = vunpack.c.l.b16 %v1723
      %v1953 = vunpack.c.h.b16 %v1723
      %v1954 = vunpack.c.l.b16 %v1724
      %v1955 = vunpack.c.h.b16 %v1724
      %v1956 = vunpack.c.l.b16 %v1725
      %v1957 = vunpack.c.h.b16 %v1725
      %v1958 = vunpack.c.l.b16 %v1726
      %v1959 = vunpack.c.h.b16 %v1726
      %v1960 = vunpack.c.l.b16 %v1727
      %v1961 = vunpack.c.h.b16 %v1727
      %v1962 = vunpack.c.l.b16 %v1728
      %v1963 = vunpack.c.h.b16 %v1728
      %v1964 = vunpack.c.l.b16 %v1729
      %v1965 = vunpack.c.h.b16 %v1729
      %v1966 = vunpack.c.l.b16 %v1730
      %v1967 = vunpack.c.h.b16 %v1730
      %v1968 = vunpack.c.l.b16 %v1731
      %v1969 = vunpack.c.h.b16 %v1731
      %v1970 = vunpack.c.l.b16 %v1732
      %v1971 = vunpack.c.h.b16 %v1732
      %v1972 = vunpack.c.l.b16 %v1733
      %v1973 = vunpack.c.h.b16 %v1733
      %v1974 = vunpack.c.l.b16 %v1734
      %v1975 = vunpack.c.h.b16 %v1734
      %v1976 = vunpack.c.l.b16 %v1735
      %v1977 = vunpack.c.h.b16 %v1735
      %v1978 = vpack.c.b16 %v1852, %v1850
      %v1979 = vpack.c.b16 %v1853, %v1851
      %v1980 = vpack.c.b16 %v1856, %v1854
      %v1981 = vpack.c.b16 %v1857, %v1855
      %v1982 = vpack.c.b16 %v1860, %v1858
      %v1983 = vpack.c.b16 %v1861, %v1859
      %v1984 = vpack.c.b16 %v1864, %v1862
      %v1985 = vpack.c.b16 %v1865, %v1863
      %v1986 = vpack.c.b16 %v1868, %v1866
      %v1987 = vpack.c.b16 %v1869, %v1867
      %v1988 = vpack.c.b16 %v1872, %v1870
      %v1989 = vpack.c.b16 %v1873, %v1871
      %v1990 = vpack.c.b16 %v1876, %v1874
      %v1991 = vpack.c.b16 %v1877, %v1875
      %v1992 = vpack.c.b16 %v1880, %v1878
      %v1993 = vpack.c.b16 %v1881, %v1879
      %v1994 = vpack.c.b16 %v1884, %v1882
      %v1995 = vpack.c.b16 %v1885, %v1883
      %v1996 = vpack.c.b16 %v1888, %v1886
      %v1997 = vpack.c.b16 %v1889, %v1887
      %v1998 = vpack.c.b16 %v1892, %v1890
      %v1999 = vpack.c.b16 %v1893, %v1891
      %v2000 = vpack.c.b16 %v1896, %v1894
      %v2001 = vpack.c.b16 %v1897, %v1895
      %v2002 = vpack.c.b16 %v1900, %v1898
      %v2003 = vpack.c.b16 %v1901, %v1899
      %v2004 = vpack.c.b16 %v1904, %v1902
      %v2005 = vpack.c.b16 %v1905, %v1903
      %v2006 = vpack.c.b16 %v1908, %v1906
      %v2007 = vpack.c.b16 %v1909, %v1907
      %v2008 = vpack.c.b16 %v1912, %v1910
      %v2009 = vpack.c.b16 %v1913, %v1911
      %v2010 = vpack.c.b16 %v1916, %v1914
      %v2011 = vpack.c.b16 %v1917, %v1915
      %v2012 = vpack.c.b16 %v1920, %v1918
      %v2013 = vpack.c.b16 %v1921, %v1919
      %v2014 = vpack.c.b16 %v1924, %v1922
      %v2015 = vpack.c.b16 %v1925, %v1923
      %v2016 = vpack.c.b16 %v1928, %v1926
      %v2017 = vpack.c.b16 %v1929, %v1927
      %v2018 = vpack.c.b16 %v1932, %v1930
      %v2019 = vpack.c.b16 %v1933, %v1931
      %v2020 = vpack.c.b16 %v1936, %v1934
      %v2021 = vpack.c.b16 %v1937, %v1935
      %v2022 = vpack.c.b16 %v1940, %v1938
      %v2023 = vpack.c.b16 %v1941, %v1939
      %v2024 = vpack.c.b16 %v1944, %v1942
      %v2025 = vpack.c.b16 %v1945, %v1943
      %v2026 = vpack.c.b16 %v1948, %v1946
      %v2027 = vpack.c.b16 %v1949, %v1947
      %v2028 = vpack.c.b16 %v1952, %v1950
      %v2029 = vpack.c.b16 %v1953, %v1951
      %v2030 = vpack.c.b16 %v1956, %v1954
      %v2031 = vpack.c.b16 %v1957, %v1955
      %v2032 = vpack.c.b16 %v1960, %v1958
      %v2033 = vpack.c.b16 %v1961, %v1959
      %v2034 = vpack.c.b16 %v1964, %v1962
      %v2035 = vpack.c.b16 %v1965, %v1963
      %v2036 = vpack.c.b16 %v1968, %v1966
      %v2037 = vpack.c.b16 %v1969, %v1967
      %v2038 = vpack.c.b16 %v1972, %v1970
      %v2039 = vpack.c.b16 %v1973, %v1971
      %v2040 = vpack.c.b16 %v1976, %v1974
      %v2041 = vpack.c.b16 %v1977, %v1975
      %2106 = vmatprep.subr.bf16.mxu0 %v1979
      %2107 = vmatpush1.bf16.msra.mxu0 %v1978
      %2108 = vmatprep.subr.bf16.mxu0 %v1981
      %2109 = vmatpush1.bf16.msra.mxu0 %v1980
      %2110 = vmatprep.subr.bf16.mxu0 %v1983
      %2111 = vmatpush1.bf16.msra.mxu0 %v1982
      %2112 = vmatprep.subr.bf16.mxu0 %v1985
      %2113 = vmatpush1.bf16.msra.mxu0 %v1984
      %2114 = vmatprep.subr.bf16.mxu0 %v1987
      %2115 = vmatpush1.bf16.msra.mxu0 %v1986
      %2116 = vmatprep.subr.bf16.mxu0 %v1989
      %2117 = vmatpush1.bf16.msra.mxu0 %v1988
      %2118 = vmatprep.subr.bf16.mxu0 %v1991
      %2119 = vmatpush1.bf16.msra.mxu0 %v1990
      %2120 = vmatprep.subr.bf16.mxu0 %v1993
      %2121 = vmatpush1.bf16.msra.mxu0 %v1992
      %2122 = vmatprep.subr.bf16.mxu0 %v1995
      %2123 = vmatpush1.bf16.msra.mxu0 %v1994
      %2124 = vmatprep.subr.bf16.mxu0 %v1997
      %2125 = vmatpush1.bf16.msra.mxu0 %v1996
      %2126 = vmatprep.subr.bf16.mxu0 %v1999
      %2127 = vmatpush1.bf16.msra.mxu0 %v1998
      %2128 = vmatprep.subr.bf16.mxu0 %v2001
      %2129 = vmatpush1.bf16.msra.mxu0 %v2000
      %2130 = vmatprep.subr.bf16.mxu0 %v2003
      %2131 = vmatpush1.bf16.msra.mxu0 %v2002
      %2132 = vmatprep.subr.bf16.mxu0 %v2005
      %2133 = vmatpush1.bf16.msra.mxu0 %v2004
      %2134 = vmatprep.subr.bf16.mxu0 %v2007
      %2135 = vmatpush1.bf16.msra.mxu0 %v2006
      %2136 = vmatprep.subr.bf16.mxu0 %v2009
      %2137 = vmatpush1.bf16.msra.mxu0 %v2008
      %2138 = vmatprep.mubr.bf16.mxu0 %v1767
      %2139 = vmatmul.mubr.bf16.gmra.mrb[0].mxu0 %v1760
      %v2140 = vpop.f32.mrb[0].mxu0
      %v2141 = vadd.f32 0.0, %v2140
      %v2142 = vpop.f32.mrb[0].mxu0
      %v2143 = vadd.f32 0.0, %v2142
      %v2144 = vpop.f32.mrb[0].mxu0
      %v2145 = vpop.f32.mrb[0].mxu0
      %2146 = vdwg.mxu0
      %2147 = vmatprep.subr.bf16.mxu0 %v2011
      %2148 = vmatpush1.bf16.msra.mxu0 %v2010
      %2149 = vmatprep.subr.bf16.mxu0 %v2013
      %2150 = vmatpush1.bf16.msra.mxu0 %v2012
      %2151 = vmatprep.subr.bf16.mxu0 %v2015
      %2152 = vmatpush1.bf16.msra.mxu0 %v2014
      %2153 = vmatprep.subr.bf16.mxu0 %v2017
      %2154 = vmatpush1.bf16.msra.mxu0 %v2016
      %2155 = vmatprep.subr.bf16.mxu0 %v2019
      %2156 = vmatpush1.bf16.msra.mxu0 %v2018
      %2157 = vmatprep.subr.bf16.mxu0 %v2021
      %2158 = vmatpush1.bf16.msra.mxu0 %v2020
      %2159 = vmatprep.subr.bf16.mxu0 %v2023
      %2160 = vmatpush1.bf16.msra.mxu0 %v2022
      %2161 = vmatprep.subr.bf16.mxu0 %v2025
      %2162 = vmatpush1.bf16.msra.mxu0 %v2024
      %2163 = vmatprep.subr.bf16.mxu0 %v2027
      %2164 = vmatpush1.bf16.msra.mxu0 %v2026
      %2165 = vmatprep.subr.bf16.mxu0 %v2029
      %2166 = vmatpush1.bf16.msra.mxu0 %v2028
      %2167 = vmatprep.subr.bf16.mxu0 %v2031
      %2168 = vmatpush1.bf16.msra.mxu0 %v2030
      %2169 = vmatprep.subr.bf16.mxu0 %v2033
      %2170 = vmatpush1.bf16.msra.mxu0 %v2032
      %2171 = vmatprep.subr.bf16.mxu0 %v2035
      %2172 = vmatpush1.bf16.msra.mxu0 %v2034
      %2173 = vmatprep.subr.bf16.mxu0 %v2037
      %2174 = vmatpush1.bf16.msra.mxu0 %v2036
      %2175 = vmatprep.subr.bf16.mxu0 %v2039
      %2176 = vmatpush1.bf16.msra.mxu0 %v2038
      %2177 = vmatprep.subr.bf16.mxu0 %v2041
      %2178 = vmatpush1.bf16.msra.mxu0 %v2040
      %2179 = vmatprep.mubr.bf16.mxu0 %v1781
      %2180 = vmatmul.mubr.bf16.gmra.mrb[0].mxu0 %v1774
      %v2181 = vpop.f32.mrb[0].mxu0
      %v2182 = vadd.f32 %v2141, %v2181
      %v2183 = vpop.f32.mrb[0].mxu0
      %v2184 = vadd.f32 %v2143, %v2183
      %v2185 = vpop.f32.mrb[0].mxu0
      %v2186 = vpop.f32.mrb[0].mxu0
      %2187 = vdwg.mxu0
      %v2188 = vadd.f32 %v1668, %v2182
      %v2189 = vadd.f32 %v1669, %v2184
      %v2191 = vlaneseq
      %v2192 = vshrl.u32 %v2191, 7
      %v2193 = vsub.s32 0, %v2192
      %v2194 = vrot.slane %v169, %v2193
      %v2195 = vlaneseq
      %v2196 = vshrl.u32 %v2195, 7
      %v2197 = vsub.s32 1, %v2196
      %v2198 = vrot.slane %v169, %v2197
      %v2201 = vadd.f32 %v2188, %v2194
      %v2202 = vadd.f32 %v2189, %v2198
      %vm2203 = vcmp.gt.f32.partialorder %v2201, 0.0
      %vm2204 = vcmp.gt.f32.partialorder %v2202, 0.0
      %v2205 = vmul.f32 %v2201, 0.2
      %v2206 = vmul.f32 %v2202, 0.2
      %v2207 = vsel %vm2203, %v2201, %v2205
      %v2208 = vsel %vm2204, %v2202, %v2206
      %v2209 = vpack.c.bf16 %v2207, %v2207
      %v2210 = vpack.c.bf16 %v2208, %v2208
      %v2213 = vcombine.low %v2209, %v2210
      %v2215 = vunpack.c.l.s4 1966171168
      %v2216 = vunpack.c.0.s8 %v2215
      %v2217 = vlaneseq
      %v2218 = vshrl.u32 %v2217, 7
      %v2219 = vsub.s32 %v2216, %v2218
      %v2220 = vrot.slane %v2213, %v2219
      %v2222 = vunpack.c.l.s4 1966171168
      %v2223 = vunpack.c.0.s8 %v2222
      %v2224 = vlaneseq
      %v2225 = vshrl.u32 %v2224, 7
      %v2226 = vsub.s32 %v2223, %v2225
      %v2227 = vrot.slane %v2220, %v2226
      %2229 = vst [vmem:[%s168] sm:$0x3] %v2227
      %v2230 = vld [vmem:[%s1177] sm:$0x55]
      %v2231 = vld [vmem:[%s1] sm:$0xff]
      %v2232 = vld [vmem:[%s1 + $0x8] sm:$0xff]
      %v2233 = vld [vmem:[%s1 + $0x10] sm:$0xff]
      %v2234 = vld [vmem:[%s1 + $0x18] sm:$0xff]
      %v2235 = vld [vmem:[%s1 + $0x20] sm:$0xff]
      %v2236 = vld [vmem:[%s1 + $0x28] sm:$0xff]
      %v2237 = vld [vmem:[%s1 + $0x30] sm:$0xff]
      %v2238 = vld [vmem:[%s1 + $0x38] sm:$0xff]
      %v2239 = vld [vmem:[%s1 + $0x40] sm:$0xff]
      %v2240 = vld [vmem:[%s1 + $0x48] sm:$0xff]
      %v2241 = vld [vmem:[%s1 + $0x50] sm:$0xff]
      %v2242 = vld [vmem:[%s1 + $0x58] sm:$0xff]
      %v2243 = vld [vmem:[%s1 + $0x60] sm:$0xff]
      %v2244 = vld [vmem:[%s1 + $0x68] sm:$0xff]
      %v2245 = vld [vmem:[%s1 + $0x70] sm:$0xff]
      %v2246 = vld [vmem:[%s1 + $0x78] sm:$0xff]
      %v2247 = vld [vmem:[%s1 + $0x80] sm:$0xff]
      %v2248 = vld [vmem:[%s1 + $0x88] sm:$0xff]
      %v2249 = vld [vmem:[%s1 + $0x90] sm:$0xff]
      %v2250 = vld [vmem:[%s1 + $0x98] sm:$0xff]
      %v2251 = vld [vmem:[%s1 + $0xa0] sm:$0xff]
      %v2252 = vld [vmem:[%s1 + $0xa8] sm:$0xff]
      %v2253 = vld [vmem:[%s1 + $0xb0] sm:$0xff]
      %v2254 = vld [vmem:[%s1 + $0xb8] sm:$0xff]
      %v2255 = vld [vmem:[%s1 + $0xc0] sm:$0xff]
      %v2256 = vld [vmem:[%s1 + $0xc8] sm:$0xff]
      %v2257 = vld [vmem:[%s1 + $0xd0] sm:$0xff]
      %v2258 = vld [vmem:[%s1 + $0xd8] sm:$0xff]
      %v2259 = vld [vmem:[%s1 + $0xe0] sm:$0xff]
      %v2260 = vld [vmem:[%s1 + $0xe8] sm:$0xff]
      %v2261 = vld [vmem:[%s1 + $0xf0] sm:$0xff]
      %v2262 = vld [vmem:[%s1 + $0xf8] sm:$0xff]
      %v2263 = vld [vmem:[%s1 + $0x100] sm:$0xff]
      %v2264 = vld [vmem:[%s1 + $0x108] sm:$0xff]
      %v2265 = vld [vmem:[%s1 + $0x110] sm:$0xff]
      %v2266 = vld [vmem:[%s1 + $0x118] sm:$0xff]
      %v2267 = vld [vmem:[%s1 + $0x120] sm:$0xff]
      %v2268 = vld [vmem:[%s1 + $0x128] sm:$0xff]
      %v2269 = vld [vmem:[%s1 + $0x130] sm:$0xff]
      %v2270 = vld [vmem:[%s1 + $0x138] sm:$0xff]
      %v2271 = vld [vmem:[%s1 + $0x140] sm:$0xff]
      %v2272 = vld [vmem:[%s1 + $0x148] sm:$0xff]
      %v2273 = vld [vmem:[%s1 + $0x150] sm:$0xff]
      %v2274 = vld [vmem:[%s1 + $0x158] sm:$0xff]
      %v2275 = vld [vmem:[%s1 + $0x160] sm:$0xff]
      %v2276 = vld [vmem:[%s1 + $0x168] sm:$0xff]
      %v2277 = vld [vmem:[%s1 + $0x170] sm:$0xff]
      %v2278 = vld [vmem:[%s1 + $0x178] sm:$0xff]
      %v2279 = vld [vmem:[%s1 + $0x180] sm:$0xff]
      %v2280 = vld [vmem:[%s1 + $0x188] sm:$0xff]
      %v2281 = vld [vmem:[%s1 + $0x190] sm:$0xff]
      %v2282 = vld [vmem:[%s1 + $0x198] sm:$0xff]
      %v2283 = vld [vmem:[%s1 + $0x1a0] sm:$0xff]
      %v2284 = vld [vmem:[%s1 + $0x1a8] sm:$0xff]
      %v2285 = vld [vmem:[%s1 + $0x1b0] sm:$0xff]
      %v2286 = vld [vmem:[%s1 + $0x1b8] sm:$0xff]
      %v2287 = vld [vmem:[%s1 + $0x1c0] sm:$0xff]
      %v2288 = vld [vmem:[%s1 + $0x1c8] sm:$0xff]
      %v2289 = vld [vmem:[%s1 + $0x1d0] sm:$0xff]
      %v2290 = vld [vmem:[%s1 + $0x1d8] sm:$0xff]
      %v2291 = vld [vmem:[%s1 + $0x1e0] sm:$0xff]
      %v2292 = vld [vmem:[%s1 + $0x1e8] sm:$0xff]
      %v2293 = vld [vmem:[%s1 + $0x1f0] sm:$0xff]
      %v2294 = vld [vmem:[%s1 + $0x1f8] sm:$0xff]
      %v2295 = vld [vmem:[%s1177] sm:$0xff]
      %v2296 = vld [vmem:[%s236] sm:$0xff]
      %v2297 = vld [vmem:[%s236 + $0x8] sm:$0xff]
      %v2298 = vld [vmem:[%s236 + $0x10] sm:$0xff]
      %v2299 = vld [vmem:[%s236 + $0x18] sm:$0xff]
      %v2300 = vld [vmem:[%s236 + $0x20] sm:$0xff]
      %v2301 = vld [vmem:[%s236 + $0x28] sm:$0xff]
      %v2302 = vld [vmem:[%s236 + $0x30] sm:$0xff]
      %v2303 = vld [vmem:[%s236 + $0x38] sm:$0xff]
      %v2304 = vld [vmem:[%s236 + $0x40] sm:$0xff]
      %v2305 = vld [vmem:[%s236 + $0x48] sm:$0xff]
      %v2306 = vld [vmem:[%s236 + $0x50] sm:$0xff]
      %v2307 = vld [vmem:[%s236 + $0x58] sm:$0xff]
      %v2308 = vld [vmem:[%s236 + $0x60] sm:$0xff]
      %v2309 = vld [vmem:[%s236 + $0x68] sm:$0xff]
      %v2310 = vld [vmem:[%s236 + $0x70] sm:$0xff]
      %v2311 = vld [vmem:[%s236 + $0x78] sm:$0xff]
      %v2312 = vld [vmem:[%s236 + $0x80] sm:$0xff]
      %v2313 = vld [vmem:[%s236 + $0x88] sm:$0xff]
      %v2314 = vld [vmem:[%s236 + $0x90] sm:$0xff]
      %v2315 = vld [vmem:[%s236 + $0x98] sm:$0xff]
      %v2316 = vld [vmem:[%s236 + $0xa0] sm:$0xff]
      %v2317 = vld [vmem:[%s236 + $0xa8] sm:$0xff]
      %v2318 = vld [vmem:[%s236 + $0xb0] sm:$0xff]
      %v2319 = vld [vmem:[%s236 + $0xb8] sm:$0xff]
      %v2320 = vld [vmem:[%s236 + $0xc0] sm:$0xff]
      %v2321 = vld [vmem:[%s236 + $0xc8] sm:$0xff]
      %v2322 = vld [vmem:[%s236 + $0xd0] sm:$0xff]
      %v2323 = vld [vmem:[%s236 + $0xd8] sm:$0xff]
      %v2324 = vld [vmem:[%s236 + $0xe0] sm:$0xff]
      %v2325 = vld [vmem:[%s236 + $0xe8] sm:$0xff]
      %v2326 = vld [vmem:[%s236 + $0xf0] sm:$0xff]
      %v2327 = vld [vmem:[%s236 + $0xf8] sm:$0xff]
      %v2328 = vld [vmem:[%s236 + $0x100] sm:$0xff]
      %v2329 = vld [vmem:[%s236 + $0x108] sm:$0xff]
      %v2330 = vld [vmem:[%s236 + $0x110] sm:$0xff]
      %v2331 = vld [vmem:[%s236 + $0x118] sm:$0xff]
      %v2332 = vld [vmem:[%s236 + $0x120] sm:$0xff]
      %v2333 = vld [vmem:[%s236 + $0x128] sm:$0xff]
      %v2334 = vld [vmem:[%s236 + $0x130] sm:$0xff]
      %v2335 = vld [vmem:[%s236 + $0x138] sm:$0xff]
      %v2336 = vld [vmem:[%s236 + $0x140] sm:$0xff]
      %v2337 = vld [vmem:[%s236 + $0x148] sm:$0xff]
      %v2338 = vld [vmem:[%s236 + $0x150] sm:$0xff]
      %v2339 = vld [vmem:[%s236 + $0x158] sm:$0xff]
      %v2340 = vld [vmem:[%s236 + $0x160] sm:$0xff]
      %v2341 = vld [vmem:[%s236 + $0x168] sm:$0xff]
      %v2342 = vld [vmem:[%s236 + $0x170] sm:$0xff]
      %v2343 = vld [vmem:[%s236 + $0x178] sm:$0xff]
      %v2344 = vld [vmem:[%s236 + $0x180] sm:$0xff]
      %v2345 = vld [vmem:[%s236 + $0x188] sm:$0xff]
      %v2346 = vld [vmem:[%s236 + $0x190] sm:$0xff]
      %v2347 = vld [vmem:[%s236 + $0x198] sm:$0xff]
      %v2348 = vld [vmem:[%s236 + $0x1a0] sm:$0xff]
      %v2349 = vld [vmem:[%s236 + $0x1a8] sm:$0xff]
      %v2350 = vld [vmem:[%s236 + $0x1b0] sm:$0xff]
      %v2351 = vld [vmem:[%s236 + $0x1b8] sm:$0xff]
      %v2352 = vld [vmem:[%s236 + $0x1c0] sm:$0xff]
      %v2353 = vld [vmem:[%s236 + $0x1c8] sm:$0xff]
      %v2354 = vld [vmem:[%s236 + $0x1d0] sm:$0xff]
      %v2355 = vld [vmem:[%s236 + $0x1d8] sm:$0xff]
      %v2356 = vld [vmem:[%s236 + $0x1e0] sm:$0xff]
      %v2357 = vld [vmem:[%s236 + $0x1e8] sm:$0xff]
      %v2358 = vld [vmem:[%s236 + $0x1f0] sm:$0xff]
      %v2359 = vld [vmem:[%s236 + $0x1f8] sm:$0xff]
      %v2361 = vcombine.high %v2295, %v2295
      %v2363 = vunpack.c.l.s4 1983009808
      %v2364 = vunpack.c.0.s8 %v2363
      %v2365 = vlaneseq
      %v2366 = vshrl.u32 %v2365, 7
      %v2367 = vsub.s32 %v2364, %v2366
      %v2368 = vrot.slane %v2295, %v2367
      %v2370 = vunpack.c.l.s4 1983009808
      %v2371 = vunpack.c.0.s8 %v2370
      %v2372 = vlaneseq
      %v2373 = vshrl.u32 %v2372, 7
      %v2374 = vsub.s32 %v2371, %v2373
      %v2375 = vrot.slane %v2361, %v2374
      %v2376 = vcombine.high %v2368, %v2368
      %v2377 = vcombine.high %v2375, %v2375
      %v2379 = vshrl.u32 %v2368, 16
      %v2381 = vshll.u32 %v2368, 16
      %v2383 = vrot.slane %v2381, 1
      %v2384 = vor.u32 %v2379, %v2383
      %v2386 = vshrl.u32 %v2376, 16
      %v2388 = vshll.u32 %v2376, 16
      %v2390 = vrot.slane %v2388, 1
      %v2391 = vor.u32 %v2386, %v2390
      %v2393 = vshrl.u32 %v2375, 16
      %v2395 = vshll.u32 %v2375, 16
      %v2397 = vrot.slane %v2395, 1
      %v2398 = vor.u32 %v2393, %v2397
      %v2400 = vshrl.u32 %v2377, 16
      %v2402 = vshll.u32 %v2377, 16
      %v2404 = vrot.slane %v2402, 1
      %v2405 = vor.u32 %v2400, %v2404
      %v2474 = vunpack.c.l.b16 %v2296
      %v2475 = vunpack.c.h.b16 %v2296
      %v2476 = vunpack.c.l.b16 %v2297
      %v2477 = vunpack.c.h.b16 %v2297
      %v2478 = vunpack.c.l.b16 %v2298
      %v2479 = vunpack.c.h.b16 %v2298
      %v2480 = vunpack.c.l.b16 %v2299
      %v2481 = vunpack.c.h.b16 %v2299
      %v2482 = vunpack.c.l.b16 %v2300
      %v2483 = vunpack.c.h.b16 %v2300
      %v2484 = vunpack.c.l.b16 %v2301
      %v2485 = vunpack.c.h.b16 %v2301
      %v2486 = vunpack.c.l.b16 %v2302
      %v2487 = vunpack.c.h.b16 %v2302
      %v2488 = vunpack.c.l.b16 %v2303
      %v2489 = vunpack.c.h.b16 %v2303
      %v2490 = vunpack.c.l.b16 %v2304
      %v2491 = vunpack.c.h.b16 %v2304
      %v2492 = vunpack.c.l.b16 %v2305
      %v2493 = vunpack.c.h.b16 %v2305
      %v2494 = vunpack.c.l.b16 %v2306
      %v2495 = vunpack.c.h.b16 %v2306
      %v2496 = vunpack.c.l.b16 %v2307
      %v2497 = vunpack.c.h.b16 %v2307
      %v2498 = vunpack.c.l.b16 %v2308
      %v2499 = vunpack.c.h.b16 %v2308
      %v2500 = vunpack.c.l.b16 %v2309
      %v2501 = vunpack.c.h.b16 %v2309
      %v2502 = vunpack.c.l.b16 %v2310
      %v2503 = vunpack.c.h.b16 %v2310
      %v2504 = vunpack.c.l.b16 %v2311
      %v2505 = vunpack.c.h.b16 %v2311
      %v2506 = vunpack.c.l.b16 %v2312
      %v2507 = vunpack.c.h.b16 %v2312
      %v2508 = vunpack.c.l.b16 %v2313
      %v2509 = vunpack.c.h.b16 %v2313
      %v2510 = vunpack.c.l.b16 %v2314
      %v2511 = vunpack.c.h.b16 %v2314
      %v2512 = vunpack.c.l.b16 %v2315
      %v2513 = vunpack.c.h.b16 %v2315
      %v2514 = vunpack.c.l.b16 %v2316
      %v2515 = vunpack.c.h.b16 %v2316
      %v2516 = vunpack.c.l.b16 %v2317
      %v2517 = vunpack.c.h.b16 %v2317
      %v2518 = vunpack.c.l.b16 %v2318
      %v2519 = vunpack.c.h.b16 %v2318
      %v2520 = vunpack.c.l.b16 %v2319
      %v2521 = vunpack.c.h.b16 %v2319
      %v2522 = vunpack.c.l.b16 %v2320
      %v2523 = vunpack.c.h.b16 %v2320
      %v2524 = vunpack.c.l.b16 %v2321
      %v2525 = vunpack.c.h.b16 %v2321
      %v2526 = vunpack.c.l.b16 %v2322
      %v2527 = vunpack.c.h.b16 %v2322
      %v2528 = vunpack.c.l.b16 %v2323
      %v2529 = vunpack.c.h.b16 %v2323
      %v2530 = vunpack.c.l.b16 %v2324
      %v2531 = vunpack.c.h.b16 %v2324
      %v2532 = vunpack.c.l.b16 %v2325
      %v2533 = vunpack.c.h.b16 %v2325
      %v2534 = vunpack.c.l.b16 %v2326
      %v2535 = vunpack.c.h.b16 %v2326
      %v2536 = vunpack.c.l.b16 %v2327
      %v2537 = vunpack.c.h.b16 %v2327
      %v2538 = vunpack.c.l.b16 %v2328
      %v2539 = vunpack.c.h.b16 %v2328
      %v2540 = vunpack.c.l.b16 %v2329
      %v2541 = vunpack.c.h.b16 %v2329
      %v2542 = vunpack.c.l.b16 %v2330
      %v2543 = vunpack.c.h.b16 %v2330
      %v2544 = vunpack.c.l.b16 %v2331
      %v2545 = vunpack.c.h.b16 %v2331
      %v2546 = vunpack.c.l.b16 %v2332
      %v2547 = vunpack.c.h.b16 %v2332
      %v2548 = vunpack.c.l.b16 %v2333
      %v2549 = vunpack.c.h.b16 %v2333
      %v2550 = vunpack.c.l.b16 %v2334
      %v2551 = vunpack.c.h.b16 %v2334
      %v2552 = vunpack.c.l.b16 %v2335
      %v2553 = vunpack.c.h.b16 %v2335
      %v2554 = vunpack.c.l.b16 %v2336
      %v2555 = vunpack.c.h.b16 %v2336
      %v2556 = vunpack.c.l.b16 %v2337
      %v2557 = vunpack.c.h.b16 %v2337
      %v2558 = vunpack.c.l.b16 %v2338
      %v2559 = vunpack.c.h.b16 %v2338
      %v2560 = vunpack.c.l.b16 %v2339
      %v2561 = vunpack.c.h.b16 %v2339
      %v2562 = vunpack.c.l.b16 %v2340
      %v2563 = vunpack.c.h.b16 %v2340
      %v2564 = vunpack.c.l.b16 %v2341
      %v2565 = vunpack.c.h.b16 %v2341
      %v2566 = vunpack.c.l.b16 %v2342
      %v2567 = vunpack.c.h.b16 %v2342
      %v2568 = vunpack.c.l.b16 %v2343
      %v2569 = vunpack.c.h.b16 %v2343
      %v2570 = vunpack.c.l.b16 %v2344
      %v2571 = vunpack.c.h.b16 %v2344
      %v2572 = vunpack.c.l.b16 %v2345
      %v2573 = vunpack.c.h.b16 %v2345
      %v2574 = vunpack.c.l.b16 %v2346
      %v2575 = vunpack.c.h.b16 %v2346
      %v2576 = vunpack.c.l.b16 %v2347
      %v2577 = vunpack.c.h.b16 %v2347
      %v2578 = vunpack.c.l.b16 %v2348
      %v2579 = vunpack.c.h.b16 %v2348
      %v2580 = vunpack.c.l.b16 %v2349
      %v2581 = vunpack.c.h.b16 %v2349
      %v2582 = vunpack.c.l.b16 %v2350
      %v2583 = vunpack.c.h.b16 %v2350
      %v2584 = vunpack.c.l.b16 %v2351
      %v2585 = vunpack.c.h.b16 %v2351
      %v2586 = vunpack.c.l.b16 %v2352
      %v2587 = vunpack.c.h.b16 %v2352
      %v2588 = vunpack.c.l.b16 %v2353
      %v2589 = vunpack.c.h.b16 %v2353
      %v2590 = vunpack.c.l.b16 %v2354
      %v2591 = vunpack.c.h.b16 %v2354
      %v2592 = vunpack.c.l.b16 %v2355
      %v2593 = vunpack.c.h.b16 %v2355
      %v2594 = vunpack.c.l.b16 %v2356
      %v2595 = vunpack.c.h.b16 %v2356
      %v2596 = vunpack.c.l.b16 %v2357
      %v2597 = vunpack.c.h.b16 %v2357
      %v2598 = vunpack.c.l.b16 %v2358
      %v2599 = vunpack.c.h.b16 %v2358
      %v2600 = vunpack.c.l.b16 %v2359
      %v2601 = vunpack.c.h.b16 %v2359
      %v2602 = vpack.c.b16 %v2476, %v2474
      %v2603 = vpack.c.b16 %v2477, %v2475
      %v2604 = vpack.c.b16 %v2480, %v2478
      %v2605 = vpack.c.b16 %v2481, %v2479
      %v2606 = vpack.c.b16 %v2484, %v2482
      %v2607 = vpack.c.b16 %v2485, %v2483
      %v2608 = vpack.c.b16 %v2488, %v2486
      %v2609 = vpack.c.b16 %v2489, %v2487
      %v2610 = vpack.c.b16 %v2492, %v2490
      %v2611 = vpack.c.b16 %v2493, %v2491
      %v2612 = vpack.c.b16 %v2496, %v2494
      %v2613 = vpack.c.b16 %v2497, %v2495
      %v2614 = vpack.c.b16 %v2500, %v2498
      %v2615 = vpack.c.b16 %v2501, %v2499
      %v2616 = vpack.c.b16 %v2504, %v2502
      %v2617 = vpack.c.b16 %v2505, %v2503
      %v2618 = vpack.c.b16 %v2508, %v2506
      %v2619 = vpack.c.b16 %v2509, %v2507
      %v2620 = vpack.c.b16 %v2512, %v2510
      %v2621 = vpack.c.b16 %v2513, %v2511
      %v2622 = vpack.c.b16 %v2516, %v2514
      %v2623 = vpack.c.b16 %v2517, %v2515
      %v2624 = vpack.c.b16 %v2520, %v2518
      %v2625 = vpack.c.b16 %v2521, %v2519
      %v2626 = vpack.c.b16 %v2524, %v2522
      %v2627 = vpack.c.b16 %v2525, %v2523
      %v2628 = vpack.c.b16 %v2528, %v2526
      %v2629 = vpack.c.b16 %v2529, %v2527
      %v2630 = vpack.c.b16 %v2532, %v2530
      %v2631 = vpack.c.b16 %v2533, %v2531
      %v2632 = vpack.c.b16 %v2536, %v2534
      %v2633 = vpack.c.b16 %v2537, %v2535
      %v2634 = vpack.c.b16 %v2540, %v2538
      %v2635 = vpack.c.b16 %v2541, %v2539
      %v2636 = vpack.c.b16 %v2544, %v2542
      %v2637 = vpack.c.b16 %v2545, %v2543
      %v2638 = vpack.c.b16 %v2548, %v2546
      %v2639 = vpack.c.b16 %v2549, %v2547
      %v2640 = vpack.c.b16 %v2552, %v2550
      %v2641 = vpack.c.b16 %v2553, %v2551
      %v2642 = vpack.c.b16 %v2556, %v2554
      %v2643 = vpack.c.b16 %v2557, %v2555
      %v2644 = vpack.c.b16 %v2560, %v2558
      %v2645 = vpack.c.b16 %v2561, %v2559
      %v2646 = vpack.c.b16 %v2564, %v2562
      %v2647 = vpack.c.b16 %v2565, %v2563
      %v2648 = vpack.c.b16 %v2568, %v2566
      %v2649 = vpack.c.b16 %v2569, %v2567
      %v2650 = vpack.c.b16 %v2572, %v2570
      %v2651 = vpack.c.b16 %v2573, %v2571
      %v2652 = vpack.c.b16 %v2576, %v2574
      %v2653 = vpack.c.b16 %v2577, %v2575
      %v2654 = vpack.c.b16 %v2580, %v2578
      %v2655 = vpack.c.b16 %v2581, %v2579
      %v2656 = vpack.c.b16 %v2584, %v2582
      %v2657 = vpack.c.b16 %v2585, %v2583
      %v2658 = vpack.c.b16 %v2588, %v2586
      %v2659 = vpack.c.b16 %v2589, %v2587
      %v2660 = vpack.c.b16 %v2592, %v2590
      %v2661 = vpack.c.b16 %v2593, %v2591
      %v2662 = vpack.c.b16 %v2596, %v2594
      %v2663 = vpack.c.b16 %v2597, %v2595
      %v2664 = vpack.c.b16 %v2600, %v2598
      %v2665 = vpack.c.b16 %v2601, %v2599
      %2730 = vmatprep.subr.bf16.mxu0 %v2603
      %2731 = vmatpush1.bf16.msra.mxu0 %v2602
      %2732 = vmatprep.subr.bf16.mxu0 %v2605
      %2733 = vmatpush1.bf16.msra.mxu0 %v2604
      %2734 = vmatprep.subr.bf16.mxu0 %v2607
      %2735 = vmatpush1.bf16.msra.mxu0 %v2606
      %2736 = vmatprep.subr.bf16.mxu0 %v2609
      %2737 = vmatpush1.bf16.msra.mxu0 %v2608
      %2738 = vmatprep.subr.bf16.mxu0 %v2611
      %2739 = vmatpush1.bf16.msra.mxu0 %v2610
      %2740 = vmatprep.subr.bf16.mxu0 %v2613
      %2741 = vmatpush1.bf16.msra.mxu0 %v2612
      %2742 = vmatprep.subr.bf16.mxu0 %v2615
      %2743 = vmatpush1.bf16.msra.mxu0 %v2614
      %2744 = vmatprep.subr.bf16.mxu0 %v2617
      %2745 = vmatpush1.bf16.msra.mxu0 %v2616
      %2746 = vmatprep.subr.bf16.mxu0 %v2619
      %2747 = vmatpush1.bf16.msra.mxu0 %v2618
      %2748 = vmatprep.subr.bf16.mxu0 %v2621
      %2749 = vmatpush1.bf16.msra.mxu0 %v2620
      %2750 = vmatprep.subr.bf16.mxu0 %v2623
      %2751 = vmatpush1.bf16.msra.mxu0 %v2622
      %2752 = vmatprep.subr.bf16.mxu0 %v2625
      %2753 = vmatpush1.bf16.msra.mxu0 %v2624
      %2754 = vmatprep.subr.bf16.mxu0 %v2627
      %2755 = vmatpush1.bf16.msra.mxu0 %v2626
      %2756 = vmatprep.subr.bf16.mxu0 %v2629
      %2757 = vmatpush1.bf16.msra.mxu0 %v2628
      %2758 = vmatprep.subr.bf16.mxu0 %v2631
      %2759 = vmatpush1.bf16.msra.mxu0 %v2630
      %2760 = vmatprep.subr.bf16.mxu0 %v2633
      %2761 = vmatpush1.bf16.msra.mxu0 %v2632
      %2762 = vmatprep.mubr.bf16.mxu0 %v2391
      %2763 = vmatmul.mubr.bf16.gmra.mrb[0].mxu0 %v2384
      %v2764 = vpop.f32.mrb[0].mxu0
      %v2765 = vadd.f32 0.0, %v2764
      %v2766 = vpop.f32.mrb[0].mxu0
      %v2767 = vadd.f32 0.0, %v2766
      %v2768 = vpop.f32.mrb[0].mxu0
      %v2769 = vpop.f32.mrb[0].mxu0
      %2770 = vdwg.mxu0
      %2771 = vmatprep.subr.bf16.mxu0 %v2635
      %2772 = vmatpush1.bf16.msra.mxu0 %v2634
      %2773 = vmatprep.subr.bf16.mxu0 %v2637
      %2774 = vmatpush1.bf16.msra.mxu0 %v2636
      %2775 = vmatprep.subr.bf16.mxu0 %v2639
      %2776 = vmatpush1.bf16.msra.mxu0 %v2638
      %2777 = vmatprep.subr.bf16.mxu0 %v2641
      %2778 = vmatpush1.bf16.msra.mxu0 %v2640
      %2779 = vmatprep.subr.bf16.mxu0 %v2643
      %2780 = vmatpush1.bf16.msra.mxu0 %v2642
      %2781 = vmatprep.subr.bf16.mxu0 %v2645
      %2782 = vmatpush1.bf16.msra.mxu0 %v2644
      %2783 = vmatprep.subr.bf16.mxu0 %v2647
      %2784 = vmatpush1.bf16.msra.mxu0 %v2646
      %2785 = vmatprep.subr.bf16.mxu0 %v2649
      %2786 = vmatpush1.bf16.msra.mxu0 %v2648
      %2787 = vmatprep.subr.bf16.mxu0 %v2651
      %2788 = vmatpush1.bf16.msra.mxu0 %v2650
      %2789 = vmatprep.subr.bf16.mxu0 %v2653
      %2790 = vmatpush1.bf16.msra.mxu0 %v2652
      %2791 = vmatprep.subr.bf16.mxu0 %v2655
      %2792 = vmatpush1.bf16.msra.mxu0 %v2654
      %2793 = vmatprep.subr.bf16.mxu0 %v2657
      %2794 = vmatpush1.bf16.msra.mxu0 %v2656
      %2795 = vmatprep.subr.bf16.mxu0 %v2659
      %2796 = vmatpush1.bf16.msra.mxu0 %v2658
      %2797 = vmatprep.subr.bf16.mxu0 %v2661
      %2798 = vmatpush1.bf16.msra.mxu0 %v2660
      %2799 = vmatprep.subr.bf16.mxu0 %v2663
      %2800 = vmatpush1.bf16.msra.mxu0 %v2662
      %2801 = vmatprep.subr.bf16.mxu0 %v2665
      %2802 = vmatpush1.bf16.msra.mxu0 %v2664
      %2803 = vmatprep.mubr.bf16.mxu0 %v2405
      %2804 = vmatmul.mubr.bf16.gmra.mrb[0].mxu0 %v2398
      %v2805 = vpop.f32.mrb[0].mxu0
      %v2806 = vadd.f32 %v2765, %v2805
      %v2807 = vpop.f32.mrb[0].mxu0
      %v2808 = vadd.f32 %v2767, %v2807
      %v2809 = vpop.f32.mrb[0].mxu0
      %v2810 = vpop.f32.mrb[0].mxu0
      %2811 = vdwg.mxu0
      %v2813 = vcombine.high %v2230, %v2230
      %v2815 = vunpack.c.l.s4 1983009808
      %v2816 = vunpack.c.0.s8 %v2815
      %v2817 = vlaneseq
      %v2818 = vshrl.u32 %v2817, 7
      %v2819 = vsub.s32 %v2816, %v2818
      %v2820 = vrot.slane %v2230, %v2819
      %v2822 = vunpack.c.l.s4 1983009808
      %v2823 = vunpack.c.0.s8 %v2822
      %v2824 = vlaneseq
      %v2825 = vshrl.u32 %v2824, 7
      %v2826 = vsub.s32 %v2823, %v2825
      %v2827 = vrot.slane %v2813, %v2826
      %v2828 = vcombine.high %v2820, %v2820
      %v2829 = vcombine.high %v2827, %v2827
      %v2898 = vunpack.c.l.b16 %v2231
      %v2899 = vunpack.c.h.b16 %v2231
      %v2900 = vunpack.c.l.b16 %v2232
      %v2901 = vunpack.c.h.b16 %v2232
      %v2902 = vunpack.c.l.b16 %v2233
      %v2903 = vunpack.c.h.b16 %v2233
      %v2904 = vunpack.c.l.b16 %v2234
      %v2905 = vunpack.c.h.b16 %v2234
      %v2906 = vunpack.c.l.b16 %v2235
      %v2907 = vunpack.c.h.b16 %v2235
      %v2908 = vunpack.c.l.b16 %v2236
      %v2909 = vunpack.c.h.b16 %v2236
      %v2910 = vunpack.c.l.b16 %v2237
      %v2911 = vunpack.c.h.b16 %v2237
      %v2912 = vunpack.c.l.b16 %v2238
      %v2913 = vunpack.c.h.b16 %v2238
      %v2914 = vunpack.c.l.b16 %v2239
      %v2915 = vunpack.c.h.b16 %v2239
      %v2916 = vunpack.c.l.b16 %v2240
      %v2917 = vunpack.c.h.b16 %v2240
      %v2918 = vunpack.c.l.b16 %v2241
      %v2919 = vunpack.c.h.b16 %v2241
      %v2920 = vunpack.c.l.b16 %v2242
      %v2921 = vunpack.c.h.b16 %v2242
      %v2922 = vunpack.c.l.b16 %v2243
      %v2923 = vunpack.c.h.b16 %v2243
      %v2924 = vunpack.c.l.b16 %v2244
      %v2925 = vunpack.c.h.b16 %v2244
      %v2926 = vunpack.c.l.b16 %v2245
      %v2927 = vunpack.c.h.b16 %v2245
      %v2928 = vunpack.c.l.b16 %v2246
      %v2929 = vunpack.c.h.b16 %v2246
      %v2930 = vunpack.c.l.b16 %v2247
      %v2931 = vunpack.c.h.b16 %v2247
      %v2932 = vunpack.c.l.b16 %v2248
      %v2933 = vunpack.c.h.b16 %v2248
      %v2934 = vunpack.c.l.b16 %v2249
      %v2935 = vunpack.c.h.b16 %v2249
      %v2936 = vunpack.c.l.b16 %v2250
      %v2937 = vunpack.c.h.b16 %v2250
      %v2938 = vunpack.c.l.b16 %v2251
      %v2939 = vunpack.c.h.b16 %v2251
      %v2940 = vunpack.c.l.b16 %v2252
      %v2941 = vunpack.c.h.b16 %v2252
      %v2942 = vunpack.c.l.b16 %v2253
      %v2943 = vunpack.c.h.b16 %v2253
      %v2944 = vunpack.c.l.b16 %v2254
      %v2945 = vunpack.c.h.b16 %v2254
      %v2946 = vunpack.c.l.b16 %v2255
      %v2947 = vunpack.c.h.b16 %v2255
      %v2948 = vunpack.c.l.b16 %v2256
      %v2949 = vunpack.c.h.b16 %v2256
      %v2950 = vunpack.c.l.b16 %v2257
      %v2951 = vunpack.c.h.b16 %v2257
      %v2952 = vunpack.c.l.b16 %v2258
      %v2953 = vunpack.c.h.b16 %v2258
      %v2954 = vunpack.c.l.b16 %v2259
      %v2955 = vunpack.c.h.b16 %v2259
      %v2956 = vunpack.c.l.b16 %v2260
      %v2957 = vunpack.c.h.b16 %v2260
      %v2958 = vunpack.c.l.b16 %v2261
      %v2959 = vunpack.c.h.b16 %v2261
      %v2960 = vunpack.c.l.b16 %v2262
      %v2961 = vunpack.c.h.b16 %v2262
      %v2962 = vunpack.c.l.b16 %v2263
      %v2963 = vunpack.c.h.b16 %v2263
      %v2964 = vunpack.c.l.b16 %v2264
      %v2965 = vunpack.c.h.b16 %v2264
      %v2966 = vunpack.c.l.b16 %v2265
      %v2967 = vunpack.c.h.b16 %v2265
      %v2968 = vunpack.c.l.b16 %v2266
      %v2969 = vunpack.c.h.b16 %v2266
      %v2970 = vunpack.c.l.b16 %v2267
      %v2971 = vunpack.c.h.b16 %v2267
      %v2972 = vunpack.c.l.b16 %v2268
      %v2973 = vunpack.c.h.b16 %v2268
      %v2974 = vunpack.c.l.b16 %v2269
      %v2975 = vunpack.c.h.b16 %v2269
      %v2976 = vunpack.c.l.b16 %v2270
      %v2977 = vunpack.c.h.b16 %v2270
      %v2978 = vunpack.c.l.b16 %v2271
      %v2979 = vunpack.c.h.b16 %v2271
      %v2980 = vunpack.c.l.b16 %v2272
      %v2981 = vunpack.c.h.b16 %v2272
      %v2982 = vunpack.c.l.b16 %v2273
      %v2983 = vunpack.c.h.b16 %v2273
      %v2984 = vunpack.c.l.b16 %v2274
      %v2985 = vunpack.c.h.b16 %v2274
      %v2986 = vunpack.c.l.b16 %v2275
      %v2987 = vunpack.c.h.b16 %v2275
      %v2988 = vunpack.c.l.b16 %v2276
      %v2989 = vunpack.c.h.b16 %v2276
      %v2990 = vunpack.c.l.b16 %v2277
      %v2991 = vunpack.c.h.b16 %v2277
      %v2992 = vunpack.c.l.b16 %v2278
      %v2993 = vunpack.c.h.b16 %v2278
      %v2994 = vunpack.c.l.b16 %v2279
      %v2995 = vunpack.c.h.b16 %v2279
      %v2996 = vunpack.c.l.b16 %v2280
      %v2997 = vunpack.c.h.b16 %v2280
      %v2998 = vunpack.c.l.b16 %v2281
      %v2999 = vunpack.c.h.b16 %v2281
      %v3000 = vunpack.c.l.b16 %v2282
      %v3001 = vunpack.c.h.b16 %v2282
      %v3002 = vunpack.c.l.b16 %v2283
      %v3003 = vunpack.c.h.b16 %v2283
      %v3004 = vunpack.c.l.b16 %v2284
      %v3005 = vunpack.c.h.b16 %v2284
      %v3006 = vunpack.c.l.b16 %v2285
      %v3007 = vunpack.c.h.b16 %v2285
      %v3008 = vunpack.c.l.b16 %v2286
      %v3009 = vunpack.c.h.b16 %v2286
      %v3010 = vunpack.c.l.b16 %v2287
      %v3011 = vunpack.c.h.b16 %v2287
      %v3012 = vunpack.c.l.b16 %v2288
      %v3013 = vunpack.c.h.b16 %v2288
      %v3014 = vunpack.c.l.b16 %v2289
      %v3015 = vunpack.c.h.b16 %v2289
      %v3016 = vunpack.c.l.b16 %v2290
      %v3017 = vunpack.c.h.b16 %v2290
      %v3018 = vunpack.c.l.b16 %v2291
      %v3019 = vunpack.c.h.b16 %v2291
      %v3020 = vunpack.c.l.b16 %v2292
      %v3021 = vunpack.c.h.b16 %v2292
      %v3022 = vunpack.c.l.b16 %v2293
      %v3023 = vunpack.c.h.b16 %v2293
      %v3024 = vunpack.c.l.b16 %v2294
      %v3025 = vunpack.c.h.b16 %v2294
      %v3026 = vpack.c.b16 %v2900, %v2898
      %v3027 = vpack.c.b16 %v2901, %v2899
      %v3028 = vpack.c.b16 %v2904, %v2902
      %v3029 = vpack.c.b16 %v2905, %v2903
      %v3030 = vpack.c.b16 %v2908, %v2906
      %v3031 = vpack.c.b16 %v2909, %v2907
      %v3032 = vpack.c.b16 %v2912, %v2910
      %v3033 = vpack.c.b16 %v2913, %v2911
      %v3034 = vpack.c.b16 %v2916, %v2914
      %v3035 = vpack.c.b16 %v2917, %v2915
      %v3036 = vpack.c.b16 %v2920, %v2918
      %v3037 = vpack.c.b16 %v2921, %v2919
      %v3038 = vpack.c.b16 %v2924, %v2922
      %v3039 = vpack.c.b16 %v2925, %v2923
      %v3040 = vpack.c.b16 %v2928, %v2926
      %v3041 = vpack.c.b16 %v2929, %v2927
      %v3042 = vpack.c.b16 %v2932, %v2930
      %v3043 = vpack.c.b16 %v2933, %v2931
      %v3044 = vpack.c.b16 %v2936, %v2934
      %v3045 = vpack.c.b16 %v2937, %v2935
      %v3046 = vpack.c.b16 %v2940, %v2938
      %v3047 = vpack.c.b16 %v2941, %v2939
      %v3048 = vpack.c.b16 %v2944, %v2942
      %v3049 = vpack.c.b16 %v2945, %v2943
      %v3050 = vpack.c.b16 %v2948, %v2946
      %v3051 = vpack.c.b16 %v2949, %v2947
      %v3052 = vpack.c.b16 %v2952, %v2950
      %v3053 = vpack.c.b16 %v2953, %v2951
      %v3054 = vpack.c.b16 %v2956, %v2954
      %v3055 = vpack.c.b16 %v2957, %v2955
      %v3056 = vpack.c.b16 %v2960, %v2958
      %v3057 = vpack.c.b16 %v2961, %v2959
      %v3058 = vpack.c.b16 %v2964, %v2962
      %v3059 = vpack.c.b16 %v2965, %v2963
      %v3060 = vpack.c.b16 %v2968, %v2966
      %v3061 = vpack.c.b16 %v2969, %v2967
      %v3062 = vpack.c.b16 %v2972, %v2970
      %v3063 = vpack.c.b16 %v2973, %v2971
      %v3064 = vpack.c.b16 %v2976, %v2974
      %v3065 = vpack.c.b16 %v2977, %v2975
      %v3066 = vpack.c.b16 %v2980, %v2978
      %v3067 = vpack.c.b16 %v2981, %v2979
      %v3068 = vpack.c.b16 %v2984, %v2982
      %v3069 = vpack.c.b16 %v2985, %v2983
      %v3070 = vpack.c.b16 %v2988, %v2986
      %v3071 = vpack.c.b16 %v2989, %v2987
      %v3072 = vpack.c.b16 %v2992, %v2990
      %v3073 = vpack.c.b16 %v2993, %v2991
      %v3074 = vpack.c.b16 %v2996, %v2994
      %v3075 = vpack.c.b16 %v2997, %v2995
      %v3076 = vpack.c.b16 %v3000, %v2998
      %v3077 = vpack.c.b16 %v3001, %v2999
      %v3078 = vpack.c.b16 %v3004, %v3002
      %v3079 = vpack.c.b16 %v3005, %v3003
      %v3080 = vpack.c.b16 %v3008, %v3006
      %v3081 = vpack.c.b16 %v3009, %v3007
      %v3082 = vpack.c.b16 %v3012, %v3010
      %v3083 = vpack.c.b16 %v3013, %v3011
      %v3084 = vpack.c.b16 %v3016, %v3014
      %v3085 = vpack.c.b16 %v3017, %v3015
      %v3086 = vpack.c.b16 %v3020, %v3018
      %v3087 = vpack.c.b16 %v3021, %v3019
      %v3088 = vpack.c.b16 %v3024, %v3022
      %v3089 = vpack.c.b16 %v3025, %v3023
      %3154 = vmatprep.subr.bf16.mxu0 %v3027
      %3155 = vmatpush1.bf16.msra.mxu0 %v3026
      %3156 = vmatprep.subr.bf16.mxu0 %v3029
      %3157 = vmatpush1.bf16.msra.mxu0 %v3028
      %3158 = vmatprep.subr.bf16.mxu0 %v3031
      %3159 = vmatpush1.bf16.msra.mxu0 %v3030
      %3160 = vmatprep.subr.bf16.mxu0 %v3033
      %3161 = vmatpush1.bf16.msra.mxu0 %v3032
      %3162 = vmatprep.subr.bf16.mxu0 %v3035
      %3163 = vmatpush1.bf16.msra.mxu0 %v3034
      %3164 = vmatprep.subr.bf16.mxu0 %v3037
      %3165 = vmatpush1.bf16.msra.mxu0 %v3036
      %3166 = vmatprep.subr.bf16.mxu0 %v3039
      %3167 = vmatpush1.bf16.msra.mxu0 %v3038
      %3168 = vmatprep.subr.bf16.mxu0 %v3041
      %3169 = vmatpush1.bf16.msra.mxu0 %v3040
      %3170 = vmatprep.subr.bf16.mxu0 %v3043
      %3171 = vmatpush1.bf16.msra.mxu0 %v3042
      %3172 = vmatprep.subr.bf16.mxu0 %v3045
      %3173 = vmatpush1.bf16.msra.mxu0 %v3044
      %3174 = vmatprep.subr.bf16.mxu0 %v3047
      %3175 = vmatpush1.bf16.msra.mxu0 %v3046
      %3176 = vmatprep.subr.bf16.mxu0 %v3049
      %3177 = vmatpush1.bf16.msra.mxu0 %v3048
      %3178 = vmatprep.subr.bf16.mxu0 %v3051
      %3179 = vmatpush1.bf16.msra.mxu0 %v3050
      %3180 = vmatprep.subr.bf16.mxu0 %v3053
      %3181 = vmatpush1.bf16.msra.mxu0 %v3052
      %3182 = vmatprep.subr.bf16.mxu0 %v3055
      %3183 = vmatpush1.bf16.msra.mxu0 %v3054
      %3184 = vmatprep.subr.bf16.mxu0 %v3057
      %3185 = vmatpush1.bf16.msra.mxu0 %v3056
      %3186 = vmatprep.mubr.bf16.mxu0 %v2828
      %3187 = vmatmul.mubr.bf16.gmra.mrb[0].mxu0 %v2820
      %v3188 = vpop.f32.mrb[0].mxu0
      %v3189 = vadd.f32 %v2806, %v3188
      %v3190 = vpop.f32.mrb[0].mxu0
      %v3191 = vadd.f32 %v2808, %v3190
      %v3192 = vpop.f32.mrb[0].mxu0
      %v3193 = vpop.f32.mrb[0].mxu0
      %3194 = vdwg.mxu0
      %3195 = vmatprep.subr.bf16.mxu0 %v3059
      %3196 = vmatpush1.bf16.msra.mxu0 %v3058
      %3197 = vmatprep.subr.bf16.mxu0 %v3061
      %3198 = vmatpush1.bf16.msra.mxu0 %v3060
      %3199 = vmatprep.subr.bf16.mxu0 %v3063
      %3200 = vmatpush1.bf16.msra.mxu0 %v3062
      %3201 = vmatprep.subr.bf16.mxu0 %v3065
      %3202 = vmatpush1.bf16.msra.mxu0 %v3064
      %3203 = vmatprep.subr.bf16.mxu0 %v3067
      %3204 = vmatpush1.bf16.msra.mxu0 %v3066
      %3205 = vmatprep.subr.bf16.mxu0 %v3069
      %3206 = vmatpush1.bf16.msra.mxu0 %v3068
      %3207 = vmatprep.subr.bf16.mxu0 %v3071
      %3208 = vmatpush1.bf16.msra.mxu0 %v3070
      %3209 = vmatprep.subr.bf16.mxu0 %v3073
      %3210 = vmatpush1.bf16.msra.mxu0 %v3072
      %3211 = vmatprep.subr.bf16.mxu0 %v3075
      %3212 = vmatpush1.bf16.msra.mxu0 %v3074
      %3213 = vmatprep.subr.bf16.mxu0 %v3077
      %3214 = vmatpush1.bf16.msra.mxu0 %v3076
      %3215 = vmatprep.subr.bf16.mxu0 %v3079
      %3216 = vmatpush1.bf16.msra.mxu0 %v3078
      %3217 = vmatprep.subr.bf16.mxu0 %v3081
      %3218 = vmatpush1.bf16.msra.mxu0 %v3080
      %3219 = vmatprep.subr.bf16.mxu0 %v3083
      %3220 = vmatpush1.bf16.msra.mxu0 %v3082
      %3221 = vmatprep.subr.bf16.mxu0 %v3085
      %3222 = vmatpush1.bf16.msra.mxu0 %v3084
      %3223 = vmatprep.subr.bf16.mxu0 %v3087
      %3224 = vmatpush1.bf16.msra.mxu0 %v3086
      %3225 = vmatprep.subr.bf16.mxu0 %v3089
      %3226 = vmatpush1.bf16.msra.mxu0 %v3088
      %3227 = vmatprep.mubr.bf16.mxu0 %v2829
      %3228 = vmatmul.mubr.bf16.gmra.mrb[0].mxu0 %v2827
      %v3229 = vpop.f32.mrb[0].mxu0
      %v3230 = vadd.f32 %v3189, %v3229
      %v3231 = vpop.f32.mrb[0].mxu0
      %v3232 = vadd.f32 %v3191, %v3231
      %v3233 = vpop.f32.mrb[0].mxu0
      %v3234 = vpop.f32.mrb[0].mxu0
      %3235 = vdwg.mxu0
      %s3236 = scalar_lea.vmem %s164, 16
      %v3237 = vld [vmem:[%s3236] sm:$0x55]
      %v3238 = vld [vmem:[%s1179] sm:$0xff]
      %v3239 = vld [vmem:[%s1179 + $0x8] sm:$0xff]
      %v3240 = vld [vmem:[%s1179 + $0x10] sm:$0xff]
      %v3241 = vld [vmem:[%s1179 + $0x18] sm:$0xff]
      %v3242 = vld [vmem:[%s1179 + $0x20] sm:$0xff]
      %v3243 = vld [vmem:[%s1179 + $0x28] sm:$0xff]
      %v3244 = vld [vmem:[%s1179 + $0x30] sm:$0xff]
      %v3245 = vld [vmem:[%s1179 + $0x38] sm:$0xff]
      %v3246 = vld [vmem:[%s1179 + $0x40] sm:$0xff]
      %v3247 = vld [vmem:[%s1179 + $0x48] sm:$0xff]
      %v3248 = vld [vmem:[%s1179 + $0x50] sm:$0xff]
      %v3249 = vld [vmem:[%s1179 + $0x58] sm:$0xff]
      %v3250 = vld [vmem:[%s1179 + $0x60] sm:$0xff]
      %v3251 = vld [vmem:[%s1179 + $0x68] sm:$0xff]
      %v3252 = vld [vmem:[%s1179 + $0x70] sm:$0xff]
      %v3253 = vld [vmem:[%s1179 + $0x78] sm:$0xff]
      %v3254 = vld [vmem:[%s1179 + $0x80] sm:$0xff]
      %v3255 = vld [vmem:[%s1179 + $0x88] sm:$0xff]
      %v3256 = vld [vmem:[%s1179 + $0x90] sm:$0xff]
      %v3257 = vld [vmem:[%s1179 + $0x98] sm:$0xff]
      %v3258 = vld [vmem:[%s1179 + $0xa0] sm:$0xff]
      %v3259 = vld [vmem:[%s1179 + $0xa8] sm:$0xff]
      %v3260 = vld [vmem:[%s1179 + $0xb0] sm:$0xff]
      %v3261 = vld [vmem:[%s1179 + $0xb8] sm:$0xff]
      %v3262 = vld [vmem:[%s1179 + $0xc0] sm:$0xff]
      %v3263 = vld [vmem:[%s1179 + $0xc8] sm:$0xff]
      %v3264 = vld [vmem:[%s1179 + $0xd0] sm:$0xff]
      %v3265 = vld [vmem:[%s1179 + $0xd8] sm:$0xff]
      %v3266 = vld [vmem:[%s1179 + $0xe0] sm:$0xff]
      %v3267 = vld [vmem:[%s1179 + $0xe8] sm:$0xff]
      %v3268 = vld [vmem:[%s1179 + $0xf0] sm:$0xff]
      %v3269 = vld [vmem:[%s1179 + $0xf8] sm:$0xff]
      %v3270 = vld [vmem:[%s1179 + $0x100] sm:$0xff]
      %v3271 = vld [vmem:[%s1179 + $0x108] sm:$0xff]
      %v3272 = vld [vmem:[%s1179 + $0x110] sm:$0xff]
      %v3273 = vld [vmem:[%s1179 + $0x118] sm:$0xff]
      %v3274 = vld [vmem:[%s1179 + $0x120] sm:$0xff]
      %v3275 = vld [vmem:[%s1179 + $0x128] sm:$0xff]
      %v3276 = vld [vmem:[%s1179 + $0x130] sm:$0xff]
      %v3277 = vld [vmem:[%s1179 + $0x138] sm:$0xff]
      %v3278 = vld [vmem:[%s1179 + $0x140] sm:$0xff]
      %v3279 = vld [vmem:[%s1179 + $0x148] sm:$0xff]
      %v3280 = vld [vmem:[%s1179 + $0x150] sm:$0xff]
      %v3281 = vld [vmem:[%s1179 + $0x158] sm:$0xff]
      %v3282 = vld [vmem:[%s1179 + $0x160] sm:$0xff]
      %v3283 = vld [vmem:[%s1179 + $0x168] sm:$0xff]
      %v3284 = vld [vmem:[%s1179 + $0x170] sm:$0xff]
      %v3285 = vld [vmem:[%s1179 + $0x178] sm:$0xff]
      %v3286 = vld [vmem:[%s1179 + $0x180] sm:$0xff]
      %v3287 = vld [vmem:[%s1179 + $0x188] sm:$0xff]
      %v3288 = vld [vmem:[%s1179 + $0x190] sm:$0xff]
      %v3289 = vld [vmem:[%s1179 + $0x198] sm:$0xff]
      %v3290 = vld [vmem:[%s1179 + $0x1a0] sm:$0xff]
      %v3291 = vld [vmem:[%s1179 + $0x1a8] sm:$0xff]
      %v3292 = vld [vmem:[%s1179 + $0x1b0] sm:$0xff]
      %v3293 = vld [vmem:[%s1179 + $0x1b8] sm:$0xff]
      %v3294 = vld [vmem:[%s1179 + $0x1c0] sm:$0xff]
      %v3295 = vld [vmem:[%s1179 + $0x1c8] sm:$0xff]
      %v3296 = vld [vmem:[%s1179 + $0x1d0] sm:$0xff]
      %v3297 = vld [vmem:[%s1179 + $0x1d8] sm:$0xff]
      %v3298 = vld [vmem:[%s1179 + $0x1e0] sm:$0xff]
      %v3299 = vld [vmem:[%s1179 + $0x1e8] sm:$0xff]
      %v3300 = vld [vmem:[%s1179 + $0x1f0] sm:$0xff]
      %v3301 = vld [vmem:[%s1179 + $0x1f8] sm:$0xff]
      %v3303 = vcombine.high %v3237, %v3237
      %v3305 = vunpack.c.l.s4 1983009808
      %v3306 = vunpack.c.0.s8 %v3305
      %v3307 = vlaneseq
      %v3308 = vshrl.u32 %v3307, 7
      %v3309 = vsub.s32 %v3306, %v3308
      %v3310 = vrot.slane %v3237, %v3309
      %v3312 = vunpack.c.l.s4 1983009808
      %v3313 = vunpack.c.0.s8 %v3312
      %v3314 = vlaneseq
      %v3315 = vshrl.u32 %v3314, 7
      %v3316 = vsub.s32 %v3313, %v3315
      %v3317 = vrot.slane %v3303, %v3316
      %v3318 = vcombine.high %v3310, %v3310
      %v3319 = vcombine.high %v3317, %v3317
      %v3388 = vunpack.c.l.b16 %v3238
      %v3389 = vunpack.c.h.b16 %v3238
      %v3390 = vunpack.c.l.b16 %v3239
      %v3391 = vunpack.c.h.b16 %v3239
      %v3392 = vunpack.c.l.b16 %v3240
      %v3393 = vunpack.c.h.b16 %v3240
      %v3394 = vunpack.c.l.b16 %v3241
      %v3395 = vunpack.c.h.b16 %v3241
      %v3396 = vunpack.c.l.b16 %v3242
      %v3397 = vunpack.c.h.b16 %v3242
      %v3398 = vunpack.c.l.b16 %v3243
      %v3399 = vunpack.c.h.b16 %v3243
      %v3400 = vunpack.c.l.b16 %v3244
      %v3401 = vunpack.c.h.b16 %v3244
      %v3402 = vunpack.c.l.b16 %v3245
      %v3403 = vunpack.c.h.b16 %v3245
      %v3404 = vunpack.c.l.b16 %v3246
      %v3405 = vunpack.c.h.b16 %v3246
      %v3406 = vunpack.c.l.b16 %v3247
      %v3407 = vunpack.c.h.b16 %v3247
      %v3408 = vunpack.c.l.b16 %v3248
      %v3409 = vunpack.c.h.b16 %v3248
      %v3410 = vunpack.c.l.b16 %v3249
      %v3411 = vunpack.c.h.b16 %v3249
      %v3412 = vunpack.c.l.b16 %v3250
      %v3413 = vunpack.c.h.b16 %v3250
      %v3414 = vunpack.c.l.b16 %v3251
      %v3415 = vunpack.c.h.b16 %v3251
      %v3416 = vunpack.c.l.b16 %v3252
      %v3417 = vunpack.c.h.b16 %v3252
      %v3418 = vunpack.c.l.b16 %v3253
      %v3419 = vunpack.c.h.b16 %v3253
      %v3420 = vunpack.c.l.b16 %v3254
      %v3421 = vunpack.c.h.b16 %v3254
      %v3422 = vunpack.c.l.b16 %v3255
      %v3423 = vunpack.c.h.b16 %v3255
      %v3424 = vunpack.c.l.b16 %v3256
      %v3425 = vunpack.c.h.b16 %v3256
      %v3426 = vunpack.c.l.b16 %v3257
      %v3427 = vunpack.c.h.b16 %v3257
      %v3428 = vunpack.c.l.b16 %v3258
      %v3429 = vunpack.c.h.b16 %v3258
      %v3430 = vunpack.c.l.b16 %v3259
      %v3431 = vunpack.c.h.b16 %v3259
      %v3432 = vunpack.c.l.b16 %v3260
      %v3433 = vunpack.c.h.b16 %v3260
      %v3434 = vunpack.c.l.b16 %v3261
      %v3435 = vunpack.c.h.b16 %v3261
      %v3436 = vunpack.c.l.b16 %v3262
      %v3437 = vunpack.c.h.b16 %v3262
      %v3438 = vunpack.c.l.b16 %v3263
      %v3439 = vunpack.c.h.b16 %v3263
      %v3440 = vunpack.c.l.b16 %v3264
      %v3441 = vunpack.c.h.b16 %v3264
      %v3442 = vunpack.c.l.b16 %v3265
      %v3443 = vunpack.c.h.b16 %v3265
      %v3444 = vunpack.c.l.b16 %v3266
      %v3445 = vunpack.c.h.b16 %v3266
      %v3446 = vunpack.c.l.b16 %v3267
      %v3447 = vunpack.c.h.b16 %v3267
      %v3448 = vunpack.c.l.b16 %v3268
      %v3449 = vunpack.c.h.b16 %v3268
      %v3450 = vunpack.c.l.b16 %v3269
      %v3451 = vunpack.c.h.b16 %v3269
      %v3452 = vunpack.c.l.b16 %v3270
      %v3453 = vunpack.c.h.b16 %v3270
      %v3454 = vunpack.c.l.b16 %v3271
      %v3455 = vunpack.c.h.b16 %v3271
      %v3456 = vunpack.c.l.b16 %v3272
      %v3457 = vunpack.c.h.b16 %v3272
      %v3458 = vunpack.c.l.b16 %v3273
      %v3459 = vunpack.c.h.b16 %v3273
      %v3460 = vunpack.c.l.b16 %v3274
      %v3461 = vunpack.c.h.b16 %v3274
      %v3462 = vunpack.c.l.b16 %v3275
      %v3463 = vunpack.c.h.b16 %v3275
      %v3464 = vunpack.c.l.b16 %v3276
      %v3465 = vunpack.c.h.b16 %v3276
      %v3466 = vunpack.c.l.b16 %v3277
      %v3467 = vunpack.c.h.b16 %v3277
      %v3468 = vunpack.c.l.b16 %v3278
      %v3469 = vunpack.c.h.b16 %v3278
      %v3470 = vunpack.c.l.b16 %v3279
      %v3471 = vunpack.c.h.b16 %v3279
      %v3472 = vunpack.c.l.b16 %v3280
      %v3473 = vunpack.c.h.b16 %v3280
      %v3474 = vunpack.c.l.b16 %v3281
      %v3475 = vunpack.c.h.b16 %v3281
      %v3476 = vunpack.c.l.b16 %v3282
      %v3477 = vunpack.c.h.b16 %v3282
      %v3478 = vunpack.c.l.b16 %v3283
      %v3479 = vunpack.c.h.b16 %v3283
      %v3480 = vunpack.c.l.b16 %v3284
      %v3481 = vunpack.c.h.b16 %v3284
      %v3482 = vunpack.c.l.b16 %v3285
      %v3483 = vunpack.c.h.b16 %v3285
      %v3484 = vunpack.c.l.b16 %v3286
      %v3485 = vunpack.c.h.b16 %v3286
      %v3486 = vunpack.c.l.b16 %v3287
      %v3487 = vunpack.c.h.b16 %v3287
      %v3488 = vunpack.c.l.b16 %v3288
      %v3489 = vunpack.c.h.b16 %v3288
      %v3490 = vunpack.c.l.b16 %v3289
      %v3491 = vunpack.c.h.b16 %v3289
      %v3492 = vunpack.c.l.b16 %v3290
      %v3493 = vunpack.c.h.b16 %v3290
      %v3494 = vunpack.c.l.b16 %v3291
      %v3495 = vunpack.c.h.b16 %v3291
      %v3496 = vunpack.c.l.b16 %v3292
      %v3497 = vunpack.c.h.b16 %v3292
      %v3498 = vunpack.c.l.b16 %v3293
      %v3499 = vunpack.c.h.b16 %v3293
      %v3500 = vunpack.c.l.b16 %v3294
      %v3501 = vunpack.c.h.b16 %v3294
      %v3502 = vunpack.c.l.b16 %v3295
      %v3503 = vunpack.c.h.b16 %v3295
      %v3504 = vunpack.c.l.b16 %v3296
      %v3505 = vunpack.c.h.b16 %v3296
      %v3506 = vunpack.c.l.b16 %v3297
      %v3507 = vunpack.c.h.b16 %v3297
      %v3508 = vunpack.c.l.b16 %v3298
      %v3509 = vunpack.c.h.b16 %v3298
      %v3510 = vunpack.c.l.b16 %v3299
      %v3511 = vunpack.c.h.b16 %v3299
      %v3512 = vunpack.c.l.b16 %v3300
      %v3513 = vunpack.c.h.b16 %v3300
      %v3514 = vunpack.c.l.b16 %v3301
      %v3515 = vunpack.c.h.b16 %v3301
      %v3516 = vpack.c.b16 %v3390, %v3388
      %v3517 = vpack.c.b16 %v3391, %v3389
      %v3518 = vpack.c.b16 %v3394, %v3392
      %v3519 = vpack.c.b16 %v3395, %v3393
      %v3520 = vpack.c.b16 %v3398, %v3396
      %v3521 = vpack.c.b16 %v3399, %v3397
      %v3522 = vpack.c.b16 %v3402, %v3400
      %v3523 = vpack.c.b16 %v3403, %v3401
      %v3524 = vpack.c.b16 %v3406, %v3404
      %v3525 = vpack.c.b16 %v3407, %v3405
      %v3526 = vpack.c.b16 %v3410, %v3408
      %v3527 = vpack.c.b16 %v3411, %v3409
      %v3528 = vpack.c.b16 %v3414, %v3412
      %v3529 = vpack.c.b16 %v3415, %v3413
      %v3530 = vpack.c.b16 %v3418, %v3416
      %v3531 = vpack.c.b16 %v3419, %v3417
      %v3532 = vpack.c.b16 %v3422, %v3420
      %v3533 = vpack.c.b16 %v3423, %v3421
      %v3534 = vpack.c.b16 %v3426, %v3424
      %v3535 = vpack.c.b16 %v3427, %v3425
      %v3536 = vpack.c.b16 %v3430, %v3428
      %v3537 = vpack.c.b16 %v3431, %v3429
      %v3538 = vpack.c.b16 %v3434, %v3432
      %v3539 = vpack.c.b16 %v3435, %v3433
      %v3540 = vpack.c.b16 %v3438, %v3436
      %v3541 = vpack.c.b16 %v3439, %v3437
      %v3542 = vpack.c.b16 %v3442, %v3440
      %v3543 = vpack.c.b16 %v3443, %v3441
      %v3544 = vpack.c.b16 %v3446, %v3444
      %v3545 = vpack.c.b16 %v3447, %v3445
      %v3546 = vpack.c.b16 %v3450, %v3448
      %v3547 = vpack.c.b16 %v3451, %v3449
      %v3548 = vpack.c.b16 %v3454, %v3452
      %v3549 = vpack.c.b16 %v3455, %v3453
      %v3550 = vpack.c.b16 %v3458, %v3456
      %v3551 = vpack.c.b16 %v3459, %v3457
      %v3552 = vpack.c.b16 %v3462, %v3460
      %v3553 = vpack.c.b16 %v3463, %v3461
      %v3554 = vpack.c.b16 %v3466, %v3464
      %v3555 = vpack.c.b16 %v3467, %v3465
      %v3556 = vpack.c.b16 %v3470, %v3468
      %v3557 = vpack.c.b16 %v3471, %v3469
      %v3558 = vpack.c.b16 %v3474, %v3472
      %v3559 = vpack.c.b16 %v3475, %v3473
      %v3560 = vpack.c.b16 %v3478, %v3476
      %v3561 = vpack.c.b16 %v3479, %v3477
      %v3562 = vpack.c.b16 %v3482, %v3480
      %v3563 = vpack.c.b16 %v3483, %v3481
      %v3564 = vpack.c.b16 %v3486, %v3484
      %v3565 = vpack.c.b16 %v3487, %v3485
      %v3566 = vpack.c.b16 %v3490, %v3488
      %v3567 = vpack.c.b16 %v3491, %v3489
      %v3568 = vpack.c.b16 %v3494, %v3492
      %v3569 = vpack.c.b16 %v3495, %v3493
      %v3570 = vpack.c.b16 %v3498, %v3496
      %v3571 = vpack.c.b16 %v3499, %v3497
      %v3572 = vpack.c.b16 %v3502, %v3500
      %v3573 = vpack.c.b16 %v3503, %v3501
      %v3574 = vpack.c.b16 %v3506, %v3504
      %v3575 = vpack.c.b16 %v3507, %v3505
      %v3576 = vpack.c.b16 %v3510, %v3508
      %v3577 = vpack.c.b16 %v3511, %v3509
      %v3578 = vpack.c.b16 %v3514, %v3512
      %v3579 = vpack.c.b16 %v3515, %v3513
      %3644 = vmatprep.subr.bf16.mxu0 %v3517
      %3645 = vmatpush1.bf16.msra.mxu0 %v3516
      %3646 = vmatprep.subr.bf16.mxu0 %v3519
      %3647 = vmatpush1.bf16.msra.mxu0 %v3518
      %3648 = vmatprep.subr.bf16.mxu0 %v3521
      %3649 = vmatpush1.bf16.msra.mxu0 %v3520
      %3650 = vmatprep.subr.bf16.mxu0 %v3523
      %3651 = vmatpush1.bf16.msra.mxu0 %v3522
      %3652 = vmatprep.subr.bf16.mxu0 %v3525
      %3653 = vmatpush1.bf16.msra.mxu0 %v3524
      %3654 = vmatprep.subr.bf16.mxu0 %v3527
      %3655 = vmatpush1.bf16.msra.mxu0 %v3526
      %3656 = vmatprep.subr.bf16.mxu0 %v3529
      %3657 = vmatpush1.bf16.msra.mxu0 %v3528
      %3658 = vmatprep.subr.bf16.mxu0 %v3531
      %3659 = vmatpush1.bf16.msra.mxu0 %v3530
      %3660 = vmatprep.subr.bf16.mxu0 %v3533
      %3661 = vmatpush1.bf16.msra.mxu0 %v3532
      %3662 = vmatprep.subr.bf16.mxu0 %v3535
      %3663 = vmatpush1.bf16.msra.mxu0 %v3534
      %3664 = vmatprep.subr.bf16.mxu0 %v3537
      %3665 = vmatpush1.bf16.msra.mxu0 %v3536
      %3666 = vmatprep.subr.bf16.mxu0 %v3539
      %3667 = vmatpush1.bf16.msra.mxu0 %v3538
      %3668 = vmatprep.subr.bf16.mxu0 %v3541
      %3669 = vmatpush1.bf16.msra.mxu0 %v3540
      %3670 = vmatprep.subr.bf16.mxu0 %v3543
      %3671 = vmatpush1.bf16.msra.mxu0 %v3542
      %3672 = vmatprep.subr.bf16.mxu0 %v3545
      %3673 = vmatpush1.bf16.msra.mxu0 %v3544
      %3674 = vmatprep.subr.bf16.mxu0 %v3547
      %3675 = vmatpush1.bf16.msra.mxu0 %v3546
      %3676 = vmatprep.mubr.bf16.mxu0 %v3318
      %3677 = vmatmul.mubr.bf16.gmra.mrb[0].mxu0 %v3310
      %v3678 = vpop.f32.mrb[0].mxu0
      %v3679 = vadd.f32 0.0, %v3678
      %v3680 = vpop.f32.mrb[0].mxu0
      %v3681 = vadd.f32 0.0, %v3680
      %v3682 = vpop.f32.mrb[0].mxu0
      %v3683 = vpop.f32.mrb[0].mxu0
      %3684 = vdwg.mxu0
      %3685 = vmatprep.subr.bf16.mxu0 %v3549
      %3686 = vmatpush1.bf16.msra.mxu0 %v3548
      %3687 = vmatprep.subr.bf16.mxu0 %v3551
      %3688 = vmatpush1.bf16.msra.mxu0 %v3550
      %3689 = vmatprep.subr.bf16.mxu0 %v3553
      %3690 = vmatpush1.bf16.msra.mxu0 %v3552
      %3691 = vmatprep.subr.bf16.mxu0 %v3555
      %3692 = vmatpush1.bf16.msra.mxu0 %v3554
      %3693 = vmatprep.subr.bf16.mxu0 %v3557
      %3694 = vmatpush1.bf16.msra.mxu0 %v3556
      %3695 = vmatprep.subr.bf16.mxu0 %v3559
      %3696 = vmatpush1.bf16.msra.mxu0 %v3558
      %3697 = vmatprep.subr.bf16.mxu0 %v3561
      %3698 = vmatpush1.bf16.msra.mxu0 %v3560
      %3699 = vmatprep.subr.bf16.mxu0 %v3563
      %3700 = vmatpush1.bf16.msra.mxu0 %v3562
      %3701 = vmatprep.subr.bf16.mxu0 %v3565
      %3702 = vmatpush1.bf16.msra.mxu0 %v3564
      %3703 = vmatprep.subr.bf16.mxu0 %v3567
      %3704 = vmatpush1.bf16.msra.mxu0 %v3566
      %3705 = vmatprep.subr.bf16.mxu0 %v3569
      %3706 = vmatpush1.bf16.msra.mxu0 %v3568
      %3707 = vmatprep.subr.bf16.mxu0 %v3571
      %3708 = vmatpush1.bf16.msra.mxu0 %v3570
      %3709 = vmatprep.subr.bf16.mxu0 %v3573
      %3710 = vmatpush1.bf16.msra.mxu0 %v3572
      %3711 = vmatprep.subr.bf16.mxu0 %v3575
      %3712 = vmatpush1.bf16.msra.mxu0 %v3574
      %3713 = vmatprep.subr.bf16.mxu0 %v3577
      %3714 = vmatpush1.bf16.msra.mxu0 %v3576
      %3715 = vmatprep.subr.bf16.mxu0 %v3579
      %3716 = vmatpush1.bf16.msra.mxu0 %v3578
      %3717 = vmatprep.mubr.bf16.mxu0 %v3319
      %3718 = vmatmul.mubr.bf16.gmra.mrb[0].mxu0 %v3317
      %v3719 = vpop.f32.mrb[0].mxu0
      %v3720 = vadd.f32 %v3679, %v3719
      %v3721 = vpop.f32.mrb[0].mxu0
      %v3722 = vadd.f32 %v3681, %v3721
      %v3723 = vpop.f32.mrb[0].mxu0
      %v3724 = vpop.f32.mrb[0].mxu0
      %3725 = vdwg.mxu0
      %v3726 = vadd.f32 %v3230, %v3720
      %v3727 = vadd.f32 %v3232, %v3722
      %v3728 = vld [vmem:[%s3236] sm:$0xff]
      %v3729 = vld [vmem:[%s1671] sm:$0xff]
      %v3730 = vld [vmem:[%s1671 + $0x8] sm:$0xff]
      %v3731 = vld [vmem:[%s1671 + $0x10] sm:$0xff]
      %v3732 = vld [vmem:[%s1671 + $0x18] sm:$0xff]
      %v3733 = vld [vmem:[%s1671 + $0x20] sm:$0xff]
      %v3734 = vld [vmem:[%s1671 + $0x28] sm:$0xff]
      %v3735 = vld [vmem:[%s1671 + $0x30] sm:$0xff]
      %v3736 = vld [vmem:[%s1671 + $0x38] sm:$0xff]
      %v3737 = vld [vmem:[%s1671 + $0x40] sm:$0xff]
      %v3738 = vld [vmem:[%s1671 + $0x48] sm:$0xff]
      %v3739 = vld [vmem:[%s1671 + $0x50] sm:$0xff]
      %v3740 = vld [vmem:[%s1671 + $0x58] sm:$0xff]
      %v3741 = vld [vmem:[%s1671 + $0x60] sm:$0xff]
      %v3742 = vld [vmem:[%s1671 + $0x68] sm:$0xff]
      %v3743 = vld [vmem:[%s1671 + $0x70] sm:$0xff]
      %v3744 = vld [vmem:[%s1671 + $0x78] sm:$0xff]
      %v3745 = vld [vmem:[%s1671 + $0x80] sm:$0xff]
      %v3746 = vld [vmem:[%s1671 + $0x88] sm:$0xff]
      %v3747 = vld [vmem:[%s1671 + $0x90] sm:$0xff]
      %v3748 = vld [vmem:[%s1671 + $0x98] sm:$0xff]
      %v3749 = vld [vmem:[%s1671 + $0xa0] sm:$0xff]
      %v3750 = vld [vmem:[%s1671 + $0xa8] sm:$0xff]
      %v3751 = vld [vmem:[%s1671 + $0xb0] sm:$0xff]
      %v3752 = vld [vmem:[%s1671 + $0xb8] sm:$0xff]
      %v3753 = vld [vmem:[%s1671 + $0xc0] sm:$0xff]
      %v3754 = vld [vmem:[%s1671 + $0xc8] sm:$0xff]
      %v3755 = vld [vmem:[%s1671 + $0xd0] sm:$0xff]
      %v3756 = vld [vmem:[%s1671 + $0xd8] sm:$0xff]
      %v3757 = vld [vmem:[%s1671 + $0xe0] sm:$0xff]
      %v3758 = vld [vmem:[%s1671 + $0xe8] sm:$0xff]
      %v3759 = vld [vmem:[%s1671 + $0xf0] sm:$0xff]
      %v3760 = vld [vmem:[%s1671 + $0xf8] sm:$0xff]
      %v3761 = vld [vmem:[%s1671 + $0x100] sm:$0xff]
      %v3762 = vld [vmem:[%s1671 + $0x108] sm:$0xff]
      %v3763 = vld [vmem:[%s1671 + $0x110] sm:$0xff]
      %v3764 = vld [vmem:[%s1671 + $0x118] sm:$0xff]
      %v3765 = vld [vmem:[%s1671 + $0x120] sm:$0xff]
      %v3766 = vld [vmem:[%s1671 + $0x128] sm:$0xff]
      %v3767 = vld [vmem:[%s1671 + $0x130] sm:$0xff]
      %v3768 = vld [vmem:[%s1671 + $0x138] sm:$0xff]
      %v3769 = vld [vmem:[%s1671 + $0x140] sm:$0xff]
      %v3770 = vld [vmem:[%s1671 + $0x148] sm:$0xff]
      %v3771 = vld [vmem:[%s1671 + $0x150] sm:$0xff]
      %v3772 = vld [vmem:[%s1671 + $0x158] sm:$0xff]
      %v3773 = vld [vmem:[%s1671 + $0x160] sm:$0xff]
      %v3774 = vld [vmem:[%s1671 + $0x168] sm:$0xff]
      %v3775 = vld [vmem:[%s1671 + $0x170] sm:$0xff]
      %v3776 = vld [vmem:[%s1671 + $0x178] sm:$0xff]
      %v3777 = vld [vmem:[%s1671 + $0x180] sm:$0xff]
      %v3778 = vld [vmem:[%s1671 + $0x188] sm:$0xff]
      %v3779 = vld [vmem:[%s1671 + $0x190] sm:$0xff]
      %v3780 = vld [vmem:[%s1671 + $0x198] sm:$0xff]
      %v3781 = vld [vmem:[%s1671 + $0x1a0] sm:$0xff]
      %v3782 = vld [vmem:[%s1671 + $0x1a8] sm:$0xff]
      %v3783 = vld [vmem:[%s1671 + $0x1b0] sm:$0xff]
      %v3784 = vld [vmem:[%s1671 + $0x1b8] sm:$0xff]
      %v3785 = vld [vmem:[%s1671 + $0x1c0] sm:$0xff]
      %v3786 = vld [vmem:[%s1671 + $0x1c8] sm:$0xff]
      %v3787 = vld [vmem:[%s1671 + $0x1d0] sm:$0xff]
      %v3788 = vld [vmem:[%s1671 + $0x1d8] sm:$0xff]
      %v3789 = vld [vmem:[%s1671 + $0x1e0] sm:$0xff]
      %v3790 = vld [vmem:[%s1671 + $0x1e8] sm:$0xff]
      %v3791 = vld [vmem:[%s1671 + $0x1f0] sm:$0xff]
      %v3792 = vld [vmem:[%s1671 + $0x1f8] sm:$0xff]
      %v3794 = vcombine.high %v3728, %v3728
      %v3796 = vunpack.c.l.s4 1983009808
      %v3797 = vunpack.c.0.s8 %v3796
      %v3798 = vlaneseq
      %v3799 = vshrl.u32 %v3798, 7
      %v3800 = vsub.s32 %v3797, %v3799
      %v3801 = vrot.slane %v3728, %v3800
      %v3803 = vunpack.c.l.s4 1983009808
      %v3804 = vunpack.c.0.s8 %v3803
      %v3805 = vlaneseq
      %v3806 = vshrl.u32 %v3805, 7
      %v3807 = vsub.s32 %v3804, %v3806
      %v3808 = vrot.slane %v3794, %v3807
      %v3809 = vcombine.high %v3801, %v3801
      %v3810 = vcombine.high %v3808, %v3808
      %v3812 = vshrl.u32 %v3801, 16
      %v3814 = vshll.u32 %v3801, 16
      %v3816 = vrot.slane %v3814, 1
      %v3817 = vor.u32 %v3812, %v3816
      %v3819 = vshrl.u32 %v3809, 16
      %v3821 = vshll.u32 %v3809, 16
      %v3823 = vrot.slane %v3821, 1
      %v3824 = vor.u32 %v3819, %v3823
      %v3826 = vshrl.u32 %v3808, 16
      %v3828 = vshll.u32 %v3808, 16
      %v3830 = vrot.slane %v3828, 1
      %v3831 = vor.u32 %v3826, %v3830
      %v3833 = vshrl.u32 %v3810, 16
      %v3835 = vshll.u32 %v3810, 16
      %v3837 = vrot.slane %v3835, 1
      %v3838 = vor.u32 %v3833, %v3837
      %v3907 = vunpack.c.l.b16 %v3729
      %v3908 = vunpack.c.h.b16 %v3729
      %v3909 = vunpack.c.l.b16 %v3730
      %v3910 = vunpack.c.h.b16 %v3730
      %v3911 = vunpack.c.l.b16 %v3731
      %v3912 = vunpack.c.h.b16 %v3731
      %v3913 = vunpack.c.l.b16 %v3732
      %v3914 = vunpack.c.h.b16 %v3732
      %v3915 = vunpack.c.l.b16 %v3733
      %v3916 = vunpack.c.h.b16 %v3733
      %v3917 = vunpack.c.l.b16 %v3734
      %v3918 = vunpack.c.h.b16 %v3734
      %v3919 = vunpack.c.l.b16 %v3735
      %v3920 = vunpack.c.h.b16 %v3735
      %v3921 = vunpack.c.l.b16 %v3736
      %v3922 = vunpack.c.h.b16 %v3736
      %v3923 = vunpack.c.l.b16 %v3737
      %v3924 = vunpack.c.h.b16 %v3737
      %v3925 = vunpack.c.l.b16 %v3738
      %v3926 = vunpack.c.h.b16 %v3738
      %v3927 = vunpack.c.l.b16 %v3739
      %v3928 = vunpack.c.h.b16 %v3739
      %v3929 = vunpack.c.l.b16 %v3740
      %v3930 = vunpack.c.h.b16 %v3740
      %v3931 = vunpack.c.l.b16 %v3741
      %v3932 = vunpack.c.h.b16 %v3741
      %v3933 = vunpack.c.l.b16 %v3742
      %v3934 = vunpack.c.h.b16 %v3742
      %v3935 = vunpack.c.l.b16 %v3743
      %v3936 = vunpack.c.h.b16 %v3743
      %v3937 = vunpack.c.l.b16 %v3744
      %v3938 = vunpack.c.h.b16 %v3744
      %v3939 = vunpack.c.l.b16 %v3745
      %v3940 = vunpack.c.h.b16 %v3745
      %v3941 = vunpack.c.l.b16 %v3746
      %v3942 = vunpack.c.h.b16 %v3746
      %v3943 = vunpack.c.l.b16 %v3747
      %v3944 = vunpack.c.h.b16 %v3747
      %v3945 = vunpack.c.l.b16 %v3748
      %v3946 = vunpack.c.h.b16 %v3748
      %v3947 = vunpack.c.l.b16 %v3749
      %v3948 = vunpack.c.h.b16 %v3749
      %v3949 = vunpack.c.l.b16 %v3750
      %v3950 = vunpack.c.h.b16 %v3750
      %v3951 = vunpack.c.l.b16 %v3751
      %v3952 = vunpack.c.h.b16 %v3751
      %v3953 = vunpack.c.l.b16 %v3752
      %v3954 = vunpack.c.h.b16 %v3752
      %v3955 = vunpack.c.l.b16 %v3753
      %v3956 = vunpack.c.h.b16 %v3753
      %v3957 = vunpack.c.l.b16 %v3754
      %v3958 = vunpack.c.h.b16 %v3754
      %v3959 = vunpack.c.l.b16 %v3755
      %v3960 = vunpack.c.h.b16 %v3755
      %v3961 = vunpack.c.l.b16 %v3756
      %v3962 = vunpack.c.h.b16 %v3756
      %v3963 = vunpack.c.l.b16 %v3757
      %v3964 = vunpack.c.h.b16 %v3757
      %v3965 = vunpack.c.l.b16 %v3758
      %v3966 = vunpack.c.h.b16 %v3758
      %v3967 = vunpack.c.l.b16 %v3759
      %v3968 = vunpack.c.h.b16 %v3759
      %v3969 = vunpack.c.l.b16 %v3760
      %v3970 = vunpack.c.h.b16 %v3760
      %v3971 = vunpack.c.l.b16 %v3761
      %v3972 = vunpack.c.h.b16 %v3761
      %v3973 = vunpack.c.l.b16 %v3762
      %v3974 = vunpack.c.h.b16 %v3762
      %v3975 = vunpack.c.l.b16 %v3763
      %v3976 = vunpack.c.h.b16 %v3763
      %v3977 = vunpack.c.l.b16 %v3764
      %v3978 = vunpack.c.h.b16 %v3764
      %v3979 = vunpack.c.l.b16 %v3765
      %v3980 = vunpack.c.h.b16 %v3765
      %v3981 = vunpack.c.l.b16 %v3766
      %v3982 = vunpack.c.h.b16 %v3766
      %v3983 = vunpack.c.l.b16 %v3767
      %v3984 = vunpack.c.h.b16 %v3767
      %v3985 = vunpack.c.l.b16 %v3768
      %v3986 = vunpack.c.h.b16 %v3768
      %v3987 = vunpack.c.l.b16 %v3769
      %v3988 = vunpack.c.h.b16 %v3769
      %v3989 = vunpack.c.l.b16 %v3770
      %v3990 = vunpack.c.h.b16 %v3770
      %v3991 = vunpack.c.l.b16 %v3771
      %v3992 = vunpack.c.h.b16 %v3771
      %v3993 = vunpack.c.l.b16 %v3772
      %v3994 = vunpack.c.h.b16 %v3772
      %v3995 = vunpack.c.l.b16 %v3773
      %v3996 = vunpack.c.h.b16 %v3773
      %v3997 = vunpack.c.l.b16 %v3774
      %v3998 = vunpack.c.h.b16 %v3774
      %v3999 = vunpack.c.l.b16 %v3775
      %v4000 = vunpack.c.h.b16 %v3775
      %v4001 = vunpack.c.l.b16 %v3776
      %v4002 = vunpack.c.h.b16 %v3776
      %v4003 = vunpack.c.l.b16 %v3777
      %v4004 = vunpack.c.h.b16 %v3777
      %v4005 = vunpack.c.l.b16 %v3778
      %v4006 = vunpack.c.h.b16 %v3778
      %v4007 = vunpack.c.l.b16 %v3779
      %v4008 = vunpack.c.h.b16 %v3779
      %v4009 = vunpack.c.l.b16 %v3780
      %v4010 = vunpack.c.h.b16 %v3780
      %v4011 = vunpack.c.l.b16 %v3781
      %v4012 = vunpack.c.h.b16 %v3781
      %v4013 = vunpack.c.l.b16 %v3782
      %v4014 = vunpack.c.h.b16 %v3782
      %v4015 = vunpack.c.l.b16 %v3783
      %v4016 = vunpack.c.h.b16 %v3783
      %v4017 = vunpack.c.l.b16 %v3784
      %v4018 = vunpack.c.h.b16 %v3784
      %v4019 = vunpack.c.l.b16 %v3785
      %v4020 = vunpack.c.h.b16 %v3785
      %v4021 = vunpack.c.l.b16 %v3786
      %v4022 = vunpack.c.h.b16 %v3786
      %v4023 = vunpack.c.l.b16 %v3787
      %v4024 = vunpack.c.h.b16 %v3787
      %v4025 = vunpack.c.l.b16 %v3788
      %v4026 = vunpack.c.h.b16 %v3788
      %v4027 = vunpack.c.l.b16 %v3789
      %v4028 = vunpack.c.h.b16 %v3789
      %v4029 = vunpack.c.l.b16 %v3790
      %v4030 = vunpack.c.h.b16 %v3790
      %v4031 = vunpack.c.l.b16 %v3791
      %v4032 = vunpack.c.h.b16 %v3791
      %v4033 = vunpack.c.l.b16 %v3792
      %v4034 = vunpack.c.h.b16 %v3792
      %v4035 = vpack.c.b16 %v3909, %v3907
      %v4036 = vpack.c.b16 %v3910, %v3908
      %v4037 = vpack.c.b16 %v3913, %v3911
      %v4038 = vpack.c.b16 %v3914, %v3912
      %v4039 = vpack.c.b16 %v3917, %v3915
      %v4040 = vpack.c.b16 %v3918, %v3916
      %v4041 = vpack.c.b16 %v3921, %v3919
      %v4042 = vpack.c.b16 %v3922, %v3920
      %v4043 = vpack.c.b16 %v3925, %v3923
      %v4044 = vpack.c.b16 %v3926, %v3924
      %v4045 = vpack.c.b16 %v3929, %v3927
      %v4046 = vpack.c.b16 %v3930, %v3928
      %v4047 = vpack.c.b16 %v3933, %v3931
      %v4048 = vpack.c.b16 %v3934, %v3932
      %v4049 = vpack.c.b16 %v3937, %v3935
      %v4050 = vpack.c.b16 %v3938, %v3936
      %v4051 = vpack.c.b16 %v3941, %v3939
      %v4052 = vpack.c.b16 %v3942, %v3940
      %v4053 = vpack.c.b16 %v3945, %v3943
      %v4054 = vpack.c.b16 %v3946, %v3944
      %v4055 = vpack.c.b16 %v3949, %v3947
      %v4056 = vpack.c.b16 %v3950, %v3948
      %v4057 = vpack.c.b16 %v3953, %v3951
      %v4058 = vpack.c.b16 %v3954, %v3952
      %v4059 = vpack.c.b16 %v3957, %v3955
      %v4060 = vpack.c.b16 %v3958, %v3956
      %v4061 = vpack.c.b16 %v3961, %v3959
      %v4062 = vpack.c.b16 %v3962, %v3960
      %v4063 = vpack.c.b16 %v3965, %v3963
      %v4064 = vpack.c.b16 %v3966, %v3964
      %v4065 = vpack.c.b16 %v3969, %v3967
      %v4066 = vpack.c.b16 %v3970, %v3968
      %v4067 = vpack.c.b16 %v3973, %v3971
      %v4068 = vpack.c.b16 %v3974, %v3972
      %v4069 = vpack.c.b16 %v3977, %v3975
      %v4070 = vpack.c.b16 %v3978, %v3976
      %v4071 = vpack.c.b16 %v3981, %v3979
      %v4072 = vpack.c.b16 %v3982, %v3980
      %v4073 = vpack.c.b16 %v3985, %v3983
      %v4074 = vpack.c.b16 %v3986, %v3984
      %v4075 = vpack.c.b16 %v3989, %v3987
      %v4076 = vpack.c.b16 %v3990, %v3988
      %v4077 = vpack.c.b16 %v3993, %v3991
      %v4078 = vpack.c.b16 %v3994, %v3992
      %v4079 = vpack.c.b16 %v3997, %v3995
      %v4080 = vpack.c.b16 %v3998, %v3996
      %v4081 = vpack.c.b16 %v4001, %v3999
      %v4082 = vpack.c.b16 %v4002, %v4000
      %v4083 = vpack.c.b16 %v4005, %v4003
      %v4084 = vpack.c.b16 %v4006, %v4004
      %v4085 = vpack.c.b16 %v4009, %v4007
      %v4086 = vpack.c.b16 %v4010, %v4008
      %v4087 = vpack.c.b16 %v4013, %v4011
      %v4088 = vpack.c.b16 %v4014, %v4012
      %v4089 = vpack.c.b16 %v4017, %v4015
      %v4090 = vpack.c.b16 %v4018, %v4016
      %v4091 = vpack.c.b16 %v4021, %v4019
      %v4092 = vpack.c.b16 %v4022, %v4020
      %v4093 = vpack.c.b16 %v4025, %v4023
      %v4094 = vpack.c.b16 %v4026, %v4024
      %v4095 = vpack.c.b16 %v4029, %v4027
      %v4096 = vpack.c.b16 %v4030, %v4028
      %v4097 = vpack.c.b16 %v4033, %v4031
      %v4098 = vpack.c.b16 %v4034, %v4032
      %4163 = vmatprep.subr.bf16.mxu0 %v4036
      %4164 = vmatpush1.bf16.msra.mxu0 %v4035
      %4165 = vmatprep.subr.bf16.mxu0 %v4038
      %4166 = vmatpush1.bf16.msra.mxu0 %v4037
      %4167 = vmatprep.subr.bf16.mxu0 %v4040
      %4168 = vmatpush1.bf16.msra.mxu0 %v4039
      %4169 = vmatprep.subr.bf16.mxu0 %v4042
      %4170 = vmatpush1.bf16.msra.mxu0 %v4041
      %4171 = vmatprep.subr.bf16.mxu0 %v4044
      %4172 = vmatpush1.bf16.msra.mxu0 %v4043
      %4173 = vmatprep.subr.bf16.mxu0 %v4046
      %4174 = vmatpush1.bf16.msra.mxu0 %v4045
      %4175 = vmatprep.subr.bf16.mxu0 %v4048
      %4176 = vmatpush1.bf16.msra.mxu0 %v4047
      %4177 = vmatprep.subr.bf16.mxu0 %v4050
      %4178 = vmatpush1.bf16.msra.mxu0 %v4049
      %4179 = vmatprep.subr.bf16.mxu0 %v4052
      %4180 = vmatpush1.bf16.msra.mxu0 %v4051
      %4181 = vmatprep.subr.bf16.mxu0 %v4054
      %4182 = vmatpush1.bf16.msra.mxu0 %v4053
      %4183 = vmatprep.subr.bf16.mxu0 %v4056
      %4184 = vmatpush1.bf16.msra.mxu0 %v4055
      %4185 = vmatprep.subr.bf16.mxu0 %v4058
      %4186 = vmatpush1.bf16.msra.mxu0 %v4057
      %4187 = vmatprep.subr.bf16.mxu0 %v4060
      %4188 = vmatpush1.bf16.msra.mxu0 %v4059
      %4189 = vmatprep.subr.bf16.mxu0 %v4062
      %4190 = vmatpush1.bf16.msra.mxu0 %v4061
      %4191 = vmatprep.subr.bf16.mxu0 %v4064
      %4192 = vmatpush1.bf16.msra.mxu0 %v4063
      %4193 = vmatprep.subr.bf16.mxu0 %v4066
      %4194 = vmatpush1.bf16.msra.mxu0 %v4065
      %4195 = vmatprep.mubr.bf16.mxu0 %v3824
      %4196 = vmatmul.mubr.bf16.gmra.mrb[0].mxu0 %v3817
      %v4197 = vpop.f32.mrb[0].mxu0
      %v4198 = vadd.f32 0.0, %v4197
      %v4199 = vpop.f32.mrb[0].mxu0
      %v4200 = vadd.f32 0.0, %v4199
      %v4201 = vpop.f32.mrb[0].mxu0
      %v4202 = vpop.f32.mrb[0].mxu0
      %4203 = vdwg.mxu0
      %4204 = vmatprep.subr.bf16.mxu0 %v4068
      %4205 = vmatpush1.bf16.msra.mxu0 %v4067
      %4206 = vmatprep.subr.bf16.mxu0 %v4070
      %4207 = vmatpush1.bf16.msra.mxu0 %v4069
      %4208 = vmatprep.subr.bf16.mxu0 %v4072
      %4209 = vmatpush1.bf16.msra.mxu0 %v4071
      %4210 = vmatprep.subr.bf16.mxu0 %v4074
      %4211 = vmatpush1.bf16.msra.mxu0 %v4073
      %4212 = vmatprep.subr.bf16.mxu0 %v4076
      %4213 = vmatpush1.bf16.msra.mxu0 %v4075
      %4214 = vmatprep.subr.bf16.mxu0 %v4078
      %4215 = vmatpush1.bf16.msra.mxu0 %v4077
      %4216 = vmatprep.subr.bf16.mxu0 %v4080
      %4217 = vmatpush1.bf16.msra.mxu0 %v4079
      %4218 = vmatprep.subr.bf16.mxu0 %v4082
      %4219 = vmatpush1.bf16.msra.mxu0 %v4081
      %4220 = vmatprep.subr.bf16.mxu0 %v4084
      %4221 = vmatpush1.bf16.msra.mxu0 %v4083
      %4222 = vmatprep.subr.bf16.mxu0 %v4086
      %4223 = vmatpush1.bf16.msra.mxu0 %v4085
      %4224 = vmatprep.subr.bf16.mxu0 %v4088
      %4225 = vmatpush1.bf16.msra.mxu0 %v4087
      %4226 = vmatprep.subr.bf16.mxu0 %v4090
      %4227 = vmatpush1.bf16.msra.mxu0 %v4089
      %4228 = vmatprep.subr.bf16.mxu0 %v4092
      %4229 = vmatpush1.bf16.msra.mxu0 %v4091
      %4230 = vmatprep.subr.bf16.mxu0 %v4094
      %4231 = vmatpush1.bf16.msra.mxu0 %v4093
      %4232 = vmatprep.subr.bf16.mxu0 %v4096
      %4233 = vmatpush1.bf16.msra.mxu0 %v4095
      %4234 = vmatprep.subr.bf16.mxu0 %v4098
      %4235 = vmatpush1.bf16.msra.mxu0 %v4097
      %4236 = vmatprep.mubr.bf16.mxu0 %v3838
      %4237 = vmatmul.mubr.bf16.gmra.mrb[0].mxu0 %v3831
      %v4238 = vpop.f32.mrb[0].mxu0
      %v4239 = vadd.f32 %v4198, %v4238
      %v4240 = vpop.f32.mrb[0].mxu0
      %v4241 = vadd.f32 %v4200, %v4240
      %v4242 = vpop.f32.mrb[0].mxu0
      %v4243 = vpop.f32.mrb[0].mxu0
      %4244 = vdwg.mxu0
      %v4245 = vadd.f32 %v3726, %v4239
      %v4246 = vadd.f32 %v3727, %v4241
      %v4247 = vadd.f32 %v4245, %v2194
      %v4248 = vadd.f32 %v4246, %v2198
      %vm4249 = vcmp.gt.f32.partialorder %v4247, 0.0
      %vm4250 = vcmp.gt.f32.partialorder %v4248, 0.0
      %v4251 = vmul.f32 %v4247, 0.2
      %v4252 = vmul.f32 %v4248, 0.2
      %v4253 = vsel %vm4249, %v4247, %v4251
      %v4254 = vsel %vm4250, %v4248, %v4252
      %v4255 = vpack.c.bf16 %v4253, %v4253
      %v4256 = vpack.c.bf16 %v4254, %v4254
      %v4259 = vcombine.low %v4255, %v4256
      %v4261 = vunpack.c.l.s4 1966171168
      %v4262 = vunpack.c.0.s8 %v4261
      %v4263 = vlaneseq
      %v4264 = vshrl.u32 %v4263, 7
      %v4265 = vsub.s32 %v4262, %v4264
      %v4266 = vrot.slane %v4259, %v4265
      %v4268 = vunpack.c.l.s4 1966171168
      %v4269 = vunpack.c.0.s8 %v4268
      %v4270 = vlaneseq
      %v4271 = vshrl.u32 %v4270, 7
      %v4272 = vsub.s32 %v4269, %v4271
      %v4273 = vrot.slane %v4266, %v4272
      %s4275 = scalar_lea.vmem %s168, 2
      %4276 = vst [vmem:[%s4275] sm:$0x3] %v4273
      %p4277 = scmp.lt.s32.totalorder %s14, 1
      %s4278 = scalar_select %p4277, %s14, 1
      %s4279 = smul.addr %s4278, 4
      %s4280 = scalar_lea.vmem %s3, %s4279
      // Predicated region
      $region33: #{discriminator_forward.6} parent=31 // pred_check
        %p4281 = pneg %p100
      $region34: #{discriminator_forward.6} parent=31 // pred_check_branch
        %4283 = sbr.rel (%p4281) target = $region36
      $region35: #{discriminator_forward.6} parent=31 // pred_region
        _
      $region36: #{discriminator_forward.6} parent=31 // pred_fallthru
        _
    $region32: #{discriminator_forward.6} parent=5 // pred_fallthru
      _
    %p4284 = scmp.le.s32.totalorder 2, %s9
    // Predicated region
    $region37: #{discriminator_forward.6} parent=5 // pred_check
      %p4285 = pneg %p4284
    $region38: #{discriminator_forward.6} parent=5 // pred_check_branch
      %4287 = sbr.rel (%p4285) target = $region40
    $region39: #{discriminator_forward.6} parent=5 // pred_region
      %s4288 = ssub.s32 %s9, 2
      // Predicated region
      $region41: #{discriminator_forward.6} parent=39 // pred_check
        %p4289 = pneg %p106
      $region42: #{discriminator_forward.6} parent=39 // pred_check_branch
        %4291 = sbr.rel (%p4289) target = $region44
      $region43: #{discriminator_forward.6} parent=39 // pred_region
        %p4292 = scmp.lt.s32.totalorder %s15, 1
        %s4293 = scalar_select %p4292, %s15, 1
        %s4294 = smul.addr %s4293, 4
        %s4295 = scalar_lea.vmem %s3, %s4294
      $region44: #{discriminator_forward.6} parent=39 // pred_fallthru
        _
    $region40: #{discriminator_forward.6} parent=5 // pred_fallthru
      _
  $region6: #{discriminator_forward.6} parent=0 // loop_footer
    %s13 = sadd.s32 1, %s9
  $region7: #{discriminator_forward.6} parent=0 // loop_footer_branch
    %8 = sbr.rel target = $region3
  $region8: #{discriminator_forward.6} parent=0 // loop_exit
    _

</llo_original>
